<compile_context>
chip_gen: v7x
topology: tpu7x:2x2x1
jax: 0.10.0
libtpu: 0.0.40
codegen_flags: <defaults>
</compile_context>

<pallas_src>
import jax
import jax.numpy as jnp
from jax.experimental import pallas as pl
from jax.experimental.pallas import tpu as pltpu

D_IN = 800
D_IN_PAD = 896      # 7 * 128: lane/K aligned for the fc1 matmul
D_H = 1024
D_OUT = 400
TB_MAX = 512        # batch tile (multiple of 8)


def _round_up(x, m):
    return ((x + m - 1) // m) * m


def _cdiv(a, b):
    return -(-a // b)


def _mlp_kernel(x_ref, w1_ref, b1_ref, w2_ref, b2_ref, w3_ref, b3_ref, o_ref):
    # fc1 + ReLU  (bf16 MXU operands, f32 accumulation)
    h1 = jnp.dot(x_ref[...], w1_ref[...], preferred_element_type=jnp.float32)
    h1 = jnp.maximum(h1 + b1_ref[...], 0.0).astype(jnp.bfloat16)
    # fc2 + ReLU
    h2 = jnp.dot(h1, w2_ref[...], preferred_element_type=jnp.float32)
    h2 = jnp.maximum(h2 + b2_ref[...], 0.0).astype(jnp.bfloat16)
    # fc3 (writes 400 output columns directly)
    out = jnp.dot(h2, w3_ref[...], preferred_element_type=jnp.float32) + b3_ref[...]
    o_ref[...] = out.astype(o_ref.dtype)


def prepare_params(params_f32):
    """f32 master params ([in,out] weights, [1,out] biases) -> kernel params:
    bf16 weights (W1 zero-padded 800 -> 896 input rows), f32 biases."""
    w1, b1, w2, b2, w3, b3 = params_f32
    w1p = jnp.zeros((D_IN_PAD, D_H), jnp.float32).at[:D_IN].set(w1)
    return (w1p.astype(jnp.bfloat16), b1.astype(jnp.float32),
            w2.astype(jnp.bfloat16), b2.astype(jnp.float32),
            w3.astype(jnp.bfloat16), b3.astype(jnp.float32))


@jax.jit
def mlp_input_forward(x, kparams):
    """x: [B, ...] whose trailing dims flatten to 800 (torch flatten(1) semantics)."""
    w1, b1, w2, b2, w3, b3 = kparams
    B = x.shape[0]
    x2d = x.reshape(B, -1)
    assert x2d.shape[1] == D_IN

    # Batch tiling: minimal padding, and >= 2 grid steps when the batch allows it so
    # v7x megacore sharding ("parallel" axis) actually uses both TensorCores.
    n_tiles = _cdiv(_round_up(B, 8), TB_MAX)
    if n_tiles == 1 and B >= 16:
        n_tiles = 2
    tb = _round_up(_cdiv(B, n_tiles), 8)
    b_pad = n_tiles * tb

    # Single fused pass over x: cast to bf16 + zero-pad batch rows and K cols 800->896.
    xk = (jnp.zeros((b_pad, D_IN_PAD), jnp.bfloat16)
          .at[:B, :D_IN].set(x2d.astype(jnp.bfloat16)))

    def const_spec(shape):
        # Grid-invariant (VMEM-resident) weights/biases: never re-fetched, so a single
        # buffer suffices — frees VMEM for bigger batch tiles.
        return pl.BlockSpec(shape, lambda i: (0,) * len(shape),
                            pipeline_mode=pl.Buffered(1))

    flops = 2 * b_pad * (D_IN_PAD * D_H + D_H * D_H + D_H * D_OUT)
    bytes_accessed = (
        xk.size * 2                                   # bf16 input
        + (w1.size + w2.size + w3.size) * 2           # bf16 weights
        + (b1.size + b2.size + b3.size) * 4           # f32 biases
        + b_pad * D_OUT * 4                           # f32 output
    )

    out = pl.pallas_call(
        _mlp_kernel,
        out_shape=jax.ShapeDtypeStruct((b_pad, D_OUT), jnp.float32),
        grid=(n_tiles,),
        in_specs=[
            pl.BlockSpec((tb, D_IN_PAD), lambda i: (i, 0)),   # x tile walks the batch
            const_spec(w1.shape), const_spec(b1.shape),       # weights/biases resident
            const_spec(w2.shape), const_spec(b2.shape),
            const_spec(w3.shape), const_spec(b3.shape),
        ],
        out_specs=pl.BlockSpec((tb, D_OUT), lambda i: (i, 0)),
        compiler_params=pltpu.CompilerParams(
            dimension_semantics=("parallel",),
            vmem_limit_bytes=48 << 20,   # safe on v7x (64 MiB phys); ample everywhere
        ),
        cost_estimate=pl.CostEstimate(
            flops=flops, transcendentals=0, bytes_accessed=bytes_accessed),
    )(xk, w1, b1, w2, b2, w3, b3)

    # Only slice when batch padding was actually added (avoids an extra HBM pass).
    return out if b_pad == B else out[:B]


def init_params(key):
    """Deterministic f32 init mimicking nn.Linear's U(-1/sqrt(fan_in), 1/sqrt(fan_in)).
    Weights stored as [in, out] (transposed vs. PyTorch's [out, in])."""
    dims = [(D_IN, D_H), (D_H, D_H), (D_H, D_OUT)]
    params = []
    for fan_in, fan_out in dims:
        kw, kb, key = jax.random.split(key, 3)
        bound = 1.0 / jnp.sqrt(fan_in)
        w = jax.random.uniform(kw, (fan_in, fan_out), jnp.float32, -bound, bound)
        b = jax.random.uniform(kb, (1, fan_out), jnp.float32, -bound, bound)
        params += [w, b]
    return tuple(params)


def reference_forward(x, params_f32):
    w1, b1, w2, b2, w3, b3 = params_f32
    h = x.reshape(x.shape[0], -1)
    h = jnp.maximum(h @ w1 + b1, 0.0)
    h = jnp.maximum(h @ w2 + b2, 0.0)
    return h @ w3 + b3


if __name__ == "__main__":
    key = jax.random.PRNGKey(0)
    kx, kp = jax.random.split(key)
    # Input whose flatten(1) gives 800 features, e.g. (B, 2, 20, 20)
    x = jax.random.normal(kx, (2, 2, 20, 20), jnp.float32)
    params = init_params(kp)
    kparams = prepare_params(params)

    out = mlp_input_forward(x, kparams)
    out = jax.block_until_ready(out)

    ref = reference_forward(x, params)
    assert out.shape == (2, D_OUT)
    # bf16 weights/activations inside the kernel -> relaxed tolerance vs f32 reference
    assert jnp.allclose(out, ref, atol=2e-2, rtol=2e-2)
    print("KERNEL_OK")
</pallas_src>

<mosaic_0001>
module attributes {stable_mosaic.version = 11 : i64} {
  func.func @_mlp_kernel(%arg0: i32, %arg1: memref<8x896xbf16, #tpu.memory_space<vmem>>, %arg2: memref<896x1024xbf16, #tpu.memory_space<vmem>>, %arg3: memref<1x1024xf32, #tpu.memory_space<vmem>>, %arg4: memref<1024x1024xbf16, #tpu.memory_space<vmem>>, %arg5: memref<1x1024xf32, #tpu.memory_space<vmem>>, %arg6: memref<1024x400xbf16, #tpu.memory_space<vmem>>, %arg7: memref<1x400xf32, #tpu.memory_space<vmem>>, %arg8: memref<8x400xf32, #tpu.memory_space<vmem>>) attributes {dimension_semantics = [#tpu.dimension_semantics<parallel>], iteration_bounds = array<i64: 1>, scalar_prefetch = 0 : i64, scratch_operands = 0 : i64, tpu.core_type = #tpu.core_type<tc>, window_params = [{transform_indices = @transform_0, window_bounds = array<i64: 8, 896>}, {pipeline_mode = #tpu.pipeline_mode<synchronous>, transform_indices = @transform_1, window_bounds = array<i64: 896, 1024>}, {pipeline_mode = #tpu.pipeline_mode<synchronous>, transform_indices = @transform_2, window_bounds = array<i64: 1, 1024>}, {pipeline_mode = #tpu.pipeline_mode<synchronous>, transform_indices = @transform_3, window_bounds = array<i64: 1024, 1024>}, {pipeline_mode = #tpu.pipeline_mode<synchronous>, transform_indices = @transform_4, window_bounds = array<i64: 1, 1024>}, {pipeline_mode = #tpu.pipeline_mode<synchronous>, transform_indices = @transform_5, window_bounds = array<i64: 1024, 400>}, {pipeline_mode = #tpu.pipeline_mode<synchronous>, transform_indices = @transform_6, window_bounds = array<i64: 1, 400>}, {transform_indices = @transform_7, window_bounds = array<i64: 8, 400>}]} {
    %c0 = arith.constant 0 : index
    %c0_0 = arith.constant 0 : index
    %0 = vector.load %arg1[%c0, %c0_0] : memref<8x896xbf16, #tpu.memory_space<vmem>>, vector<8x896xbf16>
    %c0_1 = arith.constant 0 : index
    %c0_2 = arith.constant 0 : index
    %1 = vector.load %arg2[%c0_1, %c0_2] : memref<896x1024xbf16, #tpu.memory_space<vmem>>, vector<896x1024xbf16>
    %cst = arith.constant dense<0.000000e+00> : vector<8x1024xf32>
    %2 = tpu.matmul %0, %1, %cst {dimension_numbers = #tpu.dot_dimension_numbers<[1], [0], [0], [1], [0, 0, 1, 1], [], []>} : vector<8x896xbf16>, vector<896x1024xbf16>, vector<8x1024xf32> -> vector<8x1024xf32>
    %c0_3 = arith.constant 0 : index
    %c0_4 = arith.constant 0 : index
    %3 = vector.load %arg3[%c0_3, %c0_4] : memref<1x1024xf32, #tpu.memory_space<vmem>>, vector<1x1024xf32>
    %4 = vector.broadcast %3 : vector<1x1024xf32> to vector<8x1024xf32>
    %5 = arith.addf %2, %4 : vector<8x1024xf32>
    %cst_5 = arith.constant 0.000000e+00 : f32
    %6 = vector.broadcast %cst_5 : f32 to vector<8x1024xf32>
    %7 = arith.maximumf %5, %6 : vector<8x1024xf32>
    %8 = arith.truncf %7 : vector<8x1024xf32> to vector<8x1024xbf16>
    %c0_6 = arith.constant 0 : index
    %c0_7 = arith.constant 0 : index
    %9 = vector.load %arg4[%c0_6, %c0_7] : memref<1024x1024xbf16, #tpu.memory_space<vmem>>, vector<1024x1024xbf16>
    %cst_8 = arith.constant dense<0.000000e+00> : vector<8x1024xf32>
    %10 = tpu.matmul %8, %9, %cst_8 {dimension_numbers = #tpu.dot_dimension_numbers<[1], [0], [0], [1], [0, 0, 1, 1], [], []>} : vector<8x1024xbf16>, vector<1024x1024xbf16>, vector<8x1024xf32> -> vector<8x1024xf32>
    %c0_9 = arith.constant 0 : index
    %c0_10 = arith.constant 0 : index
    %11 = vector.load %arg5[%c0_9, %c0_10] : memref<1x1024xf32, #tpu.memory_space<vmem>>, vector<1x1024xf32>
    %12 = vector.broadcast %11 : vector<1x1024xf32> to vector<8x1024xf32>
    %13 = arith.addf %10, %12 : vector<8x1024xf32>
    %cst_11 = arith.constant 0.000000e+00 : f32
    %14 = vector.broadcast %cst_11 : f32 to vector<8x1024xf32>
    %15 = arith.maximumf %13, %14 : vector<8x1024xf32>
    %16 = arith.truncf %15 : vector<8x1024xf32> to vector<8x1024xbf16>
    %c0_12 = arith.constant 0 : index
    %c0_13 = arith.constant 0 : index
    %17 = vector.load %arg6[%c0_12, %c0_13] : memref<1024x400xbf16, #tpu.memory_space<vmem>>, vector<1024x400xbf16>
    %cst_14 = arith.constant dense<0.000000e+00> : vector<8x400xf32>
    %18 = tpu.matmul %16, %17, %cst_14 {dimension_numbers = #tpu.dot_dimension_numbers<[1], [0], [0], [1], [0, 0, 1, 1], [], []>} : vector<8x1024xbf16>, vector<1024x400xbf16>, vector<8x400xf32> -> vector<8x400xf32>
    %c0_15 = arith.constant 0 : index
    %c0_16 = arith.constant 0 : index
    %19 = vector.load %arg7[%c0_15, %c0_16] : memref<1x400xf32, #tpu.memory_space<vmem>>, vector<1x400xf32>
    %20 = vector.broadcast %19 : vector<1x400xf32> to vector<8x400xf32>
    %21 = arith.addf %18, %20 : vector<8x400xf32>
    %c0_17 = arith.constant 0 : index
    %c0_18 = arith.constant 0 : index
    %22 = vector.load %arg8[%c0_17, %c0_18] : memref<8x400xf32, #tpu.memory_space<vmem>>, vector<8x400xf32>
    tpu.vector_store %arg8[%c0_17, %c0_18], %21 {strides = array<i32>} : memref<8x400xf32, #tpu.memory_space<vmem>>, vector<8x400xf32>,
    return
  }
  func.func @transform_0(%arg0: i32) -> (i32, i32) {
    %c0_i32 = arith.constant 0 : i32
    %c0_i32_0 = arith.constant 0 : i32
    return %arg0, %c0_i32 : i32, i32
  }
  func.func @transform_1(%arg0: i32) -> (i32, i32) {
    %c0_i32 = arith.constant 0 : i32
    %c0_i32_0 = arith.constant 0 : i32
    %c0_i32_1 = arith.constant 0 : i32
    return %c0_i32, %c0_i32_0 : i32, i32
  }
  func.func @transform_2(%arg0: i32) -> (i32, i32) {
    %c0_i32 = arith.constant 0 : i32
    %c0_i32_0 = arith.constant 0 : i32
    %c0_i32_1 = arith.constant 0 : i32
    return %c0_i32, %c0_i32_0 : i32, i32
  }
  func.func @transform_3(%arg0: i32) -> (i32, i32) {
    %c0_i32 = arith.constant 0 : i32
    %c0_i32_0 = arith.constant 0 : i32
    %c0_i32_1 = arith.constant 0 : i32
    return %c0_i32, %c0_i32_0 : i32, i32
  }
  func.func @transform_4(%arg0: i32) -> (i32, i32) {
    %c0_i32 = arith.constant 0 : i32
    %c0_i32_0 = arith.constant 0 : i32
    %c0_i32_1 = arith.constant 0 : i32
    return %c0_i32, %c0_i32_0 : i32, i32
  }
  func.func @transform_5(%arg0: i32) -> (i32, i32) {
    %c0_i32 = arith.constant 0 : i32
    %c0_i32_0 = arith.constant 0 : i32
    %c0_i32_1 = arith.constant 0 : i32
    return %c0_i32, %c0_i32_0 : i32, i32
  }
  func.func @transform_6(%arg0: i32) -> (i32, i32) {
    %c0_i32 = arith.constant 0 : i32
    %c0_i32_0 = arith.constant 0 : i32
    %c0_i32_1 = arith.constant 0 : i32
    return %c0_i32, %c0_i32_0 : i32, i32
  }
  func.func @transform_7(%arg0: i32) -> (i32, i32) {
    %c0_i32 = arith.constant 0 : i32
    %c0_i32_0 = arith.constant 0 : i32
    return %arg0, %c0_i32 : i32, i32
  }
}

</mosaic_0001>

<llo_original>
// kernel: mlp_input_forward.1
$region0: #{mlp_input_forward.1}
  #allocation0 [shape = 'u32[]', space=smem, size = 0x4, offset = 0x4, fixed_abs, tag = 'smem constant byte address 0x4 - core index']
  #allocation1 [shape = 'u32[144,128]{1,0:T(1,128)}', space=vmem, size = 0x12000, scoped, tag = 'internal scratch']
  %s0 = inlined_call_operand.vmem [shape: bf16[8,896], index: 0, kind: input, shape index: {}]
  %s1 = inlined_call_operand.vmem [shape: bf16[896,1024], index: 1, kind: input, shape index: {}]
  %s2 = inlined_call_operand.hbm [shape: f32[1,1024], index: 2, kind: input, shape index: {}]
  %s3 = inlined_call_operand.hbm [shape: bf16[1024,1024], index: 3, kind: input, shape index: {}]
  %s4 = inlined_call_operand.hbm [shape: f32[1,1024], index: 4, kind: input, shape index: {}]
  %s5 = inlined_call_operand.vmem [shape: bf16[1024,400], index: 5, kind: input, shape index: {}]
  %s6 = inlined_call_operand.hbm [shape: f32[1,400], index: 6, kind: input, shape index: {}]
  %s7 = inlined_call_operand.vmem [shape: f32[8,400], index: 7, kind: output, shape index: {}]
  %s8 = sld [smem:[#allocation0]]
  $region54: #{mlp_input_forward.1} parent=0
    _
  %s10 = ssub.s32 1, %s8
  %s11 = scalar_select 0, %s10, %s8
  $region1: #{mlp_input_forward.1} parent=0
    #allocation2 [shape = 'u8[4096]{0}', space=vmem, size = 0x1000, scoped, tag = 'input window, operand 2, single buffered']
    #allocation3 [shape = 's32[1]{0}', space=sflag, size = 0x4, scoped, tag = 'scoped memory for mlp_input_forward.1']
    #allocation4 [shape = 'u8[2097152]{0}', space=vmem, size = 0x200000, scoped, tag = 'input window, operand 3, single buffered']
    #allocation5 [shape = 's32[1]{0}', space=sflag, size = 0x4, scoped, tag = 'scoped memory for mlp_input_forward.1']
    #allocation6 [shape = 'u8[4096]{0}', space=vmem, size = 0x1000, scoped, tag = 'input window, operand 4, single buffered']
    #allocation7 [shape = 'u8[2048]{0}', space=vmem, size = 0x800, scoped, tag = 'input window, operand 6, single buffered']
    #allocation8 [shape = 's32[1]{0}', space=sflag, size = 0x4, scoped, tag = 'scoped memory for mlp_input_forward.1']
    %12 = vsyncpa [#allocation3], 0
    %13 = vsyncpa [#allocation5], 0
    %14 = vsyncpa [#allocation8], 0
    // Predicated region
    $region2: #{mlp_input_forward.1} parent=1 // pred_check
      _
    $region3: #{mlp_input_forward.1} parent=1 // pred_check_branch
      %16 = sbr.rel (0) target = $region5
    $region4: #{mlp_input_forward.1} parent=1 // pred_region
      _
    $region5: #{mlp_input_forward.1} parent=1 // pred_fallthru
      _
    // Predicated region
    $region6: #{mlp_input_forward.1} parent=1 // pred_check
      _
    $region7: #{mlp_input_forward.1} parent=1 // pred_check_branch
      %18 = sbr.rel (0) target = $region9
    $region8: #{mlp_input_forward.1} parent=1 // pred_region
      _
    $region9: #{mlp_input_forward.1} parent=1 // pred_fallthru
      _
    // Predicated region
    $region10: #{mlp_input_forward.1} parent=1 // pred_check
      _
    $region11: #{mlp_input_forward.1} parent=1 // pred_check_branch
      %20 = sbr.rel (0) target = $region13
    $region12: #{mlp_input_forward.1} parent=1 // pred_region
      %s22 = ssub.s32 128, 128
      %23 = vsyncadd [#allocation3], %s22
      %s25 = sshll.u32 [#allocation2], 4
      %s26 = int_to_ptr.vmem [resolvable:$true] %s25
      %28 = dma.hbm_to_vmem [thread:$0]  %s2, 128, %s26, [#allocation3]
    $region13: #{mlp_input_forward.1} parent=1 // pred_fallthru
      _
    // Predicated region
    $region14: #{mlp_input_forward.1} parent=1 // pred_check
      _
    $region15: #{mlp_input_forward.1} parent=1 // pred_check_branch
      %30 = sbr.rel (0) target = $region17
    $region16: #{mlp_input_forward.1} parent=1 // pred_region
      %s32 = ssub.s32 65536, 65536
      %33 = vsyncadd [#allocation5], %s32
      %s34 = sshll.u32 [#allocation4], 4
      %s35 = int_to_ptr.vmem [resolvable:$true] %s34
      %40 = dma.hbm_to_vmem [thread:$0]  %s3, 65536, %s35, [#allocation5], 512, 512, 32
    $region17: #{mlp_input_forward.1} parent=1 // pred_fallthru
      _
    // Predicated region
    $region18: #{mlp_input_forward.1} parent=1 // pred_check
      _
    $region19: #{mlp_input_forward.1} parent=1 // pred_check_branch
      %42 = sbr.rel (0) target = $region21
    $region20: #{mlp_input_forward.1} parent=1 // pred_region
      %s44 = ssub.s32 128, 128
      %45 = vsyncadd [#allocation5], %s44
      %s47 = sshll.u32 [#allocation6], 4
      %s48 = int_to_ptr.vmem [resolvable:$true] %s47
      %50 = dma.hbm_to_vmem [thread:$0]  %s4, 128, %s48, [#allocation5]
    $region21: #{mlp_input_forward.1} parent=1 // pred_fallthru
      _
    // Predicated region
    $region22: #{mlp_input_forward.1} parent=1 // pred_check
      _
    $region23: #{mlp_input_forward.1} parent=1 // pred_check_branch
      %52 = sbr.rel (0) target = $region25
    $region24: #{mlp_input_forward.1} parent=1 // pred_region
      _
    $region25: #{mlp_input_forward.1} parent=1 // pred_fallthru
      _
    // Predicated region
    $region26: #{mlp_input_forward.1} parent=1 // pred_check
      _
    $region27: #{mlp_input_forward.1} parent=1 // pred_check_branch
      %54 = sbr.rel (0) target = $region29
    $region28: #{mlp_input_forward.1} parent=1 // pred_region
      %s56 = ssub.s32 64, 64
      %57 = vsyncadd [#allocation8], %s56
      %s59 = sshll.u32 [#allocation7], 4
      %s60 = int_to_ptr.vmem [resolvable:$true] %s59
      %62 = dma.hbm_to_vmem [thread:$0]  %s6, 64, %s60, [#allocation8]
    $region29: #{mlp_input_forward.1} parent=1 // pred_fallthru
      _
    // Predicated region
    $region30: #{mlp_input_forward.1} parent=1 // pred_check
      _
    $region31: #{mlp_input_forward.1} parent=1 // pred_check_branch
      %64 = sbr.rel (0) target = $region33
    $region32: #{mlp_input_forward.1} parent=1 // pred_region
      %65 = dma.done [#allocation3], 128
    $region33: #{mlp_input_forward.1} parent=1 // pred_fallthru
      _
    // Predicated region
    $region34: #{mlp_input_forward.1} parent=1 // pred_check
      _
    $region35: #{mlp_input_forward.1} parent=1 // pred_check_branch
      %67 = sbr.rel (0) target = $region37
    $region36: #{mlp_input_forward.1} parent=1 // pred_region
      %68 = dma.done [#allocation5], 65536
    $region37: #{mlp_input_forward.1} parent=1 // pred_fallthru
      _
    // Predicated region
    $region38: #{mlp_input_forward.1} parent=1 // pred_check
      _
    $region39: #{mlp_input_forward.1} parent=1 // pred_check_branch
      %70 = sbr.rel (0) target = $region41
    $region40: #{mlp_input_forward.1} parent=1 // pred_region
      %71 = dma.done [#allocation5], 128
    $region41: #{mlp_input_forward.1} parent=1 // pred_fallthru
      _
    // Predicated region
    $region42: #{mlp_input_forward.1} parent=1 // pred_check
      _
    $region43: #{mlp_input_forward.1} parent=1 // pred_check_branch
      %73 = sbr.rel (0) target = $region45
    $region44: #{mlp_input_forward.1} parent=1 // pred_region
      %74 = dma.done [#allocation8], 64
    $region45: #{mlp_input_forward.1} parent=1 // pred_fallthru
      _
    %v76 = vld [vmem:[%s0] sm:$0xff]
    %v77 = vld [vmem:[%s0 + $0x8] sm:$0xff]
    %v78 = vld [vmem:[%s0 + $0x10] sm:$0xff]
    %v79 = vld [vmem:[%s0 + $0x18] sm:$0xf]
    %v80 = vld [vmem:[%s1] sm:$0xff]
    %v81 = vld [vmem:[%s1 + $0x8] sm:$0xff]
    %v82 = vld [vmem:[%s1 + $0x10] sm:$0xff]
    %v83 = vld [vmem:[%s1 + $0x18] sm:$0xff]
    %v84 = vld [vmem:[%s1 + $0x20] sm:$0xff]
    %v85 = vld [vmem:[%s1 + $0x28] sm:$0xff]
    %v86 = vld [vmem:[%s1 + $0x30] sm:$0xff]
    %v87 = vld [vmem:[%s1 + $0x38] sm:$0xff]
    %v88 = vld [vmem:[%s1 + $0x40] sm:$0xff]
    %v89 = vld [vmem:[%s1 + $0x48] sm:$0xff]
    %v90 = vld [vmem:[%s1 + $0x50] sm:$0xff]
    %v91 = vld [vmem:[%s1 + $0x58] sm:$0xff]
    %v92 = vld [vmem:[%s1 + $0x60] sm:$0xff]
    %v93 = vld [vmem:[%s1 + $0x68] sm:$0xff]
    %v94 = vld [vmem:[%s1 + $0x70] sm:$0xff]
    %v95 = vld [vmem:[%s1 + $0x78] sm:$0xff]
    %v96 = vld [vmem:[%s1 + $0x80] sm:$0xff]
    %v97 = vld [vmem:[%s1 + $0x88] sm:$0xff]
    %v98 = vld [vmem:[%s1 + $0x90] sm:$0xff]
    %v99 = vld [vmem:[%s1 + $0x98] sm:$0xff]
    %v100 = vld [vmem:[%s1 + $0xa0] sm:$0xff]
    %v101 = vld [vmem:[%s1 + $0xa8] sm:$0xff]
    %v102 = vld [vmem:[%s1 + $0xb0] sm:$0xff]
    %v103 = vld [vmem:[%s1 + $0xb8] sm:$0xff]
    %v104 = vld [vmem:[%s1 + $0xc0] sm:$0xff]
    %v105 = vld [vmem:[%s1 + $0xc8] sm:$0xff]
    %v106 = vld [vmem:[%s1 + $0xd0] sm:$0xff]
    %v107 = vld [vmem:[%s1 + $0xd8] sm:$0xff]
    %v108 = vld [vmem:[%s1 + $0xe0] sm:$0xff]
    %v109 = vld [vmem:[%s1 + $0xe8] sm:$0xff]
    %v110 = vld [vmem:[%s1 + $0xf0] sm:$0xff]
    %v111 = vld [vmem:[%s1 + $0xf8] sm:$0xff]
    %v112 = vld [vmem:[%s1 + $0x100] sm:$0xff]
    %v113 = vld [vmem:[%s1 + $0x108] sm:$0xff]
    %v114 = vld [vmem:[%s1 + $0x110] sm:$0xff]
    %v115 = vld [vmem:[%s1 + $0x118] sm:$0xff]
    %v116 = vld [vmem:[%s1 + $0x120] sm:$0xff]
    %v117 = vld [vmem:[%s1 + $0x128] sm:$0xff]
    %v118 = vld [vmem:[%s1 + $0x130] sm:$0xff]
    %v119 = vld [vmem:[%s1 + $0x138] sm:$0xff]
    %v120 = vld [vmem:[%s1 + $0x140] sm:$0xff]
    %v121 = vld [vmem:[%s1 + $0x148] sm:$0xff]
    %v122 = vld [vmem:[%s1 + $0x150] sm:$0xff]
    %v123 = vld [vmem:[%s1 + $0x158] sm:$0xff]
    %v124 = vld [vmem:[%s1 + $0x160] sm:$0xff]
    %v125 = vld [vmem:[%s1 + $0x168] sm:$0xff]
    %v126 = vld [vmem:[%s1 + $0x170] sm:$0xff]
    %v127 = vld [vmem:[%s1 + $0x178] sm:$0xff]
    %v128 = vld [vmem:[%s1 + $0x180] sm:$0xff]
    %v129 = vld [vmem:[%s1 + $0x188] sm:$0xff]
    %v130 = vld [vmem:[%s1 + $0x190] sm:$0xff]
    %v131 = vld [vmem:[%s1 + $0x198] sm:$0xff]
    %v132 = vld [vmem:[%s1 + $0x1a0] sm:$0xff]
    %v133 = vld [vmem:[%s1 + $0x1a8] sm:$0xff]
    %v134 = vld [vmem:[%s1 + $0x1b0] sm:$0xff]
    %v135 = vld [vmem:[%s1 + $0x1b8] sm:$0xff]
    %v136 = vld [vmem:[%s1 + $0x1c0] sm:$0xff]
    %v137 = vld [vmem:[%s1 + $0x1c8] sm:$0xff]
    %v138 = vld [vmem:[%s1 + $0x1d0] sm:$0xff]
    %v139 = vld [vmem:[%s1 + $0x1d8] sm:$0xff]
    %v140 = vld [vmem:[%s1 + $0x1e0] sm:$0xff]
    %v141 = vld [vmem:[%s1 + $0x1e8] sm:$0xff]
    %v142 = vld [vmem:[%s1 + $0x1f0] sm:$0xff]
    %v143 = vld [vmem:[%s1 + $0x1f8] sm:$0xff]
    %v144 = vld [vmem:[%s1 + $0x200] sm:$0xff]
    %v145 = vld [vmem:[%s1 + $0x208] sm:$0xff]
    %v146 = vld [vmem:[%s1 + $0x210] sm:$0xff]
    %v147 = vld [vmem:[%s1 + $0x218] sm:$0xff]
    %v148 = vld [vmem:[%s1 + $0x220] sm:$0xff]
    %v149 = vld [vmem:[%s1 + $0x228] sm:$0xff]
    %v150 = vld [vmem:[%s1 + $0x230] sm:$0xff]
    %v151 = vld [vmem:[%s1 + $0x238] sm:$0xff]
    %v152 = vld [vmem:[%s1 + $0x240] sm:$0xff]
    %v153 = vld [vmem:[%s1 + $0x248] sm:$0xff]
    %v154 = vld [vmem:[%s1 + $0x250] sm:$0xff]
    %v155 = vld [vmem:[%s1 + $0x258] sm:$0xff]
    %v156 = vld [vmem:[%s1 + $0x260] sm:$0xff]
    %v157 = vld [vmem:[%s1 + $0x268] sm:$0xff]
    %v158 = vld [vmem:[%s1 + $0x270] sm:$0xff]
    %v159 = vld [vmem:[%s1 + $0x278] sm:$0xff]
    %v160 = vld [vmem:[%s1 + $0x280] sm:$0xff]
    %v161 = vld [vmem:[%s1 + $0x288] sm:$0xff]
    %v162 = vld [vmem:[%s1 + $0x290] sm:$0xff]
    %v163 = vld [vmem:[%s1 + $0x298] sm:$0xff]
    %v164 = vld [vmem:[%s1 + $0x2a0] sm:$0xff]
    %v165 = vld [vmem:[%s1 + $0x2a8] sm:$0xff]
    %v166 = vld [vmem:[%s1 + $0x2b0] sm:$0xff]
    %v167 = vld [vmem:[%s1 + $0x2b8] sm:$0xff]
    %v168 = vld [vmem:[%s1 + $0x2c0] sm:$0xff]
    %v169 = vld [vmem:[%s1 + $0x2c8] sm:$0xff]
    %v170 = vld [vmem:[%s1 + $0x2d0] sm:$0xff]
    %v171 = vld [vmem:[%s1 + $0x2d8] sm:$0xff]
    %v172 = vld [vmem:[%s1 + $0x2e0] sm:$0xff]
    %v173 = vld [vmem:[%s1 + $0x2e8] sm:$0xff]
    %v174 = vld [vmem:[%s1 + $0x2f0] sm:$0xff]
    %v175 = vld [vmem:[%s1 + $0x2f8] sm:$0xff]
    %v176 = vld [vmem:[%s1 + $0x300] sm:$0xff]
    %v177 = vld [vmem:[%s1 + $0x308] sm:$0xff]
    %v178 = vld [vmem:[%s1 + $0x310] sm:$0xff]
    %v179 = vld [vmem:[%s1 + $0x318] sm:$0xff]
    %v180 = vld [vmem:[%s1 + $0x320] sm:$0xff]
    %v181 = vld [vmem:[%s1 + $0x328] sm:$0xff]
    %v182 = vld [vmem:[%s1 + $0x330] sm:$0xff]
    %v183 = vld [vmem:[%s1 + $0x338] sm:$0xff]
    %v184 = vld [vmem:[%s1 + $0x340] sm:$0xff]
    %v185 = vld [vmem:[%s1 + $0x348] sm:$0xff]
    %v186 = vld [vmem:[%s1 + $0x350] sm:$0xff]
    %v187 = vld [vmem:[%s1 + $0x358] sm:$0xff]
    %v188 = vld [vmem:[%s1 + $0x360] sm:$0xff]
    %v189 = vld [vmem:[%s1 + $0x368] sm:$0xff]
    %v190 = vld [vmem:[%s1 + $0x370] sm:$0xff]
    %v191 = vld [vmem:[%s1 + $0x378] sm:$0xff]
    %v192 = vld [vmem:[%s1 + $0x380] sm:$0xff]
    %v193 = vld [vmem:[%s1 + $0x388] sm:$0xff]
    %v194 = vld [vmem:[%s1 + $0x390] sm:$0xff]
    %v195 = vld [vmem:[%s1 + $0x398] sm:$0xff]
    %v196 = vld [vmem:[%s1 + $0x3a0] sm:$0xff]
    %v197 = vld [vmem:[%s1 + $0x3a8] sm:$0xff]
    %v198 = vld [vmem:[%s1 + $0x3b0] sm:$0xff]
    %v199 = vld [vmem:[%s1 + $0x3b8] sm:$0xff]
    %v200 = vld [vmem:[%s1 + $0x3c0] sm:$0xff]
    %v201 = vld [vmem:[%s1 + $0x3c8] sm:$0xff]
    %v202 = vld [vmem:[%s1 + $0x3d0] sm:$0xff]
    %v203 = vld [vmem:[%s1 + $0x3d8] sm:$0xff]
    %v204 = vld [vmem:[%s1 + $0x3e0] sm:$0xff]
    %v205 = vld [vmem:[%s1 + $0x3e8] sm:$0xff]
    %v206 = vld [vmem:[%s1 + $0x3f0] sm:$0xff]
    %v207 = vld [vmem:[%s1 + $0x3f8] sm:$0xff]
    %v208 = vld [vmem:[%s1 + $0x400] sm:$0xff]
    %v209 = vld [vmem:[%s1 + $0x408] sm:$0xff]
    %v210 = vld [vmem:[%s1 + $0x410] sm:$0xff]
    %v211 = vld [vmem:[%s1 + $0x418] sm:$0xff]
    %v212 = vld [vmem:[%s1 + $0x420] sm:$0xff]
    %v213 = vld [vmem:[%s1 + $0x428] sm:$0xff]
    %v214 = vld [vmem:[%s1 + $0x430] sm:$0xff]
    %v215 = vld [vmem:[%s1 + $0x438] sm:$0xff]
    %v216 = vld [vmem:[%s1 + $0x440] sm:$0xff]
    %v217 = vld [vmem:[%s1 + $0x448] sm:$0xff]
    %v218 = vld [vmem:[%s1 + $0x450] sm:$0xff]
    %v219 = vld [vmem:[%s1 + $0x458] sm:$0xff]
    %v220 = vld [vmem:[%s1 + $0x460] sm:$0xff]
    %v221 = vld [vmem:[%s1 + $0x468] sm:$0xff]
    %v222 = vld [vmem:[%s1 + $0x470] sm:$0xff]
    %v223 = vld [vmem:[%s1 + $0x478] sm:$0xff]
    %v224 = vld [vmem:[%s1 + $0x480] sm:$0xff]
    %v225 = vld [vmem:[%s1 + $0x488] sm:$0xff]
    %v226 = vld [vmem:[%s1 + $0x490] sm:$0xff]
    %v227 = vld [vmem:[%s1 + $0x498] sm:$0xff]
    %v228 = vld [vmem:[%s1 + $0x4a0] sm:$0xff]
    %v229 = vld [vmem:[%s1 + $0x4a8] sm:$0xff]
    %v230 = vld [vmem:[%s1 + $0x4b0] sm:$0xff]
    %v231 = vld [vmem:[%s1 + $0x4b8] sm:$0xff]
    %v232 = vld [vmem:[%s1 + $0x4c0] sm:$0xff]
    %v233 = vld [vmem:[%s1 + $0x4c8] sm:$0xff]
    %v234 = vld [vmem:[%s1 + $0x4d0] sm:$0xff]
    %v235 = vld [vmem:[%s1 + $0x4d8] sm:$0xff]
    %v236 = vld [vmem:[%s1 + $0x4e0] sm:$0xff]
    %v237 = vld [vmem:[%s1 + $0x4e8] sm:$0xff]
    %v238 = vld [vmem:[%s1 + $0x4f0] sm:$0xff]
    %v239 = vld [vmem:[%s1 + $0x4f8] sm:$0xff]
    %v240 = vld [vmem:[%s1 + $0x500] sm:$0xff]
    %v241 = vld [vmem:[%s1 + $0x508] sm:$0xff]
    %v242 = vld [vmem:[%s1 + $0x510] sm:$0xff]
    %v243 = vld [vmem:[%s1 + $0x518] sm:$0xff]
    %v244 = vld [vmem:[%s1 + $0x520] sm:$0xff]
    %v245 = vld [vmem:[%s1 + $0x528] sm:$0xff]
    %v246 = vld [vmem:[%s1 + $0x530] sm:$0xff]
    %v247 = vld [vmem:[%s1 + $0x538] sm:$0xff]
    %v248 = vld [vmem:[%s1 + $0x540] sm:$0xff]
    %v249 = vld [vmem:[%s1 + $0x548] sm:$0xff]
    %v250 = vld [vmem:[%s1 + $0x550] sm:$0xff]
    %v251 = vld [vmem:[%s1 + $0x558] sm:$0xff]
    %v252 = vld [vmem:[%s1 + $0x560] sm:$0xff]
    %v253 = vld [vmem:[%s1 + $0x568] sm:$0xff]
    %v254 = vld [vmem:[%s1 + $0x570] sm:$0xff]
    %v255 = vld [vmem:[%s1 + $0x578] sm:$0xff]
    %v256 = vld [vmem:[%s1 + $0x580] sm:$0xff]
    %v257 = vld [vmem:[%s1 + $0x588] sm:$0xff]
    %v258 = vld [vmem:[%s1 + $0x590] sm:$0xff]
    %v259 = vld [vmem:[%s1 + $0x598] sm:$0xff]
    %v260 = vld [vmem:[%s1 + $0x5a0] sm:$0xff]
    %v261 = vld [vmem:[%s1 + $0x5a8] sm:$0xff]
    %v262 = vld [vmem:[%s1 + $0x5b0] sm:$0xff]
    %v263 = vld [vmem:[%s1 + $0x5b8] sm:$0xff]
    %v264 = vld [vmem:[%s1 + $0x5c0] sm:$0xff]
    %v265 = vld [vmem:[%s1 + $0x5c8] sm:$0xff]
    %v266 = vld [vmem:[%s1 + $0x5d0] sm:$0xff]
    %v267 = vld [vmem:[%s1 + $0x5d8] sm:$0xff]
    %v268 = vld [vmem:[%s1 + $0x5e0] sm:$0xff]
    %v269 = vld [vmem:[%s1 + $0x5e8] sm:$0xff]
    %v270 = vld [vmem:[%s1 + $0x5f0] sm:$0xff]
    %v271 = vld [vmem:[%s1 + $0x5f8] sm:$0xff]
    %v272 = vld [vmem:[%s1 + $0x600] sm:$0xff]
    %v273 = vld [vmem:[%s1 + $0x608] sm:$0xff]
    %v274 = vld [vmem:[%s1 + $0x610] sm:$0xff]
    %v275 = vld [vmem:[%s1 + $0x618] sm:$0xff]
    %v276 = vld [vmem:[%s1 + $0x620] sm:$0xff]
    %v277 = vld [vmem:[%s1 + $0x628] sm:$0xff]
    %v278 = vld [vmem:[%s1 + $0x630] sm:$0xff]
    %v279 = vld [vmem:[%s1 + $0x638] sm:$0xff]
    %v280 = vld [vmem:[%s1 + $0x640] sm:$0xff]
    %v281 = vld [vmem:[%s1 + $0x648] sm:$0xff]
    %v282 = vld [vmem:[%s1 + $0x650] sm:$0xff]
    %v283 = vld [vmem:[%s1 + $0x658] sm:$0xff]
    %v284 = vld [vmem:[%s1 + $0x660] sm:$0xff]
    %v285 = vld [vmem:[%s1 + $0x668] sm:$0xff]
    %v286 = vld [vmem:[%s1 + $0x670] sm:$0xff]
    %v287 = vld [vmem:[%s1 + $0x678] sm:$0xff]
    %v288 = vld [vmem:[%s1 + $0x680] sm:$0xff]
    %v289 = vld [vmem:[%s1 + $0x688] sm:$0xff]
    %v290 = vld [vmem:[%s1 + $0x690] sm:$0xff]
    %v291 = vld [vmem:[%s1 + $0x698] sm:$0xff]
    %v292 = vld [vmem:[%s1 + $0x6a0] sm:$0xff]
    %v293 = vld [vmem:[%s1 + $0x6a8] sm:$0xff]
    %v294 = vld [vmem:[%s1 + $0x6b0] sm:$0xff]
    %v295 = vld [vmem:[%s1 + $0x6b8] sm:$0xff]
    %v296 = vld [vmem:[%s1 + $0x6c0] sm:$0xff]
    %v297 = vld [vmem:[%s1 + $0x6c8] sm:$0xff]
    %v298 = vld [vmem:[%s1 + $0x6d0] sm:$0xff]
    %v299 = vld [vmem:[%s1 + $0x6d8] sm:$0xff]
    %v300 = vld [vmem:[%s1 + $0x6e0] sm:$0xff]
    %v301 = vld [vmem:[%s1 + $0x6e8] sm:$0xff]
    %v302 = vld [vmem:[%s1 + $0x6f0] sm:$0xff]
    %v303 = vld [vmem:[%s1 + $0x6f8] sm:$0xff]
    %v304 = vld [vmem:[%s1 + $0x700] sm:$0xff]
    %v305 = vld [vmem:[%s1 + $0x708] sm:$0xff]
    %v306 = vld [vmem:[%s1 + $0x710] sm:$0xff]
    %v307 = vld [vmem:[%s1 + $0x718] sm:$0xff]
    %v308 = vld [vmem:[%s1 + $0x720] sm:$0xff]
    %v309 = vld [vmem:[%s1 + $0x728] sm:$0xff]
    %v310 = vld [vmem:[%s1 + $0x730] sm:$0xff]
    %v311 = vld [vmem:[%s1 + $0x738] sm:$0xff]
    %v312 = vld [vmem:[%s1 + $0x740] sm:$0xff]
    %v313 = vld [vmem:[%s1 + $0x748] sm:$0xff]
    %v314 = vld [vmem:[%s1 + $0x750] sm:$0xff]
    %v315 = vld [vmem:[%s1 + $0x758] sm:$0xff]
    %v316 = vld [vmem:[%s1 + $0x760] sm:$0xff]
    %v317 = vld [vmem:[%s1 + $0x768] sm:$0xff]
    %v318 = vld [vmem:[%s1 + $0x770] sm:$0xff]
    %v319 = vld [vmem:[%s1 + $0x778] sm:$0xff]
    %v320 = vld [vmem:[%s1 + $0x780] sm:$0xff]
    %v321 = vld [vmem:[%s1 + $0x788] sm:$0xff]
    %v322 = vld [vmem:[%s1 + $0x790] sm:$0xff]
    %v323 = vld [vmem:[%s1 + $0x798] sm:$0xff]
    %v324 = vld [vmem:[%s1 + $0x7a0] sm:$0xff]
    %v325 = vld [vmem:[%s1 + $0x7a8] sm:$0xff]
    %v326 = vld [vmem:[%s1 + $0x7b0] sm:$0xff]
    %v327 = vld [vmem:[%s1 + $0x7b8] sm:$0xff]
    %v328 = vld [vmem:[%s1 + $0x7c0] sm:$0xff]
    %v329 = vld [vmem:[%s1 + $0x7c8] sm:$0xff]
    %v330 = vld [vmem:[%s1 + $0x7d0] sm:$0xff]
    %v331 = vld [vmem:[%s1 + $0x7d8] sm:$0xff]
    %v332 = vld [vmem:[%s1 + $0x7e0] sm:$0xff]
    %v333 = vld [vmem:[%s1 + $0x7e8] sm:$0xff]
    %v334 = vld [vmem:[%s1 + $0x7f0] sm:$0xff]
    %v335 = vld [vmem:[%s1 + $0x7f8] sm:$0xff]
    %v336 = vld [vmem:[%s1 + $0x800] sm:$0xff]
    %v337 = vld [vmem:[%s1 + $0x808] sm:$0xff]
    %v338 = vld [vmem:[%s1 + $0x810] sm:$0xff]
    %v339 = vld [vmem:[%s1 + $0x818] sm:$0xff]
    %v340 = vld [vmem:[%s1 + $0x820] sm:$0xff]
    %v341 = vld [vmem:[%s1 + $0x828] sm:$0xff]
    %v342 = vld [vmem:[%s1 + $0x830] sm:$0xff]
    %v343 = vld [vmem:[%s1 + $0x838] sm:$0xff]
    %v344 = vld [vmem:[%s1 + $0x840] sm:$0xff]
    %v345 = vld [vmem:[%s1 + $0x848] sm:$0xff]
    %v346 = vld [vmem:[%s1 + $0x850] sm:$0xff]
    %v347 = vld [vmem:[%s1 + $0x858] sm:$0xff]
    %v348 = vld [vmem:[%s1 + $0x860] sm:$0xff]
    %v349 = vld [vmem:[%s1 + $0x868] sm:$0xff]
    %v350 = vld [vmem:[%s1 + $0x870] sm:$0xff]
    %v351 = vld [vmem:[%s1 + $0x878] sm:$0xff]
    %v352 = vld [vmem:[%s1 + $0x880] sm:$0xff]
    %v353 = vld [vmem:[%s1 + $0x888] sm:$0xff]
    %v354 = vld [vmem:[%s1 + $0x890] sm:$0xff]
    %v355 = vld [vmem:[%s1 + $0x898] sm:$0xff]
    %v356 = vld [vmem:[%s1 + $0x8a0] sm:$0xff]
    %v357 = vld [vmem:[%s1 + $0x8a8] sm:$0xff]
    %v358 = vld [vmem:[%s1 + $0x8b0] sm:$0xff]
    %v359 = vld [vmem:[%s1 + $0x8b8] sm:$0xff]
    %v360 = vld [vmem:[%s1 + $0x8c0] sm:$0xff]
    %v361 = vld [vmem:[%s1 + $0x8c8] sm:$0xff]
    %v362 = vld [vmem:[%s1 + $0x8d0] sm:$0xff]
    %v363 = vld [vmem:[%s1 + $0x8d8] sm:$0xff]
    %v364 = vld [vmem:[%s1 + $0x8e0] sm:$0xff]
    %v365 = vld [vmem:[%s1 + $0x8e8] sm:$0xff]
    %v366 = vld [vmem:[%s1 + $0x8f0] sm:$0xff]
    %v367 = vld [vmem:[%s1 + $0x8f8] sm:$0xff]
    %v368 = vld [vmem:[%s1 + $0x900] sm:$0xff]
    %v369 = vld [vmem:[%s1 + $0x908] sm:$0xff]
    %v370 = vld [vmem:[%s1 + $0x910] sm:$0xff]
    %v371 = vld [vmem:[%s1 + $0x918] sm:$0xff]
    %v372 = vld [vmem:[%s1 + $0x920] sm:$0xff]
    %v373 = vld [vmem:[%s1 + $0x928] sm:$0xff]
    %v374 = vld [vmem:[%s1 + $0x930] sm:$0xff]
    %v375 = vld [vmem:[%s1 + $0x938] sm:$0xff]
    %v376 = vld [vmem:[%s1 + $0x940] sm:$0xff]
    %v377 = vld [vmem:[%s1 + $0x948] sm:$0xff]
    %v378 = vld [vmem:[%s1 + $0x950] sm:$0xff]
    %v379 = vld [vmem:[%s1 + $0x958] sm:$0xff]
    %v380 = vld [vmem:[%s1 + $0x960] sm:$0xff]
    %v381 = vld [vmem:[%s1 + $0x968] sm:$0xff]
    %v382 = vld [vmem:[%s1 + $0x970] sm:$0xff]
    %v383 = vld [vmem:[%s1 + $0x978] sm:$0xff]
    %v384 = vld [vmem:[%s1 + $0x980] sm:$0xff]
    %v385 = vld [vmem:[%s1 + $0x988] sm:$0xff]
    %v386 = vld [vmem:[%s1 + $0x990] sm:$0xff]
    %v387 = vld [vmem:[%s1 + $0x998] sm:$0xff]
    %v388 = vld [vmem:[%s1 + $0x9a0] sm:$0xff]
    %v389 = vld [vmem:[%s1 + $0x9a8] sm:$0xff]
    %v390 = vld [vmem:[%s1 + $0x9b0] sm:$0xff]
    %v391 = vld [vmem:[%s1 + $0x9b8] sm:$0xff]
    %v392 = vld [vmem:[%s1 + $0x9c0] sm:$0xff]
    %v393 = vld [vmem:[%s1 + $0x9c8] sm:$0xff]
    %v394 = vld [vmem:[%s1 + $0x9d0] sm:$0xff]
    %v395 = vld [vmem:[%s1 + $0x9d8] sm:$0xff]
    %v396 = vld [vmem:[%s1 + $0x9e0] sm:$0xff]
    %v397 = vld [vmem:[%s1 + $0x9e8] sm:$0xff]
    %v398 = vld [vmem:[%s1 + $0x9f0] sm:$0xff]
    %v399 = vld [vmem:[%s1 + $0x9f8] sm:$0xff]
    %v400 = vld [vmem:[%s1 + $0xa00] sm:$0xff]
    %v401 = vld [vmem:[%s1 + $0xa08] sm:$0xff]
    %v402 = vld [vmem:[%s1 + $0xa10] sm:$0xff]
    %v403 = vld [vmem:[%s1 + $0xa18] sm:$0xff]
    %v404 = vld [vmem:[%s1 + $0xa20] sm:$0xff]
    %v405 = vld [vmem:[%s1 + $0xa28] sm:$0xff]
    %v406 = vld [vmem:[%s1 + $0xa30] sm:$0xff]
    %v407 = vld [vmem:[%s1 + $0xa38] sm:$0xff]
    %v408 = vld [vmem:[%s1 + $0xa40] sm:$0xff]
    %v409 = vld [vmem:[%s1 + $0xa48] sm:$0xff]
    %v410 = vld [vmem:[%s1 + $0xa50] sm:$0xff]
    %v411 = vld [vmem:[%s1 + $0xa58] sm:$0xff]
    %v412 = vld [vmem:[%s1 + $0xa60] sm:$0xff]
    %v413 = vld [vmem:[%s1 + $0xa68] sm:$0xff]
    %v414 = vld [vmem:[%s1 + $0xa70] sm:$0xff]
    %v415 = vld [vmem:[%s1 + $0xa78] sm:$0xff]
    %v416 = vld [vmem:[%s1 + $0xa80] sm:$0xff]
    %v417 = vld [vmem:[%s1 + $0xa88] sm:$0xff]
    %v418 = vld [vmem:[%s1 + $0xa90] sm:$0xff]
    %v419 = vld [vmem:[%s1 + $0xa98] sm:$0xff]
    %v420 = vld [vmem:[%s1 + $0xaa0] sm:$0xff]
    %v421 = vld [vmem:[%s1 + $0xaa8] sm:$0xff]
    %v422 = vld [vmem:[%s1 + $0xab0] sm:$0xff]
    %v423 = vld [vmem:[%s1 + $0xab8] sm:$0xff]
    %v424 = vld [vmem:[%s1 + $0xac0] sm:$0xff]
    %v425 = vld [vmem:[%s1 + $0xac8] sm:$0xff]
    %v426 = vld [vmem:[%s1 + $0xad0] sm:$0xff]
    %v427 = vld [vmem:[%s1 + $0xad8] sm:$0xff]
    %v428 = vld [vmem:[%s1 + $0xae0] sm:$0xff]
    %v429 = vld [vmem:[%s1 + $0xae8] sm:$0xff]
    %v430 = vld [vmem:[%s1 + $0xaf0] sm:$0xff]
    %v431 = vld [vmem:[%s1 + $0xaf8] sm:$0xff]
    %v432 = vld [vmem:[%s1 + $0xb00] sm:$0xff]
    %v433 = vld [vmem:[%s1 + $0xb08] sm:$0xff]
    %v434 = vld [vmem:[%s1 + $0xb10] sm:$0xff]
    %v435 = vld [vmem:[%s1 + $0xb18] sm:$0xff]
    %v436 = vld [vmem:[%s1 + $0xb20] sm:$0xff]
    %v437 = vld [vmem:[%s1 + $0xb28] sm:$0xff]
    %v438 = vld [vmem:[%s1 + $0xb30] sm:$0xff]
    %v439 = vld [vmem:[%s1 + $0xb38] sm:$0xff]
    %v440 = vld [vmem:[%s1 + $0xb40] sm:$0xff]
    %v441 = vld [vmem:[%s1 + $0xb48] sm:$0xff]
    %v442 = vld [vmem:[%s1 + $0xb50] sm:$0xff]
    %v443 = vld [vmem:[%s1 + $0xb58] sm:$0xff]
    %v444 = vld [vmem:[%s1 + $0xb60] sm:$0xff]
    %v445 = vld [vmem:[%s1 + $0xb68] sm:$0xff]
    %v446 = vld [vmem:[%s1 + $0xb70] sm:$0xff]
    %v447 = vld [vmem:[%s1 + $0xb78] sm:$0xff]
    %v448 = vld [vmem:[%s1 + $0xb80] sm:$0xff]
    %v449 = vld [vmem:[%s1 + $0xb88] sm:$0xff]
    %v450 = vld [vmem:[%s1 + $0xb90] sm:$0xff]
    %v451 = vld [vmem:[%s1 + $0xb98] sm:$0xff]
    %v452 = vld [vmem:[%s1 + $0xba0] sm:$0xff]
    %v453 = vld [vmem:[%s1 + $0xba8] sm:$0xff]
    %v454 = vld [vmem:[%s1 + $0xbb0] sm:$0xff]
    %v455 = vld [vmem:[%s1 + $0xbb8] sm:$0xff]
    %v456 = vld [vmem:[%s1 + $0xbc0] sm:$0xff]
    %v457 = vld [vmem:[%s1 + $0xbc8] sm:$0xff]
    %v458 = vld [vmem:[%s1 + $0xbd0] sm:$0xff]
    %v459 = vld [vmem:[%s1 + $0xbd8] sm:$0xff]
    %v460 = vld [vmem:[%s1 + $0xbe0] sm:$0xff]
    %v461 = vld [vmem:[%s1 + $0xbe8] sm:$0xff]
    %v462 = vld [vmem:[%s1 + $0xbf0] sm:$0xff]
    %v463 = vld [vmem:[%s1 + $0xbf8] sm:$0xff]
    %v464 = vld [vmem:[%s1 + $0xc00] sm:$0xff]
    %v465 = vld [vmem:[%s1 + $0xc08] sm:$0xff]
    %v466 = vld [vmem:[%s1 + $0xc10] sm:$0xff]
    %v467 = vld [vmem:[%s1 + $0xc18] sm:$0xff]
    %v468 = vld [vmem:[%s1 + $0xc20] sm:$0xff]
    %v469 = vld [vmem:[%s1 + $0xc28] sm:$0xff]
    %v470 = vld [vmem:[%s1 + $0xc30] sm:$0xff]
    %v471 = vld [vmem:[%s1 + $0xc38] sm:$0xff]
    %v472 = vld [vmem:[%s1 + $0xc40] sm:$0xff]
    %v473 = vld [vmem:[%s1 + $0xc48] sm:$0xff]
    %v474 = vld [vmem:[%s1 + $0xc50] sm:$0xff]
    %v475 = vld [vmem:[%s1 + $0xc58] sm:$0xff]
    %v476 = vld [vmem:[%s1 + $0xc60] sm:$0xff]
    %v477 = vld [vmem:[%s1 + $0xc68] sm:$0xff]
    %v478 = vld [vmem:[%s1 + $0xc70] sm:$0xff]
    %v479 = vld [vmem:[%s1 + $0xc78] sm:$0xff]
    %v480 = vld [vmem:[%s1 + $0xc80] sm:$0xff]
    %v481 = vld [vmem:[%s1 + $0xc88] sm:$0xff]
    %v482 = vld [vmem:[%s1 + $0xc90] sm:$0xff]
    %v483 = vld [vmem:[%s1 + $0xc98] sm:$0xff]
    %v484 = vld [vmem:[%s1 + $0xca0] sm:$0xff]
    %v485 = vld [vmem:[%s1 + $0xca8] sm:$0xff]
    %v486 = vld [vmem:[%s1 + $0xcb0] sm:$0xff]
    %v487 = vld [vmem:[%s1 + $0xcb8] sm:$0xff]
    %v488 = vld [vmem:[%s1 + $0xcc0] sm:$0xff]
    %v489 = vld [vmem:[%s1 + $0xcc8] sm:$0xff]
    %v490 = vld [vmem:[%s1 + $0xcd0] sm:$0xff]
    %v491 = vld [vmem:[%s1 + $0xcd8] sm:$0xff]
    %v492 = vld [vmem:[%s1 + $0xce0] sm:$0xff]
    %v493 = vld [vmem:[%s1 + $0xce8] sm:$0xff]
    %v494 = vld [vmem:[%s1 + $0xcf0] sm:$0xff]
    %v495 = vld [vmem:[%s1 + $0xcf8] sm:$0xff]
    %v496 = vld [vmem:[%s1 + $0xd00] sm:$0xff]
    %v497 = vld [vmem:[%s1 + $0xd08] sm:$0xff]
    %v498 = vld [vmem:[%s1 + $0xd10] sm:$0xff]
    %v499 = vld [vmem:[%s1 + $0xd18] sm:$0xff]
    %v500 = vld [vmem:[%s1 + $0xd20] sm:$0xff]
    %v501 = vld [vmem:[%s1 + $0xd28] sm:$0xff]
    %v502 = vld [vmem:[%s1 + $0xd30] sm:$0xff]
    %v503 = vld [vmem:[%s1 + $0xd38] sm:$0xff]
    %v504 = vld [vmem:[%s1 + $0xd40] sm:$0xff]
    %v505 = vld [vmem:[%s1 + $0xd48] sm:$0xff]
    %v506 = vld [vmem:[%s1 + $0xd50] sm:$0xff]
    %v507 = vld [vmem:[%s1 + $0xd58] sm:$0xff]
    %v508 = vld [vmem:[%s1 + $0xd60] sm:$0xff]
    %v509 = vld [vmem:[%s1 + $0xd68] sm:$0xff]
    %v510 = vld [vmem:[%s1 + $0xd70] sm:$0xff]
    %v511 = vld [vmem:[%s1 + $0xd78] sm:$0xff]
    %v512 = vld [vmem:[%s1 + $0xd80] sm:$0xff]
    %v513 = vld [vmem:[%s1 + $0xd88] sm:$0xff]
    %v514 = vld [vmem:[%s1 + $0xd90] sm:$0xff]
    %v515 = vld [vmem:[%s1 + $0xd98] sm:$0xff]
    %v516 = vld [vmem:[%s1 + $0xda0] sm:$0xff]
    %v517 = vld [vmem:[%s1 + $0xda8] sm:$0xff]
    %v518 = vld [vmem:[%s1 + $0xdb0] sm:$0xff]
    %v519 = vld [vmem:[%s1 + $0xdb8] sm:$0xff]
    %v520 = vld [vmem:[%s1 + $0xdc0] sm:$0xff]
    %v521 = vld [vmem:[%s1 + $0xdc8] sm:$0xff]
    %v522 = vld [vmem:[%s1 + $0xdd0] sm:$0xff]
    %v523 = vld [vmem:[%s1 + $0xdd8] sm:$0xff]
    %v524 = vld [vmem:[%s1 + $0xde0] sm:$0xff]
    %v525 = vld [vmem:[%s1 + $0xde8] sm:$0xff]
    %v526 = vld [vmem:[%s1 + $0xdf0] sm:$0xff]
    %v527 = vld [vmem:[%s1 + $0xdf8] sm:$0xff]
    %v528 = vld [vmem:[#allocation2] sm:$0xff]
    %v530 = vlaneseq
    %v531 = vshrl.u32 %v530, 7
    %v532 = vsub.s32 0, %v531
    %v533 = vrot.slane %v528, %v532
    %v534 = vlaneseq
    %v535 = vshrl.u32 %v534, 7
    %v536 = vsub.s32 1, %v535
    %v537 = vrot.slane %v528, %v536
    %v538 = vlaneseq
    %v539 = vshrl.u32 %v538, 7
    %v540 = vsub.s32 2, %v539
    %v541 = vrot.slane %v528, %v540
    %v542 = vlaneseq
    %v543 = vshrl.u32 %v542, 7
    %v544 = vsub.s32 3, %v543
    %v545 = vrot.slane %v528, %v544
    %v546 = vlaneseq
    %v547 = vshrl.u32 %v546, 7
    %v548 = vsub.s32 4, %v547
    %v549 = vrot.slane %v528, %v548
    %v550 = vlaneseq
    %v551 = vshrl.u32 %v550, 7
    %v552 = vsub.s32 5, %v551
    %v553 = vrot.slane %v528, %v552
    %v554 = vlaneseq
    %v555 = vshrl.u32 %v554, 7
    %v556 = vsub.s32 6, %v555
    %v557 = vrot.slane %v528, %v556
    %v558 = vlaneseq
    %v559 = vshrl.u32 %v558, 7
    %v560 = vsub.s32 7, %v559
    %v561 = vrot.slane %v528, %v560
    %v574 = vunpack.c.l.b16 %v76
    %v575 = vunpack.c.h.b16 %v76
    %v576 = vunpack.c.l.b16 %v77
    %v577 = vunpack.c.h.b16 %v77
    %v578 = vunpack.c.l.b16 %v78
    %v579 = vunpack.c.h.b16 %v78
    %v580 = vunpack.c.l.b16 %v79
    %v581 = vpack.c.b16 %v574, %v574
    %v582 = vpack.c.b16 %v575, %v575
    %v583 = vpack.c.b16 %v576, %v576
    %v584 = vpack.c.b16 %v577, %v577
    %v585 = vpack.c.b16 %v578, %v578
    %v586 = vpack.c.b16 %v579, %v579
    %v587 = vpack.c.b16 %v580, %v580
    %v1043 = vunpack.c.l.b16 %v80
    %v1044 = vunpack.c.h.b16 %v80
    %v1045 = vunpack.c.l.b16 %v81
    %v1046 = vunpack.c.h.b16 %v81
    %v1047 = vunpack.c.l.b16 %v82
    %v1048 = vunpack.c.h.b16 %v82
    %v1049 = vunpack.c.l.b16 %v83
    %v1050 = vunpack.c.h.b16 %v83
    %v1051 = vunpack.c.l.b16 %v84
    %v1052 = vunpack.c.h.b16 %v84
    %v1053 = vunpack.c.l.b16 %v85
    %v1054 = vunpack.c.h.b16 %v85
    %v1055 = vunpack.c.l.b16 %v86
    %v1056 = vunpack.c.h.b16 %v86
    %v1057 = vunpack.c.l.b16 %v87
    %v1058 = vunpack.c.h.b16 %v87
    %v1059 = vunpack.c.l.b16 %v88
    %v1060 = vunpack.c.h.b16 %v88
    %v1061 = vunpack.c.l.b16 %v89
    %v1062 = vunpack.c.h.b16 %v89
    %v1063 = vunpack.c.l.b16 %v90
    %v1064 = vunpack.c.h.b16 %v90
    %v1065 = vunpack.c.l.b16 %v91
    %v1066 = vunpack.c.h.b16 %v91
    %v1067 = vunpack.c.l.b16 %v92
    %v1068 = vunpack.c.h.b16 %v92
    %v1069 = vunpack.c.l.b16 %v93
    %v1070 = vunpack.c.h.b16 %v93
    %v1071 = vunpack.c.l.b16 %v94
    %v1072 = vunpack.c.h.b16 %v94
    %v1073 = vunpack.c.l.b16 %v95
    %v1074 = vunpack.c.h.b16 %v95
    %v1075 = vunpack.c.l.b16 %v96
    %v1076 = vunpack.c.h.b16 %v96
    %v1077 = vunpack.c.l.b16 %v97
    %v1078 = vunpack.c.h.b16 %v97
    %v1079 = vunpack.c.l.b16 %v98
    %v1080 = vunpack.c.h.b16 %v98
    %v1081 = vunpack.c.l.b16 %v99
    %v1082 = vunpack.c.h.b16 %v99
    %v1083 = vunpack.c.l.b16 %v100
    %v1084 = vunpack.c.h.b16 %v100
    %v1085 = vunpack.c.l.b16 %v101
    %v1086 = vunpack.c.h.b16 %v101
    %v1087 = vunpack.c.l.b16 %v102
    %v1088 = vunpack.c.h.b16 %v102
    %v1089 = vunpack.c.l.b16 %v103
    %v1090 = vunpack.c.h.b16 %v103
    %v1091 = vunpack.c.l.b16 %v104
    %v1092 = vunpack.c.h.b16 %v104
    %v1093 = vunpack.c.l.b16 %v105
    %v1094 = vunpack.c.h.b16 %v105
    %v1095 = vunpack.c.l.b16 %v106
    %v1096 = vunpack.c.h.b16 %v106
    %v1097 = vunpack.c.l.b16 %v107
    %v1098 = vunpack.c.h.b16 %v107
    %v1099 = vunpack.c.l.b16 %v108
    %v1100 = vunpack.c.h.b16 %v108
    %v1101 = vunpack.c.l.b16 %v109
    %v1102 = vunpack.c.h.b16 %v109
    %v1103 = vunpack.c.l.b16 %v110
    %v1104 = vunpack.c.h.b16 %v110
    %v1105 = vunpack.c.l.b16 %v111
    %v1106 = vunpack.c.h.b16 %v111
    %v1107 = vunpack.c.l.b16 %v112
    %v1108 = vunpack.c.h.b16 %v112
    %v1109 = vunpack.c.l.b16 %v113
    %v1110 = vunpack.c.h.b16 %v113
    %v1111 = vunpack.c.l.b16 %v114
    %v1112 = vunpack.c.h.b16 %v114
    %v1113 = vunpack.c.l.b16 %v115
    %v1114 = vunpack.c.h.b16 %v115
    %v1115 = vunpack.c.l.b16 %v116
    %v1116 = vunpack.c.h.b16 %v116
    %v1117 = vunpack.c.l.b16 %v117
    %v1118 = vunpack.c.h.b16 %v117
    %v1119 = vunpack.c.l.b16 %v118
    %v1120 = vunpack.c.h.b16 %v118
    %v1121 = vunpack.c.l.b16 %v119
    %v1122 = vunpack.c.h.b16 %v119
    %v1123 = vunpack.c.l.b16 %v120
    %v1124 = vunpack.c.h.b16 %v120
    %v1125 = vunpack.c.l.b16 %v121
    %v1126 = vunpack.c.h.b16 %v121
    %v1127 = vunpack.c.l.b16 %v122
    %v1128 = vunpack.c.h.b16 %v122
    %v1129 = vunpack.c.l.b16 %v123
    %v1130 = vunpack.c.h.b16 %v123
    %v1131 = vunpack.c.l.b16 %v124
    %v1132 = vunpack.c.h.b16 %v124
    %v1133 = vunpack.c.l.b16 %v125
    %v1134 = vunpack.c.h.b16 %v125
    %v1135 = vunpack.c.l.b16 %v126
    %v1136 = vunpack.c.h.b16 %v126
    %v1137 = vunpack.c.l.b16 %v127
    %v1138 = vunpack.c.h.b16 %v127
    %v1139 = vunpack.c.l.b16 %v128
    %v1140 = vunpack.c.h.b16 %v128
    %v1141 = vunpack.c.l.b16 %v129
    %v1142 = vunpack.c.h.b16 %v129
    %v1143 = vunpack.c.l.b16 %v130
    %v1144 = vunpack.c.h.b16 %v130
    %v1145 = vunpack.c.l.b16 %v131
    %v1146 = vunpack.c.h.b16 %v131
    %v1147 = vunpack.c.l.b16 %v132
    %v1148 = vunpack.c.h.b16 %v132
    %v1149 = vunpack.c.l.b16 %v133
    %v1150 = vunpack.c.h.b16 %v133
    %v1151 = vunpack.c.l.b16 %v134
    %v1152 = vunpack.c.h.b16 %v134
    %v1153 = vunpack.c.l.b16 %v135
    %v1154 = vunpack.c.h.b16 %v135
    %v1155 = vunpack.c.l.b16 %v136
    %v1156 = vunpack.c.h.b16 %v136
    %v1157 = vunpack.c.l.b16 %v137
    %v1158 = vunpack.c.h.b16 %v137
    %v1159 = vunpack.c.l.b16 %v138
    %v1160 = vunpack.c.h.b16 %v138
    %v1161 = vunpack.c.l.b16 %v139
    %v1162 = vunpack.c.h.b16 %v139
    %v1163 = vunpack.c.l.b16 %v140
    %v1164 = vunpack.c.h.b16 %v140
    %v1165 = vunpack.c.l.b16 %v141
    %v1166 = vunpack.c.h.b16 %v141
    %v1167 = vunpack.c.l.b16 %v142
    %v1168 = vunpack.c.h.b16 %v142
    %v1169 = vunpack.c.l.b16 %v143
    %v1170 = vunpack.c.h.b16 %v143
    %v1171 = vunpack.c.l.b16 %v144
    %v1172 = vunpack.c.h.b16 %v144
    %v1173 = vunpack.c.l.b16 %v145
    %v1174 = vunpack.c.h.b16 %v145
    %v1175 = vunpack.c.l.b16 %v146
    %v1176 = vunpack.c.h.b16 %v146
    %v1177 = vunpack.c.l.b16 %v147
    %v1178 = vunpack.c.h.b16 %v147
    %v1179 = vunpack.c.l.b16 %v148
    %v1180 = vunpack.c.h.b16 %v148
    %v1181 = vunpack.c.l.b16 %v149
    %v1182 = vunpack.c.h.b16 %v149
    %v1183 = vunpack.c.l.b16 %v150
    %v1184 = vunpack.c.h.b16 %v150
    %v1185 = vunpack.c.l.b16 %v151
    %v1186 = vunpack.c.h.b16 %v151
    %v1187 = vunpack.c.l.b16 %v152
    %v1188 = vunpack.c.h.b16 %v152
    %v1189 = vunpack.c.l.b16 %v153
    %v1190 = vunpack.c.h.b16 %v153
    %v1191 = vunpack.c.l.b16 %v154
    %v1192 = vunpack.c.h.b16 %v154
    %v1193 = vunpack.c.l.b16 %v155
    %v1194 = vunpack.c.h.b16 %v155
    %v1195 = vunpack.c.l.b16 %v156
    %v1196 = vunpack.c.h.b16 %v156
    %v1197 = vunpack.c.l.b16 %v157
    %v1198 = vunpack.c.h.b16 %v157
    %v1199 = vunpack.c.l.b16 %v158
    %v1200 = vunpack.c.h.b16 %v158
    %v1201 = vunpack.c.l.b16 %v159
    %v1202 = vunpack.c.h.b16 %v159
    %v1203 = vunpack.c.l.b16 %v160
    %v1204 = vunpack.c.h.b16 %v160
    %v1205 = vunpack.c.l.b16 %v161
    %v1206 = vunpack.c.h.b16 %v161
    %v1207 = vunpack.c.l.b16 %v162
    %v1208 = vunpack.c.h.b16 %v162
    %v1209 = vunpack.c.l.b16 %v163
    %v1210 = vunpack.c.h.b16 %v163
    %v1211 = vunpack.c.l.b16 %v164
    %v1212 = vunpack.c.h.b16 %v164
    %v1213 = vunpack.c.l.b16 %v165
    %v1214 = vunpack.c.h.b16 %v165
    %v1215 = vunpack.c.l.b16 %v166
    %v1216 = vunpack.c.h.b16 %v166
    %v1217 = vunpack.c.l.b16 %v167
    %v1218 = vunpack.c.h.b16 %v167
    %v1219 = vunpack.c.l.b16 %v168
    %v1220 = vunpack.c.h.b16 %v168
    %v1221 = vunpack.c.l.b16 %v169
    %v1222 = vunpack.c.h.b16 %v169
    %v1223 = vunpack.c.l.b16 %v170
    %v1224 = vunpack.c.h.b16 %v170
    %v1225 = vunpack.c.l.b16 %v171
    %v1226 = vunpack.c.h.b16 %v171
    %v1227 = vunpack.c.l.b16 %v172
    %v1228 = vunpack.c.h.b16 %v172
    %v1229 = vunpack.c.l.b16 %v173
    %v1230 = vunpack.c.h.b16 %v173
    %v1231 = vunpack.c.l.b16 %v174
    %v1232 = vunpack.c.h.b16 %v174
    %v1233 = vunpack.c.l.b16 %v175
    %v1234 = vunpack.c.h.b16 %v175
    %v1235 = vunpack.c.l.b16 %v176
    %v1236 = vunpack.c.h.b16 %v176
    %v1237 = vunpack.c.l.b16 %v177
    %v1238 = vunpack.c.h.b16 %v177
    %v1239 = vunpack.c.l.b16 %v178
    %v1240 = vunpack.c.h.b16 %v178
    %v1241 = vunpack.c.l.b16 %v179
    %v1242 = vunpack.c.h.b16 %v179
    %v1243 = vunpack.c.l.b16 %v180
    %v1244 = vunpack.c.h.b16 %v180
    %v1245 = vunpack.c.l.b16 %v181
    %v1246 = vunpack.c.h.b16 %v181
    %v1247 = vunpack.c.l.b16 %v182
    %v1248 = vunpack.c.h.b16 %v182
    %v1249 = vunpack.c.l.b16 %v183
    %v1250 = vunpack.c.h.b16 %v183
    %v1251 = vunpack.c.l.b16 %v184
    %v1252 = vunpack.c.h.b16 %v184
    %v1253 = vunpack.c.l.b16 %v185
    %v1254 = vunpack.c.h.b16 %v185
    %v1255 = vunpack.c.l.b16 %v186
    %v1256 = vunpack.c.h.b16 %v186
    %v1257 = vunpack.c.l.b16 %v187
    %v1258 = vunpack.c.h.b16 %v187
    %v1259 = vunpack.c.l.b16 %v188
    %v1260 = vunpack.c.h.b16 %v188
    %v1261 = vunpack.c.l.b16 %v189
    %v1262 = vunpack.c.h.b16 %v189
    %v1263 = vunpack.c.l.b16 %v190
    %v1264 = vunpack.c.h.b16 %v190
    %v1265 = vunpack.c.l.b16 %v191
    %v1266 = vunpack.c.h.b16 %v191
    %v1267 = vunpack.c.l.b16 %v192
    %v1268 = vunpack.c.h.b16 %v192
    %v1269 = vunpack.c.l.b16 %v193
    %v1270 = vunpack.c.h.b16 %v193
    %v1271 = vunpack.c.l.b16 %v194
    %v1272 = vunpack.c.h.b16 %v194
    %v1273 = vunpack.c.l.b16 %v195
    %v1274 = vunpack.c.h.b16 %v195
    %v1275 = vunpack.c.l.b16 %v196
    %v1276 = vunpack.c.h.b16 %v196
    %v1277 = vunpack.c.l.b16 %v197
    %v1278 = vunpack.c.h.b16 %v197
    %v1279 = vunpack.c.l.b16 %v198
    %v1280 = vunpack.c.h.b16 %v198
    %v1281 = vunpack.c.l.b16 %v199
    %v1282 = vunpack.c.h.b16 %v199
    %v1283 = vunpack.c.l.b16 %v200
    %v1284 = vunpack.c.h.b16 %v200
    %v1285 = vunpack.c.l.b16 %v201
    %v1286 = vunpack.c.h.b16 %v201
    %v1287 = vunpack.c.l.b16 %v202
    %v1288 = vunpack.c.h.b16 %v202
    %v1289 = vunpack.c.l.b16 %v203
    %v1290 = vunpack.c.h.b16 %v203
    %v1291 = vunpack.c.l.b16 %v204
    %v1292 = vunpack.c.h.b16 %v204
    %v1293 = vunpack.c.l.b16 %v205
    %v1294 = vunpack.c.h.b16 %v205
    %v1295 = vunpack.c.l.b16 %v206
    %v1296 = vunpack.c.h.b16 %v206
    %v1297 = vunpack.c.l.b16 %v207
    %v1298 = vunpack.c.h.b16 %v207
    %v1299 = vunpack.c.l.b16 %v208
    %v1300 = vunpack.c.h.b16 %v208
    %v1301 = vunpack.c.l.b16 %v209
    %v1302 = vunpack.c.h.b16 %v209
    %v1303 = vunpack.c.l.b16 %v210
    %v1304 = vunpack.c.h.b16 %v210
    %v1305 = vunpack.c.l.b16 %v211
    %v1306 = vunpack.c.h.b16 %v211
    %v1307 = vunpack.c.l.b16 %v212
    %v1308 = vunpack.c.h.b16 %v212
    %v1309 = vunpack.c.l.b16 %v213
    %v1310 = vunpack.c.h.b16 %v213
    %v1311 = vunpack.c.l.b16 %v214
    %v1312 = vunpack.c.h.b16 %v214
    %v1313 = vunpack.c.l.b16 %v215
    %v1314 = vunpack.c.h.b16 %v215
    %v1315 = vunpack.c.l.b16 %v216
    %v1316 = vunpack.c.h.b16 %v216
    %v1317 = vunpack.c.l.b16 %v217
    %v1318 = vunpack.c.h.b16 %v217
    %v1319 = vunpack.c.l.b16 %v218
    %v1320 = vunpack.c.h.b16 %v218
    %v1321 = vunpack.c.l.b16 %v219
    %v1322 = vunpack.c.h.b16 %v219
    %v1323 = vunpack.c.l.b16 %v220
    %v1324 = vunpack.c.h.b16 %v220
    %v1325 = vunpack.c.l.b16 %v221
    %v1326 = vunpack.c.h.b16 %v221
    %v1327 = vunpack.c.l.b16 %v222
    %v1328 = vunpack.c.h.b16 %v222
    %v1329 = vunpack.c.l.b16 %v223
    %v1330 = vunpack.c.h.b16 %v223
    %v1331 = vunpack.c.l.b16 %v224
    %v1332 = vunpack.c.h.b16 %v224
    %v1333 = vunpack.c.l.b16 %v225
    %v1334 = vunpack.c.h.b16 %v225
    %v1335 = vunpack.c.l.b16 %v226
    %v1336 = vunpack.c.h.b16 %v226
    %v1337 = vunpack.c.l.b16 %v227
    %v1338 = vunpack.c.h.b16 %v227
    %v1339 = vunpack.c.l.b16 %v228
    %v1340 = vunpack.c.h.b16 %v228
    %v1341 = vunpack.c.l.b16 %v229
    %v1342 = vunpack.c.h.b16 %v229
    %v1343 = vunpack.c.l.b16 %v230
    %v1344 = vunpack.c.h.b16 %v230
    %v1345 = vunpack.c.l.b16 %v231
    %v1346 = vunpack.c.h.b16 %v231
    %v1347 = vunpack.c.l.b16 %v232
    %v1348 = vunpack.c.h.b16 %v232
    %v1349 = vunpack.c.l.b16 %v233
    %v1350 = vunpack.c.h.b16 %v233
    %v1351 = vunpack.c.l.b16 %v234
    %v1352 = vunpack.c.h.b16 %v234
    %v1353 = vunpack.c.l.b16 %v235
    %v1354 = vunpack.c.h.b16 %v235
    %v1355 = vunpack.c.l.b16 %v236
    %v1356 = vunpack.c.h.b16 %v236
    %v1357 = vunpack.c.l.b16 %v237
    %v1358 = vunpack.c.h.b16 %v237
    %v1359 = vunpack.c.l.b16 %v238
    %v1360 = vunpack.c.h.b16 %v238
    %v1361 = vunpack.c.l.b16 %v239
    %v1362 = vunpack.c.h.b16 %v239
    %v1363 = vunpack.c.l.b16 %v240
    %v1364 = vunpack.c.h.b16 %v240
    %v1365 = vunpack.c.l.b16 %v241
    %v1366 = vunpack.c.h.b16 %v241
    %v1367 = vunpack.c.l.b16 %v242
    %v1368 = vunpack.c.h.b16 %v242
    %v1369 = vunpack.c.l.b16 %v243
    %v1370 = vunpack.c.h.b16 %v243
    %v1371 = vunpack.c.l.b16 %v244
    %v1372 = vunpack.c.h.b16 %v244
    %v1373 = vunpack.c.l.b16 %v245
    %v1374 = vunpack.c.h.b16 %v245
    %v1375 = vunpack.c.l.b16 %v246
    %v1376 = vunpack.c.h.b16 %v246
    %v1377 = vunpack.c.l.b16 %v247
    %v1378 = vunpack.c.h.b16 %v247
    %v1379 = vunpack.c.l.b16 %v248
    %v1380 = vunpack.c.h.b16 %v248
    %v1381 = vunpack.c.l.b16 %v249
    %v1382 = vunpack.c.h.b16 %v249
    %v1383 = vunpack.c.l.b16 %v250
    %v1384 = vunpack.c.h.b16 %v250
    %v1385 = vunpack.c.l.b16 %v251
    %v1386 = vunpack.c.h.b16 %v251
    %v1387 = vunpack.c.l.b16 %v252
    %v1388 = vunpack.c.h.b16 %v252
    %v1389 = vunpack.c.l.b16 %v253
    %v1390 = vunpack.c.h.b16 %v253
    %v1391 = vunpack.c.l.b16 %v254
    %v1392 = vunpack.c.h.b16 %v254
    %v1393 = vunpack.c.l.b16 %v255
    %v1394 = vunpack.c.h.b16 %v255
    %v1395 = vunpack.c.l.b16 %v256
    %v1396 = vunpack.c.h.b16 %v256
    %v1397 = vunpack.c.l.b16 %v257
    %v1398 = vunpack.c.h.b16 %v257
    %v1399 = vunpack.c.l.b16 %v258
    %v1400 = vunpack.c.h.b16 %v258
    %v1401 = vunpack.c.l.b16 %v259
    %v1402 = vunpack.c.h.b16 %v259
    %v1403 = vunpack.c.l.b16 %v260
    %v1404 = vunpack.c.h.b16 %v260
    %v1405 = vunpack.c.l.b16 %v261
    %v1406 = vunpack.c.h.b16 %v261
    %v1407 = vunpack.c.l.b16 %v262
    %v1408 = vunpack.c.h.b16 %v262
    %v1409 = vunpack.c.l.b16 %v263
    %v1410 = vunpack.c.h.b16 %v263
    %v1411 = vunpack.c.l.b16 %v264
    %v1412 = vunpack.c.h.b16 %v264
    %v1413 = vunpack.c.l.b16 %v265
    %v1414 = vunpack.c.h.b16 %v265
    %v1415 = vunpack.c.l.b16 %v266
    %v1416 = vunpack.c.h.b16 %v266
    %v1417 = vunpack.c.l.b16 %v267
    %v1418 = vunpack.c.h.b16 %v267
    %v1419 = vunpack.c.l.b16 %v268
    %v1420 = vunpack.c.h.b16 %v268
    %v1421 = vunpack.c.l.b16 %v269
    %v1422 = vunpack.c.h.b16 %v269
    %v1423 = vunpack.c.l.b16 %v270
    %v1424 = vunpack.c.h.b16 %v270
    %v1425 = vunpack.c.l.b16 %v271
    %v1426 = vunpack.c.h.b16 %v271
    %v1427 = vunpack.c.l.b16 %v272
    %v1428 = vunpack.c.h.b16 %v272
    %v1429 = vunpack.c.l.b16 %v273
    %v1430 = vunpack.c.h.b16 %v273
    %v1431 = vunpack.c.l.b16 %v274
    %v1432 = vunpack.c.h.b16 %v274
    %v1433 = vunpack.c.l.b16 %v275
    %v1434 = vunpack.c.h.b16 %v275
    %v1435 = vunpack.c.l.b16 %v276
    %v1436 = vunpack.c.h.b16 %v276
    %v1437 = vunpack.c.l.b16 %v277
    %v1438 = vunpack.c.h.b16 %v277
    %v1439 = vunpack.c.l.b16 %v278
    %v1440 = vunpack.c.h.b16 %v278
    %v1441 = vunpack.c.l.b16 %v279
    %v1442 = vunpack.c.h.b16 %v279
    %v1443 = vunpack.c.l.b16 %v280
    %v1444 = vunpack.c.h.b16 %v280
    %v1445 = vunpack.c.l.b16 %v281
    %v1446 = vunpack.c.h.b16 %v281
    %v1447 = vunpack.c.l.b16 %v282
    %v1448 = vunpack.c.h.b16 %v282
    %v1449 = vunpack.c.l.b16 %v283
    %v1450 = vunpack.c.h.b16 %v283
    %v1451 = vunpack.c.l.b16 %v284
    %v1452 = vunpack.c.h.b16 %v284
    %v1453 = vunpack.c.l.b16 %v285
    %v1454 = vunpack.c.h.b16 %v285
    %v1455 = vunpack.c.l.b16 %v286
    %v1456 = vunpack.c.h.b16 %v286
    %v1457 = vunpack.c.l.b16 %v287
    %v1458 = vunpack.c.h.b16 %v287
    %v1459 = vunpack.c.l.b16 %v288
    %v1460 = vunpack.c.h.b16 %v288
    %v1461 = vunpack.c.l.b16 %v289
    %v1462 = vunpack.c.h.b16 %v289
    %v1463 = vunpack.c.l.b16 %v290
    %v1464 = vunpack.c.h.b16 %v290
    %v1465 = vunpack.c.l.b16 %v291
    %v1466 = vunpack.c.h.b16 %v291
    %v1467 = vunpack.c.l.b16 %v292
    %v1468 = vunpack.c.h.b16 %v292
    %v1469 = vunpack.c.l.b16 %v293
    %v1470 = vunpack.c.h.b16 %v293
    %v1471 = vunpack.c.l.b16 %v294
    %v1472 = vunpack.c.h.b16 %v294
    %v1473 = vunpack.c.l.b16 %v295
    %v1474 = vunpack.c.h.b16 %v295
    %v1475 = vunpack.c.l.b16 %v296
    %v1476 = vunpack.c.h.b16 %v296
    %v1477 = vunpack.c.l.b16 %v297
    %v1478 = vunpack.c.h.b16 %v297
    %v1479 = vunpack.c.l.b16 %v298
    %v1480 = vunpack.c.h.b16 %v298
    %v1481 = vunpack.c.l.b16 %v299
    %v1482 = vunpack.c.h.b16 %v299
    %v1483 = vunpack.c.l.b16 %v300
    %v1484 = vunpack.c.h.b16 %v300
    %v1485 = vunpack.c.l.b16 %v301
    %v1486 = vunpack.c.h.b16 %v301
    %v1487 = vunpack.c.l.b16 %v302
    %v1488 = vunpack.c.h.b16 %v302
    %v1489 = vunpack.c.l.b16 %v303
    %v1490 = vunpack.c.h.b16 %v303
    %v1491 = vunpack.c.l.b16 %v304
    %v1492 = vunpack.c.h.b16 %v304
    %v1493 = vunpack.c.l.b16 %v305
    %v1494 = vunpack.c.h.b16 %v305
    %v1495 = vunpack.c.l.b16 %v306
    %v1496 = vunpack.c.h.b16 %v306
    %v1497 = vunpack.c.l.b16 %v307
    %v1498 = vunpack.c.h.b16 %v307
    %v1499 = vunpack.c.l.b16 %v308
    %v1500 = vunpack.c.h.b16 %v308
    %v1501 = vunpack.c.l.b16 %v309
    %v1502 = vunpack.c.h.b16 %v309
    %v1503 = vunpack.c.l.b16 %v310
    %v1504 = vunpack.c.h.b16 %v310
    %v1505 = vunpack.c.l.b16 %v311
    %v1506 = vunpack.c.h.b16 %v311
    %v1507 = vunpack.c.l.b16 %v312
    %v1508 = vunpack.c.h.b16 %v312
    %v1509 = vunpack.c.l.b16 %v313
    %v1510 = vunpack.c.h.b16 %v313
    %v1511 = vunpack.c.l.b16 %v314
    %v1512 = vunpack.c.h.b16 %v314
    %v1513 = vunpack.c.l.b16 %v315
    %v1514 = vunpack.c.h.b16 %v315
    %v1515 = vunpack.c.l.b16 %v316
    %v1516 = vunpack.c.h.b16 %v316
    %v1517 = vunpack.c.l.b16 %v317
    %v1518 = vunpack.c.h.b16 %v317
    %v1519 = vunpack.c.l.b16 %v318
    %v1520 = vunpack.c.h.b16 %v318
    %v1521 = vunpack.c.l.b16 %v319
    %v1522 = vunpack.c.h.b16 %v319
    %v1523 = vunpack.c.l.b16 %v320
    %v1524 = vunpack.c.h.b16 %v320
    %v1525 = vunpack.c.l.b16 %v321
    %v1526 = vunpack.c.h.b16 %v321
    %v1527 = vunpack.c.l.b16 %v322
    %v1528 = vunpack.c.h.b16 %v322
    %v1529 = vunpack.c.l.b16 %v323
    %v1530 = vunpack.c.h.b16 %v323
    %v1531 = vunpack.c.l.b16 %v324
    %v1532 = vunpack.c.h.b16 %v324
    %v1533 = vunpack.c.l.b16 %v325
    %v1534 = vunpack.c.h.b16 %v325
    %v1535 = vunpack.c.l.b16 %v326
    %v1536 = vunpack.c.h.b16 %v326
    %v1537 = vunpack.c.l.b16 %v327
    %v1538 = vunpack.c.h.b16 %v327
    %v1539 = vunpack.c.l.b16 %v328
    %v1540 = vunpack.c.h.b16 %v328
    %v1541 = vunpack.c.l.b16 %v329
    %v1542 = vunpack.c.h.b16 %v329
    %v1543 = vunpack.c.l.b16 %v330
    %v1544 = vunpack.c.h.b16 %v330
    %v1545 = vunpack.c.l.b16 %v331
    %v1546 = vunpack.c.h.b16 %v331
    %v1547 = vunpack.c.l.b16 %v332
    %v1548 = vunpack.c.h.b16 %v332
    %v1549 = vunpack.c.l.b16 %v333
    %v1550 = vunpack.c.h.b16 %v333
    %v1551 = vunpack.c.l.b16 %v334
    %v1552 = vunpack.c.h.b16 %v334
    %v1553 = vunpack.c.l.b16 %v335
    %v1554 = vunpack.c.h.b16 %v335
    %v1555 = vunpack.c.l.b16 %v336
    %v1556 = vunpack.c.h.b16 %v336
    %v1557 = vunpack.c.l.b16 %v337
    %v1558 = vunpack.c.h.b16 %v337
    %v1559 = vunpack.c.l.b16 %v338
    %v1560 = vunpack.c.h.b16 %v338
    %v1561 = vunpack.c.l.b16 %v339
    %v1562 = vunpack.c.h.b16 %v339
    %v1563 = vunpack.c.l.b16 %v340
    %v1564 = vunpack.c.h.b16 %v340
    %v1565 = vunpack.c.l.b16 %v341
    %v1566 = vunpack.c.h.b16 %v341
    %v1567 = vunpack.c.l.b16 %v342
    %v1568 = vunpack.c.h.b16 %v342
    %v1569 = vunpack.c.l.b16 %v343
    %v1570 = vunpack.c.h.b16 %v343
    %v1571 = vunpack.c.l.b16 %v344
    %v1572 = vunpack.c.h.b16 %v344
    %v1573 = vunpack.c.l.b16 %v345
    %v1574 = vunpack.c.h.b16 %v345
    %v1575 = vunpack.c.l.b16 %v346
    %v1576 = vunpack.c.h.b16 %v346
    %v1577 = vunpack.c.l.b16 %v347
    %v1578 = vunpack.c.h.b16 %v347
    %v1579 = vunpack.c.l.b16 %v348
    %v1580 = vunpack.c.h.b16 %v348
    %v1581 = vunpack.c.l.b16 %v349
    %v1582 = vunpack.c.h.b16 %v349
    %v1583 = vunpack.c.l.b16 %v350
    %v1584 = vunpack.c.h.b16 %v350
    %v1585 = vunpack.c.l.b16 %v351
    %v1586 = vunpack.c.h.b16 %v351
    %v1587 = vunpack.c.l.b16 %v352
    %v1588 = vunpack.c.h.b16 %v352
    %v1589 = vunpack.c.l.b16 %v353
    %v1590 = vunpack.c.h.b16 %v353
    %v1591 = vunpack.c.l.b16 %v354
    %v1592 = vunpack.c.h.b16 %v354
    %v1593 = vunpack.c.l.b16 %v355
    %v1594 = vunpack.c.h.b16 %v355
    %v1595 = vunpack.c.l.b16 %v356
    %v1596 = vunpack.c.h.b16 %v356
    %v1597 = vunpack.c.l.b16 %v357
    %v1598 = vunpack.c.h.b16 %v357
    %v1599 = vunpack.c.l.b16 %v358
    %v1600 = vunpack.c.h.b16 %v358
    %v1601 = vunpack.c.l.b16 %v359
    %v1602 = vunpack.c.h.b16 %v359
    %v1603 = vunpack.c.l.b16 %v360
    %v1604 = vunpack.c.h.b16 %v360
    %v1605 = vunpack.c.l.b16 %v361
    %v1606 = vunpack.c.h.b16 %v361
    %v1607 = vunpack.c.l.b16 %v362
    %v1608 = vunpack.c.h.b16 %v362
    %v1609 = vunpack.c.l.b16 %v363
    %v1610 = vunpack.c.h.b16 %v363
    %v1611 = vunpack.c.l.b16 %v364
    %v1612 = vunpack.c.h.b16 %v364
    %v1613 = vunpack.c.l.b16 %v365
    %v1614 = vunpack.c.h.b16 %v365
    %v1615 = vunpack.c.l.b16 %v366
    %v1616 = vunpack.c.h.b16 %v366
    %v1617 = vunpack.c.l.b16 %v367
    %v1618 = vunpack.c.h.b16 %v367
    %v1619 = vunpack.c.l.b16 %v368
    %v1620 = vunpack.c.h.b16 %v368
    %v1621 = vunpack.c.l.b16 %v369
    %v1622 = vunpack.c.h.b16 %v369
    %v1623 = vunpack.c.l.b16 %v370
    %v1624 = vunpack.c.h.b16 %v370
    %v1625 = vunpack.c.l.b16 %v371
    %v1626 = vunpack.c.h.b16 %v371
    %v1627 = vunpack.c.l.b16 %v372
    %v1628 = vunpack.c.h.b16 %v372
    %v1629 = vunpack.c.l.b16 %v373
    %v1630 = vunpack.c.h.b16 %v373
    %v1631 = vunpack.c.l.b16 %v374
    %v1632 = vunpack.c.h.b16 %v374
    %v1633 = vunpack.c.l.b16 %v375
    %v1634 = vunpack.c.h.b16 %v375
    %v1635 = vunpack.c.l.b16 %v376
    %v1636 = vunpack.c.h.b16 %v376
    %v1637 = vunpack.c.l.b16 %v377
    %v1638 = vunpack.c.h.b16 %v377
    %v1639 = vunpack.c.l.b16 %v378
    %v1640 = vunpack.c.h.b16 %v378
    %v1641 = vunpack.c.l.b16 %v379
    %v1642 = vunpack.c.h.b16 %v379
    %v1643 = vunpack.c.l.b16 %v380
    %v1644 = vunpack.c.h.b16 %v380
    %v1645 = vunpack.c.l.b16 %v381
    %v1646 = vunpack.c.h.b16 %v381
    %v1647 = vunpack.c.l.b16 %v382
    %v1648 = vunpack.c.h.b16 %v382
    %v1649 = vunpack.c.l.b16 %v383
    %v1650 = vunpack.c.h.b16 %v383
    %v1651 = vunpack.c.l.b16 %v384
    %v1652 = vunpack.c.h.b16 %v384
    %v1653 = vunpack.c.l.b16 %v385
    %v1654 = vunpack.c.h.b16 %v385
    %v1655 = vunpack.c.l.b16 %v386
    %v1656 = vunpack.c.h.b16 %v386
    %v1657 = vunpack.c.l.b16 %v387
    %v1658 = vunpack.c.h.b16 %v387
    %v1659 = vunpack.c.l.b16 %v388
    %v1660 = vunpack.c.h.b16 %v388
    %v1661 = vunpack.c.l.b16 %v389
    %v1662 = vunpack.c.h.b16 %v389
    %v1663 = vunpack.c.l.b16 %v390
    %v1664 = vunpack.c.h.b16 %v390
    %v1665 = vunpack.c.l.b16 %v391
    %v1666 = vunpack.c.h.b16 %v391
    %v1667 = vunpack.c.l.b16 %v392
    %v1668 = vunpack.c.h.b16 %v392
    %v1669 = vunpack.c.l.b16 %v393
    %v1670 = vunpack.c.h.b16 %v393
    %v1671 = vunpack.c.l.b16 %v394
    %v1672 = vunpack.c.h.b16 %v394
    %v1673 = vunpack.c.l.b16 %v395
    %v1674 = vunpack.c.h.b16 %v395
    %v1675 = vunpack.c.l.b16 %v396
    %v1676 = vunpack.c.h.b16 %v396
    %v1677 = vunpack.c.l.b16 %v397
    %v1678 = vunpack.c.h.b16 %v397
    %v1679 = vunpack.c.l.b16 %v398
    %v1680 = vunpack.c.h.b16 %v398
    %v1681 = vunpack.c.l.b16 %v399
    %v1682 = vunpack.c.h.b16 %v399
    %v1683 = vunpack.c.l.b16 %v400
    %v1684 = vunpack.c.h.b16 %v400
    %v1685 = vunpack.c.l.b16 %v401
    %v1686 = vunpack.c.h.b16 %v401
    %v1687 = vunpack.c.l.b16 %v402
    %v1688 = vunpack.c.h.b16 %v402
    %v1689 = vunpack.c.l.b16 %v403
    %v1690 = vunpack.c.h.b16 %v403
    %v1691 = vunpack.c.l.b16 %v404
    %v1692 = vunpack.c.h.b16 %v404
    %v1693 = vunpack.c.l.b16 %v405
    %v1694 = vunpack.c.h.b16 %v405
    %v1695 = vunpack.c.l.b16 %v406
    %v1696 = vunpack.c.h.b16 %v406
    %v1697 = vunpack.c.l.b16 %v407
    %v1698 = vunpack.c.h.b16 %v407
    %v1699 = vunpack.c.l.b16 %v408
    %v1700 = vunpack.c.h.b16 %v408
    %v1701 = vunpack.c.l.b16 %v409
    %v1702 = vunpack.c.h.b16 %v409
    %v1703 = vunpack.c.l.b16 %v410
    %v1704 = vunpack.c.h.b16 %v410
    %v1705 = vunpack.c.l.b16 %v411
    %v1706 = vunpack.c.h.b16 %v411
    %v1707 = vunpack.c.l.b16 %v412
    %v1708 = vunpack.c.h.b16 %v412
    %v1709 = vunpack.c.l.b16 %v413
    %v1710 = vunpack.c.h.b16 %v413
    %v1711 = vunpack.c.l.b16 %v414
    %v1712 = vunpack.c.h.b16 %v414
    %v1713 = vunpack.c.l.b16 %v415
    %v1714 = vunpack.c.h.b16 %v415
    %v1715 = vunpack.c.l.b16 %v416
    %v1716 = vunpack.c.h.b16 %v416
    %v1717 = vunpack.c.l.b16 %v417
    %v1718 = vunpack.c.h.b16 %v417
    %v1719 = vunpack.c.l.b16 %v418
    %v1720 = vunpack.c.h.b16 %v418
    %v1721 = vunpack.c.l.b16 %v419
    %v1722 = vunpack.c.h.b16 %v419
    %v1723 = vunpack.c.l.b16 %v420
    %v1724 = vunpack.c.h.b16 %v420
    %v1725 = vunpack.c.l.b16 %v421
    %v1726 = vunpack.c.h.b16 %v421
    %v1727 = vunpack.c.l.b16 %v422
    %v1728 = vunpack.c.h.b16 %v422
    %v1729 = vunpack.c.l.b16 %v423
    %v1730 = vunpack.c.h.b16 %v423
    %v1731 = vunpack.c.l.b16 %v424
    %v1732 = vunpack.c.h.b16 %v424
    %v1733 = vunpack.c.l.b16 %v425
    %v1734 = vunpack.c.h.b16 %v425
    %v1735 = vunpack.c.l.b16 %v426
    %v1736 = vunpack.c.h.b16 %v426
    %v1737 = vunpack.c.l.b16 %v427
    %v1738 = vunpack.c.h.b16 %v427
    %v1739 = vunpack.c.l.b16 %v428
    %v1740 = vunpack.c.h.b16 %v428
    %v1741 = vunpack.c.l.b16 %v429
    %v1742 = vunpack.c.h.b16 %v429
    %v1743 = vunpack.c.l.b16 %v430
    %v1744 = vunpack.c.h.b16 %v430
    %v1745 = vunpack.c.l.b16 %v431
    %v1746 = vunpack.c.h.b16 %v431
    %v1747 = vunpack.c.l.b16 %v432
    %v1748 = vunpack.c.h.b16 %v432
    %v1749 = vunpack.c.l.b16 %v433
    %v1750 = vunpack.c.h.b16 %v433
    %v1751 = vunpack.c.l.b16 %v434
    %v1752 = vunpack.c.h.b16 %v434
    %v1753 = vunpack.c.l.b16 %v435
    %v1754 = vunpack.c.h.b16 %v435
    %v1755 = vunpack.c.l.b16 %v436
    %v1756 = vunpack.c.h.b16 %v436
    %v1757 = vunpack.c.l.b16 %v437
    %v1758 = vunpack.c.h.b16 %v437
    %v1759 = vunpack.c.l.b16 %v438
    %v1760 = vunpack.c.h.b16 %v438
    %v1761 = vunpack.c.l.b16 %v439
    %v1762 = vunpack.c.h.b16 %v439
    %v1763 = vunpack.c.l.b16 %v440
    %v1764 = vunpack.c.h.b16 %v440
    %v1765 = vunpack.c.l.b16 %v441
    %v1766 = vunpack.c.h.b16 %v441
    %v1767 = vunpack.c.l.b16 %v442
    %v1768 = vunpack.c.h.b16 %v442
    %v1769 = vunpack.c.l.b16 %v443
    %v1770 = vunpack.c.h.b16 %v443
    %v1771 = vunpack.c.l.b16 %v444
    %v1772 = vunpack.c.h.b16 %v444
    %v1773 = vunpack.c.l.b16 %v445
    %v1774 = vunpack.c.h.b16 %v445
    %v1775 = vunpack.c.l.b16 %v446
    %v1776 = vunpack.c.h.b16 %v446
    %v1777 = vunpack.c.l.b16 %v447
    %v1778 = vunpack.c.h.b16 %v447
    %v1779 = vunpack.c.l.b16 %v448
    %v1780 = vunpack.c.h.b16 %v448
    %v1781 = vunpack.c.l.b16 %v449
    %v1782 = vunpack.c.h.b16 %v449
    %v1783 = vunpack.c.l.b16 %v450
    %v1784 = vunpack.c.h.b16 %v450
    %v1785 = vunpack.c.l.b16 %v451
    %v1786 = vunpack.c.h.b16 %v451
    %v1787 = vunpack.c.l.b16 %v452
    %v1788 = vunpack.c.h.b16 %v452
    %v1789 = vunpack.c.l.b16 %v453
    %v1790 = vunpack.c.h.b16 %v453
    %v1791 = vunpack.c.l.b16 %v454
    %v1792 = vunpack.c.h.b16 %v454
    %v1793 = vunpack.c.l.b16 %v455
    %v1794 = vunpack.c.h.b16 %v455
    %v1795 = vunpack.c.l.b16 %v456
    %v1796 = vunpack.c.h.b16 %v456
    %v1797 = vunpack.c.l.b16 %v457
    %v1798 = vunpack.c.h.b16 %v457
    %v1799 = vunpack.c.l.b16 %v458
    %v1800 = vunpack.c.h.b16 %v458
    %v1801 = vunpack.c.l.b16 %v459
    %v1802 = vunpack.c.h.b16 %v459
    %v1803 = vunpack.c.l.b16 %v460
    %v1804 = vunpack.c.h.b16 %v460
    %v1805 = vunpack.c.l.b16 %v461
    %v1806 = vunpack.c.h.b16 %v461
    %v1807 = vunpack.c.l.b16 %v462
    %v1808 = vunpack.c.h.b16 %v462
    %v1809 = vunpack.c.l.b16 %v463
    %v1810 = vunpack.c.h.b16 %v463
    %v1811 = vunpack.c.l.b16 %v464
    %v1812 = vunpack.c.h.b16 %v464
    %v1813 = vunpack.c.l.b16 %v465
    %v1814 = vunpack.c.h.b16 %v465
    %v1815 = vunpack.c.l.b16 %v466
    %v1816 = vunpack.c.h.b16 %v466
    %v1817 = vunpack.c.l.b16 %v467
    %v1818 = vunpack.c.h.b16 %v467
    %v1819 = vunpack.c.l.b16 %v468
    %v1820 = vunpack.c.h.b16 %v468
    %v1821 = vunpack.c.l.b16 %v469
    %v1822 = vunpack.c.h.b16 %v469
    %v1823 = vunpack.c.l.b16 %v470
    %v1824 = vunpack.c.h.b16 %v470
    %v1825 = vunpack.c.l.b16 %v471
    %v1826 = vunpack.c.h.b16 %v471
    %v1827 = vunpack.c.l.b16 %v472
    %v1828 = vunpack.c.h.b16 %v472
    %v1829 = vunpack.c.l.b16 %v473
    %v1830 = vunpack.c.h.b16 %v473
    %v1831 = vunpack.c.l.b16 %v474
    %v1832 = vunpack.c.h.b16 %v474
    %v1833 = vunpack.c.l.b16 %v475
    %v1834 = vunpack.c.h.b16 %v475
    %v1835 = vunpack.c.l.b16 %v476
    %v1836 = vunpack.c.h.b16 %v476
    %v1837 = vunpack.c.l.b16 %v477
    %v1838 = vunpack.c.h.b16 %v477
    %v1839 = vunpack.c.l.b16 %v478
    %v1840 = vunpack.c.h.b16 %v478
    %v1841 = vunpack.c.l.b16 %v479
    %v1842 = vunpack.c.h.b16 %v479
    %v1843 = vunpack.c.l.b16 %v480
    %v1844 = vunpack.c.h.b16 %v480
    %v1845 = vunpack.c.l.b16 %v481
    %v1846 = vunpack.c.h.b16 %v481
    %v1847 = vunpack.c.l.b16 %v482
    %v1848 = vunpack.c.h.b16 %v482
    %v1849 = vunpack.c.l.b16 %v483
    %v1850 = vunpack.c.h.b16 %v483
    %v1851 = vunpack.c.l.b16 %v484
    %v1852 = vunpack.c.h.b16 %v484
    %v1853 = vunpack.c.l.b16 %v485
    %v1854 = vunpack.c.h.b16 %v485
    %v1855 = vunpack.c.l.b16 %v486
    %v1856 = vunpack.c.h.b16 %v486
    %v1857 = vunpack.c.l.b16 %v487
    %v1858 = vunpack.c.h.b16 %v487
    %v1859 = vunpack.c.l.b16 %v488
    %v1860 = vunpack.c.h.b16 %v488
    %v1861 = vunpack.c.l.b16 %v489
    %v1862 = vunpack.c.h.b16 %v489
    %v1863 = vunpack.c.l.b16 %v490
    %v1864 = vunpack.c.h.b16 %v490
    %v1865 = vunpack.c.l.b16 %v491
    %v1866 = vunpack.c.h.b16 %v491
    %v1867 = vunpack.c.l.b16 %v492
    %v1868 = vunpack.c.h.b16 %v492
    %v1869 = vunpack.c.l.b16 %v493
    %v1870 = vunpack.c.h.b16 %v493
    %v1871 = vunpack.c.l.b16 %v494
    %v1872 = vunpack.c.h.b16 %v494
    %v1873 = vunpack.c.l.b16 %v495
    %v1874 = vunpack.c.h.b16 %v495
    %v1875 = vunpack.c.l.b16 %v496
    %v1876 = vunpack.c.h.b16 %v496
    %v1877 = vunpack.c.l.b16 %v497
    %v1878 = vunpack.c.h.b16 %v497
    %v1879 = vunpack.c.l.b16 %v498
    %v1880 = vunpack.c.h.b16 %v498
    %v1881 = vunpack.c.l.b16 %v499
    %v1882 = vunpack.c.h.b16 %v499
    %v1883 = vunpack.c.l.b16 %v500
    %v1884 = vunpack.c.h.b16 %v500
    %v1885 = vunpack.c.l.b16 %v501
    %v1886 = vunpack.c.h.b16 %v501
    %v1887 = vunpack.c.l.b16 %v502
    %v1888 = vunpack.c.h.b16 %v502
    %v1889 = vunpack.c.l.b16 %v503
    %v1890 = vunpack.c.h.b16 %v503
    %v1891 = vunpack.c.l.b16 %v504
    %v1892 = vunpack.c.h.b16 %v504
    %v1893 = vunpack.c.l.b16 %v505
    %v1894 = vunpack.c.h.b16 %v505
    %v1895 = vunpack.c.l.b16 %v506
    %v1896 = vunpack.c.h.b16 %v506
    %v1897 = vunpack.c.l.b16 %v507
    %v1898 = vunpack.c.h.b16 %v507
    %v1899 = vunpack.c.l.b16 %v508
    %v1900 = vunpack.c.h.b16 %v508
    %v1901 = vunpack.c.l.b16 %v509
    %v1902 = vunpack.c.h.b16 %v509
    %v1903 = vunpack.c.l.b16 %v510
    %v1904 = vunpack.c.h.b16 %v510
    %v1905 = vunpack.c.l.b16 %v511
    %v1906 = vunpack.c.h.b16 %v511
    %v1907 = vunpack.c.l.b16 %v512
    %v1908 = vunpack.c.h.b16 %v512
    %v1909 = vunpack.c.l.b16 %v513
    %v1910 = vunpack.c.h.b16 %v513
    %v1911 = vunpack.c.l.b16 %v514
    %v1912 = vunpack.c.h.b16 %v514
    %v1913 = vunpack.c.l.b16 %v515
    %v1914 = vunpack.c.h.b16 %v515
    %v1915 = vunpack.c.l.b16 %v516
    %v1916 = vunpack.c.h.b16 %v516
    %v1917 = vunpack.c.l.b16 %v517
    %v1918 = vunpack.c.h.b16 %v517
    %v1919 = vunpack.c.l.b16 %v518
    %v1920 = vunpack.c.h.b16 %v518
    %v1921 = vunpack.c.l.b16 %v519
    %v1922 = vunpack.c.h.b16 %v519
    %v1923 = vunpack.c.l.b16 %v520
    %v1924 = vunpack.c.h.b16 %v520
    %v1925 = vunpack.c.l.b16 %v521
    %v1926 = vunpack.c.h.b16 %v521
    %v1927 = vunpack.c.l.b16 %v522
    %v1928 = vunpack.c.h.b16 %v522
    %v1929 = vunpack.c.l.b16 %v523
    %v1930 = vunpack.c.h.b16 %v523
    %v1931 = vunpack.c.l.b16 %v524
    %v1932 = vunpack.c.h.b16 %v524
    %v1933 = vunpack.c.l.b16 %v525
    %v1934 = vunpack.c.h.b16 %v525
    %v1935 = vunpack.c.l.b16 %v526
    %v1936 = vunpack.c.h.b16 %v526
    %v1937 = vunpack.c.l.b16 %v527
    %v1938 = vunpack.c.h.b16 %v527
    %v1939 = vpack.c.b16 %v1051, %v1043
    %v1940 = vpack.c.b16 %v1052, %v1044
    %v1941 = vpack.c.b16 %v1053, %v1045
    %v1942 = vpack.c.b16 %v1054, %v1046
    %v1943 = vpack.c.b16 %v1055, %v1047
    %v1944 = vpack.c.b16 %v1056, %v1048
    %v1945 = vpack.c.b16 %v1057, %v1049
    %v1946 = vpack.c.b16 %v1058, %v1050
    %v1947 = vpack.c.b16 %v1067, %v1059
    %v1948 = vpack.c.b16 %v1068, %v1060
    %v1949 = vpack.c.b16 %v1069, %v1061
    %v1950 = vpack.c.b16 %v1070, %v1062
    %v1951 = vpack.c.b16 %v1071, %v1063
    %v1952 = vpack.c.b16 %v1072, %v1064
    %v1953 = vpack.c.b16 %v1073, %v1065
    %v1954 = vpack.c.b16 %v1074, %v1066
    %v1955 = vpack.c.b16 %v1083, %v1075
    %v1956 = vpack.c.b16 %v1084, %v1076
    %v1957 = vpack.c.b16 %v1085, %v1077
    %v1958 = vpack.c.b16 %v1086, %v1078
    %v1959 = vpack.c.b16 %v1087, %v1079
    %v1960 = vpack.c.b16 %v1088, %v1080
    %v1961 = vpack.c.b16 %v1089, %v1081
    %v1962 = vpack.c.b16 %v1090, %v1082
    %v1963 = vpack.c.b16 %v1099, %v1091
    %v1964 = vpack.c.b16 %v1100, %v1092
    %v1965 = vpack.c.b16 %v1101, %v1093
    %v1966 = vpack.c.b16 %v1102, %v1094
    %v1967 = vpack.c.b16 %v1103, %v1095
    %v1968 = vpack.c.b16 %v1104, %v1096
    %v1969 = vpack.c.b16 %v1105, %v1097
    %v1970 = vpack.c.b16 %v1106, %v1098
    %v1971 = vpack.c.b16 %v1115, %v1107
    %v1972 = vpack.c.b16 %v1116, %v1108
    %v1973 = vpack.c.b16 %v1117, %v1109
    %v1974 = vpack.c.b16 %v1118, %v1110
    %v1975 = vpack.c.b16 %v1119, %v1111
    %v1976 = vpack.c.b16 %v1120, %v1112
    %v1977 = vpack.c.b16 %v1121, %v1113
    %v1978 = vpack.c.b16 %v1122, %v1114
    %v1979 = vpack.c.b16 %v1131, %v1123
    %v1980 = vpack.c.b16 %v1132, %v1124
    %v1981 = vpack.c.b16 %v1133, %v1125
    %v1982 = vpack.c.b16 %v1134, %v1126
    %v1983 = vpack.c.b16 %v1135, %v1127
    %v1984 = vpack.c.b16 %v1136, %v1128
    %v1985 = vpack.c.b16 %v1137, %v1129
    %v1986 = vpack.c.b16 %v1138, %v1130
    %v1987 = vpack.c.b16 %v1147, %v1139
    %v1988 = vpack.c.b16 %v1148, %v1140
    %v1989 = vpack.c.b16 %v1149, %v1141
    %v1990 = vpack.c.b16 %v1150, %v1142
    %v1991 = vpack.c.b16 %v1151, %v1143
    %v1992 = vpack.c.b16 %v1152, %v1144
    %v1993 = vpack.c.b16 %v1153, %v1145
    %v1994 = vpack.c.b16 %v1154, %v1146
    %v1995 = vpack.c.b16 %v1163, %v1155
    %v1996 = vpack.c.b16 %v1164, %v1156
    %v1997 = vpack.c.b16 %v1165, %v1157
    %v1998 = vpack.c.b16 %v1166, %v1158
    %v1999 = vpack.c.b16 %v1167, %v1159
    %v2000 = vpack.c.b16 %v1168, %v1160
    %v2001 = vpack.c.b16 %v1169, %v1161
    %v2002 = vpack.c.b16 %v1170, %v1162
    %v2003 = vpack.c.b16 %v1179, %v1171
    %v2004 = vpack.c.b16 %v1180, %v1172
    %v2005 = vpack.c.b16 %v1181, %v1173
    %v2006 = vpack.c.b16 %v1182, %v1174
    %v2007 = vpack.c.b16 %v1183, %v1175
    %v2008 = vpack.c.b16 %v1184, %v1176
    %v2009 = vpack.c.b16 %v1185, %v1177
    %v2010 = vpack.c.b16 %v1186, %v1178
    %v2011 = vpack.c.b16 %v1195, %v1187
    %v2012 = vpack.c.b16 %v1196, %v1188
    %v2013 = vpack.c.b16 %v1197, %v1189
    %v2014 = vpack.c.b16 %v1198, %v1190
    %v2015 = vpack.c.b16 %v1199, %v1191
    %v2016 = vpack.c.b16 %v1200, %v1192
    %v2017 = vpack.c.b16 %v1201, %v1193
    %v2018 = vpack.c.b16 %v1202, %v1194
    %v2019 = vpack.c.b16 %v1211, %v1203
    %v2020 = vpack.c.b16 %v1212, %v1204
    %v2021 = vpack.c.b16 %v1213, %v1205
    %v2022 = vpack.c.b16 %v1214, %v1206
    %v2023 = vpack.c.b16 %v1215, %v1207
    %v2024 = vpack.c.b16 %v1216, %v1208
    %v2025 = vpack.c.b16 %v1217, %v1209
    %v2026 = vpack.c.b16 %v1218, %v1210
    %v2027 = vpack.c.b16 %v1227, %v1219
    %v2028 = vpack.c.b16 %v1228, %v1220
    %v2029 = vpack.c.b16 %v1229, %v1221
    %v2030 = vpack.c.b16 %v1230, %v1222
    %v2031 = vpack.c.b16 %v1231, %v1223
    %v2032 = vpack.c.b16 %v1232, %v1224
    %v2033 = vpack.c.b16 %v1233, %v1225
    %v2034 = vpack.c.b16 %v1234, %v1226
    %v2035 = vpack.c.b16 %v1243, %v1235
    %v2036 = vpack.c.b16 %v1244, %v1236
    %v2037 = vpack.c.b16 %v1245, %v1237
    %v2038 = vpack.c.b16 %v1246, %v1238
    %v2039 = vpack.c.b16 %v1247, %v1239
    %v2040 = vpack.c.b16 %v1248, %v1240
    %v2041 = vpack.c.b16 %v1249, %v1241
    %v2042 = vpack.c.b16 %v1250, %v1242
    %v2043 = vpack.c.b16 %v1259, %v1251
    %v2044 = vpack.c.b16 %v1260, %v1252
    %v2045 = vpack.c.b16 %v1261, %v1253
    %v2046 = vpack.c.b16 %v1262, %v1254
    %v2047 = vpack.c.b16 %v1263, %v1255
    %v2048 = vpack.c.b16 %v1264, %v1256
    %v2049 = vpack.c.b16 %v1265, %v1257
    %v2050 = vpack.c.b16 %v1266, %v1258
    %v2051 = vpack.c.b16 %v1275, %v1267
    %v2052 = vpack.c.b16 %v1276, %v1268
    %v2053 = vpack.c.b16 %v1277, %v1269
    %v2054 = vpack.c.b16 %v1278, %v1270
    %v2055 = vpack.c.b16 %v1279, %v1271
    %v2056 = vpack.c.b16 %v1280, %v1272
    %v2057 = vpack.c.b16 %v1281, %v1273
    %v2058 = vpack.c.b16 %v1282, %v1274
    %v2059 = vpack.c.b16 %v1291, %v1283
    %v2060 = vpack.c.b16 %v1292, %v1284
    %v2061 = vpack.c.b16 %v1293, %v1285
    %v2062 = vpack.c.b16 %v1294, %v1286
    %v2063 = vpack.c.b16 %v1295, %v1287
    %v2064 = vpack.c.b16 %v1296, %v1288
    %v2065 = vpack.c.b16 %v1297, %v1289
    %v2066 = vpack.c.b16 %v1298, %v1290
    %v2067 = vpack.c.b16 %v1307, %v1299
    %v2068 = vpack.c.b16 %v1308, %v1300
    %v2069 = vpack.c.b16 %v1309, %v1301
    %v2070 = vpack.c.b16 %v1310, %v1302
    %v2071 = vpack.c.b16 %v1311, %v1303
    %v2072 = vpack.c.b16 %v1312, %v1304
    %v2073 = vpack.c.b16 %v1313, %v1305
    %v2074 = vpack.c.b16 %v1314, %v1306
    %v2075 = vpack.c.b16 %v1323, %v1315
    %v2076 = vpack.c.b16 %v1324, %v1316
    %v2077 = vpack.c.b16 %v1325, %v1317
    %v2078 = vpack.c.b16 %v1326, %v1318
    %v2079 = vpack.c.b16 %v1327, %v1319
    %v2080 = vpack.c.b16 %v1328, %v1320
    %v2081 = vpack.c.b16 %v1329, %v1321
    %v2082 = vpack.c.b16 %v1330, %v1322
    %v2083 = vpack.c.b16 %v1339, %v1331
    %v2084 = vpack.c.b16 %v1340, %v1332
    %v2085 = vpack.c.b16 %v1341, %v1333
    %v2086 = vpack.c.b16 %v1342, %v1334
    %v2087 = vpack.c.b16 %v1343, %v1335
    %v2088 = vpack.c.b16 %v1344, %v1336
    %v2089 = vpack.c.b16 %v1345, %v1337
    %v2090 = vpack.c.b16 %v1346, %v1338
    %v2091 = vpack.c.b16 %v1355, %v1347
    %v2092 = vpack.c.b16 %v1356, %v1348
    %v2093 = vpack.c.b16 %v1357, %v1349
    %v2094 = vpack.c.b16 %v1358, %v1350
    %v2095 = vpack.c.b16 %v1359, %v1351
    %v2096 = vpack.c.b16 %v1360, %v1352
    %v2097 = vpack.c.b16 %v1361, %v1353
    %v2098 = vpack.c.b16 %v1362, %v1354
    %v2099 = vpack.c.b16 %v1371, %v1363
    %v2100 = vpack.c.b16 %v1372, %v1364
    %v2101 = vpack.c.b16 %v1373, %v1365
    %v2102 = vpack.c.b16 %v1374, %v1366
    %v2103 = vpack.c.b16 %v1375, %v1367
    %v2104 = vpack.c.b16 %v1376, %v1368
    %v2105 = vpack.c.b16 %v1377, %v1369
    %v2106 = vpack.c.b16 %v1378, %v1370
    %v2107 = vpack.c.b16 %v1387, %v1379
    %v2108 = vpack.c.b16 %v1388, %v1380
    %v2109 = vpack.c.b16 %v1389, %v1381
    %v2110 = vpack.c.b16 %v1390, %v1382
    %v2111 = vpack.c.b16 %v1391, %v1383
    %v2112 = vpack.c.b16 %v1392, %v1384
    %v2113 = vpack.c.b16 %v1393, %v1385
    %v2114 = vpack.c.b16 %v1394, %v1386
    %v2115 = vpack.c.b16 %v1403, %v1395
    %v2116 = vpack.c.b16 %v1404, %v1396
    %v2117 = vpack.c.b16 %v1405, %v1397
    %v2118 = vpack.c.b16 %v1406, %v1398
    %v2119 = vpack.c.b16 %v1407, %v1399
    %v2120 = vpack.c.b16 %v1408, %v1400
    %v2121 = vpack.c.b16 %v1409, %v1401
    %v2122 = vpack.c.b16 %v1410, %v1402
    %v2123 = vpack.c.b16 %v1419, %v1411
    %v2124 = vpack.c.b16 %v1420, %v1412
    %v2125 = vpack.c.b16 %v1421, %v1413
    %v2126 = vpack.c.b16 %v1422, %v1414
    %v2127 = vpack.c.b16 %v1423, %v1415
    %v2128 = vpack.c.b16 %v1424, %v1416
    %v2129 = vpack.c.b16 %v1425, %v1417
    %v2130 = vpack.c.b16 %v1426, %v1418
    %v2131 = vpack.c.b16 %v1435, %v1427
    %v2132 = vpack.c.b16 %v1436, %v1428
    %v2133 = vpack.c.b16 %v1437, %v1429
    %v2134 = vpack.c.b16 %v1438, %v1430
    %v2135 = vpack.c.b16 %v1439, %v1431
    %v2136 = vpack.c.b16 %v1440, %v1432
    %v2137 = vpack.c.b16 %v1441, %v1433
    %v2138 = vpack.c.b16 %v1442, %v1434
    %v2139 = vpack.c.b16 %v1451, %v1443
    %v2140 = vpack.c.b16 %v1452, %v1444
    %v2141 = vpack.c.b16 %v1453, %v1445
    %v2142 = vpack.c.b16 %v1454, %v1446
    %v2143 = vpack.c.b16 %v1455, %v1447
    %v2144 = vpack.c.b16 %v1456, %v1448
    %v2145 = vpack.c.b16 %v1457, %v1449
    %v2146 = vpack.c.b16 %v1458, %v1450
    %v2147 = vpack.c.b16 %v1467, %v1459
    %v2148 = vpack.c.b16 %v1468, %v1460
    %v2149 = vpack.c.b16 %v1469, %v1461
    %v2150 = vpack.c.b16 %v1470, %v1462
    %v2151 = vpack.c.b16 %v1471, %v1463
    %v2152 = vpack.c.b16 %v1472, %v1464
    %v2153 = vpack.c.b16 %v1473, %v1465
    %v2154 = vpack.c.b16 %v1474, %v1466
    %v2155 = vpack.c.b16 %v1483, %v1475
    %v2156 = vpack.c.b16 %v1484, %v1476
    %v2157 = vpack.c.b16 %v1485, %v1477
    %v2158 = vpack.c.b16 %v1486, %v1478
    %v2159 = vpack.c.b16 %v1487, %v1479
    %v2160 = vpack.c.b16 %v1488, %v1480
    %v2161 = vpack.c.b16 %v1489, %v1481
    %v2162 = vpack.c.b16 %v1490, %v1482
    %v2163 = vpack.c.b16 %v1499, %v1491
    %v2164 = vpack.c.b16 %v1500, %v1492
    %v2165 = vpack.c.b16 %v1501, %v1493
    %v2166 = vpack.c.b16 %v1502, %v1494
    %v2167 = vpack.c.b16 %v1503, %v1495
    %v2168 = vpack.c.b16 %v1504, %v1496
    %v2169 = vpack.c.b16 %v1505, %v1497
    %v2170 = vpack.c.b16 %v1506, %v1498
    %v2171 = vpack.c.b16 %v1515, %v1507
    %v2172 = vpack.c.b16 %v1516, %v1508
    %v2173 = vpack.c.b16 %v1517, %v1509
    %v2174 = vpack.c.b16 %v1518, %v1510
    %v2175 = vpack.c.b16 %v1519, %v1511
    %v2176 = vpack.c.b16 %v1520, %v1512
    %v2177 = vpack.c.b16 %v1521, %v1513
    %v2178 = vpack.c.b16 %v1522, %v1514
    %v2179 = vpack.c.b16 %v1531, %v1523
    %v2180 = vpack.c.b16 %v1532, %v1524
    %v2181 = vpack.c.b16 %v1533, %v1525
    %v2182 = vpack.c.b16 %v1534, %v1526
    %v2183 = vpack.c.b16 %v1535, %v1527
    %v2184 = vpack.c.b16 %v1536, %v1528
    %v2185 = vpack.c.b16 %v1537, %v1529
    %v2186 = vpack.c.b16 %v1538, %v1530
    %v2187 = vpack.c.b16 %v1547, %v1539
    %v2188 = vpack.c.b16 %v1548, %v1540
    %v2189 = vpack.c.b16 %v1549, %v1541
    %v2190 = vpack.c.b16 %v1550, %v1542
    %v2191 = vpack.c.b16 %v1551, %v1543
    %v2192 = vpack.c.b16 %v1552, %v1544
    %v2193 = vpack.c.b16 %v1553, %v1545
    %v2194 = vpack.c.b16 %v1554, %v1546
    %v2195 = vpack.c.b16 %v1563, %v1555
    %v2196 = vpack.c.b16 %v1564, %v1556
    %v2197 = vpack.c.b16 %v1565, %v1557
    %v2198 = vpack.c.b16 %v1566, %v1558
    %v2199 = vpack.c.b16 %v1567, %v1559
    %v2200 = vpack.c.b16 %v1568, %v1560
    %v2201 = vpack.c.b16 %v1569, %v1561
    %v2202 = vpack.c.b16 %v1570, %v1562
    %v2203 = vpack.c.b16 %v1579, %v1571
    %v2204 = vpack.c.b16 %v1580, %v1572
    %v2205 = vpack.c.b16 %v1581, %v1573
    %v2206 = vpack.c.b16 %v1582, %v1574
    %v2207 = vpack.c.b16 %v1583, %v1575
    %v2208 = vpack.c.b16 %v1584, %v1576
    %v2209 = vpack.c.b16 %v1585, %v1577
    %v2210 = vpack.c.b16 %v1586, %v1578
    %v2211 = vpack.c.b16 %v1595, %v1587
    %v2212 = vpack.c.b16 %v1596, %v1588
    %v2213 = vpack.c.b16 %v1597, %v1589
    %v2214 = vpack.c.b16 %v1598, %v1590
    %v2215 = vpack.c.b16 %v1599, %v1591
    %v2216 = vpack.c.b16 %v1600, %v1592
    %v2217 = vpack.c.b16 %v1601, %v1593
    %v2218 = vpack.c.b16 %v1602, %v1594
    %v2219 = vpack.c.b16 %v1611, %v1603
    %v2220 = vpack.c.b16 %v1612, %v1604
    %v2221 = vpack.c.b16 %v1613, %v1605
    %v2222 = vpack.c.b16 %v1614, %v1606
    %v2223 = vpack.c.b16 %v1615, %v1607
    %v2224 = vpack.c.b16 %v1616, %v1608
    %v2225 = vpack.c.b16 %v1617, %v1609
    %v2226 = vpack.c.b16 %v1618, %v1610
    %v2227 = vpack.c.b16 %v1627, %v1619
    %v2228 = vpack.c.b16 %v1628, %v1620
    %v2229 = vpack.c.b16 %v1629, %v1621
    %v2230 = vpack.c.b16 %v1630, %v1622
    %v2231 = vpack.c.b16 %v1631, %v1623
    %v2232 = vpack.c.b16 %v1632, %v1624
    %v2233 = vpack.c.b16 %v1633, %v1625
    %v2234 = vpack.c.b16 %v1634, %v1626
    %v2235 = vpack.c.b16 %v1643, %v1635
    %v2236 = vpack.c.b16 %v1644, %v1636
    %v2237 = vpack.c.b16 %v1645, %v1637
    %v2238 = vpack.c.b16 %v1646, %v1638
    %v2239 = vpack.c.b16 %v1647, %v1639
    %v2240 = vpack.c.b16 %v1648, %v1640
    %v2241 = vpack.c.b16 %v1649, %v1641
    %v2242 = vpack.c.b16 %v1650, %v1642
    %v2243 = vpack.c.b16 %v1659, %v1651
    %v2244 = vpack.c.b16 %v1660, %v1652
    %v2245 = vpack.c.b16 %v1661, %v1653
    %v2246 = vpack.c.b16 %v1662, %v1654
    %v2247 = vpack.c.b16 %v1663, %v1655
    %v2248 = vpack.c.b16 %v1664, %v1656
    %v2249 = vpack.c.b16 %v1665, %v1657
    %v2250 = vpack.c.b16 %v1666, %v1658
    %v2251 = vpack.c.b16 %v1675, %v1667
    %v2252 = vpack.c.b16 %v1676, %v1668
    %v2253 = vpack.c.b16 %v1677, %v1669
    %v2254 = vpack.c.b16 %v1678, %v1670
    %v2255 = vpack.c.b16 %v1679, %v1671
    %v2256 = vpack.c.b16 %v1680, %v1672
    %v2257 = vpack.c.b16 %v1681, %v1673
    %v2258 = vpack.c.b16 %v1682, %v1674
    %v2259 = vpack.c.b16 %v1691, %v1683
    %v2260 = vpack.c.b16 %v1692, %v1684
    %v2261 = vpack.c.b16 %v1693, %v1685
    %v2262 = vpack.c.b16 %v1694, %v1686
    %v2263 = vpack.c.b16 %v1695, %v1687
    %v2264 = vpack.c.b16 %v1696, %v1688
    %v2265 = vpack.c.b16 %v1697, %v1689
    %v2266 = vpack.c.b16 %v1698, %v1690
    %v2267 = vpack.c.b16 %v1707, %v1699
    %v2268 = vpack.c.b16 %v1708, %v1700
    %v2269 = vpack.c.b16 %v1709, %v1701
    %v2270 = vpack.c.b16 %v1710, %v1702
    %v2271 = vpack.c.b16 %v1711, %v1703
    %v2272 = vpack.c.b16 %v1712, %v1704
    %v2273 = vpack.c.b16 %v1713, %v1705
    %v2274 = vpack.c.b16 %v1714, %v1706
    %v2275 = vpack.c.b16 %v1723, %v1715
    %v2276 = vpack.c.b16 %v1724, %v1716
    %v2277 = vpack.c.b16 %v1725, %v1717
    %v2278 = vpack.c.b16 %v1726, %v1718
    %v2279 = vpack.c.b16 %v1727, %v1719
    %v2280 = vpack.c.b16 %v1728, %v1720
    %v2281 = vpack.c.b16 %v1729, %v1721
    %v2282 = vpack.c.b16 %v1730, %v1722
    %v2283 = vpack.c.b16 %v1739, %v1731
    %v2284 = vpack.c.b16 %v1740, %v1732
    %v2285 = vpack.c.b16 %v1741, %v1733
    %v2286 = vpack.c.b16 %v1742, %v1734
    %v2287 = vpack.c.b16 %v1743, %v1735
    %v2288 = vpack.c.b16 %v1744, %v1736
    %v2289 = vpack.c.b16 %v1745, %v1737
    %v2290 = vpack.c.b16 %v1746, %v1738
    %v2291 = vpack.c.b16 %v1755, %v1747
    %v2292 = vpack.c.b16 %v1756, %v1748
    %v2293 = vpack.c.b16 %v1757, %v1749
    %v2294 = vpack.c.b16 %v1758, %v1750
    %v2295 = vpack.c.b16 %v1759, %v1751
    %v2296 = vpack.c.b16 %v1760, %v1752
    %v2297 = vpack.c.b16 %v1761, %v1753
    %v2298 = vpack.c.b16 %v1762, %v1754
    %v2299 = vpack.c.b16 %v1771, %v1763
    %v2300 = vpack.c.b16 %v1772, %v1764
    %v2301 = vpack.c.b16 %v1773, %v1765
    %v2302 = vpack.c.b16 %v1774, %v1766
    %v2303 = vpack.c.b16 %v1775, %v1767
    %v2304 = vpack.c.b16 %v1776, %v1768
    %v2305 = vpack.c.b16 %v1777, %v1769
    %v2306 = vpack.c.b16 %v1778, %v1770
    %v2307 = vpack.c.b16 %v1787, %v1779
    %v2308 = vpack.c.b16 %v1788, %v1780
    %v2309 = vpack.c.b16 %v1789, %v1781
    %v2310 = vpack.c.b16 %v1790, %v1782
    %v2311 = vpack.c.b16 %v1791, %v1783
    %v2312 = vpack.c.b16 %v1792, %v1784
    %v2313 = vpack.c.b16 %v1793, %v1785
    %v2314 = vpack.c.b16 %v1794, %v1786
    %v2315 = vpack.c.b16 %v1803, %v1795
    %v2316 = vpack.c.b16 %v1804, %v1796
    %v2317 = vpack.c.b16 %v1805, %v1797
    %v2318 = vpack.c.b16 %v1806, %v1798
    %v2319 = vpack.c.b16 %v1807, %v1799
    %v2320 = vpack.c.b16 %v1808, %v1800
    %v2321 = vpack.c.b16 %v1809, %v1801
    %v2322 = vpack.c.b16 %v1810, %v1802
    %v2323 = vpack.c.b16 %v1819, %v1811
    %v2324 = vpack.c.b16 %v1820, %v1812
    %v2325 = vpack.c.b16 %v1821, %v1813
    %v2326 = vpack.c.b16 %v1822, %v1814
    %v2327 = vpack.c.b16 %v1823, %v1815
    %v2328 = vpack.c.b16 %v1824, %v1816
    %v2329 = vpack.c.b16 %v1825, %v1817
    %v2330 = vpack.c.b16 %v1826, %v1818
    %v2331 = vpack.c.b16 %v1835, %v1827
    %v2332 = vpack.c.b16 %v1836, %v1828
    %v2333 = vpack.c.b16 %v1837, %v1829
    %v2334 = vpack.c.b16 %v1838, %v1830
    %v2335 = vpack.c.b16 %v1839, %v1831
    %v2336 = vpack.c.b16 %v1840, %v1832
    %v2337 = vpack.c.b16 %v1841, %v1833
    %v2338 = vpack.c.b16 %v1842, %v1834
    %v2339 = vpack.c.b16 %v1851, %v1843
    %v2340 = vpack.c.b16 %v1852, %v1844
    %v2341 = vpack.c.b16 %v1853, %v1845
    %v2342 = vpack.c.b16 %v1854, %v1846
    %v2343 = vpack.c.b16 %v1855, %v1847
    %v2344 = vpack.c.b16 %v1856, %v1848
    %v2345 = vpack.c.b16 %v1857, %v1849
    %v2346 = vpack.c.b16 %v1858, %v1850
    %v2347 = vpack.c.b16 %v1867, %v1859
    %v2348 = vpack.c.b16 %v1868, %v1860
    %v2349 = vpack.c.b16 %v1869, %v1861
    %v2350 = vpack.c.b16 %v1870, %v1862
    %v2351 = vpack.c.b16 %v1871, %v1863
    %v2352 = vpack.c.b16 %v1872, %v1864
    %v2353 = vpack.c.b16 %v1873, %v1865
    %v2354 = vpack.c.b16 %v1874, %v1866
    %v2355 = vpack.c.b16 %v1883, %v1875
    %v2356 = vpack.c.b16 %v1884, %v1876
    %v2357 = vpack.c.b16 %v1885, %v1877
    %v2358 = vpack.c.b16 %v1886, %v1878
    %v2359 = vpack.c.b16 %v1887, %v1879
    %v2360 = vpack.c.b16 %v1888, %v1880
    %v2361 = vpack.c.b16 %v1889, %v1881
    %v2362 = vpack.c.b16 %v1890, %v1882
    %v2363 = vpack.c.b16 %v1899, %v1891
    %v2364 = vpack.c.b16 %v1900, %v1892
    %v2365 = vpack.c.b16 %v1901, %v1893
    %v2366 = vpack.c.b16 %v1902, %v1894
    %v2367 = vpack.c.b16 %v1903, %v1895
    %v2368 = vpack.c.b16 %v1904, %v1896
    %v2369 = vpack.c.b16 %v1905, %v1897
    %v2370 = vpack.c.b16 %v1906, %v1898
    %v2371 = vpack.c.b16 %v1915, %v1907
    %v2372 = vpack.c.b16 %v1916, %v1908
    %v2373 = vpack.c.b16 %v1917, %v1909
    %v2374 = vpack.c.b16 %v1918, %v1910
    %v2375 = vpack.c.b16 %v1919, %v1911
    %v2376 = vpack.c.b16 %v1920, %v1912
    %v2377 = vpack.c.b16 %v1921, %v1913
    %v2378 = vpack.c.b16 %v1922, %v1914
    %v2379 = vpack.c.b16 %v1931, %v1923
    %v2380 = vpack.c.b16 %v1932, %v1924
    %v2381 = vpack.c.b16 %v1933, %v1925
    %v2382 = vpack.c.b16 %v1934, %v1926
    %v2383 = vpack.c.b16 %v1935, %v1927
    %v2384 = vpack.c.b16 %v1936, %v1928
    %v2385 = vpack.c.b16 %v1937, %v1929
    %v2386 = vpack.c.b16 %v1938, %v1930
    %2835 = vmatprep.subr.bf16.mxu0 %v1940
    %2836 = vmatpush1.bf16.msra.mxu0 %v1939
    %2837 = vmatprep.subr.bf16.mxu0 %v1948
    %2838 = vmatpush1.bf16.msra.mxu0 %v1947
    %2839 = vmatprep.subr.bf16.mxu0 %v1956
    %2840 = vmatpush1.bf16.msra.mxu0 %v1955
    %2841 = vmatprep.subr.bf16.mxu0 %v1964
    %2842 = vmatpush1.bf16.msra.mxu0 %v1963
    %2843 = vmatprep.subr.bf16.mxu0 %v1972
    %2844 = vmatpush1.bf16.msra.mxu0 %v1971
    %2845 = vmatprep.subr.bf16.mxu0 %v1980
    %2846 = vmatpush1.bf16.msra.mxu0 %v1979
    %2847 = vmatprep.subr.bf16.mxu0 %v1988
    %2848 = vmatpush1.bf16.msra.mxu0 %v1987
    %2849 = vmatprep.subr.bf16.mxu0 %v1996
    %2850 = vmatpush1.bf16.msra.mxu0 %v1995
    %2851 = vmatprep.subr.bf16.mxu0 %v2004
    %2852 = vmatpush1.bf16.msra.mxu0 %v2003
    %2853 = vmatprep.subr.bf16.mxu0 %v2012
    %2854 = vmatpush1.bf16.msra.mxu0 %v2011
    %2855 = vmatprep.subr.bf16.mxu0 %v2020
    %2856 = vmatpush1.bf16.msra.mxu0 %v2019
    %2857 = vmatprep.subr.bf16.mxu0 %v2028
    %2858 = vmatpush1.bf16.msra.mxu0 %v2027
    %2859 = vmatprep.subr.bf16.mxu0 %v2036
    %2860 = vmatpush1.bf16.msra.mxu0 %v2035
    %2861 = vmatprep.subr.bf16.mxu0 %v2044
    %2862 = vmatpush1.bf16.msra.mxu0 %v2043
    %2863 = vmatprep.subr.bf16.mxu0 %v2052
    %2864 = vmatpush1.bf16.msra.mxu0 %v2051
    %2865 = vmatprep.subr.bf16.mxu0 %v2060
    %2866 = vmatpush1.bf16.msra.mxu0 %v2059
    %2867 = vmatprep.mubr.bf16.mxu0 %v582
    %2868 = vmatmul.mubr.bf16.gmra.mrb[0].mxu0 %v581
    %v2869 = vpop.f32.mrb[0].mxu0
    %v2870 = vadd.f32 %v533, %v2869
    %v2871 = vpop.f32.mrb[0].mxu0
    %v2872 = vadd.f32 %v537, %v2871
    %v2873 = vpop.f32.mrb[0].mxu0
    %v2874 = vpop.f32.mrb[0].mxu0
    %2875 = vdwg.mxu0
    %2876 = vmatprep.subr.bf16.mxu0 %v2068
    %2877 = vmatpush1.bf16.msra.mxu0 %v2067
    %2878 = vmatprep.subr.bf16.mxu0 %v2076
    %2879 = vmatpush1.bf16.msra.mxu0 %v2075
    %2880 = vmatprep.subr.bf16.mxu0 %v2084
    %2881 = vmatpush1.bf16.msra.mxu0 %v2083
    %2882 = vmatprep.subr.bf16.mxu0 %v2092
    %2883 = vmatpush1.bf16.msra.mxu0 %v2091
    %2884 = vmatprep.subr.bf16.mxu0 %v2100
    %2885 = vmatpush1.bf16.msra.mxu0 %v2099
    %2886 = vmatprep.subr.bf16.mxu0 %v2108
    %2887 = vmatpush1.bf16.msra.mxu0 %v2107
    %2888 = vmatprep.subr.bf16.mxu0 %v2116
    %2889 = vmatpush1.bf16.msra.mxu0 %v2115
    %2890 = vmatprep.subr.bf16.mxu0 %v2124
    %2891 = vmatpush1.bf16.msra.mxu0 %v2123
    %2892 = vmatprep.subr.bf16.mxu0 %v2132
    %2893 = vmatpush1.bf16.msra.mxu0 %v2131
    %2894 = vmatprep.subr.bf16.mxu0 %v2140
    %2895 = vmatpush1.bf16.msra.mxu0 %v2139
    %2896 = vmatprep.subr.bf16.mxu0 %v2148
    %2897 = vmatpush1.bf16.msra.mxu0 %v2147
    %2898 = vmatprep.subr.bf16.mxu0 %v2156
    %2899 = vmatpush1.bf16.msra.mxu0 %v2155
    %2900 = vmatprep.subr.bf16.mxu0 %v2164
    %2901 = vmatpush1.bf16.msra.mxu0 %v2163
    %2902 = vmatprep.subr.bf16.mxu0 %v2172
    %2903 = vmatpush1.bf16.msra.mxu0 %v2171
    %2904 = vmatprep.subr.bf16.mxu0 %v2180
    %2905 = vmatpush1.bf16.msra.mxu0 %v2179
    %2906 = vmatprep.subr.bf16.mxu0 %v2188
    %2907 = vmatpush1.bf16.msra.mxu0 %v2187
    %2908 = vmatprep.mubr.bf16.mxu0 %v584
    %2909 = vmatmul.mubr.bf16.gmra.mrb[0].mxu0 %v583
    %v2910 = vpop.f32.mrb[0].mxu0
    %v2911 = vadd.f32 %v2870, %v2910
    %v2912 = vpop.f32.mrb[0].mxu0
    %v2913 = vadd.f32 %v2872, %v2912
    %v2914 = vpop.f32.mrb[0].mxu0
    %v2915 = vpop.f32.mrb[0].mxu0
    %2916 = vdwg.mxu0
    %2917 = vmatprep.subr.bf16.mxu0 %v2196
    %2918 = vmatpush1.bf16.msra.mxu0 %v2195
    %2919 = vmatprep.subr.bf16.mxu0 %v2204
    %2920 = vmatpush1.bf16.msra.mxu0 %v2203
    %2921 = vmatprep.subr.bf16.mxu0 %v2212
    %2922 = vmatpush1.bf16.msra.mxu0 %v2211
    %2923 = vmatprep.subr.bf16.mxu0 %v2220
    %2924 = vmatpush1.bf16.msra.mxu0 %v2219
    %2925 = vmatprep.subr.bf16.mxu0 %v2228
    %2926 = vmatpush1.bf16.msra.mxu0 %v2227
    %2927 = vmatprep.subr.bf16.mxu0 %v2236
    %2928 = vmatpush1.bf16.msra.mxu0 %v2235
    %2929 = vmatprep.subr.bf16.mxu0 %v2244
    %2930 = vmatpush1.bf16.msra.mxu0 %v2243
    %2931 = vmatprep.subr.bf16.mxu0 %v2252
    %2932 = vmatpush1.bf16.msra.mxu0 %v2251
    %2933 = vmatprep.subr.bf16.mxu0 %v2260
    %2934 = vmatpush1.bf16.msra.mxu0 %v2259
    %2935 = vmatprep.subr.bf16.mxu0 %v2268
    %2936 = vmatpush1.bf16.msra.mxu0 %v2267
    %2937 = vmatprep.subr.bf16.mxu0 %v2276
    %2938 = vmatpush1.bf16.msra.mxu0 %v2275
    %2939 = vmatprep.subr.bf16.mxu0 %v2284
    %2940 = vmatpush1.bf16.msra.mxu0 %v2283
    %2941 = vmatprep.subr.bf16.mxu0 %v2292
    %2942 = vmatpush1.bf16.msra.mxu0 %v2291
    %2943 = vmatprep.subr.bf16.mxu0 %v2300
    %2944 = vmatpush1.bf16.msra.mxu0 %v2299
    %2945 = vmatprep.subr.bf16.mxu0 %v2308
    %2946 = vmatpush1.bf16.msra.mxu0 %v2307
    %2947 = vmatprep.subr.bf16.mxu0 %v2316
    %2948 = vmatpush1.bf16.msra.mxu0 %v2315
    %2949 = vmatprep.mubr.bf16.mxu0 %v586
    %2950 = vmatmul.mubr.bf16.gmra.mrb[0].mxu0 %v585
    %v2951 = vpop.f32.mrb[0].mxu0
    %v2952 = vadd.f32 %v2911, %v2951
    %v2953 = vpop.f32.mrb[0].mxu0
    %v2954 = vadd.f32 %v2913, %v2953
    %v2955 = vpop.f32.mrb[0].mxu0
    %v2956 = vpop.f32.mrb[0].mxu0
    %2957 = vdwg.mxu0
    %2958 = vmatprep.subr.bf16.mxu0 %v2324
    %2959 = vmatpush1.bf16.msra.mxu0 %v2323
    %2960 = vmatprep.subr.bf16.mxu0 %v2332
    %2961 = vmatpush1.bf16.msra.mxu0 %v2331
    %2962 = vmatprep.subr.bf16.mxu0 %v2340
    %2963 = vmatpush1.bf16.msra.mxu0 %v2339
    %2964 = vmatprep.subr.bf16.mxu0 %v2348
    %2965 = vmatpush1.bf16.msra.mxu0 %v2347
    %2966 = vmatprep.subr.bf16.mxu0 %v2356
    %2967 = vmatpush1.bf16.msra.mxu0 %v2355
    %2968 = vmatprep.subr.bf16.mxu0 %v2364
    %2969 = vmatpush1.bf16.msra.mxu0 %v2363
    %2970 = vmatprep.subr.bf16.mxu0 %v2372
    %2971 = vmatpush1.bf16.msra.mxu0 %v2371
    %2972 = vmatprep.subr.bf16.mxu0 %v2380
    %2973 = vmatpush1.bf16.msra.mxu0 %v2379
    %2974 = vmatprep.subr.bf16.mxu0 0
    %2975 = vmatpush1.bf16.msra.mxu0 0
    %2976 = vmatprep.subr.bf16.mxu0 0
    %2977 = vmatpush1.bf16.msra.mxu0 0
    %2978 = vmatprep.subr.bf16.mxu0 0
    %2979 = vmatpush1.bf16.msra.mxu0 0
    %2980 = vmatprep.subr.bf16.mxu0 0
    %2981 = vmatpush1.bf16.msra.mxu0 0
    %2982 = vmatprep.subr.bf16.mxu0 0
    %2983 = vmatpush1.bf16.msra.mxu0 0
    %2984 = vmatprep.subr.bf16.mxu0 0
    %2985 = vmatpush1.bf16.msra.mxu0 0
    %2986 = vmatprep.subr.bf16.mxu0 0
    %2987 = vmatpush1.bf16.msra.mxu0 0
    %2988 = vmatprep.subr.bf16.mxu0 0
    %2989 = vmatpush1.bf16.msra.mxu0 0
    %2990 = vmatprep.mubr.bf16.mxu0 0
    %2991 = vmatmul.mubr.bf16.gmra.mrb[0].mxu0 %v587
    %v2992 = vpop.f32.mrb[0].mxu0
    %v2993 = vadd.f32 %v2952, %v2992
    %v2994 = vpop.f32.mrb[0].mxu0
    %v2995 = vadd.f32 %v2954, %v2994
    %v2996 = vpop.f32.mrb[0].mxu0
    %v2997 = vpop.f32.mrb[0].mxu0
    %2998 = vdwg.mxu0
    %2999 = vmatprep.subr.bf16.mxu0 %v1942
    %3000 = vmatpush1.bf16.msra.mxu0 %v1941
    %3001 = vmatprep.subr.bf16.mxu0 %v1950
    %3002 = vmatpush1.bf16.msra.mxu0 %v1949
    %3003 = vmatprep.subr.bf16.mxu0 %v1958
    %3004 = vmatpush1.bf16.msra.mxu0 %v1957
    %3005 = vmatprep.subr.bf16.mxu0 %v1966
    %3006 = vmatpush1.bf16.msra.mxu0 %v1965
    %3007 = vmatprep.subr.bf16.mxu0 %v1974
    %3008 = vmatpush1.bf16.msra.mxu0 %v1973
    %3009 = vmatprep.subr.bf16.mxu0 %v1982
    %3010 = vmatpush1.bf16.msra.mxu0 %v1981
    %3011 = vmatprep.subr.bf16.mxu0 %v1990
    %3012 = vmatpush1.bf16.msra.mxu0 %v1989
    %3013 = vmatprep.subr.bf16.mxu0 %v1998
    %3014 = vmatpush1.bf16.msra.mxu0 %v1997
    %3015 = vmatprep.subr.bf16.mxu0 %v2006
    %3016 = vmatpush1.bf16.msra.mxu0 %v2005
    %3017 = vmatprep.subr.bf16.mxu0 %v2014
    %3018 = vmatpush1.bf16.msra.mxu0 %v2013
    %3019 = vmatprep.subr.bf16.mxu0 %v2022
    %3020 = vmatpush1.bf16.msra.mxu0 %v2021
    %3021 = vmatprep.subr.bf16.mxu0 %v2030
    %3022 = vmatpush1.bf16.msra.mxu0 %v2029
    %3023 = vmatprep.subr.bf16.mxu0 %v2038
    %3024 = vmatpush1.bf16.msra.mxu0 %v2037
    %3025 = vmatprep.subr.bf16.mxu0 %v2046
    %3026 = vmatpush1.bf16.msra.mxu0 %v2045
    %3027 = vmatprep.subr.bf16.mxu0 %v2054
    %3028 = vmatpush1.bf16.msra.mxu0 %v2053
    %3029 = vmatprep.subr.bf16.mxu0 %v2062
    %3030 = vmatpush1.bf16.msra.mxu0 %v2061
    %3031 = vmatprep.mubr.bf16.mxu0 %v582
    %3032 = vmatmul.mubr.bf16.gmra.mrb[0].mxu0 %v581
    %v3033 = vpop.f32.mrb[0].mxu0
    %v3034 = vadd.f32 %v541, %v3033
    %v3035 = vpop.f32.mrb[0].mxu0
    %v3036 = vadd.f32 %v545, %v3035
    %v3037 = vpop.f32.mrb[0].mxu0
    %v3038 = vpop.f32.mrb[0].mxu0
    %3039 = vdwg.mxu0
    %3040 = vmatprep.subr.bf16.mxu0 %v2070
    %3041 = vmatpush1.bf16.msra.mxu0 %v2069
    %3042 = vmatprep.subr.bf16.mxu0 %v2078
    %3043 = vmatpush1.bf16.msra.mxu0 %v2077
    %3044 = vmatprep.subr.bf16.mxu0 %v2086
    %3045 = vmatpush1.bf16.msra.mxu0 %v2085
    %3046 = vmatprep.subr.bf16.mxu0 %v2094
    %3047 = vmatpush1.bf16.msra.mxu0 %v2093
    %3048 = vmatprep.subr.bf16.mxu0 %v2102
    %3049 = vmatpush1.bf16.msra.mxu0 %v2101
    %3050 = vmatprep.subr.bf16.mxu0 %v2110
    %3051 = vmatpush1.bf16.msra.mxu0 %v2109
    %3052 = vmatprep.subr.bf16.mxu0 %v2118
    %3053 = vmatpush1.bf16.msra.mxu0 %v2117
    %3054 = vmatprep.subr.bf16.mxu0 %v2126
    %3055 = vmatpush1.bf16.msra.mxu0 %v2125
    %3056 = vmatprep.subr.bf16.mxu0 %v2134
    %3057 = vmatpush1.bf16.msra.mxu0 %v2133
    %3058 = vmatprep.subr.bf16.mxu0 %v2142
    %3059 = vmatpush1.bf16.msra.mxu0 %v2141
    %3060 = vmatprep.subr.bf16.mxu0 %v2150
    %3061 = vmatpush1.bf16.msra.mxu0 %v2149
    %3062 = vmatprep.subr.bf16.mxu0 %v2158
    %3063 = vmatpush1.bf16.msra.mxu0 %v2157
    %3064 = vmatprep.subr.bf16.mxu0 %v2166
    %3065 = vmatpush1.bf16.msra.mxu0 %v2165
    %3066 = vmatprep.subr.bf16.mxu0 %v2174
    %3067 = vmatpush1.bf16.msra.mxu0 %v2173
    %3068 = vmatprep.subr.bf16.mxu0 %v2182
    %3069 = vmatpush1.bf16.msra.mxu0 %v2181
    %3070 = vmatprep.subr.bf16.mxu0 %v2190
    %3071 = vmatpush1.bf16.msra.mxu0 %v2189
    %3072 = vmatprep.mubr.bf16.mxu0 %v584
    %3073 = vmatmul.mubr.bf16.gmra.mrb[0].mxu0 %v583
    %v3074 = vpop.f32.mrb[0].mxu0
    %v3075 = vadd.f32 %v3034, %v3074
    %v3076 = vpop.f32.mrb[0].mxu0
    %v3077 = vadd.f32 %v3036, %v3076
    %v3078 = vpop.f32.mrb[0].mxu0
    %v3079 = vpop.f32.mrb[0].mxu0
    %3080 = vdwg.mxu0
    %3081 = vmatprep.subr.bf16.mxu0 %v2198
    %3082 = vmatpush1.bf16.msra.mxu0 %v2197
    %3083 = vmatprep.subr.bf16.mxu0 %v2206
    %3084 = vmatpush1.bf16.msra.mxu0 %v2205
    %3085 = vmatprep.subr.bf16.mxu0 %v2214
    %3086 = vmatpush1.bf16.msra.mxu0 %v2213
    %3087 = vmatprep.subr.bf16.mxu0 %v2222
    %3088 = vmatpush1.bf16.msra.mxu0 %v2221
    %3089 = vmatprep.subr.bf16.mxu0 %v2230
    %3090 = vmatpush1.bf16.msra.mxu0 %v2229
    %3091 = vmatprep.subr.bf16.mxu0 %v2238
    %3092 = vmatpush1.bf16.msra.mxu0 %v2237
    %3093 = vmatprep.subr.bf16.mxu0 %v2246
    %3094 = vmatpush1.bf16.msra.mxu0 %v2245
    %3095 = vmatprep.subr.bf16.mxu0 %v2254
    %3096 = vmatpush1.bf16.msra.mxu0 %v2253
    %3097 = vmatprep.subr.bf16.mxu0 %v2262
    %3098 = vmatpush1.bf16.msra.mxu0 %v2261
    %3099 = vmatprep.subr.bf16.mxu0 %v2270
    %3100 = vmatpush1.bf16.msra.mxu0 %v2269
    %3101 = vmatprep.subr.bf16.mxu0 %v2278
    %3102 = vmatpush1.bf16.msra.mxu0 %v2277
    %3103 = vmatprep.subr.bf16.mxu0 %v2286
    %3104 = vmatpush1.bf16.msra.mxu0 %v2285
    %3105 = vmatprep.subr.bf16.mxu0 %v2294
    %3106 = vmatpush1.bf16.msra.mxu0 %v2293
    %3107 = vmatprep.subr.bf16.mxu0 %v2302
    %3108 = vmatpush1.bf16.msra.mxu0 %v2301
    %3109 = vmatprep.subr.bf16.mxu0 %v2310
    %3110 = vmatpush1.bf16.msra.mxu0 %v2309
    %3111 = vmatprep.subr.bf16.mxu0 %v2318
    %3112 = vmatpush1.bf16.msra.mxu0 %v2317
    %3113 = vmatprep.mubr.bf16.mxu0 %v586
    %3114 = vmatmul.mubr.bf16.gmra.mrb[0].mxu0 %v585
    %v3115 = vpop.f32.mrb[0].mxu0
    %v3116 = vadd.f32 %v3075, %v3115
    %v3117 = vpop.f32.mrb[0].mxu0
    %v3118 = vadd.f32 %v3077, %v3117
    %v3119 = vpop.f32.mrb[0].mxu0
    %v3120 = vpop.f32.mrb[0].mxu0
    %3121 = vdwg.mxu0
    %3122 = vmatprep.subr.bf16.mxu0 %v2326
    %3123 = vmatpush1.bf16.msra.mxu0 %v2325
    %3124 = vmatprep.subr.bf16.mxu0 %v2334
    %3125 = vmatpush1.bf16.msra.mxu0 %v2333
    %3126 = vmatprep.subr.bf16.mxu0 %v2342
    %3127 = vmatpush1.bf16.msra.mxu0 %v2341
    %3128 = vmatprep.subr.bf16.mxu0 %v2350
    %3129 = vmatpush1.bf16.msra.mxu0 %v2349
    %3130 = vmatprep.subr.bf16.mxu0 %v2358
    %3131 = vmatpush1.bf16.msra.mxu0 %v2357
    %3132 = vmatprep.subr.bf16.mxu0 %v2366
    %3133 = vmatpush1.bf16.msra.mxu0 %v2365
    %3134 = vmatprep.subr.bf16.mxu0 %v2374
    %3135 = vmatpush1.bf16.msra.mxu0 %v2373
    %3136 = vmatprep.subr.bf16.mxu0 %v2382
    %3137 = vmatpush1.bf16.msra.mxu0 %v2381
    %3138 = vmatprep.subr.bf16.mxu0 0
    %3139 = vmatpush1.bf16.msra.mxu0 0
    %3140 = vmatprep.subr.bf16.mxu0 0
    %3141 = vmatpush1.bf16.msra.mxu0 0
    %3142 = vmatprep.subr.bf16.mxu0 0
    %3143 = vmatpush1.bf16.msra.mxu0 0
    %3144 = vmatprep.subr.bf16.mxu0 0
    %3145 = vmatpush1.bf16.msra.mxu0 0
    %3146 = vmatprep.subr.bf16.mxu0 0
    %3147 = vmatpush1.bf16.msra.mxu0 0
    %3148 = vmatprep.subr.bf16.mxu0 0
    %3149 = vmatpush1.bf16.msra.mxu0 0
    %3150 = vmatprep.subr.bf16.mxu0 0
    %3151 = vmatpush1.bf16.msra.mxu0 0
    %3152 = vmatprep.subr.bf16.mxu0 0
    %3153 = vmatpush1.bf16.msra.mxu0 0
    %3154 = vmatprep.mubr.bf16.mxu0 0
    %3155 = vmatmul.mubr.bf16.gmra.mrb[0].mxu0 %v587
    %v3156 = vpop.f32.mrb[0].mxu0
    %v3157 = vadd.f32 %v3116, %v3156
    %v3158 = vpop.f32.mrb[0].mxu0
    %v3159 = vadd.f32 %v3118, %v3158
    %v3160 = vpop.f32.mrb[0].mxu0
    %v3161 = vpop.f32.mrb[0].mxu0
    %3162 = vdwg.mxu0
    %3163 = vmatprep.subr.bf16.mxu0 %v1944
    %3164 = vmatpush1.bf16.msra.mxu0 %v1943
    %3165 = vmatprep.subr.bf16.mxu0 %v1952
    %3166 = vmatpush1.bf16.msra.mxu0 %v1951
    %3167 = vmatprep.subr.bf16.mxu0 %v1960
    %3168 = vmatpush1.bf16.msra.mxu0 %v1959
    %3169 = vmatprep.subr.bf16.mxu0 %v1968
    %3170 = vmatpush1.bf16.msra.mxu0 %v1967
    %3171 = vmatprep.subr.bf16.mxu0 %v1976
    %3172 = vmatpush1.bf16.msra.mxu0 %v1975
    %3173 = vmatprep.subr.bf16.mxu0 %v1984
    %3174 = vmatpush1.bf16.msra.mxu0 %v1983
    %3175 = vmatprep.subr.bf16.mxu0 %v1992
    %3176 = vmatpush1.bf16.msra.mxu0 %v1991
    %3177 = vmatprep.subr.bf16.mxu0 %v2000
    %3178 = vmatpush1.bf16.msra.mxu0 %v1999
    %3179 = vmatprep.subr.bf16.mxu0 %v2008
    %3180 = vmatpush1.bf16.msra.mxu0 %v2007
    %3181 = vmatprep.subr.bf16.mxu0 %v2016
    %3182 = vmatpush1.bf16.msra.mxu0 %v2015
    %3183 = vmatprep.subr.bf16.mxu0 %v2024
    %3184 = vmatpush1.bf16.msra.mxu0 %v2023
    %3185 = vmatprep.subr.bf16.mxu0 %v2032
    %3186 = vmatpush1.bf16.msra.mxu0 %v2031
    %3187 = vmatprep.subr.bf16.mxu0 %v2040
    %3188 = vmatpush1.bf16.msra.mxu0 %v2039
    %3189 = vmatprep.subr.bf16.mxu0 %v2048
    %3190 = vmatpush1.bf16.msra.mxu0 %v2047
    %3191 = vmatprep.subr.bf16.mxu0 %v2056
    %3192 = vmatpush1.bf16.msra.mxu0 %v2055
    %3193 = vmatprep.subr.bf16.mxu0 %v2064
    %3194 = vmatpush1.bf16.msra.mxu0 %v2063
    %3195 = vmatprep.mubr.bf16.mxu0 %v582
    %3196 = vmatmul.mubr.bf16.gmra.mrb[0].mxu0 %v581
    %v3197 = vpop.f32.mrb[0].mxu0
    %v3198 = vadd.f32 %v549, %v3197
    %v3199 = vpop.f32.mrb[0].mxu0
    %v3200 = vadd.f32 %v553, %v3199
    %v3201 = vpop.f32.mrb[0].mxu0
    %v3202 = vpop.f32.mrb[0].mxu0
    %3203 = vdwg.mxu0
    %3204 = vmatprep.subr.bf16.mxu0 %v2072
    %3205 = vmatpush1.bf16.msra.mxu0 %v2071
    %3206 = vmatprep.subr.bf16.mxu0 %v2080
    %3207 = vmatpush1.bf16.msra.mxu0 %v2079
    %3208 = vmatprep.subr.bf16.mxu0 %v2088
    %3209 = vmatpush1.bf16.msra.mxu0 %v2087
    %3210 = vmatprep.subr.bf16.mxu0 %v2096
    %3211 = vmatpush1.bf16.msra.mxu0 %v2095
    %3212 = vmatprep.subr.bf16.mxu0 %v2104
    %3213 = vmatpush1.bf16.msra.mxu0 %v2103
    %3214 = vmatprep.subr.bf16.mxu0 %v2112
    %3215 = vmatpush1.bf16.msra.mxu0 %v2111
    %3216 = vmatprep.subr.bf16.mxu0 %v2120
    %3217 = vmatpush1.bf16.msra.mxu0 %v2119
    %3218 = vmatprep.subr.bf16.mxu0 %v2128
    %3219 = vmatpush1.bf16.msra.mxu0 %v2127
    %3220 = vmatprep.subr.bf16.mxu0 %v2136
    %3221 = vmatpush1.bf16.msra.mxu0 %v2135
    %3222 = vmatprep.subr.bf16.mxu0 %v2144
    %3223 = vmatpush1.bf16.msra.mxu0 %v2143
    %3224 = vmatprep.subr.bf16.mxu0 %v2152
    %3225 = vmatpush1.bf16.msra.mxu0 %v2151
    %3226 = vmatprep.subr.bf16.mxu0 %v2160
    %3227 = vmatpush1.bf16.msra.mxu0 %v2159
    %3228 = vmatprep.subr.bf16.mxu0 %v2168
    %3229 = vmatpush1.bf16.msra.mxu0 %v2167
    %3230 = vmatprep.subr.bf16.mxu0 %v2176
    %3231 = vmatpush1.bf16.msra.mxu0 %v2175
    %3232 = vmatprep.subr.bf16.mxu0 %v2184
    %3233 = vmatpush1.bf16.msra.mxu0 %v2183
    %3234 = vmatprep.subr.bf16.mxu0 %v2192
    %3235 = vmatpush1.bf16.msra.mxu0 %v2191
    %3236 = vmatprep.mubr.bf16.mxu0 %v584
    %3237 = vmatmul.mubr.bf16.gmra.mrb[0].mxu0 %v583
    %v3238 = vpop.f32.mrb[0].mxu0
    %v3239 = vadd.f32 %v3198, %v3238
    %v3240 = vpop.f32.mrb[0].mxu0
    %v3241 = vadd.f32 %v3200, %v3240
    %v3242 = vpop.f32.mrb[0].mxu0
    %v3243 = vpop.f32.mrb[0].mxu0
    %3244 = vdwg.mxu0
    %3245 = vmatprep.subr.bf16.mxu0 %v2200
    %3246 = vmatpush1.bf16.msra.mxu0 %v2199
    %3247 = vmatprep.subr.bf16.mxu0 %v2208
    %3248 = vmatpush1.bf16.msra.mxu0 %v2207
    %3249 = vmatprep.subr.bf16.mxu0 %v2216
    %3250 = vmatpush1.bf16.msra.mxu0 %v2215
    %3251 = vmatprep.subr.bf16.mxu0 %v2224
    %3252 = vmatpush1.bf16.msra.mxu0 %v2223
    %3253 = vmatprep.subr.bf16.mxu0 %v2232
    %3254 = vmatpush1.bf16.msra.mxu0 %v2231
    %3255 = vmatprep.subr.bf16.mxu0 %v2240
    %3256 = vmatpush1.bf16.msra.mxu0 %v2239
    %3257 = vmatprep.subr.bf16.mxu0 %v2248
    %3258 = vmatpush1.bf16.msra.mxu0 %v2247
    %3259 = vmatprep.subr.bf16.mxu0 %v2256
    %3260 = vmatpush1.bf16.msra.mxu0 %v2255
    %3261 = vmatprep.subr.bf16.mxu0 %v2264
    %3262 = vmatpush1.bf16.msra.mxu0 %v2263
    %3263 = vmatprep.subr.bf16.mxu0 %v2272
    %3264 = vmatpush1.bf16.msra.mxu0 %v2271
    %3265 = vmatprep.subr.bf16.mxu0 %v2280
    %3266 = vmatpush1.bf16.msra.mxu0 %v2279
    %3267 = vmatprep.subr.bf16.mxu0 %v2288
    %3268 = vmatpush1.bf16.msra.mxu0 %v2287
    %3269 = vmatprep.subr.bf16.mxu0 %v2296
    %3270 = vmatpush1.bf16.msra.mxu0 %v2295
    %3271 = vmatprep.subr.bf16.mxu0 %v2304
    %3272 = vmatpush1.bf16.msra.mxu0 %v2303
    %3273 = vmatprep.subr.bf16.mxu0 %v2312
    %3274 = vmatpush1.bf16.msra.mxu0 %v2311
    %3275 = vmatprep.subr.bf16.mxu0 %v2320
    %3276 = vmatpush1.bf16.msra.mxu0 %v2319
    %3277 = vmatprep.mubr.bf16.mxu0 %v586
    %3278 = vmatmul.mubr.bf16.gmra.mrb[0].mxu0 %v585
    %v3279 = vpop.f32.mrb[0].mxu0
    %v3280 = vadd.f32 %v3239, %v3279
    %v3281 = vpop.f32.mrb[0].mxu0
    %v3282 = vadd.f32 %v3241, %v3281
    %v3283 = vpop.f32.mrb[0].mxu0
    %v3284 = vpop.f32.mrb[0].mxu0
    %3285 = vdwg.mxu0
    %3286 = vmatprep.subr.bf16.mxu0 %v2328
    %3287 = vmatpush1.bf16.msra.mxu0 %v2327
    %3288 = vmatprep.subr.bf16.mxu0 %v2336
    %3289 = vmatpush1.bf16.msra.mxu0 %v2335
    %3290 = vmatprep.subr.bf16.mxu0 %v2344
    %3291 = vmatpush1.bf16.msra.mxu0 %v2343
    %3292 = vmatprep.subr.bf16.mxu0 %v2352
    %3293 = vmatpush1.bf16.msra.mxu0 %v2351
    %3294 = vmatprep.subr.bf16.mxu0 %v2360
    %3295 = vmatpush1.bf16.msra.mxu0 %v2359
    %3296 = vmatprep.subr.bf16.mxu0 %v2368
    %3297 = vmatpush1.bf16.msra.mxu0 %v2367
    %3298 = vmatprep.subr.bf16.mxu0 %v2376
    %3299 = vmatpush1.bf16.msra.mxu0 %v2375
    %3300 = vmatprep.subr.bf16.mxu0 %v2384
    %3301 = vmatpush1.bf16.msra.mxu0 %v2383
    %3302 = vmatprep.subr.bf16.mxu0 0
    %3303 = vmatpush1.bf16.msra.mxu0 0
    %3304 = vmatprep.subr.bf16.mxu0 0
    %3305 = vmatpush1.bf16.msra.mxu0 0
    %3306 = vmatprep.subr.bf16.mxu0 0
    %3307 = vmatpush1.bf16.msra.mxu0 0
    %3308 = vmatprep.subr.bf16.mxu0 0
    %3309 = vmatpush1.bf16.msra.mxu0 0
    %3310 = vmatprep.subr.bf16.mxu0 0
    %3311 = vmatpush1.bf16.msra.mxu0 0
    %3312 = vmatprep.subr.bf16.mxu0 0
    %3313 = vmatpush1.bf16.msra.mxu0 0
    %3314 = vmatprep.subr.bf16.mxu0 0
    %3315 = vmatpush1.bf16.msra.mxu0 0
    %3316 = vmatprep.subr.bf16.mxu0 0
    %3317 = vmatpush1.bf16.msra.mxu0 0
    %3318 = vmatprep.mubr.bf16.mxu0 0
    %3319 = vmatmul.mubr.bf16.gmra.mrb[0].mxu0 %v587
    %v3320 = vpop.f32.mrb[0].mxu0
    %v3321 = vadd.f32 %v3280, %v3320
    %v3322 = vpop.f32.mrb[0].mxu0
    %v3323 = vadd.f32 %v3282, %v3322
    %v3324 = vpop.f32.mrb[0].mxu0
    %v3325 = vpop.f32.mrb[0].mxu0
    %3326 = vdwg.mxu0
    %3327 = vmatprep.subr.bf16.mxu0 %v1946
    %3328 = vmatpush1.bf16.msra.mxu0 %v1945
    %3329 = vmatprep.subr.bf16.mxu0 %v1954
    %3330 = vmatpush1.bf16.msra.mxu0 %v1953
    %3331 = vmatprep.subr.bf16.mxu0 %v1962
    %3332 = vmatpush1.bf16.msra.mxu0 %v1961
    %3333 = vmatprep.subr.bf16.mxu0 %v1970
    %3334 = vmatpush1.bf16.msra.mxu0 %v1969
    %3335 = vmatprep.subr.bf16.mxu0 %v1978
    %3336 = vmatpush1.bf16.msra.mxu0 %v1977
    %3337 = vmatprep.subr.bf16.mxu0 %v1986
    %3338 = vmatpush1.bf16.msra.mxu0 %v1985
    %3339 = vmatprep.subr.bf16.mxu0 %v1994
    %3340 = vmatpush1.bf16.msra.mxu0 %v1993
    %3341 = vmatprep.subr.bf16.mxu0 %v2002
    %3342 = vmatpush1.bf16.msra.mxu0 %v2001
    %3343 = vmatprep.subr.bf16.mxu0 %v2010
    %3344 = vmatpush1.bf16.msra.mxu0 %v2009
    %3345 = vmatprep.subr.bf16.mxu0 %v2018
    %3346 = vmatpush1.bf16.msra.mxu0 %v2017
    %3347 = vmatprep.subr.bf16.mxu0 %v2026
    %3348 = vmatpush1.bf16.msra.mxu0 %v2025
    %3349 = vmatprep.subr.bf16.mxu0 %v2034
    %3350 = vmatpush1.bf16.msra.mxu0 %v2033
    %3351 = vmatprep.subr.bf16.mxu0 %v2042
    %3352 = vmatpush1.bf16.msra.mxu0 %v2041
    %3353 = vmatprep.subr.bf16.mxu0 %v2050
    %3354 = vmatpush1.bf16.msra.mxu0 %v2049
    %3355 = vmatprep.subr.bf16.mxu0 %v2058
    %3356 = vmatpush1.bf16.msra.mxu0 %v2057
    %3357 = vmatprep.subr.bf16.mxu0 %v2066
    %3358 = vmatpush1.bf16.msra.mxu0 %v2065
    %3359 = vmatprep.mubr.bf16.mxu0 %v582
    %3360 = vmatmul.mubr.bf16.gmra.mrb[0].mxu0 %v581
    %v3361 = vpop.f32.mrb[0].mxu0
    %v3362 = vadd.f32 %v557, %v3361
    %v3363 = vpop.f32.mrb[0].mxu0
    %v3364 = vadd.f32 %v561, %v3363
    %v3365 = vpop.f32.mrb[0].mxu0
    %v3366 = vpop.f32.mrb[0].mxu0
    %3367 = vdwg.mxu0
    %3368 = vmatprep.subr.bf16.mxu0 %v2074
    %3369 = vmatpush1.bf16.msra.mxu0 %v2073
    %3370 = vmatprep.subr.bf16.mxu0 %v2082
    %3371 = vmatpush1.bf16.msra.mxu0 %v2081
    %3372 = vmatprep.subr.bf16.mxu0 %v2090
    %3373 = vmatpush1.bf16.msra.mxu0 %v2089
    %3374 = vmatprep.subr.bf16.mxu0 %v2098
    %3375 = vmatpush1.bf16.msra.mxu0 %v2097
    %3376 = vmatprep.subr.bf16.mxu0 %v2106
    %3377 = vmatpush1.bf16.msra.mxu0 %v2105
    %3378 = vmatprep.subr.bf16.mxu0 %v2114
    %3379 = vmatpush1.bf16.msra.mxu0 %v2113
    %3380 = vmatprep.subr.bf16.mxu0 %v2122
    %3381 = vmatpush1.bf16.msra.mxu0 %v2121
    %3382 = vmatprep.subr.bf16.mxu0 %v2130
    %3383 = vmatpush1.bf16.msra.mxu0 %v2129
    %3384 = vmatprep.subr.bf16.mxu0 %v2138
    %3385 = vmatpush1.bf16.msra.mxu0 %v2137
    %3386 = vmatprep.subr.bf16.mxu0 %v2146
    %3387 = vmatpush1.bf16.msra.mxu0 %v2145
    %3388 = vmatprep.subr.bf16.mxu0 %v2154
    %3389 = vmatpush1.bf16.msra.mxu0 %v2153
    %3390 = vmatprep.subr.bf16.mxu0 %v2162
    %3391 = vmatpush1.bf16.msra.mxu0 %v2161
    %3392 = vmatprep.subr.bf16.mxu0 %v2170
    %3393 = vmatpush1.bf16.msra.mxu0 %v2169
    %3394 = vmatprep.subr.bf16.mxu0 %v2178
    %3395 = vmatpush1.bf16.msra.mxu0 %v2177
    %3396 = vmatprep.subr.bf16.mxu0 %v2186
    %3397 = vmatpush1.bf16.msra.mxu0 %v2185
    %3398 = vmatprep.subr.bf16.mxu0 %v2194
    %3399 = vmatpush1.bf16.msra.mxu0 %v2193
    %3400 = vmatprep.mubr.bf16.mxu0 %v584
    %3401 = vmatmul.mubr.bf16.gmra.mrb[0].mxu0 %v583
    %v3402 = vpop.f32.mrb[0].mxu0
    %v3403 = vadd.f32 %v3362, %v3402
    %v3404 = vpop.f32.mrb[0].mxu0
    %v3405 = vadd.f32 %v3364, %v3404
    %v3406 = vpop.f32.mrb[0].mxu0
    %v3407 = vpop.f32.mrb[0].mxu0
    %3408 = vdwg.mxu0
    %3409 = vmatprep.subr.bf16.mxu0 %v2202
    %3410 = vmatpush1.bf16.msra.mxu0 %v2201
    %3411 = vmatprep.subr.bf16.mxu0 %v2210
    %3412 = vmatpush1.bf16.msra.mxu0 %v2209
    %3413 = vmatprep.subr.bf16.mxu0 %v2218
    %3414 = vmatpush1.bf16.msra.mxu0 %v2217
    %3415 = vmatprep.subr.bf16.mxu0 %v2226
    %3416 = vmatpush1.bf16.msra.mxu0 %v2225
    %3417 = vmatprep.subr.bf16.mxu0 %v2234
    %3418 = vmatpush1.bf16.msra.mxu0 %v2233
    %3419 = vmatprep.subr.bf16.mxu0 %v2242
    %3420 = vmatpush1.bf16.msra.mxu0 %v2241
    %3421 = vmatprep.subr.bf16.mxu0 %v2250
    %3422 = vmatpush1.bf16.msra.mxu0 %v2249
    %3423 = vmatprep.subr.bf16.mxu0 %v2258
    %3424 = vmatpush1.bf16.msra.mxu0 %v2257
    %3425 = vmatprep.subr.bf16.mxu0 %v2266
    %3426 = vmatpush1.bf16.msra.mxu0 %v2265
    %3427 = vmatprep.subr.bf16.mxu0 %v2274
    %3428 = vmatpush1.bf16.msra.mxu0 %v2273
    %3429 = vmatprep.subr.bf16.mxu0 %v2282
    %3430 = vmatpush1.bf16.msra.mxu0 %v2281
    %3431 = vmatprep.subr.bf16.mxu0 %v2290
    %3432 = vmatpush1.bf16.msra.mxu0 %v2289
    %3433 = vmatprep.subr.bf16.mxu0 %v2298
    %3434 = vmatpush1.bf16.msra.mxu0 %v2297
    %3435 = vmatprep.subr.bf16.mxu0 %v2306
    %3436 = vmatpush1.bf16.msra.mxu0 %v2305
    %3437 = vmatprep.subr.bf16.mxu0 %v2314
    %3438 = vmatpush1.bf16.msra.mxu0 %v2313
    %3439 = vmatprep.subr.bf16.mxu0 %v2322
    %3440 = vmatpush1.bf16.msra.mxu0 %v2321
    %3441 = vmatprep.mubr.bf16.mxu0 %v586
    %3442 = vmatmul.mubr.bf16.gmra.mrb[0].mxu0 %v585
    %v3443 = vpop.f32.mrb[0].mxu0
    %v3444 = vadd.f32 %v3403, %v3443
    %v3445 = vpop.f32.mrb[0].mxu0
    %v3446 = vadd.f32 %v3405, %v3445
    %v3447 = vpop.f32.mrb[0].mxu0
    %v3448 = vpop.f32.mrb[0].mxu0
    %3449 = vdwg.mxu0
    %3450 = vmatprep.subr.bf16.mxu0 %v2330
    %3451 = vmatpush1.bf16.msra.mxu0 %v2329
    %3452 = vmatprep.subr.bf16.mxu0 %v2338
    %3453 = vmatpush1.bf16.msra.mxu0 %v2337
    %3454 = vmatprep.subr.bf16.mxu0 %v2346
    %3455 = vmatpush1.bf16.msra.mxu0 %v2345
    %3456 = vmatprep.subr.bf16.mxu0 %v2354
    %3457 = vmatpush1.bf16.msra.mxu0 %v2353
    %3458 = vmatprep.subr.bf16.mxu0 %v2362
    %3459 = vmatpush1.bf16.msra.mxu0 %v2361
    %3460 = vmatprep.subr.bf16.mxu0 %v2370
    %3461 = vmatpush1.bf16.msra.mxu0 %v2369
    %3462 = vmatprep.subr.bf16.mxu0 %v2378
    %3463 = vmatpush1.bf16.msra.mxu0 %v2377
    %3464 = vmatprep.subr.bf16.mxu0 %v2386
    %3465 = vmatpush1.bf16.msra.mxu0 %v2385
    %3466 = vmatprep.subr.bf16.mxu0 0
    %3467 = vmatpush1.bf16.msra.mxu0 0
    %3468 = vmatprep.subr.bf16.mxu0 0
    %3469 = vmatpush1.bf16.msra.mxu0 0
    %3470 = vmatprep.subr.bf16.mxu0 0
    %3471 = vmatpush1.bf16.msra.mxu0 0
    %3472 = vmatprep.subr.bf16.mxu0 0
    %3473 = vmatpush1.bf16.msra.mxu0 0
    %3474 = vmatprep.subr.bf16.mxu0 0
    %3475 = vmatpush1.bf16.msra.mxu0 0
    %3476 = vmatprep.subr.bf16.mxu0 0
    %3477 = vmatpush1.bf16.msra.mxu0 0
    %3478 = vmatprep.subr.bf16.mxu0 0
    %3479 = vmatpush1.bf16.msra.mxu0 0
    %3480 = vmatprep.subr.bf16.mxu0 0
    %3481 = vmatpush1.bf16.msra.mxu0 0
    %3482 = vmatprep.mubr.bf16.mxu0 0
    %3483 = vmatmul.mubr.bf16.gmra.mrb[0].mxu0 %v587
    %v3484 = vpop.f32.mrb[0].mxu0
    %v3485 = vadd.f32 %v3444, %v3484
    %v3486 = vpop.f32.mrb[0].mxu0
    %v3487 = vadd.f32 %v3446, %v3486
    %v3488 = vpop.f32.mrb[0].mxu0
    %v3489 = vpop.f32.mrb[0].mxu0
    %3490 = vdwg.mxu0
    %v3491 = vmax.f32 %v2993, 0.0
    %v3492 = vmax.f32 %v2995, 0.0
    %v3493 = vmax.f32 %v3157, 0.0
    %v3494 = vmax.f32 %v3159, 0.0
    %v3495 = vmax.f32 %v3321, 0.0
    %v3496 = vmax.f32 %v3323, 0.0
    %v3497 = vmax.f32 %v3485, 0.0
    %v3498 = vmax.f32 %v3487, 0.0
    %v3499 = vpack.c.bf16 %v3491, %v3491
    %v3500 = vpack.c.bf16 %v3492, %v3492
    %v3501 = vpack.c.bf16 %v3493, %v3493
    %v3502 = vpack.c.bf16 %v3494, %v3494
    %v3503 = vpack.c.bf16 %v3495, %v3495
    %v3504 = vpack.c.bf16 %v3496, %v3496
    %v3505 = vpack.c.bf16 %v3497, %v3497
    %v3506 = vpack.c.bf16 %v3498, %v3498
    %v3507 = vld [vmem:[#allocation4] sm:$0xff]
    %v3508 = vld [vmem:[#allocation4 + $0x8] sm:$0xff]
    %v3509 = vld [vmem:[#allocation4 + $0x10] sm:$0xff]
    %v3510 = vld [vmem:[#allocation4 + $0x18] sm:$0xff]
    %v3511 = vld [vmem:[#allocation4 + $0x20] sm:$0xff]
    %v3512 = vld [vmem:[#allocation4 + $0x28] sm:$0xff]
    %v3513 = vld [vmem:[#allocation4 + $0x30] sm:$0xff]
    %v3514 = vld [vmem:[#allocation4 + $0x38] sm:$0xff]
    %v3515 = vld [vmem:[#allocation4 + $0x40] sm:$0xff]
    %v3516 = vld [vmem:[#allocation4 + $0x48] sm:$0xff]
    %v3517 = vld [vmem:[#allocation4 + $0x50] sm:$0xff]
    %v3518 = vld [vmem:[#allocation4 + $0x58] sm:$0xff]
    %v3519 = vld [vmem:[#allocation4 + $0x60] sm:$0xff]
    %v3520 = vld [vmem:[#allocation4 + $0x68] sm:$0xff]
    %v3521 = vld [vmem:[#allocation4 + $0x70] sm:$0xff]
    %v3522 = vld [vmem:[#allocation4 + $0x78] sm:$0xff]
    %v3523 = vld [vmem:[#allocation4 + $0x80] sm:$0xff]
    %v3524 = vld [vmem:[#allocation4 + $0x88] sm:$0xff]
    %v3525 = vld [vmem:[#allocation4 + $0x90] sm:$0xff]
    %v3526 = vld [vmem:[#allocation4 + $0x98] sm:$0xff]
    %v3527 = vld [vmem:[#allocation4 + $0xa0] sm:$0xff]
    %v3528 = vld [vmem:[#allocation4 + $0xa8] sm:$0xff]
    %v3529 = vld [vmem:[#allocation4 + $0xb0] sm:$0xff]
    %v3530 = vld [vmem:[#allocation4 + $0xb8] sm:$0xff]
    %v3531 = vld [vmem:[#allocation4 + $0xc0] sm:$0xff]
    %v3532 = vld [vmem:[#allocation4 + $0xc8] sm:$0xff]
    %v3533 = vld [vmem:[#allocation4 + $0xd0] sm:$0xff]
    %v3534 = vld [vmem:[#allocation4 + $0xd8] sm:$0xff]
    %v3535 = vld [vmem:[#allocation4 + $0xe0] sm:$0xff]
    %v3536 = vld [vmem:[#allocation4 + $0xe8] sm:$0xff]
    %v3537 = vld [vmem:[#allocation4 + $0xf0] sm:$0xff]
    %v3538 = vld [vmem:[#allocation4 + $0xf8] sm:$0xff]
    %v3539 = vld [vmem:[#allocation4 + $0x100] sm:$0xff]
    %v3540 = vld [vmem:[#allocation4 + $0x108] sm:$0xff]
    %v3541 = vld [vmem:[#allocation4 + $0x110] sm:$0xff]
    %v3542 = vld [vmem:[#allocation4 + $0x118] sm:$0xff]
    %v3543 = vld [vmem:[#allocation4 + $0x120] sm:$0xff]
    %v3544 = vld [vmem:[#allocation4 + $0x128] sm:$0xff]
    %v3545 = vld [vmem:[#allocation4 + $0x130] sm:$0xff]
    %v3546 = vld [vmem:[#allocation4 + $0x138] sm:$0xff]
    %v3547 = vld [vmem:[#allocation4 + $0x140] sm:$0xff]
    %v3548 = vld [vmem:[#allocation4 + $0x148] sm:$0xff]
    %v3549 = vld [vmem:[#allocation4 + $0x150] sm:$0xff]
    %v3550 = vld [vmem:[#allocation4 + $0x158] sm:$0xff]
    %v3551 = vld [vmem:[#allocation4 + $0x160] sm:$0xff]
    %v3552 = vld [vmem:[#allocation4 + $0x168] sm:$0xff]
    %v3553 = vld [vmem:[#allocation4 + $0x170] sm:$0xff]
    %v3554 = vld [vmem:[#allocation4 + $0x178] sm:$0xff]
    %v3555 = vld [vmem:[#allocation4 + $0x180] sm:$0xff]
    %v3556 = vld [vmem:[#allocation4 + $0x188] sm:$0xff]
    %v3557 = vld [vmem:[#allocation4 + $0x190] sm:$0xff]
    %v3558 = vld [vmem:[#allocation4 + $0x198] sm:$0xff]
    %v3559 = vld [vmem:[#allocation4 + $0x1a0] sm:$0xff]
    %v3560 = vld [vmem:[#allocation4 + $0x1a8] sm:$0xff]
    %v3561 = vld [vmem:[#allocation4 + $0x1b0] sm:$0xff]
    %v3562 = vld [vmem:[#allocation4 + $0x1b8] sm:$0xff]
    %v3563 = vld [vmem:[#allocation4 + $0x1c0] sm:$0xff]
    %v3564 = vld [vmem:[#allocation4 + $0x1c8] sm:$0xff]
    %v3565 = vld [vmem:[#allocation4 + $0x1d0] sm:$0xff]
    %v3566 = vld [vmem:[#allocation4 + $0x1d8] sm:$0xff]
    %v3567 = vld [vmem:[#allocation4 + $0x1e0] sm:$0xff]
    %v3568 = vld [vmem:[#allocation4 + $0x1e8] sm:$0xff]
    %v3569 = vld [vmem:[#allocation4 + $0x1f0] sm:$0xff]
    %v3570 = vld [vmem:[#allocation4 + $0x1f8] sm:$0xff]
    %v3571 = vld [vmem:[#allocation4 + $0x200] sm:$0xff]
    %v3572 = vld [vmem:[#allocation4 + $0x208] sm:$0xff]
    %v3573 = vld [vmem:[#allocation4 + $0x210] sm:$0xff]
    %v3574 = vld [vmem:[#allocation4 + $0x218] sm:$0xff]
    %v3575 = vld [vmem:[#allocation4 + $0x220] sm:$0xff]
    %v3576 = vld [vmem:[#allocation4 + $0x228] sm:$0xff]
    %v3577 = vld [vmem:[#allocation4 + $0x230] sm:$0xff]
    %v3578 = vld [vmem:[#allocation4 + $0x238] sm:$0xff]
    %v3579 = vld [vmem:[#allocation4 + $0x240] sm:$0xff]
    %v3580 = vld [vmem:[#allocation4 + $0x248] sm:$0xff]
    %v3581 = vld [vmem:[#allocation4 + $0x250] sm:$0xff]
    %v3582 = vld [vmem:[#allocation4 + $0x258] sm:$0xff]
    %v3583 = vld [vmem:[#allocation4 + $0x260] sm:$0xff]
    %v3584 = vld [vmem:[#allocation4 + $0x268] sm:$0xff]
    %v3585 = vld [vmem:[#allocation4 + $0x270] sm:$0xff]
    %v3586 = vld [vmem:[#allocation4 + $0x278] sm:$0xff]
    %v3587 = vld [vmem:[#allocation4 + $0x280] sm:$0xff]
    %v3588 = vld [vmem:[#allocation4 + $0x288] sm:$0xff]
    %v3589 = vld [vmem:[#allocation4 + $0x290] sm:$0xff]
    %v3590 = vld [vmem:[#allocation4 + $0x298] sm:$0xff]
    %v3591 = vld [vmem:[#allocation4 + $0x2a0] sm:$0xff]
    %v3592 = vld [vmem:[#allocation4 + $0x2a8] sm:$0xff]
    %v3593 = vld [vmem:[#allocation4 + $0x2b0] sm:$0xff]
    %v3594 = vld [vmem:[#allocation4 + $0x2b8] sm:$0xff]
    %v3595 = vld [vmem:[#allocation4 + $0x2c0] sm:$0xff]
    %v3596 = vld [vmem:[#allocation4 + $0x2c8] sm:$0xff]
    %v3597 = vld [vmem:[#allocation4 + $0x2d0] sm:$0xff]
    %v3598 = vld [vmem:[#allocation4 + $0x2d8] sm:$0xff]
    %v3599 = vld [vmem:[#allocation4 + $0x2e0] sm:$0xff]
    %v3600 = vld [vmem:[#allocation4 + $0x2e8] sm:$0xff]
    %v3601 = vld [vmem:[#allocation4 + $0x2f0] sm:$0xff]
    %v3602 = vld [vmem:[#allocation4 + $0x2f8] sm:$0xff]
    %v3603 = vld [vmem:[#allocation4 + $0x300] sm:$0xff]
    %v3604 = vld [vmem:[#allocation4 + $0x308] sm:$0xff]
    %v3605 = vld [vmem:[#allocation4 + $0x310] sm:$0xff]
    %v3606 = vld [vmem:[#allocation4 + $0x318] sm:$0xff]
    %v3607 = vld [vmem:[#allocation4 + $0x320] sm:$0xff]
    %v3608 = vld [vmem:[#allocation4 + $0x328] sm:$0xff]
    %v3609 = vld [vmem:[#allocation4 + $0x330] sm:$0xff]
    %v3610 = vld [vmem:[#allocation4 + $0x338] sm:$0xff]
    %v3611 = vld [vmem:[#allocation4 + $0x340] sm:$0xff]
    %v3612 = vld [vmem:[#allocation4 + $0x348] sm:$0xff]
    %v3613 = vld [vmem:[#allocation4 + $0x350] sm:$0xff]
    %v3614 = vld [vmem:[#allocation4 + $0x358] sm:$0xff]
    %v3615 = vld [vmem:[#allocation4 + $0x360] sm:$0xff]
    %v3616 = vld [vmem:[#allocation4 + $0x368] sm:$0xff]
    %v3617 = vld [vmem:[#allocation4 + $0x370] sm:$0xff]
    %v3618 = vld [vmem:[#allocation4 + $0x378] sm:$0xff]
    %v3619 = vld [vmem:[#allocation4 + $0x380] sm:$0xff]
    %v3620 = vld [vmem:[#allocation4 + $0x388] sm:$0xff]
    %v3621 = vld [vmem:[#allocation4 + $0x390] sm:$0xff]
    %v3622 = vld [vmem:[#allocation4 + $0x398] sm:$0xff]
    %v3623 = vld [vmem:[#allocation4 + $0x3a0] sm:$0xff]
    %v3624 = vld [vmem:[#allocation4 + $0x3a8] sm:$0xff]
    %v3625 = vld [vmem:[#allocation4 + $0x3b0] sm:$0xff]
    %v3626 = vld [vmem:[#allocation4 + $0x3b8] sm:$0xff]
    %v3627 = vld [vmem:[#allocation4 + $0x3c0] sm:$0xff]
    %v3628 = vld [vmem:[#allocation4 + $0x3c8] sm:$0xff]
    %v3629 = vld [vmem:[#allocation4 + $0x3d0] sm:$0xff]
    %v3630 = vld [vmem:[#allocation4 + $0x3d8] sm:$0xff]
    %v3631 = vld [vmem:[#allocation4 + $0x3e0] sm:$0xff]
    %v3632 = vld [vmem:[#allocation4 + $0x3e8] sm:$0xff]
    %v3633 = vld [vmem:[#allocation4 + $0x3f0] sm:$0xff]
    %v3634 = vld [vmem:[#allocation4 + $0x3f8] sm:$0xff]
    %v3635 = vld [vmem:[#allocation4 + $0x400] sm:$0xff]
    %v3636 = vld [vmem:[#allocation4 + $0x408] sm:$0xff]
    %v3637 = vld [vmem:[#allocation4 + $0x410] sm:$0xff]
    %v3638 = vld [vmem:[#allocation4 + $0x418] sm:$0xff]
    %v3639 = vld [vmem:[#allocation4 + $0x420] sm:$0xff]
    %v3640 = vld [vmem:[#allocation4 + $0x428] sm:$0xff]
    %v3641 = vld [vmem:[#allocation4 + $0x430] sm:$0xff]
    %v3642 = vld [vmem:[#allocation4 + $0x438] sm:$0xff]
    %v3643 = vld [vmem:[#allocation4 + $0x440] sm:$0xff]
    %v3644 = vld [vmem:[#allocation4 + $0x448] sm:$0xff]
    %v3645 = vld [vmem:[#allocation4 + $0x450] sm:$0xff]
    %v3646 = vld [vmem:[#allocation4 + $0x458] sm:$0xff]
    %v3647 = vld [vmem:[#allocation4 + $0x460] sm:$0xff]
    %v3648 = vld [vmem:[#allocation4 + $0x468] sm:$0xff]
    %v3649 = vld [vmem:[#allocation4 + $0x470] sm:$0xff]
    %v3650 = vld [vmem:[#allocation4 + $0x478] sm:$0xff]
    %v3651 = vld [vmem:[#allocation4 + $0x480] sm:$0xff]
    %v3652 = vld [vmem:[#allocation4 + $0x488] sm:$0xff]
    %v3653 = vld [vmem:[#allocation4 + $0x490] sm:$0xff]
    %v3654 = vld [vmem:[#allocation4 + $0x498] sm:$0xff]
    %v3655 = vld [vmem:[#allocation4 + $0x4a0] sm:$0xff]
    %v3656 = vld [vmem:[#allocation4 + $0x4a8] sm:$0xff]
    %v3657 = vld [vmem:[#allocation4 + $0x4b0] sm:$0xff]
    %v3658 = vld [vmem:[#allocation4 + $0x4b8] sm:$0xff]
    %v3659 = vld [vmem:[#allocation4 + $0x4c0] sm:$0xff]
    %v3660 = vld [vmem:[#allocation4 + $0x4c8] sm:$0xff]
    %v3661 = vld [vmem:[#allocation4 + $0x4d0] sm:$0xff]
    %v3662 = vld [vmem:[#allocation4 + $0x4d8] sm:$0xff]
    %v3663 = vld [vmem:[#allocation4 + $0x4e0] sm:$0xff]
    %v3664 = vld [vmem:[#allocation4 + $0x4e8] sm:$0xff]
    %v3665 = vld [vmem:[#allocation4 + $0x4f0] sm:$0xff]
    %v3666 = vld [vmem:[#allocation4 + $0x4f8] sm:$0xff]
    %v3667 = vld [vmem:[#allocation4 + $0x500] sm:$0xff]
    %v3668 = vld [vmem:[#allocation4 + $0x508] sm:$0xff]
    %v3669 = vld [vmem:[#allocation4 + $0x510] sm:$0xff]
    %v3670 = vld [vmem:[#allocation4 + $0x518] sm:$0xff]
    %v3671 = vld [vmem:[#allocation4 + $0x520] sm:$0xff]
    %v3672 = vld [vmem:[#allocation4 + $0x528] sm:$0xff]
    %v3673 = vld [vmem:[#allocation4 + $0x530] sm:$0xff]
    %v3674 = vld [vmem:[#allocation4 + $0x538] sm:$0xff]
    %v3675 = vld [vmem:[#allocation4 + $0x540] sm:$0xff]
    %v3676 = vld [vmem:[#allocation4 + $0x548] sm:$0xff]
    %v3677 = vld [vmem:[#allocation4 + $0x550] sm:$0xff]
    %v3678 = vld [vmem:[#allocation4 + $0x558] sm:$0xff]
    %v3679 = vld [vmem:[#allocation4 + $0x560] sm:$0xff]
    %v3680 = vld [vmem:[#allocation4 + $0x568] sm:$0xff]
    %v3681 = vld [vmem:[#allocation4 + $0x570] sm:$0xff]
    %v3682 = vld [vmem:[#allocation4 + $0x578] sm:$0xff]
    %v3683 = vld [vmem:[#allocation4 + $0x580] sm:$0xff]
    %v3684 = vld [vmem:[#allocation4 + $0x588] sm:$0xff]
    %v3685 = vld [vmem:[#allocation4 + $0x590] sm:$0xff]
    %v3686 = vld [vmem:[#allocation4 + $0x598] sm:$0xff]
    %v3687 = vld [vmem:[#allocation4 + $0x5a0] sm:$0xff]
    %v3688 = vld [vmem:[#allocation4 + $0x5a8] sm:$0xff]
    %v3689 = vld [vmem:[#allocation4 + $0x5b0] sm:$0xff]
    %v3690 = vld [vmem:[#allocation4 + $0x5b8] sm:$0xff]
    %v3691 = vld [vmem:[#allocation4 + $0x5c0] sm:$0xff]
    %v3692 = vld [vmem:[#allocation4 + $0x5c8] sm:$0xff]
    %v3693 = vld [vmem:[#allocation4 + $0x5d0] sm:$0xff]
    %v3694 = vld [vmem:[#allocation4 + $0x5d8] sm:$0xff]
    %v3695 = vld [vmem:[#allocation4 + $0x5e0] sm:$0xff]
    %v3696 = vld [vmem:[#allocation4 + $0x5e8] sm:$0xff]
    %v3697 = vld [vmem:[#allocation4 + $0x5f0] sm:$0xff]
    %v3698 = vld [vmem:[#allocation4 + $0x5f8] sm:$0xff]
    %v3699 = vld [vmem:[#allocation4 + $0x600] sm:$0xff]
    %v3700 = vld [vmem:[#allocation4 + $0x608] sm:$0xff]
    %v3701 = vld [vmem:[#allocation4 + $0x610] sm:$0xff]
    %v3702 = vld [vmem:[#allocation4 + $0x618] sm:$0xff]
    %v3703 = vld [vmem:[#allocation4 + $0x620] sm:$0xff]
    %v3704 = vld [vmem:[#allocation4 + $0x628] sm:$0xff]
    %v3705 = vld [vmem:[#allocation4 + $0x630] sm:$0xff]
    %v3706 = vld [vmem:[#allocation4 + $0x638] sm:$0xff]
    %v3707 = vld [vmem:[#allocation4 + $0x640] sm:$0xff]
    %v3708 = vld [vmem:[#allocation4 + $0x648] sm:$0xff]
    %v3709 = vld [vmem:[#allocation4 + $0x650] sm:$0xff]
    %v3710 = vld [vmem:[#allocation4 + $0x658] sm:$0xff]
    %v3711 = vld [vmem:[#allocation4 + $0x660] sm:$0xff]
    %v3712 = vld [vmem:[#allocation4 + $0x668] sm:$0xff]
    %v3713 = vld [vmem:[#allocation4 + $0x670] sm:$0xff]
    %v3714 = vld [vmem:[#allocation4 + $0x678] sm:$0xff]
    %v3715 = vld [vmem:[#allocation4 + $0x680] sm:$0xff]
    %v3716 = vld [vmem:[#allocation4 + $0x688] sm:$0xff]
    %v3717 = vld [vmem:[#allocation4 + $0x690] sm:$0xff]
    %v3718 = vld [vmem:[#allocation4 + $0x698] sm:$0xff]
    %v3719 = vld [vmem:[#allocation4 + $0x6a0] sm:$0xff]
    %v3720 = vld [vmem:[#allocation4 + $0x6a8] sm:$0xff]
    %v3721 = vld [vmem:[#allocation4 + $0x6b0] sm:$0xff]
    %v3722 = vld [vmem:[#allocation4 + $0x6b8] sm:$0xff]
    %v3723 = vld [vmem:[#allocation4 + $0x6c0] sm:$0xff]
    %v3724 = vld [vmem:[#allocation4 + $0x6c8] sm:$0xff]
    %v3725 = vld [vmem:[#allocation4 + $0x6d0] sm:$0xff]
    %v3726 = vld [vmem:[#allocation4 + $0x6d8] sm:$0xff]
    %v3727 = vld [vmem:[#allocation4 + $0x6e0] sm:$0xff]
    %v3728 = vld [vmem:[#allocation4 + $0x6e8] sm:$0xff]
    %v3729 = vld [vmem:[#allocation4 + $0x6f0] sm:$0xff]
    %v3730 = vld [vmem:[#allocation4 + $0x6f8] sm:$0xff]
    %v3731 = vld [vmem:[#allocation4 + $0x700] sm:$0xff]
    %v3732 = vld [vmem:[#allocation4 + $0x708] sm:$0xff]
    %v3733 = vld [vmem:[#allocation4 + $0x710] sm:$0xff]
    %v3734 = vld [vmem:[#allocation4 + $0x718] sm:$0xff]
    %v3735 = vld [vmem:[#allocation4 + $0x720] sm:$0xff]
    %v3736 = vld [vmem:[#allocation4 + $0x728] sm:$0xff]
    %v3737 = vld [vmem:[#allocation4 + $0x730] sm:$0xff]
    %v3738 = vld [vmem:[#allocation4 + $0x738] sm:$0xff]
    %v3739 = vld [vmem:[#allocation4 + $0x740] sm:$0xff]
    %v3740 = vld [vmem:[#allocation4 + $0x748] sm:$0xff]
    %v3741 = vld [vmem:[#allocation4 + $0x750] sm:$0xff]
    %v3742 = vld [vmem:[#allocation4 + $0x758] sm:$0xff]
    %v3743 = vld [vmem:[#allocation4 + $0x760] sm:$0xff]
    %v3744 = vld [vmem:[#allocation4 + $0x768] sm:$0xff]
    %v3745 = vld [vmem:[#allocation4 + $0x770] sm:$0xff]
    %v3746 = vld [vmem:[#allocation4 + $0x778] sm:$0xff]
    %v3747 = vld [vmem:[#allocation4 + $0x780] sm:$0xff]
    %v3748 = vld [vmem:[#allocation4 + $0x788] sm:$0xff]
    %v3749 = vld [vmem:[#allocation4 + $0x790] sm:$0xff]
    %v3750 = vld [vmem:[#allocation4 + $0x798] sm:$0xff]
    %v3751 = vld [vmem:[#allocation4 + $0x7a0] sm:$0xff]
    %v3752 = vld [vmem:[#allocation4 + $0x7a8] sm:$0xff]
    %v3753 = vld [vmem:[#allocation4 + $0x7b0] sm:$0xff]
    %v3754 = vld [vmem:[#allocation4 + $0x7b8] sm:$0xff]
    %v3755 = vld [vmem:[#allocation4 + $0x7c0] sm:$0xff]
    %v3756 = vld [vmem:[#allocation4 + $0x7c8] sm:$0xff]
    %v3757 = vld [vmem:[#allocation4 + $0x7d0] sm:$0xff]
    %v3758 = vld [vmem:[#allocation4 + $0x7d8] sm:$0xff]
    %v3759 = vld [vmem:[#allocation4 + $0x7e0] sm:$0xff]
    %v3760 = vld [vmem:[#allocation4 + $0x7e8] sm:$0xff]
    %v3761 = vld [vmem:[#allocation4 + $0x7f0] sm:$0xff]
    %v3762 = vld [vmem:[#allocation4 + $0x7f8] sm:$0xff]
    %v3763 = vld [vmem:[#allocation4 + $0x800] sm:$0xff]
    %v3764 = vld [vmem:[#allocation4 + $0x808] sm:$0xff]
    %v3765 = vld [vmem:[#allocation4 + $0x810] sm:$0xff]
    %v3766 = vld [vmem:[#allocation4 + $0x818] sm:$0xff]
    %v3767 = vld [vmem:[#allocation4 + $0x820] sm:$0xff]
    %v3768 = vld [vmem:[#allocation4 + $0x828] sm:$0xff]
    %v3769 = vld [vmem:[#allocation4 + $0x830] sm:$0xff]
    %v3770 = vld [vmem:[#allocation4 + $0x838] sm:$0xff]
    %v3771 = vld [vmem:[#allocation4 + $0x840] sm:$0xff]
    %v3772 = vld [vmem:[#allocation4 + $0x848] sm:$0xff]
    %v3773 = vld [vmem:[#allocation4 + $0x850] sm:$0xff]
    %v3774 = vld [vmem:[#allocation4 + $0x858] sm:$0xff]
    %v3775 = vld [vmem:[#allocation4 + $0x860] sm:$0xff]
    %v3776 = vld [vmem:[#allocation4 + $0x868] sm:$0xff]
    %v3777 = vld [vmem:[#allocation4 + $0x870] sm:$0xff]
    %v3778 = vld [vmem:[#allocation4 + $0x878] sm:$0xff]
    %v3779 = vld [vmem:[#allocation4 + $0x880] sm:$0xff]
    %v3780 = vld [vmem:[#allocation4 + $0x888] sm:$0xff]
    %v3781 = vld [vmem:[#allocation4 + $0x890] sm:$0xff]
    %v3782 = vld [vmem:[#allocation4 + $0x898] sm:$0xff]
    %v3783 = vld [vmem:[#allocation4 + $0x8a0] sm:$0xff]
    %v3784 = vld [vmem:[#allocation4 + $0x8a8] sm:$0xff]
    %v3785 = vld [vmem:[#allocation4 + $0x8b0] sm:$0xff]
    %v3786 = vld [vmem:[#allocation4 + $0x8b8] sm:$0xff]
    %v3787 = vld [vmem:[#allocation4 + $0x8c0] sm:$0xff]
    %v3788 = vld [vmem:[#allocation4 + $0x8c8] sm:$0xff]
    %v3789 = vld [vmem:[#allocation4 + $0x8d0] sm:$0xff]
    %v3790 = vld [vmem:[#allocation4 + $0x8d8] sm:$0xff]
    %v3791 = vld [vmem:[#allocation4 + $0x8e0] sm:$0xff]
    %v3792 = vld [vmem:[#allocation4 + $0x8e8] sm:$0xff]
    %v3793 = vld [vmem:[#allocation4 + $0x8f0] sm:$0xff]
    %v3794 = vld [vmem:[#allocation4 + $0x8f8] sm:$0xff]
    %v3795 = vld [vmem:[#allocation4 + $0x900] sm:$0xff]
    %v3796 = vld [vmem:[#allocation4 + $0x908] sm:$0xff]
    %v3797 = vld [vmem:[#allocation4 + $0x910] sm:$0xff]
    %v3798 = vld [vmem:[#allocation4 + $0x918] sm:$0xff]
    %v3799 = vld [vmem:[#allocation4 + $0x920] sm:$0xff]
    %v3800 = vld [vmem:[#allocation4 + $0x928] sm:$0xff]
    %v3801 = vld [vmem:[#allocation4 + $0x930] sm:$0xff]
    %v3802 = vld [vmem:[#allocation4 + $0x938] sm:$0xff]
    %v3803 = vld [vmem:[#allocation4 + $0x940] sm:$0xff]
    %v3804 = vld [vmem:[#allocation4 + $0x948] sm:$0xff]
    %v3805 = vld [vmem:[#allocation4 + $0x950] sm:$0xff]
    %v3806 = vld [vmem:[#allocation4 + $0x958] sm:$0xff]
    %v3807 = vld [vmem:[#allocation4 + $0x960] sm:$0xff]
    %v3808 = vld [vmem:[#allocation4 + $0x968] sm:$0xff]
    %v3809 = vld [vmem:[#allocation4 + $0x970] sm:$0xff]
    %v3810 = vld [vmem:[#allocation4 + $0x978] sm:$0xff]
    %v3811 = vld [vmem:[#allocation4 + $0x980] sm:$0xff]
    %v3812 = vld [vmem:[#allocation4 + $0x988] sm:$0xff]
    %v3813 = vld [vmem:[#allocation4 + $0x990] sm:$0xff]
    %v3814 = vld [vmem:[#allocation4 + $0x998] sm:$0xff]
    %v3815 = vld [vmem:[#allocation4 + $0x9a0] sm:$0xff]
    %v3816 = vld [vmem:[#allocation4 + $0x9a8] sm:$0xff]
    %v3817 = vld [vmem:[#allocation4 + $0x9b0] sm:$0xff]
    %v3818 = vld [vmem:[#allocation4 + $0x9b8] sm:$0xff]
    %v3819 = vld [vmem:[#allocation4 + $0x9c0] sm:$0xff]
    %v3820 = vld [vmem:[#allocation4 + $0x9c8] sm:$0xff]
    %v3821 = vld [vmem:[#allocation4 + $0x9d0] sm:$0xff]
    %v3822 = vld [vmem:[#allocation4 + $0x9d8] sm:$0xff]
    %v3823 = vld [vmem:[#allocation4 + $0x9e0] sm:$0xff]
    %v3824 = vld [vmem:[#allocation4 + $0x9e8] sm:$0xff]
    %v3825 = vld [vmem:[#allocation4 + $0x9f0] sm:$0xff]
    %v3826 = vld [vmem:[#allocation4 + $0x9f8] sm:$0xff]
    %v3827 = vld [vmem:[#allocation4 + $0xa00] sm:$0xff]
    %v3828 = vld [vmem:[#allocation4 + $0xa08] sm:$0xff]
    %v3829 = vld [vmem:[#allocation4 + $0xa10] sm:$0xff]
    %v3830 = vld [vmem:[#allocation4 + $0xa18] sm:$0xff]
    %v3831 = vld [vmem:[#allocation4 + $0xa20] sm:$0xff]
    %v3832 = vld [vmem:[#allocation4 + $0xa28] sm:$0xff]
    %v3833 = vld [vmem:[#allocation4 + $0xa30] sm:$0xff]
    %v3834 = vld [vmem:[#allocation4 + $0xa38] sm:$0xff]
    %v3835 = vld [vmem:[#allocation4 + $0xa40] sm:$0xff]
    %v3836 = vld [vmem:[#allocation4 + $0xa48] sm:$0xff]
    %v3837 = vld [vmem:[#allocation4 + $0xa50] sm:$0xff]
    %v3838 = vld [vmem:[#allocation4 + $0xa58] sm:$0xff]
    %v3839 = vld [vmem:[#allocation4 + $0xa60] sm:$0xff]
    %v3840 = vld [vmem:[#allocation4 + $0xa68] sm:$0xff]
    %v3841 = vld [vmem:[#allocation4 + $0xa70] sm:$0xff]
    %v3842 = vld [vmem:[#allocation4 + $0xa78] sm:$0xff]
    %v3843 = vld [vmem:[#allocation4 + $0xa80] sm:$0xff]
    %v3844 = vld [vmem:[#allocation4 + $0xa88] sm:$0xff]
    %v3845 = vld [vmem:[#allocation4 + $0xa90] sm:$0xff]
    %v3846 = vld [vmem:[#allocation4 + $0xa98] sm:$0xff]
    %v3847 = vld [vmem:[#allocation4 + $0xaa0] sm:$0xff]
    %v3848 = vld [vmem:[#allocation4 + $0xaa8] sm:$0xff]
    %v3849 = vld [vmem:[#allocation4 + $0xab0] sm:$0xff]
    %v3850 = vld [vmem:[#allocation4 + $0xab8] sm:$0xff]
    %v3851 = vld [vmem:[#allocation4 + $0xac0] sm:$0xff]
    %v3852 = vld [vmem:[#allocation4 + $0xac8] sm:$0xff]
    %v3853 = vld [vmem:[#allocation4 + $0xad0] sm:$0xff]
    %v3854 = vld [vmem:[#allocation4 + $0xad8] sm:$0xff]
    %v3855 = vld [vmem:[#allocation4 + $0xae0] sm:$0xff]
    %v3856 = vld [vmem:[#allocation4 + $0xae8] sm:$0xff]
    %v3857 = vld [vmem:[#allocation4 + $0xaf0] sm:$0xff]
    %v3858 = vld [vmem:[#allocation4 + $0xaf8] sm:$0xff]
    %v3859 = vld [vmem:[#allocation4 + $0xb00] sm:$0xff]
    %v3860 = vld [vmem:[#allocation4 + $0xb08] sm:$0xff]
    %v3861 = vld [vmem:[#allocation4 + $0xb10] sm:$0xff]
    %v3862 = vld [vmem:[#allocation4 + $0xb18] sm:$0xff]
    %v3863 = vld [vmem:[#allocation4 + $0xb20] sm:$0xff]
    %v3864 = vld [vmem:[#allocation4 + $0xb28] sm:$0xff]
    %v3865 = vld [vmem:[#allocation4 + $0xb30] sm:$0xff]
    %v3866 = vld [vmem:[#allocation4 + $0xb38] sm:$0xff]
    %v3867 = vld [vmem:[#allocation4 + $0xb40] sm:$0xff]
    %v3868 = vld [vmem:[#allocation4 + $0xb48] sm:$0xff]
    %v3869 = vld [vmem:[#allocation4 + $0xb50] sm:$0xff]
    %v3870 = vld [vmem:[#allocation4 + $0xb58] sm:$0xff]
    %v3871 = vld [vmem:[#allocation4 + $0xb60] sm:$0xff]
    %v3872 = vld [vmem:[#allocation4 + $0xb68] sm:$0xff]
    %v3873 = vld [vmem:[#allocation4 + $0xb70] sm:$0xff]
    %v3874 = vld [vmem:[#allocation4 + $0xb78] sm:$0xff]
    %v3875 = vld [vmem:[#allocation4 + $0xb80] sm:$0xff]
    %v3876 = vld [vmem:[#allocation4 + $0xb88] sm:$0xff]
    %v3877 = vld [vmem:[#allocation4 + $0xb90] sm:$0xff]
    %v3878 = vld [vmem:[#allocation4 + $0xb98] sm:$0xff]
    %v3879 = vld [vmem:[#allocation4 + $0xba0] sm:$0xff]
    %v3880 = vld [vmem:[#allocation4 + $0xba8] sm:$0xff]
    %v3881 = vld [vmem:[#allocation4 + $0xbb0] sm:$0xff]
    %v3882 = vld [vmem:[#allocation4 + $0xbb8] sm:$0xff]
    %v3883 = vld [vmem:[#allocation4 + $0xbc0] sm:$0xff]
    %v3884 = vld [vmem:[#allocation4 + $0xbc8] sm:$0xff]
    %v3885 = vld [vmem:[#allocation4 + $0xbd0] sm:$0xff]
    %v3886 = vld [vmem:[#allocation4 + $0xbd8] sm:$0xff]
    %v3887 = vld [vmem:[#allocation4 + $0xbe0] sm:$0xff]
    %v3888 = vld [vmem:[#allocation4 + $0xbe8] sm:$0xff]
    %v3889 = vld [vmem:[#allocation4 + $0xbf0] sm:$0xff]
    %v3890 = vld [vmem:[#allocation4 + $0xbf8] sm:$0xff]
    %v3891 = vld [vmem:[#allocation4 + $0xc00] sm:$0xff]
    %v3892 = vld [vmem:[#allocation4 + $0xc08] sm:$0xff]
    %v3893 = vld [vmem:[#allocation4 + $0xc10] sm:$0xff]
    %v3894 = vld [vmem:[#allocation4 + $0xc18] sm:$0xff]
    %v3895 = vld [vmem:[#allocation4 + $0xc20] sm:$0xff]
    %v3896 = vld [vmem:[#allocation4 + $0xc28] sm:$0xff]
    %v3897 = vld [vmem:[#allocation4 + $0xc30] sm:$0xff]
    %v3898 = vld [vmem:[#allocation4 + $0xc38] sm:$0xff]
    %v3899 = vld [vmem:[#allocation4 + $0xc40] sm:$0xff]
    %v3900 = vld [vmem:[#allocation4 + $0xc48] sm:$0xff]
    %v3901 = vld [vmem:[#allocation4 + $0xc50] sm:$0xff]
    %v3902 = vld [vmem:[#allocation4 + $0xc58] sm:$0xff]
    %v3903 = vld [vmem:[#allocation4 + $0xc60] sm:$0xff]
    %v3904 = vld [vmem:[#allocation4 + $0xc68] sm:$0xff]
    %v3905 = vld [vmem:[#allocation4 + $0xc70] sm:$0xff]
    %v3906 = vld [vmem:[#allocation4 + $0xc78] sm:$0xff]
    %v3907 = vld [vmem:[#allocation4 + $0xc80] sm:$0xff]
    %v3908 = vld [vmem:[#allocation4 + $0xc88] sm:$0xff]
    %v3909 = vld [vmem:[#allocation4 + $0xc90] sm:$0xff]
    %v3910 = vld [vmem:[#allocation4 + $0xc98] sm:$0xff]
    %v3911 = vld [vmem:[#allocation4 + $0xca0] sm:$0xff]
    %v3912 = vld [vmem:[#allocation4 + $0xca8] sm:$0xff]
    %v3913 = vld [vmem:[#allocation4 + $0xcb0] sm:$0xff]
    %v3914 = vld [vmem:[#allocation4 + $0xcb8] sm:$0xff]
    %v3915 = vld [vmem:[#allocation4 + $0xcc0] sm:$0xff]
    %v3916 = vld [vmem:[#allocation4 + $0xcc8] sm:$0xff]
    %v3917 = vld [vmem:[#allocation4 + $0xcd0] sm:$0xff]
    %v3918 = vld [vmem:[#allocation4 + $0xcd8] sm:$0xff]
    %v3919 = vld [vmem:[#allocation4 + $0xce0] sm:$0xff]
    %v3920 = vld [vmem:[#allocation4 + $0xce8] sm:$0xff]
    %v3921 = vld [vmem:[#allocation4 + $0xcf0] sm:$0xff]
    %v3922 = vld [vmem:[#allocation4 + $0xcf8] sm:$0xff]
    %v3923 = vld [vmem:[#allocation4 + $0xd00] sm:$0xff]
    %v3924 = vld [vmem:[#allocation4 + $0xd08] sm:$0xff]
    %v3925 = vld [vmem:[#allocation4 + $0xd10] sm:$0xff]
    %v3926 = vld [vmem:[#allocation4 + $0xd18] sm:$0xff]
    %v3927 = vld [vmem:[#allocation4 + $0xd20] sm:$0xff]
    %v3928 = vld [vmem:[#allocation4 + $0xd28] sm:$0xff]
    %v3929 = vld [vmem:[#allocation4 + $0xd30] sm:$0xff]
    %v3930 = vld [vmem:[#allocation4 + $0xd38] sm:$0xff]
    %v3931 = vld [vmem:[#allocation4 + $0xd40] sm:$0xff]
    %v3932 = vld [vmem:[#allocation4 + $0xd48] sm:$0xff]
    %v3933 = vld [vmem:[#allocation4 + $0xd50] sm:$0xff]
    %v3934 = vld [vmem:[#allocation4 + $0xd58] sm:$0xff]
    %v3935 = vld [vmem:[#allocation4 + $0xd60] sm:$0xff]
    %v3936 = vld [vmem:[#allocation4 + $0xd68] sm:$0xff]
    %v3937 = vld [vmem:[#allocation4 + $0xd70] sm:$0xff]
    %v3938 = vld [vmem:[#allocation4 + $0xd78] sm:$0xff]
    %v3939 = vld [vmem:[#allocation4 + $0xd80] sm:$0xff]
    %v3940 = vld [vmem:[#allocation4 + $0xd88] sm:$0xff]
    %v3941 = vld [vmem:[#allocation4 + $0xd90] sm:$0xff]
    %v3942 = vld [vmem:[#allocation4 + $0xd98] sm:$0xff]
    %v3943 = vld [vmem:[#allocation4 + $0xda0] sm:$0xff]
    %v3944 = vld [vmem:[#allocation4 + $0xda8] sm:$0xff]
    %v3945 = vld [vmem:[#allocation4 + $0xdb0] sm:$0xff]
    %v3946 = vld [vmem:[#allocation4 + $0xdb8] sm:$0xff]
    %v3947 = vld [vmem:[#allocation4 + $0xdc0] sm:$0xff]
    %v3948 = vld [vmem:[#allocation4 + $0xdc8] sm:$0xff]
    %v3949 = vld [vmem:[#allocation4 + $0xdd0] sm:$0xff]
    %v3950 = vld [vmem:[#allocation4 + $0xdd8] sm:$0xff]
    %v3951 = vld [vmem:[#allocation4 + $0xde0] sm:$0xff]
    %v3952 = vld [vmem:[#allocation4 + $0xde8] sm:$0xff]
    %v3953 = vld [vmem:[#allocation4 + $0xdf0] sm:$0xff]
    %v3954 = vld [vmem:[#allocation4 + $0xdf8] sm:$0xff]
    %v3955 = vld [vmem:[#allocation4 + $0xe00] sm:$0xff]
    %v3956 = vld [vmem:[#allocation4 + $0xe08] sm:$0xff]
    %v3957 = vld [vmem:[#allocation4 + $0xe10] sm:$0xff]
    %v3958 = vld [vmem:[#allocation4 + $0xe18] sm:$0xff]
    %v3959 = vld [vmem:[#allocation4 + $0xe20] sm:$0xff]
    %v3960 = vld [vmem:[#allocation4 + $0xe28] sm:$0xff]
    %v3961 = vld [vmem:[#allocation4 + $0xe30] sm:$0xff]
    %v3962 = vld [vmem:[#allocation4 + $0xe38] sm:$0xff]
    %v3963 = vld [vmem:[#allocation4 + $0xe40] sm:$0xff]
    %v3964 = vld [vmem:[#allocation4 + $0xe48] sm:$0xff]
    %v3965 = vld [vmem:[#allocation4 + $0xe50] sm:$0xff]
    %v3966 = vld [vmem:[#allocation4 + $0xe58] sm:$0xff]
    %v3967 = vld [vmem:[#allocation4 + $0xe60] sm:$0xff]
    %v3968 = vld [vmem:[#allocation4 + $0xe68] sm:$0xff]
    %v3969 = vld [vmem:[#allocation4 + $0xe70] sm:$0xff]
    %v3970 = vld [vmem:[#allocation4 + $0xe78] sm:$0xff]
    %v3971 = vld [vmem:[#allocation4 + $0xe80] sm:$0xff]
    %v3972 = vld [vmem:[#allocation4 + $0xe88] sm:$0xff]
    %v3973 = vld [vmem:[#allocation4 + $0xe90] sm:$0xff]
    %v3974 = vld [vmem:[#allocation4 + $0xe98] sm:$0xff]
    %v3975 = vld [vmem:[#allocation4 + $0xea0] sm:$0xff]
    %v3976 = vld [vmem:[#allocation4 + $0xea8] sm:$0xff]
    %v3977 = vld [vmem:[#allocation4 + $0xeb0] sm:$0xff]
    %v3978 = vld [vmem:[#allocation4 + $0xeb8] sm:$0xff]
    %v3979 = vld [vmem:[#allocation4 + $0xec0] sm:$0xff]
    %v3980 = vld [vmem:[#allocation4 + $0xec8] sm:$0xff]
    %v3981 = vld [vmem:[#allocation4 + $0xed0] sm:$0xff]
    %v3982 = vld [vmem:[#allocation4 + $0xed8] sm:$0xff]
    %v3983 = vld [vmem:[#allocation4 + $0xee0] sm:$0xff]
    %v3984 = vld [vmem:[#allocation4 + $0xee8] sm:$0xff]
    %v3985 = vld [vmem:[#allocation4 + $0xef0] sm:$0xff]
    %v3986 = vld [vmem:[#allocation4 + $0xef8] sm:$0xff]
    %v3987 = vld [vmem:[#allocation4 + $0xf00] sm:$0xff]
    %v3988 = vld [vmem:[#allocation4 + $0xf08] sm:$0xff]
    %v3989 = vld [vmem:[#allocation4 + $0xf10] sm:$0xff]
    %v3990 = vld [vmem:[#allocation4 + $0xf18] sm:$0xff]
    %v3991 = vld [vmem:[#allocation4 + $0xf20] sm:$0xff]
    %v3992 = vld [vmem:[#allocation4 + $0xf28] sm:$0xff]
    %v3993 = vld [vmem:[#allocation4 + $0xf30] sm:$0xff]
    %v3994 = vld [vmem:[#allocation4 + $0xf38] sm:$0xff]
    %v3995 = vld [vmem:[#allocation4 + $0xf40] sm:$0xff]
    %v3996 = vld [vmem:[#allocation4 + $0xf48] sm:$0xff]
    %v3997 = vld [vmem:[#allocation4 + $0xf50] sm:$0xff]
    %v3998 = vld [vmem:[#allocation4 + $0xf58] sm:$0xff]
    %v3999 = vld [vmem:[#allocation4 + $0xf60] sm:$0xff]
    %v4000 = vld [vmem:[#allocation4 + $0xf68] sm:$0xff]
    %v4001 = vld [vmem:[#allocation4 + $0xf70] sm:$0xff]
    %v4002 = vld [vmem:[#allocation4 + $0xf78] sm:$0xff]
    %v4003 = vld [vmem:[#allocation4 + $0xf80] sm:$0xff]
    %v4004 = vld [vmem:[#allocation4 + $0xf88] sm:$0xff]
    %v4005 = vld [vmem:[#allocation4 + $0xf90] sm:$0xff]
    %v4006 = vld [vmem:[#allocation4 + $0xf98] sm:$0xff]
    %v4007 = vld [vmem:[#allocation4 + $0xfa0] sm:$0xff]
    %v4008 = vld [vmem:[#allocation4 + $0xfa8] sm:$0xff]
    %v4009 = vld [vmem:[#allocation4 + $0xfb0] sm:$0xff]
    %v4010 = vld [vmem:[#allocation4 + $0xfb8] sm:$0xff]
    %v4011 = vld [vmem:[#allocation4 + $0xfc0] sm:$0xff]
    %v4012 = vld [vmem:[#allocation4 + $0xfc8] sm:$0xff]
    %v4013 = vld [vmem:[#allocation4 + $0xfd0] sm:$0xff]
    %v4014 = vld [vmem:[#allocation4 + $0xfd8] sm:$0xff]
    %v4015 = vld [vmem:[#allocation4 + $0xfe0] sm:$0xff]
    %v4016 = vld [vmem:[#allocation4 + $0xfe8] sm:$0xff]
    %v4017 = vld [vmem:[#allocation4 + $0xff0] sm:$0xff]
    %v4018 = vld [vmem:[#allocation4 + $0xff8] sm:$0xff]
    %v4019 = vld [vmem:[#allocation6] sm:$0xff]
    %v4021 = vlaneseq
    %v4022 = vshrl.u32 %v4021, 7
    %v4023 = vsub.s32 0, %v4022
    %v4024 = vrot.slane %v4019, %v4023
    %v4025 = vlaneseq
    %v4026 = vshrl.u32 %v4025, 7
    %v4027 = vsub.s32 1, %v4026
    %v4028 = vrot.slane %v4019, %v4027
    %v4029 = vlaneseq
    %v4030 = vshrl.u32 %v4029, 7
    %v4031 = vsub.s32 2, %v4030
    %v4032 = vrot.slane %v4019, %v4031
    %v4033 = vlaneseq
    %v4034 = vshrl.u32 %v4033, 7
    %v4035 = vsub.s32 3, %v4034
    %v4036 = vrot.slane %v4019, %v4035
    %v4037 = vlaneseq
    %v4038 = vshrl.u32 %v4037, 7
    %v4039 = vsub.s32 4, %v4038
    %v4040 = vrot.slane %v4019, %v4039
    %v4041 = vlaneseq
    %v4042 = vshrl.u32 %v4041, 7
    %v4043 = vsub.s32 5, %v4042
    %v4044 = vrot.slane %v4019, %v4043
    %v4045 = vlaneseq
    %v4046 = vshrl.u32 %v4045, 7
    %v4047 = vsub.s32 6, %v4046
    %v4048 = vrot.slane %v4019, %v4047
    %v4049 = vlaneseq
    %v4050 = vshrl.u32 %v4049, 7
    %v4051 = vsub.s32 7, %v4050
    %v4052 = vrot.slane %v4019, %v4051
    %v4573 = vunpack.c.l.b16 %v3507
    %v4574 = vunpack.c.h.b16 %v3507
    %v4575 = vunpack.c.l.b16 %v3508
    %v4576 = vunpack.c.h.b16 %v3508
    %v4577 = vunpack.c.l.b16 %v3509
    %v4578 = vunpack.c.h.b16 %v3509
    %v4579 = vunpack.c.l.b16 %v3510
    %v4580 = vunpack.c.h.b16 %v3510
    %v4581 = vunpack.c.l.b16 %v3511
    %v4582 = vunpack.c.h.b16 %v3511
    %v4583 = vunpack.c.l.b16 %v3512
    %v4584 = vunpack.c.h.b16 %v3512
    %v4585 = vunpack.c.l.b16 %v3513
    %v4586 = vunpack.c.h.b16 %v3513
    %v4587 = vunpack.c.l.b16 %v3514
    %v4588 = vunpack.c.h.b16 %v3514
    %v4589 = vunpack.c.l.b16 %v3515
    %v4590 = vunpack.c.h.b16 %v3515
    %v4591 = vunpack.c.l.b16 %v3516
    %v4592 = vunpack.c.h.b16 %v3516
    %v4593 = vunpack.c.l.b16 %v3517
    %v4594 = vunpack.c.h.b16 %v3517
    %v4595 = vunpack.c.l.b16 %v3518
    %v4596 = vunpack.c.h.b16 %v3518
    %v4597 = vunpack.c.l.b16 %v3519
    %v4598 = vunpack.c.h.b16 %v3519
    %v4599 = vunpack.c.l.b16 %v3520
    %v4600 = vunpack.c.h.b16 %v3520
    %v4601 = vunpack.c.l.b16 %v3521
    %v4602 = vunpack.c.h.b16 %v3521
    %v4603 = vunpack.c.l.b16 %v3522
    %v4604 = vunpack.c.h.b16 %v3522
    %v4605 = vunpack.c.l.b16 %v3523
    %v4606 = vunpack.c.h.b16 %v3523
    %v4607 = vunpack.c.l.b16 %v3524
    %v4608 = vunpack.c.h.b16 %v3524
    %v4609 = vunpack.c.l.b16 %v3525
    %v4610 = vunpack.c.h.b16 %v3525
    %v4611 = vunpack.c.l.b16 %v3526
    %v4612 = vunpack.c.h.b16 %v3526
    %v4613 = vunpack.c.l.b16 %v3527
    %v4614 = vunpack.c.h.b16 %v3527
    %v4615 = vunpack.c.l.b16 %v3528
    %v4616 = vunpack.c.h.b16 %v3528
    %v4617 = vunpack.c.l.b16 %v3529
    %v4618 = vunpack.c.h.b16 %v3529
    %v4619 = vunpack.c.l.b16 %v3530
    %v4620 = vunpack.c.h.b16 %v3530
    %v4621 = vunpack.c.l.b16 %v3531
    %v4622 = vunpack.c.h.b16 %v3531
    %v4623 = vunpack.c.l.b16 %v3532
    %v4624 = vunpack.c.h.b16 %v3532
    %v4625 = vunpack.c.l.b16 %v3533
    %v4626 = vunpack.c.h.b16 %v3533
    %v4627 = vunpack.c.l.b16 %v3534
    %v4628 = vunpack.c.h.b16 %v3534
    %v4629 = vunpack.c.l.b16 %v3535
    %v4630 = vunpack.c.h.b16 %v3535
    %v4631 = vunpack.c.l.b16 %v3536
    %v4632 = vunpack.c.h.b16 %v3536
    %v4633 = vunpack.c.l.b16 %v3537
    %v4634 = vunpack.c.h.b16 %v3537
    %v4635 = vunpack.c.l.b16 %v3538
    %v4636 = vunpack.c.h.b16 %v3538
    %v4637 = vunpack.c.l.b16 %v3539
    %v4638 = vunpack.c.h.b16 %v3539
    %v4639 = vunpack.c.l.b16 %v3540
    %v4640 = vunpack.c.h.b16 %v3540
    %v4641 = vunpack.c.l.b16 %v3541
    %v4642 = vunpack.c.h.b16 %v3541
    %v4643 = vunpack.c.l.b16 %v3542
    %v4644 = vunpack.c.h.b16 %v3542
    %v4645 = vunpack.c.l.b16 %v3543
    %v4646 = vunpack.c.h.b16 %v3543
    %v4647 = vunpack.c.l.b16 %v3544
    %v4648 = vunpack.c.h.b16 %v3544
    %v4649 = vunpack.c.l.b16 %v3545
    %v4650 = vunpack.c.h.b16 %v3545
    %v4651 = vunpack.c.l.b16 %v3546
    %v4652 = vunpack.c.h.b16 %v3546
    %v4653 = vunpack.c.l.b16 %v3547
    %v4654 = vunpack.c.h.b16 %v3547
    %v4655 = vunpack.c.l.b16 %v3548
    %v4656 = vunpack.c.h.b16 %v3548
    %v4657 = vunpack.c.l.b16 %v3549
    %v4658 = vunpack.c.h.b16 %v3549
    %v4659 = vunpack.c.l.b16 %v3550
    %v4660 = vunpack.c.h.b16 %v3550
    %v4661 = vunpack.c.l.b16 %v3551
    %v4662 = vunpack.c.h.b16 %v3551
    %v4663 = vunpack.c.l.b16 %v3552
    %v4664 = vunpack.c.h.b16 %v3552
    %v4665 = vunpack.c.l.b16 %v3553
    %v4666 = vunpack.c.h.b16 %v3553
    %v4667 = vunpack.c.l.b16 %v3554
    %v4668 = vunpack.c.h.b16 %v3554
    %v4669 = vunpack.c.l.b16 %v3555
    %v4670 = vunpack.c.h.b16 %v3555
    %v4671 = vunpack.c.l.b16 %v3556
    %v4672 = vunpack.c.h.b16 %v3556
    %v4673 = vunpack.c.l.b16 %v3557
    %v4674 = vunpack.c.h.b16 %v3557
    %v4675 = vunpack.c.l.b16 %v3558
    %v4676 = vunpack.c.h.b16 %v3558
    %v4677 = vunpack.c.l.b16 %v3559
    %v4678 = vunpack.c.h.b16 %v3559
    %v4679 = vunpack.c.l.b16 %v3560
    %v4680 = vunpack.c.h.b16 %v3560
    %v4681 = vunpack.c.l.b16 %v3561
    %v4682 = vunpack.c.h.b16 %v3561
    %v4683 = vunpack.c.l.b16 %v3562
    %v4684 = vunpack.c.h.b16 %v3562
    %v4685 = vunpack.c.l.b16 %v3563
    %v4686 = vunpack.c.h.b16 %v3563
    %v4687 = vunpack.c.l.b16 %v3564
    %v4688 = vunpack.c.h.b16 %v3564
    %v4689 = vunpack.c.l.b16 %v3565
    %v4690 = vunpack.c.h.b16 %v3565
    %v4691 = vunpack.c.l.b16 %v3566
    %v4692 = vunpack.c.h.b16 %v3566
    %v4693 = vunpack.c.l.b16 %v3567
    %v4694 = vunpack.c.h.b16 %v3567
    %v4695 = vunpack.c.l.b16 %v3568
    %v4696 = vunpack.c.h.b16 %v3568
    %v4697 = vunpack.c.l.b16 %v3569
    %v4698 = vunpack.c.h.b16 %v3569
    %v4699 = vunpack.c.l.b16 %v3570
    %v4700 = vunpack.c.h.b16 %v3570
    %v4701 = vunpack.c.l.b16 %v3571
    %v4702 = vunpack.c.h.b16 %v3571
    %v4703 = vunpack.c.l.b16 %v3572
    %v4704 = vunpack.c.h.b16 %v3572
    %v4705 = vunpack.c.l.b16 %v3573
    %v4706 = vunpack.c.h.b16 %v3573
    %v4707 = vunpack.c.l.b16 %v3574
    %v4708 = vunpack.c.h.b16 %v3574
    %v4709 = vunpack.c.l.b16 %v3575
    %v4710 = vunpack.c.h.b16 %v3575
    %v4711 = vunpack.c.l.b16 %v3576
    %v4712 = vunpack.c.h.b16 %v3576
    %v4713 = vunpack.c.l.b16 %v3577
    %v4714 = vunpack.c.h.b16 %v3577
    %v4715 = vunpack.c.l.b16 %v3578
    %v4716 = vunpack.c.h.b16 %v3578
    %v4717 = vunpack.c.l.b16 %v3579
    %v4718 = vunpack.c.h.b16 %v3579
    %v4719 = vunpack.c.l.b16 %v3580
    %v4720 = vunpack.c.h.b16 %v3580
    %v4721 = vunpack.c.l.b16 %v3581
    %v4722 = vunpack.c.h.b16 %v3581
    %v4723 = vunpack.c.l.b16 %v3582
    %v4724 = vunpack.c.h.b16 %v3582
    %v4725 = vunpack.c.l.b16 %v3583
    %v4726 = vunpack.c.h.b16 %v3583
    %v4727 = vunpack.c.l.b16 %v3584
    %v4728 = vunpack.c.h.b16 %v3584
    %v4729 = vunpack.c.l.b16 %v3585
    %v4730 = vunpack.c.h.b16 %v3585
    %v4731 = vunpack.c.l.b16 %v3586
    %v4732 = vunpack.c.h.b16 %v3586
    %v4733 = vunpack.c.l.b16 %v3587
    %v4734 = vunpack.c.h.b16 %v3587
    %v4735 = vunpack.c.l.b16 %v3588
    %v4736 = vunpack.c.h.b16 %v3588
    %v4737 = vunpack.c.l.b16 %v3589
    %v4738 = vunpack.c.h.b16 %v3589
    %v4739 = vunpack.c.l.b16 %v3590
    %v4740 = vunpack.c.h.b16 %v3590
    %v4741 = vunpack.c.l.b16 %v3591
    %v4742 = vunpack.c.h.b16 %v3591
    %v4743 = vunpack.c.l.b16 %v3592
    %v4744 = vunpack.c.h.b16 %v3592
    %v4745 = vunpack.c.l.b16 %v3593
    %v4746 = vunpack.c.h.b16 %v3593
    %v4747 = vunpack.c.l.b16 %v3594
    %v4748 = vunpack.c.h.b16 %v3594
    %v4749 = vunpack.c.l.b16 %v3595
    %v4750 = vunpack.c.h.b16 %v3595
    %v4751 = vunpack.c.l.b16 %v3596
    %v4752 = vunpack.c.h.b16 %v3596
    %v4753 = vunpack.c.l.b16 %v3597
    %v4754 = vunpack.c.h.b16 %v3597
    %v4755 = vunpack.c.l.b16 %v3598
    %v4756 = vunpack.c.h.b16 %v3598
    %v4757 = vunpack.c.l.b16 %v3599
    %v4758 = vunpack.c.h.b16 %v3599
    %v4759 = vunpack.c.l.b16 %v3600
    %v4760 = vunpack.c.h.b16 %v3600
    %v4761 = vunpack.c.l.b16 %v3601
    %v4762 = vunpack.c.h.b16 %v3601
    %v4763 = vunpack.c.l.b16 %v3602
    %v4764 = vunpack.c.h.b16 %v3602
    %v4765 = vunpack.c.l.b16 %v3603
    %v4766 = vunpack.c.h.b16 %v3603
    %v4767 = vunpack.c.l.b16 %v3604
    %v4768 = vunpack.c.h.b16 %v3604
    %v4769 = vunpack.c.l.b16 %v3605
    %v4770 = vunpack.c.h.b16 %v3605
    %v4771 = vunpack.c.l.b16 %v3606
    %v4772 = vunpack.c.h.b16 %v3606
    %v4773 = vunpack.c.l.b16 %v3607
    %v4774 = vunpack.c.h.b16 %v3607
    %v4775 = vunpack.c.l.b16 %v3608
    %v4776 = vunpack.c.h.b16 %v3608
    %v4777 = vunpack.c.l.b16 %v3609
    %v4778 = vunpack.c.h.b16 %v3609
    %v4779 = vunpack.c.l.b16 %v3610
    %v4780 = vunpack.c.h.b16 %v3610
    %v4781 = vunpack.c.l.b16 %v3611
    %v4782 = vunpack.c.h.b16 %v3611
    %v4783 = vunpack.c.l.b16 %v3612
    %v4784 = vunpack.c.h.b16 %v3612
    %v4785 = vunpack.c.l.b16 %v3613
    %v4786 = vunpack.c.h.b16 %v3613
    %v4787 = vunpack.c.l.b16 %v3614
    %v4788 = vunpack.c.h.b16 %v3614
    %v4789 = vunpack.c.l.b16 %v3615
    %v4790 = vunpack.c.h.b16 %v3615
    %v4791 = vunpack.c.l.b16 %v3616
    %v4792 = vunpack.c.h.b16 %v3616
    %v4793 = vunpack.c.l.b16 %v3617
    %v4794 = vunpack.c.h.b16 %v3617
    %v4795 = vunpack.c.l.b16 %v3618
    %v4796 = vunpack.c.h.b16 %v3618
    %v4797 = vunpack.c.l.b16 %v3619
    %v4798 = vunpack.c.h.b16 %v3619
    %v4799 = vunpack.c.l.b16 %v3620
    %v4800 = vunpack.c.h.b16 %v3620
    %v4801 = vunpack.c.l.b16 %v3621
    %v4802 = vunpack.c.h.b16 %v3621
    %v4803 = vunpack.c.l.b16 %v3622
    %v4804 = vunpack.c.h.b16 %v3622
    %v4805 = vunpack.c.l.b16 %v3623
    %v4806 = vunpack.c.h.b16 %v3623
    %v4807 = vunpack.c.l.b16 %v3624
    %v4808 = vunpack.c.h.b16 %v3624
    %v4809 = vunpack.c.l.b16 %v3625
    %v4810 = vunpack.c.h.b16 %v3625
    %v4811 = vunpack.c.l.b16 %v3626
    %v4812 = vunpack.c.h.b16 %v3626
    %v4813 = vunpack.c.l.b16 %v3627
    %v4814 = vunpack.c.h.b16 %v3627
    %v4815 = vunpack.c.l.b16 %v3628
    %v4816 = vunpack.c.h.b16 %v3628
    %v4817 = vunpack.c.l.b16 %v3629
    %v4818 = vunpack.c.h.b16 %v3629
    %v4819 = vunpack.c.l.b16 %v3630
    %v4820 = vunpack.c.h.b16 %v3630
    %v4821 = vunpack.c.l.b16 %v3631
    %v4822 = vunpack.c.h.b16 %v3631
    %v4823 = vunpack.c.l.b16 %v3632
    %v4824 = vunpack.c.h.b16 %v3632
    %v4825 = vunpack.c.l.b16 %v3633
    %v4826 = vunpack.c.h.b16 %v3633
    %v4827 = vunpack.c.l.b16 %v3634
    %v4828 = vunpack.c.h.b16 %v3634
    %v4829 = vunpack.c.l.b16 %v3635
    %v4830 = vunpack.c.h.b16 %v3635
    %v4831 = vunpack.c.l.b16 %v3636
    %v4832 = vunpack.c.h.b16 %v3636
    %v4833 = vunpack.c.l.b16 %v3637
    %v4834 = vunpack.c.h.b16 %v3637
    %v4835 = vunpack.c.l.b16 %v3638
    %v4836 = vunpack.c.h.b16 %v3638
    %v4837 = vunpack.c.l.b16 %v3639
    %v4838 = vunpack.c.h.b16 %v3639
    %v4839 = vunpack.c.l.b16 %v3640
    %v4840 = vunpack.c.h.b16 %v3640
    %v4841 = vunpack.c.l.b16 %v3641
    %v4842 = vunpack.c.h.b16 %v3641
    %v4843 = vunpack.c.l.b16 %v3642
    %v4844 = vunpack.c.h.b16 %v3642
    %v4845 = vunpack.c.l.b16 %v3643
    %v4846 = vunpack.c.h.b16 %v3643
    %v4847 = vunpack.c.l.b16 %v3644
    %v4848 = vunpack.c.h.b16 %v3644
    %v4849 = vunpack.c.l.b16 %v3645
    %v4850 = vunpack.c.h.b16 %v3645
    %v4851 = vunpack.c.l.b16 %v3646
    %v4852 = vunpack.c.h.b16 %v3646
    %v4853 = vunpack.c.l.b16 %v3647
    %v4854 = vunpack.c.h.b16 %v3647
    %v4855 = vunpack.c.l.b16 %v3648
    %v4856 = vunpack.c.h.b16 %v3648
    %v4857 = vunpack.c.l.b16 %v3649
    %v4858 = vunpack.c.h.b16 %v3649
    %v4859 = vunpack.c.l.b16 %v3650
    %v4860 = vunpack.c.h.b16 %v3650
    %v4861 = vunpack.c.l.b16 %v3651
    %v4862 = vunpack.c.h.b16 %v3651
    %v4863 = vunpack.c.l.b16 %v3652
    %v4864 = vunpack.c.h.b16 %v3652
    %v4865 = vunpack.c.l.b16 %v3653
    %v4866 = vunpack.c.h.b16 %v3653
    %v4867 = vunpack.c.l.b16 %v3654
    %v4868 = vunpack.c.h.b16 %v3654
    %v4869 = vunpack.c.l.b16 %v3655
    %v4870 = vunpack.c.h.b16 %v3655
    %v4871 = vunpack.c.l.b16 %v3656
    %v4872 = vunpack.c.h.b16 %v3656
    %v4873 = vunpack.c.l.b16 %v3657
    %v4874 = vunpack.c.h.b16 %v3657
    %v4875 = vunpack.c.l.b16 %v3658
    %v4876 = vunpack.c.h.b16 %v3658
    %v4877 = vunpack.c.l.b16 %v3659
    %v4878 = vunpack.c.h.b16 %v3659
    %v4879 = vunpack.c.l.b16 %v3660
    %v4880 = vunpack.c.h.b16 %v3660
    %v4881 = vunpack.c.l.b16 %v3661
    %v4882 = vunpack.c.h.b16 %v3661
    %v4883 = vunpack.c.l.b16 %v3662
    %v4884 = vunpack.c.h.b16 %v3662
    %v4885 = vunpack.c.l.b16 %v3663
    %v4886 = vunpack.c.h.b16 %v3663
    %v4887 = vunpack.c.l.b16 %v3664
    %v4888 = vunpack.c.h.b16 %v3664
    %v4889 = vunpack.c.l.b16 %v3665
    %v4890 = vunpack.c.h.b16 %v3665
    %v4891 = vunpack.c.l.b16 %v3666
    %v4892 = vunpack.c.h.b16 %v3666
    %v4893 = vunpack.c.l.b16 %v3667
    %v4894 = vunpack.c.h.b16 %v3667
    %v4895 = vunpack.c.l.b16 %v3668
    %v4896 = vunpack.c.h.b16 %v3668
    %v4897 = vunpack.c.l.b16 %v3669
    %v4898 = vunpack.c.h.b16 %v3669
    %v4899 = vunpack.c.l.b16 %v3670
    %v4900 = vunpack.c.h.b16 %v3670
    %v4901 = vunpack.c.l.b16 %v3671
    %v4902 = vunpack.c.h.b16 %v3671
    %v4903 = vunpack.c.l.b16 %v3672
    %v4904 = vunpack.c.h.b16 %v3672
    %v4905 = vunpack.c.l.b16 %v3673
    %v4906 = vunpack.c.h.b16 %v3673
    %v4907 = vunpack.c.l.b16 %v3674
    %v4908 = vunpack.c.h.b16 %v3674
    %v4909 = vunpack.c.l.b16 %v3675
    %v4910 = vunpack.c.h.b16 %v3675
    %v4911 = vunpack.c.l.b16 %v3676
    %v4912 = vunpack.c.h.b16 %v3676
    %v4913 = vunpack.c.l.b16 %v3677
    %v4914 = vunpack.c.h.b16 %v3677
    %v4915 = vunpack.c.l.b16 %v3678
    %v4916 = vunpack.c.h.b16 %v3678
    %v4917 = vunpack.c.l.b16 %v3679
    %v4918 = vunpack.c.h.b16 %v3679
    %v4919 = vunpack.c.l.b16 %v3680
    %v4920 = vunpack.c.h.b16 %v3680
    %v4921 = vunpack.c.l.b16 %v3681
    %v4922 = vunpack.c.h.b16 %v3681
    %v4923 = vunpack.c.l.b16 %v3682
    %v4924 = vunpack.c.h.b16 %v3682
    %v4925 = vunpack.c.l.b16 %v3683
    %v4926 = vunpack.c.h.b16 %v3683
    %v4927 = vunpack.c.l.b16 %v3684
    %v4928 = vunpack.c.h.b16 %v3684
    %v4929 = vunpack.c.l.b16 %v3685
    %v4930 = vunpack.c.h.b16 %v3685
    %v4931 = vunpack.c.l.b16 %v3686
    %v4932 = vunpack.c.h.b16 %v3686
    %v4933 = vunpack.c.l.b16 %v3687
    %v4934 = vunpack.c.h.b16 %v3687
    %v4935 = vunpack.c.l.b16 %v3688
    %v4936 = vunpack.c.h.b16 %v3688
    %v4937 = vunpack.c.l.b16 %v3689
    %v4938 = vunpack.c.h.b16 %v3689
    %v4939 = vunpack.c.l.b16 %v3690
    %v4940 = vunpack.c.h.b16 %v3690
    %v4941 = vunpack.c.l.b16 %v3691
    %v4942 = vunpack.c.h.b16 %v3691
    %v4943 = vunpack.c.l.b16 %v3692
    %v4944 = vunpack.c.h.b16 %v3692
    %v4945 = vunpack.c.l.b16 %v3693
    %v4946 = vunpack.c.h.b16 %v3693
    %v4947 = vunpack.c.l.b16 %v3694
    %v4948 = vunpack.c.h.b16 %v3694
    %v4949 = vunpack.c.l.b16 %v3695
    %v4950 = vunpack.c.h.b16 %v3695
    %v4951 = vunpack.c.l.b16 %v3696
    %v4952 = vunpack.c.h.b16 %v3696
    %v4953 = vunpack.c.l.b16 %v3697
    %v4954 = vunpack.c.h.b16 %v3697
    %v4955 = vunpack.c.l.b16 %v3698
    %v4956 = vunpack.c.h.b16 %v3698
    %v4957 = vunpack.c.l.b16 %v3699
    %v4958 = vunpack.c.h.b16 %v3699
    %v4959 = vunpack.c.l.b16 %v3700
    %v4960 = vunpack.c.h.b16 %v3700
    %v4961 = vunpack.c.l.b16 %v3701
    %v4962 = vunpack.c.h.b16 %v3701
    %v4963 = vunpack.c.l.b16 %v3702
    %v4964 = vunpack.c.h.b16 %v3702
    %v4965 = vunpack.c.l.b16 %v3703
    %v4966 = vunpack.c.h.b16 %v3703
    %v4967 = vunpack.c.l.b16 %v3704
    %v4968 = vunpack.c.h.b16 %v3704
    %v4969 = vunpack.c.l.b16 %v3705
    %v4970 = vunpack.c.h.b16 %v3705
    %v4971 = vunpack.c.l.b16 %v3706
    %v4972 = vunpack.c.h.b16 %v3706
    %v4973 = vunpack.c.l.b16 %v3707
    %v4974 = vunpack.c.h.b16 %v3707
    %v4975 = vunpack.c.l.b16 %v3708
    %v4976 = vunpack.c.h.b16 %v3708
    %v4977 = vunpack.c.l.b16 %v3709
    %v4978 = vunpack.c.h.b16 %v3709
    %v4979 = vunpack.c.l.b16 %v3710
    %v4980 = vunpack.c.h.b16 %v3710
    %v4981 = vunpack.c.l.b16 %v3711
    %v4982 = vunpack.c.h.b16 %v3711
    %v4983 = vunpack.c.l.b16 %v3712
    %v4984 = vunpack.c.h.b16 %v3712
    %v4985 = vunpack.c.l.b16 %v3713
    %v4986 = vunpack.c.h.b16 %v3713
    %v4987 = vunpack.c.l.b16 %v3714
    %v4988 = vunpack.c.h.b16 %v3714
    %v4989 = vunpack.c.l.b16 %v3715
    %v4990 = vunpack.c.h.b16 %v3715
    %v4991 = vunpack.c.l.b16 %v3716
    %v4992 = vunpack.c.h.b16 %v3716
    %v4993 = vunpack.c.l.b16 %v3717
    %v4994 = vunpack.c.h.b16 %v3717
    %v4995 = vunpack.c.l.b16 %v3718
    %v4996 = vunpack.c.h.b16 %v3718
    %v4997 = vunpack.c.l.b16 %v3719
    %v4998 = vunpack.c.h.b16 %v3719
    %v4999 = vunpack.c.l.b16 %v3720
    %v5000 = vunpack.c.h.b16 %v3720
    %v5001 = vunpack.c.l.b16 %v3721
    %v5002 = vunpack.c.h.b16 %v3721
    %v5003 = vunpack.c.l.b16 %v3722
    %v5004 = vunpack.c.h.b16 %v3722
    %v5005 = vunpack.c.l.b16 %v3723
    %v5006 = vunpack.c.h.b16 %v3723
    %v5007 = vunpack.c.l.b16 %v3724
    %v5008 = vunpack.c.h.b16 %v3724
    %v5009 = vunpack.c.l.b16 %v3725
    %v5010 = vunpack.c.h.b16 %v3725
    %v5011 = vunpack.c.l.b16 %v3726
    %v5012 = vunpack.c.h.b16 %v3726
    %v5013 = vunpack.c.l.b16 %v3727
    %v5014 = vunpack.c.h.b16 %v3727
    %v5015 = vunpack.c.l.b16 %v3728
    %v5016 = vunpack.c.h.b16 %v3728
    %v5017 = vunpack.c.l.b16 %v3729
    %v5018 = vunpack.c.h.b16 %v3729
    %v5019 = vunpack.c.l.b16 %v3730
    %v5020 = vunpack.c.h.b16 %v3730
    %v5021 = vunpack.c.l.b16 %v3731
    %v5022 = vunpack.c.h.b16 %v3731
    %v5023 = vunpack.c.l.b16 %v3732
    %v5024 = vunpack.c.h.b16 %v3732
    %v5025 = vunpack.c.l.b16 %v3733
    %v5026 = vunpack.c.h.b16 %v3733
    %v5027 = vunpack.c.l.b16 %v3734
    %v5028 = vunpack.c.h.b16 %v3734
    %v5029 = vunpack.c.l.b16 %v3735
    %v5030 = vunpack.c.h.b16 %v3735
    %v5031 = vunpack.c.l.b16 %v3736
    %v5032 = vunpack.c.h.b16 %v3736
    %v5033 = vunpack.c.l.b16 %v3737
    %v5034 = vunpack.c.h.b16 %v3737
    %v5035 = vunpack.c.l.b16 %v3738
    %v5036 = vunpack.c.h.b16 %v3738
    %v5037 = vunpack.c.l.b16 %v3739
    %v5038 = vunpack.c.h.b16 %v3739
    %v5039 = vunpack.c.l.b16 %v3740
    %v5040 = vunpack.c.h.b16 %v3740
    %v5041 = vunpack.c.l.b16 %v3741
    %v5042 = vunpack.c.h.b16 %v3741
    %v5043 = vunpack.c.l.b16 %v3742
    %v5044 = vunpack.c.h.b16 %v3742
    %v5045 = vunpack.c.l.b16 %v3743
    %v5046 = vunpack.c.h.b16 %v3743
    %v5047 = vunpack.c.l.b16 %v3744
    %v5048 = vunpack.c.h.b16 %v3744
    %v5049 = vunpack.c.l.b16 %v3745
    %v5050 = vunpack.c.h.b16 %v3745
    %v5051 = vunpack.c.l.b16 %v3746
    %v5052 = vunpack.c.h.b16 %v3746
    %v5053 = vunpack.c.l.b16 %v3747
    %v5054 = vunpack.c.h.b16 %v3747
    %v5055 = vunpack.c.l.b16 %v3748
    %v5056 = vunpack.c.h.b16 %v3748
    %v5057 = vunpack.c.l.b16 %v3749
    %v5058 = vunpack.c.h.b16 %v3749
    %v5059 = vunpack.c.l.b16 %v3750
    %v5060 = vunpack.c.h.b16 %v3750
    %v5061 = vunpack.c.l.b16 %v3751
    %v5062 = vunpack.c.h.b16 %v3751
    %v5063 = vunpack.c.l.b16 %v3752
    %v5064 = vunpack.c.h.b16 %v3752
    %v5065 = vunpack.c.l.b16 %v3753
    %v5066 = vunpack.c.h.b16 %v3753
    %v5067 = vunpack.c.l.b16 %v3754
    %v5068 = vunpack.c.h.b16 %v3754
    %v5069 = vunpack.c.l.b16 %v3755
    %v5070 = vunpack.c.h.b16 %v3755
    %v5071 = vunpack.c.l.b16 %v3756
    %v5072 = vunpack.c.h.b16 %v3756
    %v5073 = vunpack.c.l.b16 %v3757
    %v5074 = vunpack.c.h.b16 %v3757
    %v5075 = vunpack.c.l.b16 %v3758
    %v5076 = vunpack.c.h.b16 %v3758
    %v5077 = vunpack.c.l.b16 %v3759
    %v5078 = vunpack.c.h.b16 %v3759
    %v5079 = vunpack.c.l.b16 %v3760
    %v5080 = vunpack.c.h.b16 %v3760
    %v5081 = vunpack.c.l.b16 %v3761
    %v5082 = vunpack.c.h.b16 %v3761
    %v5083 = vunpack.c.l.b16 %v3762
    %v5084 = vunpack.c.h.b16 %v3762
    %v5085 = vunpack.c.l.b16 %v3763
    %v5086 = vunpack.c.h.b16 %v3763
    %v5087 = vunpack.c.l.b16 %v3764
    %v5088 = vunpack.c.h.b16 %v3764
    %v5089 = vunpack.c.l.b16 %v3765
    %v5090 = vunpack.c.h.b16 %v3765
    %v5091 = vunpack.c.l.b16 %v3766
    %v5092 = vunpack.c.h.b16 %v3766
    %v5093 = vunpack.c.l.b16 %v3767
    %v5094 = vunpack.c.h.b16 %v3767
    %v5095 = vunpack.c.l.b16 %v3768
    %v5096 = vunpack.c.h.b16 %v3768
    %v5097 = vunpack.c.l.b16 %v3769
    %v5098 = vunpack.c.h.b16 %v3769
    %v5099 = vunpack.c.l.b16 %v3770
    %v5100 = vunpack.c.h.b16 %v3770
    %v5101 = vunpack.c.l.b16 %v3771
    %v5102 = vunpack.c.h.b16 %v3771
    %v5103 = vunpack.c.l.b16 %v3772
    %v5104 = vunpack.c.h.b16 %v3772
    %v5105 = vunpack.c.l.b16 %v3773
    %v5106 = vunpack.c.h.b16 %v3773
    %v5107 = vunpack.c.l.b16 %v3774
    %v5108 = vunpack.c.h.b16 %v3774
    %v5109 = vunpack.c.l.b16 %v3775
    %v5110 = vunpack.c.h.b16 %v3775
    %v5111 = vunpack.c.l.b16 %v3776
    %v5112 = vunpack.c.h.b16 %v3776
    %v5113 = vunpack.c.l.b16 %v3777
    %v5114 = vunpack.c.h.b16 %v3777
    %v5115 = vunpack.c.l.b16 %v3778
    %v5116 = vunpack.c.h.b16 %v3778
    %v5117 = vunpack.c.l.b16 %v3779
    %v5118 = vunpack.c.h.b16 %v3779
    %v5119 = vunpack.c.l.b16 %v3780
    %v5120 = vunpack.c.h.b16 %v3780
    %v5121 = vunpack.c.l.b16 %v3781
    %v5122 = vunpack.c.h.b16 %v3781
    %v5123 = vunpack.c.l.b16 %v3782
    %v5124 = vunpack.c.h.b16 %v3782
    %v5125 = vunpack.c.l.b16 %v3783
    %v5126 = vunpack.c.h.b16 %v3783
    %v5127 = vunpack.c.l.b16 %v3784
    %v5128 = vunpack.c.h.b16 %v3784
    %v5129 = vunpack.c.l.b16 %v3785
    %v5130 = vunpack.c.h.b16 %v3785
    %v5131 = vunpack.c.l.b16 %v3786
    %v5132 = vunpack.c.h.b16 %v3786
    %v5133 = vunpack.c.l.b16 %v3787
    %v5134 = vunpack.c.h.b16 %v3787
    %v5135 = vunpack.c.l.b16 %v3788
    %v5136 = vunpack.c.h.b16 %v3788
    %v5137 = vunpack.c.l.b16 %v3789
    %v5138 = vunpack.c.h.b16 %v3789
    %v5139 = vunpack.c.l.b16 %v3790
    %v5140 = vunpack.c.h.b16 %v3790
    %v5141 = vunpack.c.l.b16 %v3791
    %v5142 = vunpack.c.h.b16 %v3791
    %v5143 = vunpack.c.l.b16 %v3792
    %v5144 = vunpack.c.h.b16 %v3792
    %v5145 = vunpack.c.l.b16 %v3793
    %v5146 = vunpack.c.h.b16 %v3793
    %v5147 = vunpack.c.l.b16 %v3794
    %v5148 = vunpack.c.h.b16 %v3794
    %v5149 = vunpack.c.l.b16 %v3795
    %v5150 = vunpack.c.h.b16 %v3795
    %v5151 = vunpack.c.l.b16 %v3796
    %v5152 = vunpack.c.h.b16 %v3796
    %v5153 = vunpack.c.l.b16 %v3797
    %v5154 = vunpack.c.h.b16 %v3797
    %v5155 = vunpack.c.l.b16 %v3798
    %v5156 = vunpack.c.h.b16 %v3798
    %v5157 = vunpack.c.l.b16 %v3799
    %v5158 = vunpack.c.h.b16 %v3799
    %v5159 = vunpack.c.l.b16 %v3800
    %v5160 = vunpack.c.h.b16 %v3800
    %v5161 = vunpack.c.l.b16 %v3801
    %v5162 = vunpack.c.h.b16 %v3801
    %v5163 = vunpack.c.l.b16 %v3802
    %v5164 = vunpack.c.h.b16 %v3802
    %v5165 = vunpack.c.l.b16 %v3803
    %v5166 = vunpack.c.h.b16 %v3803
    %v5167 = vunpack.c.l.b16 %v3804
    %v5168 = vunpack.c.h.b16 %v3804
    %v5169 = vunpack.c.l.b16 %v3805
    %v5170 = vunpack.c.h.b16 %v3805
    %v5171 = vunpack.c.l.b16 %v3806
    %v5172 = vunpack.c.h.b16 %v3806
    %v5173 = vunpack.c.l.b16 %v3807
    %v5174 = vunpack.c.h.b16 %v3807
    %v5175 = vunpack.c.l.b16 %v3808
    %v5176 = vunpack.c.h.b16 %v3808
    %v5177 = vunpack.c.l.b16 %v3809
    %v5178 = vunpack.c.h.b16 %v3809
    %v5179 = vunpack.c.l.b16 %v3810
    %v5180 = vunpack.c.h.b16 %v3810
    %v5181 = vunpack.c.l.b16 %v3811
    %v5182 = vunpack.c.h.b16 %v3811
    %v5183 = vunpack.c.l.b16 %v3812
    %v5184 = vunpack.c.h.b16 %v3812
    %v5185 = vunpack.c.l.b16 %v3813
    %v5186 = vunpack.c.h.b16 %v3813
    %v5187 = vunpack.c.l.b16 %v3814
    %v5188 = vunpack.c.h.b16 %v3814
    %v5189 = vunpack.c.l.b16 %v3815
    %v5190 = vunpack.c.h.b16 %v3815
    %v5191 = vunpack.c.l.b16 %v3816
    %v5192 = vunpack.c.h.b16 %v3816
    %v5193 = vunpack.c.l.b16 %v3817
    %v5194 = vunpack.c.h.b16 %v3817
    %v5195 = vunpack.c.l.b16 %v3818
    %v5196 = vunpack.c.h.b16 %v3818
    %v5197 = vunpack.c.l.b16 %v3819
    %v5198 = vunpack.c.h.b16 %v3819
    %v5199 = vunpack.c.l.b16 %v3820
    %v5200 = vunpack.c.h.b16 %v3820
    %v5201 = vunpack.c.l.b16 %v3821
    %v5202 = vunpack.c.h.b16 %v3821
    %v5203 = vunpack.c.l.b16 %v3822
    %v5204 = vunpack.c.h.b16 %v3822
    %v5205 = vunpack.c.l.b16 %v3823
    %v5206 = vunpack.c.h.b16 %v3823
    %v5207 = vunpack.c.l.b16 %v3824
    %v5208 = vunpack.c.h.b16 %v3824
    %v5209 = vunpack.c.l.b16 %v3825
    %v5210 = vunpack.c.h.b16 %v3825
    %v5211 = vunpack.c.l.b16 %v3826
    %v5212 = vunpack.c.h.b16 %v3826
    %v5213 = vunpack.c.l.b16 %v3827
    %v5214 = vunpack.c.h.b16 %v3827
    %v5215 = vunpack.c.l.b16 %v3828
    %v5216 = vunpack.c.h.b16 %v3828
    %v5217 = vunpack.c.l.b16 %v3829
    %v5218 = vunpack.c.h.b16 %v3829
    %v5219 = vunpack.c.l.b16 %v3830
    %v5220 = vunpack.c.h.b16 %v3830
    %v5221 = vunpack.c.l.b16 %v3831
    %v5222 = vunpack.c.h.b16 %v3831
    %v5223 = vunpack.c.l.b16 %v3832
    %v5224 = vunpack.c.h.b16 %v3832
    %v5225 = vunpack.c.l.b16 %v3833
    %v5226 = vunpack.c.h.b16 %v3833
    %v5227 = vunpack.c.l.b16 %v3834
    %v5228 = vunpack.c.h.b16 %v3834
    %v5229 = vunpack.c.l.b16 %v3835
    %v5230 = vunpack.c.h.b16 %v3835
    %v5231 = vunpack.c.l.b16 %v3836
    %v5232 = vunpack.c.h.b16 %v3836
    %v5233 = vunpack.c.l.b16 %v3837
    %v5234 = vunpack.c.h.b16 %v3837
    %v5235 = vunpack.c.l.b16 %v3838
    %v5236 = vunpack.c.h.b16 %v3838
    %v5237 = vunpack.c.l.b16 %v3839
    %v5238 = vunpack.c.h.b16 %v3839
    %v5239 = vunpack.c.l.b16 %v3840
    %v5240 = vunpack.c.h.b16 %v3840
    %v5241 = vunpack.c.l.b16 %v3841
    %v5242 = vunpack.c.h.b16 %v3841
    %v5243 = vunpack.c.l.b16 %v3842
    %v5244 = vunpack.c.h.b16 %v3842
    %v5245 = vunpack.c.l.b16 %v3843
    %v5246 = vunpack.c.h.b16 %v3843
    %v5247 = vunpack.c.l.b16 %v3844
    %v5248 = vunpack.c.h.b16 %v3844
    %v5249 = vunpack.c.l.b16 %v3845
    %v5250 = vunpack.c.h.b16 %v3845
    %v5251 = vunpack.c.l.b16 %v3846
    %v5252 = vunpack.c.h.b16 %v3846
    %v5253 = vunpack.c.l.b16 %v3847
    %v5254 = vunpack.c.h.b16 %v3847
    %v5255 = vunpack.c.l.b16 %v3848
    %v5256 = vunpack.c.h.b16 %v3848
    %v5257 = vunpack.c.l.b16 %v3849
    %v5258 = vunpack.c.h.b16 %v3849
    %v5259 = vunpack.c.l.b16 %v3850
    %v5260 = vunpack.c.h.b16 %v3850
    %v5261 = vunpack.c.l.b16 %v3851
    %v5262 = vunpack.c.h.b16 %v3851
    %v5263 = vunpack.c.l.b16 %v3852
    %v5264 = vunpack.c.h.b16 %v3852
    %v5265 = vunpack.c.l.b16 %v3853
    %v5266 = vunpack.c.h.b16 %v3853
    %v5267 = vunpack.c.l.b16 %v3854
    %v5268 = vunpack.c.h.b16 %v3854
    %v5269 = vunpack.c.l.b16 %v3855
    %v5270 = vunpack.c.h.b16 %v3855
    %v5271 = vunpack.c.l.b16 %v3856
    %v5272 = vunpack.c.h.b16 %v3856
    %v5273 = vunpack.c.l.b16 %v3857
    %v5274 = vunpack.c.h.b16 %v3857
    %v5275 = vunpack.c.l.b16 %v3858
    %v5276 = vunpack.c.h.b16 %v3858
    %v5277 = vunpack.c.l.b16 %v3859
    %v5278 = vunpack.c.h.b16 %v3859
    %v5279 = vunpack.c.l.b16 %v3860
    %v5280 = vunpack.c.h.b16 %v3860
    %v5281 = vunpack.c.l.b16 %v3861
    %v5282 = vunpack.c.h.b16 %v3861
    %v5283 = vunpack.c.l.b16 %v3862
    %v5284 = vunpack.c.h.b16 %v3862
    %v5285 = vunpack.c.l.b16 %v3863
    %v5286 = vunpack.c.h.b16 %v3863
    %v5287 = vunpack.c.l.b16 %v3864
    %v5288 = vunpack.c.h.b16 %v3864
    %v5289 = vunpack.c.l.b16 %v3865
    %v5290 = vunpack.c.h.b16 %v3865
    %v5291 = vunpack.c.l.b16 %v3866
    %v5292 = vunpack.c.h.b16 %v3866
    %v5293 = vunpack.c.l.b16 %v3867
    %v5294 = vunpack.c.h.b16 %v3867
    %v5295 = vunpack.c.l.b16 %v3868
    %v5296 = vunpack.c.h.b16 %v3868
    %v5297 = vunpack.c.l.b16 %v3869
    %v5298 = vunpack.c.h.b16 %v3869
    %v5299 = vunpack.c.l.b16 %v3870
    %v5300 = vunpack.c.h.b16 %v3870
    %v5301 = vunpack.c.l.b16 %v3871
    %v5302 = vunpack.c.h.b16 %v3871
    %v5303 = vunpack.c.l.b16 %v3872
    %v5304 = vunpack.c.h.b16 %v3872
    %v5305 = vunpack.c.l.b16 %v3873
    %v5306 = vunpack.c.h.b16 %v3873
    %v5307 = vunpack.c.l.b16 %v3874
    %v5308 = vunpack.c.h.b16 %v3874
    %v5309 = vunpack.c.l.b16 %v3875
    %v5310 = vunpack.c.h.b16 %v3875
    %v5311 = vunpack.c.l.b16 %v3876
    %v5312 = vunpack.c.h.b16 %v3876
    %v5313 = vunpack.c.l.b16 %v3877
    %v5314 = vunpack.c.h.b16 %v3877
    %v5315 = vunpack.c.l.b16 %v3878
    %v5316 = vunpack.c.h.b16 %v3878
    %v5317 = vunpack.c.l.b16 %v3879
    %v5318 = vunpack.c.h.b16 %v3879
    %v5319 = vunpack.c.l.b16 %v3880
    %v5320 = vunpack.c.h.b16 %v3880
    %v5321 = vunpack.c.l.b16 %v3881
    %v5322 = vunpack.c.h.b16 %v3881
    %v5323 = vunpack.c.l.b16 %v3882
    %v5324 = vunpack.c.h.b16 %v3882
    %v5325 = vunpack.c.l.b16 %v3883
    %v5326 = vunpack.c.h.b16 %v3883
    %v5327 = vunpack.c.l.b16 %v3884
    %v5328 = vunpack.c.h.b16 %v3884
    %v5329 = vunpack.c.l.b16 %v3885
    %v5330 = vunpack.c.h.b16 %v3885
    %v5331 = vunpack.c.l.b16 %v3886
    %v5332 = vunpack.c.h.b16 %v3886
    %v5333 = vunpack.c.l.b16 %v3887
    %v5334 = vunpack.c.h.b16 %v3887
    %v5335 = vunpack.c.l.b16 %v3888
    %v5336 = vunpack.c.h.b16 %v3888
    %v5337 = vunpack.c.l.b16 %v3889
    %v5338 = vunpack.c.h.b16 %v3889
    %v5339 = vunpack.c.l.b16 %v3890
    %v5340 = vunpack.c.h.b16 %v3890
    %v5341 = vunpack.c.l.b16 %v3891
    %v5342 = vunpack.c.h.b16 %v3891
    %v5343 = vunpack.c.l.b16 %v3892
    %v5344 = vunpack.c.h.b16 %v3892
    %v5345 = vunpack.c.l.b16 %v3893
    %v5346 = vunpack.c.h.b16 %v3893
    %v5347 = vunpack.c.l.b16 %v3894
    %v5348 = vunpack.c.h.b16 %v3894
    %v5349 = vunpack.c.l.b16 %v3895
    %v5350 = vunpack.c.h.b16 %v3895
    %v5351 = vunpack.c.l.b16 %v3896
    %v5352 = vunpack.c.h.b16 %v3896
    %v5353 = vunpack.c.l.b16 %v3897
    %v5354 = vunpack.c.h.b16 %v3897
    %v5355 = vunpack.c.l.b16 %v3898
    %v5356 = vunpack.c.h.b16 %v3898
    %v5357 = vunpack.c.l.b16 %v3899
    %v5358 = vunpack.c.h.b16 %v3899
    %v5359 = vunpack.c.l.b16 %v3900
    %v5360 = vunpack.c.h.b16 %v3900
    %v5361 = vunpack.c.l.b16 %v3901
    %v5362 = vunpack.c.h.b16 %v3901
    %v5363 = vunpack.c.l.b16 %v3902
    %v5364 = vunpack.c.h.b16 %v3902
    %v5365 = vunpack.c.l.b16 %v3903
    %v5366 = vunpack.c.h.b16 %v3903
    %v5367 = vunpack.c.l.b16 %v3904
    %v5368 = vunpack.c.h.b16 %v3904
    %v5369 = vunpack.c.l.b16 %v3905
    %v5370 = vunpack.c.h.b16 %v3905
    %v5371 = vunpack.c.l.b16 %v3906
    %v5372 = vunpack.c.h.b16 %v3906
    %v5373 = vunpack.c.l.b16 %v3907
    %v5374 = vunpack.c.h.b16 %v3907
    %v5375 = vunpack.c.l.b16 %v3908
    %v5376 = vunpack.c.h.b16 %v3908
    %v5377 = vunpack.c.l.b16 %v3909
    %v5378 = vunpack.c.h.b16 %v3909
    %v5379 = vunpack.c.l.b16 %v3910
    %v5380 = vunpack.c.h.b16 %v3910
    %v5381 = vunpack.c.l.b16 %v3911
    %v5382 = vunpack.c.h.b16 %v3911
    %v5383 = vunpack.c.l.b16 %v3912
    %v5384 = vunpack.c.h.b16 %v3912
    %v5385 = vunpack.c.l.b16 %v3913
    %v5386 = vunpack.c.h.b16 %v3913
    %v5387 = vunpack.c.l.b16 %v3914
    %v5388 = vunpack.c.h.b16 %v3914
    %v5389 = vunpack.c.l.b16 %v3915
    %v5390 = vunpack.c.h.b16 %v3915
    %v5391 = vunpack.c.l.b16 %v3916
    %v5392 = vunpack.c.h.b16 %v3916
    %v5393 = vunpack.c.l.b16 %v3917
    %v5394 = vunpack.c.h.b16 %v3917
    %v5395 = vunpack.c.l.b16 %v3918
    %v5396 = vunpack.c.h.b16 %v3918
    %v5397 = vunpack.c.l.b16 %v3919
    %v5398 = vunpack.c.h.b16 %v3919
    %v5399 = vunpack.c.l.b16 %v3920
    %v5400 = vunpack.c.h.b16 %v3920
    %v5401 = vunpack.c.l.b16 %v3921
    %v5402 = vunpack.c.h.b16 %v3921
    %v5403 = vunpack.c.l.b16 %v3922
    %v5404 = vunpack.c.h.b16 %v3922
    %v5405 = vunpack.c.l.b16 %v3923
    %v5406 = vunpack.c.h.b16 %v3923
    %v5407 = vunpack.c.l.b16 %v3924
    %v5408 = vunpack.c.h.b16 %v3924
    %v5409 = vunpack.c.l.b16 %v3925
    %v5410 = vunpack.c.h.b16 %v3925
    %v5411 = vunpack.c.l.b16 %v3926
    %v5412 = vunpack.c.h.b16 %v3926
    %v5413 = vunpack.c.l.b16 %v3927
    %v5414 = vunpack.c.h.b16 %v3927
    %v5415 = vunpack.c.l.b16 %v3928
    %v5416 = vunpack.c.h.b16 %v3928
    %v5417 = vunpack.c.l.b16 %v3929
    %v5418 = vunpack.c.h.b16 %v3929
    %v5419 = vunpack.c.l.b16 %v3930
    %v5420 = vunpack.c.h.b16 %v3930
    %v5421 = vunpack.c.l.b16 %v3931
    %v5422 = vunpack.c.h.b16 %v3931
    %v5423 = vunpack.c.l.b16 %v3932
    %v5424 = vunpack.c.h.b16 %v3932
    %v5425 = vunpack.c.l.b16 %v3933
    %v5426 = vunpack.c.h.b16 %v3933
    %v5427 = vunpack.c.l.b16 %v3934
    %v5428 = vunpack.c.h.b16 %v3934
    %v5429 = vunpack.c.l.b16 %v3935
    %v5430 = vunpack.c.h.b16 %v3935
    %v5431 = vunpack.c.l.b16 %v3936
    %v5432 = vunpack.c.h.b16 %v3936
    %v5433 = vunpack.c.l.b16 %v3937
    %v5434 = vunpack.c.h.b16 %v3937
    %v5435 = vunpack.c.l.b16 %v3938
    %v5436 = vunpack.c.h.b16 %v3938
    %v5437 = vunpack.c.l.b16 %v3939
    %v5438 = vunpack.c.h.b16 %v3939
    %v5439 = vunpack.c.l.b16 %v3940
    %v5440 = vunpack.c.h.b16 %v3940
    %v5441 = vunpack.c.l.b16 %v3941
    %v5442 = vunpack.c.h.b16 %v3941
    %v5443 = vunpack.c.l.b16 %v3942
    %v5444 = vunpack.c.h.b16 %v3942
    %v5445 = vunpack.c.l.b16 %v3943
    %v5446 = vunpack.c.h.b16 %v3943
    %v5447 = vunpack.c.l.b16 %v3944
    %v5448 = vunpack.c.h.b16 %v3944
    %v5449 = vunpack.c.l.b16 %v3945
    %v5450 = vunpack.c.h.b16 %v3945
    %v5451 = vunpack.c.l.b16 %v3946
    %v5452 = vunpack.c.h.b16 %v3946
    %v5453 = vunpack.c.l.b16 %v3947
    %v5454 = vunpack.c.h.b16 %v3947
    %v5455 = vunpack.c.l.b16 %v3948
    %v5456 = vunpack.c.h.b16 %v3948
    %v5457 = vunpack.c.l.b16 %v3949
    %v5458 = vunpack.c.h.b16 %v3949
    %v5459 = vunpack.c.l.b16 %v3950
    %v5460 = vunpack.c.h.b16 %v3950
    %v5461 = vunpack.c.l.b16 %v3951
    %v5462 = vunpack.c.h.b16 %v3951
    %v5463 = vunpack.c.l.b16 %v3952
    %v5464 = vunpack.c.h.b16 %v3952
    %v5465 = vunpack.c.l.b16 %v3953
    %v5466 = vunpack.c.h.b16 %v3953
    %v5467 = vunpack.c.l.b16 %v3954
    %v5468 = vunpack.c.h.b16 %v3954
    %v5469 = vunpack.c.l.b16 %v3955
    %v5470 = vunpack.c.h.b16 %v3955
    %v5471 = vunpack.c.l.b16 %v3956
    %v5472 = vunpack.c.h.b16 %v3956
    %v5473 = vunpack.c.l.b16 %v3957
    %v5474 = vunpack.c.h.b16 %v3957
    %v5475 = vunpack.c.l.b16 %v3958
    %v5476 = vunpack.c.h.b16 %v3958
    %v5477 = vunpack.c.l.b16 %v3959
    %v5478 = vunpack.c.h.b16 %v3959
    %v5479 = vunpack.c.l.b16 %v3960
    %v5480 = vunpack.c.h.b16 %v3960
    %v5481 = vunpack.c.l.b16 %v3961
    %v5482 = vunpack.c.h.b16 %v3961
    %v5483 = vunpack.c.l.b16 %v3962
    %v5484 = vunpack.c.h.b16 %v3962
    %v5485 = vunpack.c.l.b16 %v3963
    %v5486 = vunpack.c.h.b16 %v3963
    %v5487 = vunpack.c.l.b16 %v3964
    %v5488 = vunpack.c.h.b16 %v3964
    %v5489 = vunpack.c.l.b16 %v3965
    %v5490 = vunpack.c.h.b16 %v3965
    %v5491 = vunpack.c.l.b16 %v3966
    %v5492 = vunpack.c.h.b16 %v3966
    %v5493 = vunpack.c.l.b16 %v3967
    %v5494 = vunpack.c.h.b16 %v3967
    %v5495 = vunpack.c.l.b16 %v3968
    %v5496 = vunpack.c.h.b16 %v3968
    %v5497 = vunpack.c.l.b16 %v3969
    %v5498 = vunpack.c.h.b16 %v3969
    %v5499 = vunpack.c.l.b16 %v3970
    %v5500 = vunpack.c.h.b16 %v3970
    %v5501 = vunpack.c.l.b16 %v3971
    %v5502 = vunpack.c.h.b16 %v3971
    %v5503 = vunpack.c.l.b16 %v3972
    %v5504 = vunpack.c.h.b16 %v3972
    %v5505 = vunpack.c.l.b16 %v3973
    %v5506 = vunpack.c.h.b16 %v3973
    %v5507 = vunpack.c.l.b16 %v3974
    %v5508 = vunpack.c.h.b16 %v3974
    %v5509 = vunpack.c.l.b16 %v3975
    %v5510 = vunpack.c.h.b16 %v3975
    %v5511 = vunpack.c.l.b16 %v3976
    %v5512 = vunpack.c.h.b16 %v3976
    %v5513 = vunpack.c.l.b16 %v3977
    %v5514 = vunpack.c.h.b16 %v3977
    %v5515 = vunpack.c.l.b16 %v3978
    %v5516 = vunpack.c.h.b16 %v3978
    %v5517 = vunpack.c.l.b16 %v3979
    %v5518 = vunpack.c.h.b16 %v3979
    %v5519 = vunpack.c.l.b16 %v3980
    %v5520 = vunpack.c.h.b16 %v3980
    %v5521 = vunpack.c.l.b16 %v3981
    %v5522 = vunpack.c.h.b16 %v3981
    %v5523 = vunpack.c.l.b16 %v3982
    %v5524 = vunpack.c.h.b16 %v3982
    %v5525 = vunpack.c.l.b16 %v3983
    %v5526 = vunpack.c.h.b16 %v3983
    %v5527 = vunpack.c.l.b16 %v3984
    %v5528 = vunpack.c.h.b16 %v3984
    %v5529 = vunpack.c.l.b16 %v3985
    %v5530 = vunpack.c.h.b16 %v3985
    %v5531 = vunpack.c.l.b16 %v3986
    %v5532 = vunpack.c.h.b16 %v3986
    %v5533 = vunpack.c.l.b16 %v3987
    %v5534 = vunpack.c.h.b16 %v3987
    %v5535 = vunpack.c.l.b16 %v3988
    %v5536 = vunpack.c.h.b16 %v3988
    %v5537 = vunpack.c.l.b16 %v3989
    %v5538 = vunpack.c.h.b16 %v3989
    %v5539 = vunpack.c.l.b16 %v3990
    %v5540 = vunpack.c.h.b16 %v3990
    %v5541 = vunpack.c.l.b16 %v3991
    %v5542 = vunpack.c.h.b16 %v3991
    %v5543 = vunpack.c.l.b16 %v3992
    %v5544 = vunpack.c.h.b16 %v3992
    %v5545 = vunpack.c.l.b16 %v3993
    %v5546 = vunpack.c.h.b16 %v3993
    %v5547 = vunpack.c.l.b16 %v3994
    %v5548 = vunpack.c.h.b16 %v3994
    %v5549 = vunpack.c.l.b16 %v3995
    %v5550 = vunpack.c.h.b16 %v3995
    %v5551 = vunpack.c.l.b16 %v3996
    %v5552 = vunpack.c.h.b16 %v3996
    %v5553 = vunpack.c.l.b16 %v3997
    %v5554 = vunpack.c.h.b16 %v3997
    %v5555 = vunpack.c.l.b16 %v3998
    %v5556 = vunpack.c.h.b16 %v3998
    %v5557 = vunpack.c.l.b16 %v3999
    %v5558 = vunpack.c.h.b16 %v3999
    %v5559 = vunpack.c.l.b16 %v4000
    %v5560 = vunpack.c.h.b16 %v4000
    %v5561 = vunpack.c.l.b16 %v4001
    %v5562 = vunpack.c.h.b16 %v4001
    %v5563 = vunpack.c.l.b16 %v4002
    %v5564 = vunpack.c.h.b16 %v4002
    %v5565 = vunpack.c.l.b16 %v4003
    %v5566 = vunpack.c.h.b16 %v4003
    %v5567 = vunpack.c.l.b16 %v4004
    %v5568 = vunpack.c.h.b16 %v4004
    %v5569 = vunpack.c.l.b16 %v4005
    %v5570 = vunpack.c.h.b16 %v4005
    %v5571 = vunpack.c.l.b16 %v4006
    %v5572 = vunpack.c.h.b16 %v4006
    %v5573 = vunpack.c.l.b16 %v4007
    %v5574 = vunpack.c.h.b16 %v4007
    %v5575 = vunpack.c.l.b16 %v4008
    %v5576 = vunpack.c.h.b16 %v4008
    %v5577 = vunpack.c.l.b16 %v4009
    %v5578 = vunpack.c.h.b16 %v4009
    %v5579 = vunpack.c.l.b16 %v4010
    %v5580 = vunpack.c.h.b16 %v4010
    %v5581 = vunpack.c.l.b16 %v4011
    %v5582 = vunpack.c.h.b16 %v4011
    %v5583 = vunpack.c.l.b16 %v4012
    %v5584 = vunpack.c.h.b16 %v4012
    %v5585 = vunpack.c.l.b16 %v4013
    %v5586 = vunpack.c.h.b16 %v4013
    %v5587 = vunpack.c.l.b16 %v4014
    %v5588 = vunpack.c.h.b16 %v4014
    %v5589 = vunpack.c.l.b16 %v4015
    %v5590 = vunpack.c.h.b16 %v4015
    %v5591 = vunpack.c.l.b16 %v4016
    %v5592 = vunpack.c.h.b16 %v4016
    %v5593 = vunpack.c.l.b16 %v4017
    %v5594 = vunpack.c.h.b16 %v4017
    %v5595 = vunpack.c.l.b16 %v4018
    %v5596 = vunpack.c.h.b16 %v4018
    %v5597 = vpack.c.b16 %v4581, %v4573
    %v5598 = vpack.c.b16 %v4582, %v4574
    %v5599 = vpack.c.b16 %v4583, %v4575
    %v5600 = vpack.c.b16 %v4584, %v4576
    %v5601 = vpack.c.b16 %v4585, %v4577
    %v5602 = vpack.c.b16 %v4586, %v4578
    %v5603 = vpack.c.b16 %v4587, %v4579
    %v5604 = vpack.c.b16 %v4588, %v4580
    %v5605 = vpack.c.b16 %v4597, %v4589
    %v5606 = vpack.c.b16 %v4598, %v4590
    %v5607 = vpack.c.b16 %v4599, %v4591
    %v5608 = vpack.c.b16 %v4600, %v4592
    %v5609 = vpack.c.b16 %v4601, %v4593
    %v5610 = vpack.c.b16 %v4602, %v4594
    %v5611 = vpack.c.b16 %v4603, %v4595
    %v5612 = vpack.c.b16 %v4604, %v4596
    %v5613 = vpack.c.b16 %v4613, %v4605
    %v5614 = vpack.c.b16 %v4614, %v4606
    %v5615 = vpack.c.b16 %v4615, %v4607
    %v5616 = vpack.c.b16 %v4616, %v4608
    %v5617 = vpack.c.b16 %v4617, %v4609
    %v5618 = vpack.c.b16 %v4618, %v4610
    %v5619 = vpack.c.b16 %v4619, %v4611
    %v5620 = vpack.c.b16 %v4620, %v4612
    %v5621 = vpack.c.b16 %v4629, %v4621
    %v5622 = vpack.c.b16 %v4630, %v4622
    %v5623 = vpack.c.b16 %v4631, %v4623
    %v5624 = vpack.c.b16 %v4632, %v4624
    %v5625 = vpack.c.b16 %v4633, %v4625
    %v5626 = vpack.c.b16 %v4634, %v4626
    %v5627 = vpack.c.b16 %v4635, %v4627
    %v5628 = vpack.c.b16 %v4636, %v4628
    %v5629 = vpack.c.b16 %v4645, %v4637
    %v5630 = vpack.c.b16 %v4646, %v4638
    %v5631 = vpack.c.b16 %v4647, %v4639
    %v5632 = vpack.c.b16 %v4648, %v4640
    %v5633 = vpack.c.b16 %v4649, %v4641
    %v5634 = vpack.c.b16 %v4650, %v4642
    %v5635 = vpack.c.b16 %v4651, %v4643
    %v5636 = vpack.c.b16 %v4652, %v4644
    %v5637 = vpack.c.b16 %v4661, %v4653
    %v5638 = vpack.c.b16 %v4662, %v4654
    %v5639 = vpack.c.b16 %v4663, %v4655
    %v5640 = vpack.c.b16 %v4664, %v4656
    %v5641 = vpack.c.b16 %v4665, %v4657
    %v5642 = vpack.c.b16 %v4666, %v4658
    %v5643 = vpack.c.b16 %v4667, %v4659
    %v5644 = vpack.c.b16 %v4668, %v4660
    %v5645 = vpack.c.b16 %v4677, %v4669
    %v5646 = vpack.c.b16 %v4678, %v4670
    %v5647 = vpack.c.b16 %v4679, %v4671
    %v5648 = vpack.c.b16 %v4680, %v4672
    %v5649 = vpack.c.b16 %v4681, %v4673
    %v5650 = vpack.c.b16 %v4682, %v4674
    %v5651 = vpack.c.b16 %v4683, %v4675
    %v5652 = vpack.c.b16 %v4684, %v4676
    %v5653 = vpack.c.b16 %v4693, %v4685
    %v5654 = vpack.c.b16 %v4694, %v4686
    %v5655 = vpack.c.b16 %v4695, %v4687
    %v5656 = vpack.c.b16 %v4696, %v4688
    %v5657 = vpack.c.b16 %v4697, %v4689
    %v5658 = vpack.c.b16 %v4698, %v4690
    %v5659 = vpack.c.b16 %v4699, %v4691
    %v5660 = vpack.c.b16 %v4700, %v4692
    %v5661 = vpack.c.b16 %v4709, %v4701
    %v5662 = vpack.c.b16 %v4710, %v4702
    %v5663 = vpack.c.b16 %v4711, %v4703
    %v5664 = vpack.c.b16 %v4712, %v4704
    %v5665 = vpack.c.b16 %v4713, %v4705
    %v5666 = vpack.c.b16 %v4714, %v4706
    %v5667 = vpack.c.b16 %v4715, %v4707
    %v5668 = vpack.c.b16 %v4716, %v4708
    %v5669 = vpack.c.b16 %v4725, %v4717
    %v5670 = vpack.c.b16 %v4726, %v4718
    %v5671 = vpack.c.b16 %v4727, %v4719
    %v5672 = vpack.c.b16 %v4728, %v4720
    %v5673 = vpack.c.b16 %v4729, %v4721
    %v5674 = vpack.c.b16 %v4730, %v4722
    %v5675 = vpack.c.b16 %v4731, %v4723
    %v5676 = vpack.c.b16 %v4732, %v4724
    %v5677 = vpack.c.b16 %v4741, %v4733
    %v5678 = vpack.c.b16 %v4742, %v4734
    %v5679 = vpack.c.b16 %v4743, %v4735
    %v5680 = vpack.c.b16 %v4744, %v4736
    %v5681 = vpack.c.b16 %v4745, %v4737
    %v5682 = vpack.c.b16 %v4746, %v4738
    %v5683 = vpack.c.b16 %v4747, %v4739
    %v5684 = vpack.c.b16 %v4748, %v4740
    %v5685 = vpack.c.b16 %v4757, %v4749
    %v5686 = vpack.c.b16 %v4758, %v4750
    %v5687 = vpack.c.b16 %v4759, %v4751
    %v5688 = vpack.c.b16 %v4760, %v4752
    %v5689 = vpack.c.b16 %v4761, %v4753
    %v5690 = vpack.c.b16 %v4762, %v4754
    %v5691 = vpack.c.b16 %v4763, %v4755
    %v5692 = vpack.c.b16 %v4764, %v4756
    %v5693 = vpack.c.b16 %v4773, %v4765
    %v5694 = vpack.c.b16 %v4774, %v4766
    %v5695 = vpack.c.b16 %v4775, %v4767
    %v5696 = vpack.c.b16 %v4776, %v4768
    %v5697 = vpack.c.b16 %v4777, %v4769
    %v5698 = vpack.c.b16 %v4778, %v4770
    %v5699 = vpack.c.b16 %v4779, %v4771
    %v5700 = vpack.c.b16 %v4780, %v4772
    %v5701 = vpack.c.b16 %v4789, %v4781
    %v5702 = vpack.c.b16 %v4790, %v4782
    %v5703 = vpack.c.b16 %v4791, %v4783
    %v5704 = vpack.c.b16 %v4792, %v4784
    %v5705 = vpack.c.b16 %v4793, %v4785
    %v5706 = vpack.c.b16 %v4794, %v4786
    %v5707 = vpack.c.b16 %v4795, %v4787
    %v5708 = vpack.c.b16 %v4796, %v4788
    %v5709 = vpack.c.b16 %v4805, %v4797
    %v5710 = vpack.c.b16 %v4806, %v4798
    %v5711 = vpack.c.b16 %v4807, %v4799
    %v5712 = vpack.c.b16 %v4808, %v4800
    %v5713 = vpack.c.b16 %v4809, %v4801
    %v5714 = vpack.c.b16 %v4810, %v4802
    %v5715 = vpack.c.b16 %v4811, %v4803
    %v5716 = vpack.c.b16 %v4812, %v4804
    %v5717 = vpack.c.b16 %v4821, %v4813
    %v5718 = vpack.c.b16 %v4822, %v4814
    %v5719 = vpack.c.b16 %v4823, %v4815
    %v5720 = vpack.c.b16 %v4824, %v4816
    %v5721 = vpack.c.b16 %v4825, %v4817
    %v5722 = vpack.c.b16 %v4826, %v4818
    %v5723 = vpack.c.b16 %v4827, %v4819
    %v5724 = vpack.c.b16 %v4828, %v4820
    %v5725 = vpack.c.b16 %v4837, %v4829
    %v5726 = vpack.c.b16 %v4838, %v4830
    %v5727 = vpack.c.b16 %v4839, %v4831
    %v5728 = vpack.c.b16 %v4840, %v4832
    %v5729 = vpack.c.b16 %v4841, %v4833
    %v5730 = vpack.c.b16 %v4842, %v4834
    %v5731 = vpack.c.b16 %v4843, %v4835
    %v5732 = vpack.c.b16 %v4844, %v4836
    %v5733 = vpack.c.b16 %v4853, %v4845
    %v5734 = vpack.c.b16 %v4854, %v4846
    %v5735 = vpack.c.b16 %v4855, %v4847
    %v5736 = vpack.c.b16 %v4856, %v4848
    %v5737 = vpack.c.b16 %v4857, %v4849
    %v5738 = vpack.c.b16 %v4858, %v4850
    %v5739 = vpack.c.b16 %v4859, %v4851
    %v5740 = vpack.c.b16 %v4860, %v4852
    %v5741 = vpack.c.b16 %v4869, %v4861
    %v5742 = vpack.c.b16 %v4870, %v4862
    %v5743 = vpack.c.b16 %v4871, %v4863
    %v5744 = vpack.c.b16 %v4872, %v4864
    %v5745 = vpack.c.b16 %v4873, %v4865
    %v5746 = vpack.c.b16 %v4874, %v4866
    %v5747 = vpack.c.b16 %v4875, %v4867
    %v5748 = vpack.c.b16 %v4876, %v4868
    %v5749 = vpack.c.b16 %v4885, %v4877
    %v5750 = vpack.c.b16 %v4886, %v4878
    %v5751 = vpack.c.b16 %v4887, %v4879
    %v5752 = vpack.c.b16 %v4888, %v4880
    %v5753 = vpack.c.b16 %v4889, %v4881
    %v5754 = vpack.c.b16 %v4890, %v4882
    %v5755 = vpack.c.b16 %v4891, %v4883
    %v5756 = vpack.c.b16 %v4892, %v4884
    %v5757 = vpack.c.b16 %v4901, %v4893
    %v5758 = vpack.c.b16 %v4902, %v4894
    %v5759 = vpack.c.b16 %v4903, %v4895
    %v5760 = vpack.c.b16 %v4904, %v4896
    %v5761 = vpack.c.b16 %v4905, %v4897
    %v5762 = vpack.c.b16 %v4906, %v4898
    %v5763 = vpack.c.b16 %v4907, %v4899
    %v5764 = vpack.c.b16 %v4908, %v4900
    %v5765 = vpack.c.b16 %v4917, %v4909
    %v5766 = vpack.c.b16 %v4918, %v4910
    %v5767 = vpack.c.b16 %v4919, %v4911
    %v5768 = vpack.c.b16 %v4920, %v4912
    %v5769 = vpack.c.b16 %v4921, %v4913
    %v5770 = vpack.c.b16 %v4922, %v4914
    %v5771 = vpack.c.b16 %v4923, %v4915
    %v5772 = vpack.c.b16 %v4924, %v4916
    %v5773 = vpack.c.b16 %v4933, %v4925
    %v5774 = vpack.c.b16 %v4934, %v4926
    %v5775 = vpack.c.b16 %v4935, %v4927
    %v5776 = vpack.c.b16 %v4936, %v4928
    %v5777 = vpack.c.b16 %v4937, %v4929
    %v5778 = vpack.c.b16 %v4938, %v4930
    %v5779 = vpack.c.b16 %v4939, %v4931
    %v5780 = vpack.c.b16 %v4940, %v4932
    %v5781 = vpack.c.b16 %v4949, %v4941
    %v5782 = vpack.c.b16 %v4950, %v4942
    %v5783 = vpack.c.b16 %v4951, %v4943
    %v5784 = vpack.c.b16 %v4952, %v4944
    %v5785 = vpack.c.b16 %v4953, %v4945
    %v5786 = vpack.c.b16 %v4954, %v4946
    %v5787 = vpack.c.b16 %v4955, %v4947
    %v5788 = vpack.c.b16 %v4956, %v4948
    %v5789 = vpack.c.b16 %v4965, %v4957
    %v5790 = vpack.c.b16 %v4966, %v4958
    %v5791 = vpack.c.b16 %v4967, %v4959
    %v5792 = vpack.c.b16 %v4968, %v4960
    %v5793 = vpack.c.b16 %v4969, %v4961
    %v5794 = vpack.c.b16 %v4970, %v4962
    %v5795 = vpack.c.b16 %v4971, %v4963
    %v5796 = vpack.c.b16 %v4972, %v4964
    %v5797 = vpack.c.b16 %v4981, %v4973
    %v5798 = vpack.c.b16 %v4982, %v4974
    %v5799 = vpack.c.b16 %v4983, %v4975
    %v5800 = vpack.c.b16 %v4984, %v4976
    %v5801 = vpack.c.b16 %v4985, %v4977
    %v5802 = vpack.c.b16 %v4986, %v4978
    %v5803 = vpack.c.b16 %v4987, %v4979
    %v5804 = vpack.c.b16 %v4988, %v4980
    %v5805 = vpack.c.b16 %v4997, %v4989
    %v5806 = vpack.c.b16 %v4998, %v4990
    %v5807 = vpack.c.b16 %v4999, %v4991
    %v5808 = vpack.c.b16 %v5000, %v4992
    %v5809 = vpack.c.b16 %v5001, %v4993
    %v5810 = vpack.c.b16 %v5002, %v4994
    %v5811 = vpack.c.b16 %v5003, %v4995
    %v5812 = vpack.c.b16 %v5004, %v4996
    %v5813 = vpack.c.b16 %v5013, %v5005
    %v5814 = vpack.c.b16 %v5014, %v5006
    %v5815 = vpack.c.b16 %v5015, %v5007
    %v5816 = vpack.c.b16 %v5016, %v5008
    %v5817 = vpack.c.b16 %v5017, %v5009
    %v5818 = vpack.c.b16 %v5018, %v5010
    %v5819 = vpack.c.b16 %v5019, %v5011
    %v5820 = vpack.c.b16 %v5020, %v5012
    %v5821 = vpack.c.b16 %v5029, %v5021
    %v5822 = vpack.c.b16 %v5030, %v5022
    %v5823 = vpack.c.b16 %v5031, %v5023
    %v5824 = vpack.c.b16 %v5032, %v5024
    %v5825 = vpack.c.b16 %v5033, %v5025
    %v5826 = vpack.c.b16 %v5034, %v5026
    %v5827 = vpack.c.b16 %v5035, %v5027
    %v5828 = vpack.c.b16 %v5036, %v5028
    %v5829 = vpack.c.b16 %v5045, %v5037
    %v5830 = vpack.c.b16 %v5046, %v5038
    %v5831 = vpack.c.b16 %v5047, %v5039
    %v5832 = vpack.c.b16 %v5048, %v5040
    %v5833 = vpack.c.b16 %v5049, %v5041
    %v5834 = vpack.c.b16 %v5050, %v5042
    %v5835 = vpack.c.b16 %v5051, %v5043
    %v5836 = vpack.c.b16 %v5052, %v5044
    %v5837 = vpack.c.b16 %v5061, %v5053
    %v5838 = vpack.c.b16 %v5062, %v5054
    %v5839 = vpack.c.b16 %v5063, %v5055
    %v5840 = vpack.c.b16 %v5064, %v5056
    %v5841 = vpack.c.b16 %v5065, %v5057
    %v5842 = vpack.c.b16 %v5066, %v5058
    %v5843 = vpack.c.b16 %v5067, %v5059
    %v5844 = vpack.c.b16 %v5068, %v5060
    %v5845 = vpack.c.b16 %v5077, %v5069
    %v5846 = vpack.c.b16 %v5078, %v5070
    %v5847 = vpack.c.b16 %v5079, %v5071
    %v5848 = vpack.c.b16 %v5080, %v5072
    %v5849 = vpack.c.b16 %v5081, %v5073
    %v5850 = vpack.c.b16 %v5082, %v5074
    %v5851 = vpack.c.b16 %v5083, %v5075
    %v5852 = vpack.c.b16 %v5084, %v5076
    %v5853 = vpack.c.b16 %v5093, %v5085
    %v5854 = vpack.c.b16 %v5094, %v5086
    %v5855 = vpack.c.b16 %v5095, %v5087
    %v5856 = vpack.c.b16 %v5096, %v5088
    %v5857 = vpack.c.b16 %v5097, %v5089
    %v5858 = vpack.c.b16 %v5098, %v5090
    %v5859 = vpack.c.b16 %v5099, %v5091
    %v5860 = vpack.c.b16 %v5100, %v5092
    %v5861 = vpack.c.b16 %v5109, %v5101
    %v5862 = vpack.c.b16 %v5110, %v5102
    %v5863 = vpack.c.b16 %v5111, %v5103
    %v5864 = vpack.c.b16 %v5112, %v5104
    %v5865 = vpack.c.b16 %v5113, %v5105
    %v5866 = vpack.c.b16 %v5114, %v5106
    %v5867 = vpack.c.b16 %v5115, %v5107
    %v5868 = vpack.c.b16 %v5116, %v5108
    %v5869 = vpack.c.b16 %v5125, %v5117
    %v5870 = vpack.c.b16 %v5126, %v5118
    %v5871 = vpack.c.b16 %v5127, %v5119
    %v5872 = vpack.c.b16 %v5128, %v5120
    %v5873 = vpack.c.b16 %v5129, %v5121
    %v5874 = vpack.c.b16 %v5130, %v5122
    %v5875 = vpack.c.b16 %v5131, %v5123
    %v5876 = vpack.c.b16 %v5132, %v5124
    %v5877 = vpack.c.b16 %v5141, %v5133
    %v5878 = vpack.c.b16 %v5142, %v5134
    %v5879 = vpack.c.b16 %v5143, %v5135
    %v5880 = vpack.c.b16 %v5144, %v5136
    %v5881 = vpack.c.b16 %v5145, %v5137
    %v5882 = vpack.c.b16 %v5146, %v5138
    %v5883 = vpack.c.b16 %v5147, %v5139
    %v5884 = vpack.c.b16 %v5148, %v5140
    %v5885 = vpack.c.b16 %v5157, %v5149
    %v5886 = vpack.c.b16 %v5158, %v5150
    %v5887 = vpack.c.b16 %v5159, %v5151
    %v5888 = vpack.c.b16 %v5160, %v5152
    %v5889 = vpack.c.b16 %v5161, %v5153
    %v5890 = vpack.c.b16 %v5162, %v5154
    %v5891 = vpack.c.b16 %v5163, %v5155
    %v5892 = vpack.c.b16 %v5164, %v5156
    %v5893 = vpack.c.b16 %v5173, %v5165
    %v5894 = vpack.c.b16 %v5174, %v5166
    %v5895 = vpack.c.b16 %v5175, %v5167
    %v5896 = vpack.c.b16 %v5176, %v5168
    %v5897 = vpack.c.b16 %v5177, %v5169
    %v5898 = vpack.c.b16 %v5178, %v5170
    %v5899 = vpack.c.b16 %v5179, %v5171
    %v5900 = vpack.c.b16 %v5180, %v5172
    %v5901 = vpack.c.b16 %v5189, %v5181
    %v5902 = vpack.c.b16 %v5190, %v5182
    %v5903 = vpack.c.b16 %v5191, %v5183
    %v5904 = vpack.c.b16 %v5192, %v5184
    %v5905 = vpack.c.b16 %v5193, %v5185
    %v5906 = vpack.c.b16 %v5194, %v5186
    %v5907 = vpack.c.b16 %v5195, %v5187
    %v5908 = vpack.c.b16 %v5196, %v5188
    %v5909 = vpack.c.b16 %v5205, %v5197
    %v5910 = vpack.c.b16 %v5206, %v5198
    %v5911 = vpack.c.b16 %v5207, %v5199
    %v5912 = vpack.c.b16 %v5208, %v5200
    %v5913 = vpack.c.b16 %v5209, %v5201
    %v5914 = vpack.c.b16 %v5210, %v5202
    %v5915 = vpack.c.b16 %v5211, %v5203
    %v5916 = vpack.c.b16 %v5212, %v5204
    %v5917 = vpack.c.b16 %v5221, %v5213
    %v5918 = vpack.c.b16 %v5222, %v5214
    %v5919 = vpack.c.b16 %v5223, %v5215
    %v5920 = vpack.c.b16 %v5224, %v5216
    %v5921 = vpack.c.b16 %v5225, %v5217
    %v5922 = vpack.c.b16 %v5226, %v5218
    %v5923 = vpack.c.b16 %v5227, %v5219
    %v5924 = vpack.c.b16 %v5228, %v5220
    %v5925 = vpack.c.b16 %v5237, %v5229
    %v5926 = vpack.c.b16 %v5238, %v5230
    %v5927 = vpack.c.b16 %v5239, %v5231
    %v5928 = vpack.c.b16 %v5240, %v5232
    %v5929 = vpack.c.b16 %v5241, %v5233
    %v5930 = vpack.c.b16 %v5242, %v5234
    %v5931 = vpack.c.b16 %v5243, %v5235
    %v5932 = vpack.c.b16 %v5244, %v5236
    %v5933 = vpack.c.b16 %v5253, %v5245
    %v5934 = vpack.c.b16 %v5254, %v5246
    %v5935 = vpack.c.b16 %v5255, %v5247
    %v5936 = vpack.c.b16 %v5256, %v5248
    %v5937 = vpack.c.b16 %v5257, %v5249
    %v5938 = vpack.c.b16 %v5258, %v5250
    %v5939 = vpack.c.b16 %v5259, %v5251
    %v5940 = vpack.c.b16 %v5260, %v5252
    %v5941 = vpack.c.b16 %v5269, %v5261
    %v5942 = vpack.c.b16 %v5270, %v5262
    %v5943 = vpack.c.b16 %v5271, %v5263
    %v5944 = vpack.c.b16 %v5272, %v5264
    %v5945 = vpack.c.b16 %v5273, %v5265
    %v5946 = vpack.c.b16 %v5274, %v5266
    %v5947 = vpack.c.b16 %v5275, %v5267
    %v5948 = vpack.c.b16 %v5276, %v5268
    %v5949 = vpack.c.b16 %v5285, %v5277
    %v5950 = vpack.c.b16 %v5286, %v5278
    %v5951 = vpack.c.b16 %v5287, %v5279
    %v5952 = vpack.c.b16 %v5288, %v5280
    %v5953 = vpack.c.b16 %v5289, %v5281
    %v5954 = vpack.c.b16 %v5290, %v5282
    %v5955 = vpack.c.b16 %v5291, %v5283
    %v5956 = vpack.c.b16 %v5292, %v5284
    %v5957 = vpack.c.b16 %v5301, %v5293
    %v5958 = vpack.c.b16 %v5302, %v5294
    %v5959 = vpack.c.b16 %v5303, %v5295
    %v5960 = vpack.c.b16 %v5304, %v5296
    %v5961 = vpack.c.b16 %v5305, %v5297
    %v5962 = vpack.c.b16 %v5306, %v5298
    %v5963 = vpack.c.b16 %v5307, %v5299
    %v5964 = vpack.c.b16 %v5308, %v5300
    %v5965 = vpack.c.b16 %v5317, %v5309
    %v5966 = vpack.c.b16 %v5318, %v5310
    %v5967 = vpack.c.b16 %v5319, %v5311
    %v5968 = vpack.c.b16 %v5320, %v5312
    %v5969 = vpack.c.b16 %v5321, %v5313
    %v5970 = vpack.c.b16 %v5322, %v5314
    %v5971 = vpack.c.b16 %v5323, %v5315
    %v5972 = vpack.c.b16 %v5324, %v5316
    %v5973 = vpack.c.b16 %v5333, %v5325
    %v5974 = vpack.c.b16 %v5334, %v5326
    %v5975 = vpack.c.b16 %v5335, %v5327
    %v5976 = vpack.c.b16 %v5336, %v5328
    %v5977 = vpack.c.b16 %v5337, %v5329
    %v5978 = vpack.c.b16 %v5338, %v5330
    %v5979 = vpack.c.b16 %v5339, %v5331
    %v5980 = vpack.c.b16 %v5340, %v5332
    %v5981 = vpack.c.b16 %v5349, %v5341
    %v5982 = vpack.c.b16 %v5350, %v5342
    %v5983 = vpack.c.b16 %v5351, %v5343
    %v5984 = vpack.c.b16 %v5352, %v5344
    %v5985 = vpack.c.b16 %v5353, %v5345
    %v5986 = vpack.c.b16 %v5354, %v5346
    %v5987 = vpack.c.b16 %v5355, %v5347
    %v5988 = vpack.c.b16 %v5356, %v5348
    %v5989 = vpack.c.b16 %v5365, %v5357
    %v5990 = vpack.c.b16 %v5366, %v5358
    %v5991 = vpack.c.b16 %v5367, %v5359
    %v5992 = vpack.c.b16 %v5368, %v5360
    %v5993 = vpack.c.b16 %v5369, %v5361
    %v5994 = vpack.c.b16 %v5370, %v5362
    %v5995 = vpack.c.b16 %v5371, %v5363
    %v5996 = vpack.c.b16 %v5372, %v5364
    %v5997 = vpack.c.b16 %v5381, %v5373
    %v5998 = vpack.c.b16 %v5382, %v5374
    %v5999 = vpack.c.b16 %v5383, %v5375
    %v6000 = vpack.c.b16 %v5384, %v5376
    %v6001 = vpack.c.b16 %v5385, %v5377
    %v6002 = vpack.c.b16 %v5386, %v5378
    %v6003 = vpack.c.b16 %v5387, %v5379
    %v6004 = vpack.c.b16 %v5388, %v5380
    %v6005 = vpack.c.b16 %v5397, %v5389
    %v6006 = vpack.c.b16 %v5398, %v5390
    %v6007 = vpack.c.b16 %v5399, %v5391
    %v6008 = vpack.c.b16 %v5400, %v5392
    %v6009 = vpack.c.b16 %v5401, %v5393
    %v6010 = vpack.c.b16 %v5402, %v5394
    %v6011 = vpack.c.b16 %v5403, %v5395
    %v6012 = vpack.c.b16 %v5404, %v5396
    %v6013 = vpack.c.b16 %v5413, %v5405
    %v6014 = vpack.c.b16 %v5414, %v5406
    %v6015 = vpack.c.b16 %v5415, %v5407
    %v6016 = vpack.c.b16 %v5416, %v5408
    %v6017 = vpack.c.b16 %v5417, %v5409
    %v6018 = vpack.c.b16 %v5418, %v5410
    %v6019 = vpack.c.b16 %v5419, %v5411
    %v6020 = vpack.c.b16 %v5420, %v5412
    %v6021 = vpack.c.b16 %v5429, %v5421
    %v6022 = vpack.c.b16 %v5430, %v5422
    %v6023 = vpack.c.b16 %v5431, %v5423
    %v6024 = vpack.c.b16 %v5432, %v5424
    %v6025 = vpack.c.b16 %v5433, %v5425
    %v6026 = vpack.c.b16 %v5434, %v5426
    %v6027 = vpack.c.b16 %v5435, %v5427
    %v6028 = vpack.c.b16 %v5436, %v5428
    %v6029 = vpack.c.b16 %v5445, %v5437
    %v6030 = vpack.c.b16 %v5446, %v5438
    %v6031 = vpack.c.b16 %v5447, %v5439
    %v6032 = vpack.c.b16 %v5448, %v5440
    %v6033 = vpack.c.b16 %v5449, %v5441
    %v6034 = vpack.c.b16 %v5450, %v5442
    %v6035 = vpack.c.b16 %v5451, %v5443
    %v6036 = vpack.c.b16 %v5452, %v5444
    %v6037 = vpack.c.b16 %v5461, %v5453
    %v6038 = vpack.c.b16 %v5462, %v5454
    %v6039 = vpack.c.b16 %v5463, %v5455
    %v6040 = vpack.c.b16 %v5464, %v5456
    %v6041 = vpack.c.b16 %v5465, %v5457
    %v6042 = vpack.c.b16 %v5466, %v5458
    %v6043 = vpack.c.b16 %v5467, %v5459
    %v6044 = vpack.c.b16 %v5468, %v5460
    %v6045 = vpack.c.b16 %v5477, %v5469
    %v6046 = vpack.c.b16 %v5478, %v5470
    %v6047 = vpack.c.b16 %v5479, %v5471
    %v6048 = vpack.c.b16 %v5480, %v5472
    %v6049 = vpack.c.b16 %v5481, %v5473
    %v6050 = vpack.c.b16 %v5482, %v5474
    %v6051 = vpack.c.b16 %v5483, %v5475
    %v6052 = vpack.c.b16 %v5484, %v5476
    %v6053 = vpack.c.b16 %v5493, %v5485
    %v6054 = vpack.c.b16 %v5494, %v5486
    %v6055 = vpack.c.b16 %v5495, %v5487
    %v6056 = vpack.c.b16 %v5496, %v5488
    %v6057 = vpack.c.b16 %v5497, %v5489
    %v6058 = vpack.c.b16 %v5498, %v5490
    %v6059 = vpack.c.b16 %v5499, %v5491
    %v6060 = vpack.c.b16 %v5500, %v5492
    %v6061 = vpack.c.b16 %v5509, %v5501
    %v6062 = vpack.c.b16 %v5510, %v5502
    %v6063 = vpack.c.b16 %v5511, %v5503
    %v6064 = vpack.c.b16 %v5512, %v5504
    %v6065 = vpack.c.b16 %v5513, %v5505
    %v6066 = vpack.c.b16 %v5514, %v5506
    %v6067 = vpack.c.b16 %v5515, %v5507
    %v6068 = vpack.c.b16 %v5516, %v5508
    %v6069 = vpack.c.b16 %v5525, %v5517
    %v6070 = vpack.c.b16 %v5526, %v5518
    %v6071 = vpack.c.b16 %v5527, %v5519
    %v6072 = vpack.c.b16 %v5528, %v5520
    %v6073 = vpack.c.b16 %v5529, %v5521
    %v6074 = vpack.c.b16 %v5530, %v5522
    %v6075 = vpack.c.b16 %v5531, %v5523
    %v6076 = vpack.c.b16 %v5532, %v5524
    %v6077 = vpack.c.b16 %v5541, %v5533
    %v6078 = vpack.c.b16 %v5542, %v5534
    %v6079 = vpack.c.b16 %v5543, %v5535
    %v6080 = vpack.c.b16 %v5544, %v5536
    %v6081 = vpack.c.b16 %v5545, %v5537
    %v6082 = vpack.c.b16 %v5546, %v5538
    %v6083 = vpack.c.b16 %v5547, %v5539
    %v6084 = vpack.c.b16 %v5548, %v5540
    %v6085 = vpack.c.b16 %v5557, %v5549
    %v6086 = vpack.c.b16 %v5558, %v5550
    %v6087 = vpack.c.b16 %v5559, %v5551
    %v6088 = vpack.c.b16 %v5560, %v5552
    %v6089 = vpack.c.b16 %v5561, %v5553
    %v6090 = vpack.c.b16 %v5562, %v5554
    %v6091 = vpack.c.b16 %v5563, %v5555
    %v6092 = vpack.c.b16 %v5564, %v5556
    %v6093 = vpack.c.b16 %v5573, %v5565
    %v6094 = vpack.c.b16 %v5574, %v5566
    %v6095 = vpack.c.b16 %v5575, %v5567
    %v6096 = vpack.c.b16 %v5576, %v5568
    %v6097 = vpack.c.b16 %v5577, %v5569
    %v6098 = vpack.c.b16 %v5578, %v5570
    %v6099 = vpack.c.b16 %v5579, %v5571
    %v6100 = vpack.c.b16 %v5580, %v5572
    %v6101 = vpack.c.b16 %v5589, %v5581
    %v6102 = vpack.c.b16 %v5590, %v5582
    %v6103 = vpack.c.b16 %v5591, %v5583
    %v6104 = vpack.c.b16 %v5592, %v5584
    %v6105 = vpack.c.b16 %v5593, %v5585
    %v6106 = vpack.c.b16 %v5594, %v5586
    %v6107 = vpack.c.b16 %v5595, %v5587
    %v6108 = vpack.c.b16 %v5596, %v5588
    %6621 = vmatprep.subr.bf16.mxu0 %v5598
    %6622 = vmatpush1.bf16.msra.mxu0 %v5597
    %6623 = vmatprep.subr.bf16.mxu0 %v5606
    %6624 = vmatpush1.bf16.msra.mxu0 %v5605
    %6625 = vmatprep.subr.bf16.mxu0 %v5614
    %6626 = vmatpush1.bf16.msra.mxu0 %v5613
    %6627 = vmatprep.subr.bf16.mxu0 %v5622
    %6628 = vmatpush1.bf16.msra.mxu0 %v5621
    %6629 = vmatprep.subr.bf16.mxu0 %v5630
    %6630 = vmatpush1.bf16.msra.mxu0 %v5629
    %6631 = vmatprep.subr.bf16.mxu0 %v5638
    %6632 = vmatpush1.bf16.msra.mxu0 %v5637
    %6633 = vmatprep.subr.bf16.mxu0 %v5646
    %6634 = vmatpush1.bf16.msra.mxu0 %v5645
    %6635 = vmatprep.subr.bf16.mxu0 %v5654
    %6636 = vmatpush1.bf16.msra.mxu0 %v5653
    %6637 = vmatprep.subr.bf16.mxu0 %v5662
    %6638 = vmatpush1.bf16.msra.mxu0 %v5661
    %6639 = vmatprep.subr.bf16.mxu0 %v5670
    %6640 = vmatpush1.bf16.msra.mxu0 %v5669
    %6641 = vmatprep.subr.bf16.mxu0 %v5678
    %6642 = vmatpush1.bf16.msra.mxu0 %v5677
    %6643 = vmatprep.subr.bf16.mxu0 %v5686
    %6644 = vmatpush1.bf16.msra.mxu0 %v5685
    %6645 = vmatprep.subr.bf16.mxu0 %v5694
    %6646 = vmatpush1.bf16.msra.mxu0 %v5693
    %6647 = vmatprep.subr.bf16.mxu0 %v5702
    %6648 = vmatpush1.bf16.msra.mxu0 %v5701
    %6649 = vmatprep.subr.bf16.mxu0 %v5710
    %6650 = vmatpush1.bf16.msra.mxu0 %v5709
    %6651 = vmatprep.subr.bf16.mxu0 %v5718
    %6652 = vmatpush1.bf16.msra.mxu0 %v5717
    %6653 = vmatprep.mubr.bf16.mxu0 %v3500
    %6654 = vmatmul.mubr.bf16.gmra.mrb[0].mxu0 %v3499
    %v6655 = vpop.f32.mrb[0].mxu0
    %v6656 = vadd.f32 %v4024, %v6655
    %v6657 = vpop.f32.mrb[0].mxu0
    %v6658 = vadd.f32 %v4028, %v6657
    %v6659 = vpop.f32.mrb[0].mxu0
    %v6660 = vpop.f32.mrb[0].mxu0
    %6661 = vdwg.mxu0
    %6662 = vmatprep.subr.bf16.mxu0 %v5726
    %6663 = vmatpush1.bf16.msra.mxu0 %v5725
    %6664 = vmatprep.subr.bf16.mxu0 %v5734
    %6665 = vmatpush1.bf16.msra.mxu0 %v5733
    %6666 = vmatprep.subr.bf16.mxu0 %v5742
    %6667 = vmatpush1.bf16.msra.mxu0 %v5741
    %6668 = vmatprep.subr.bf16.mxu0 %v5750
    %6669 = vmatpush1.bf16.msra.mxu0 %v5749
    %6670 = vmatprep.subr.bf16.mxu0 %v5758
    %6671 = vmatpush1.bf16.msra.mxu0 %v5757
    %6672 = vmatprep.subr.bf16.mxu0 %v5766
    %6673 = vmatpush1.bf16.msra.mxu0 %v5765
    %6674 = vmatprep.subr.bf16.mxu0 %v5774
    %6675 = vmatpush1.bf16.msra.mxu0 %v5773
    %6676 = vmatprep.subr.bf16.mxu0 %v5782
    %6677 = vmatpush1.bf16.msra.mxu0 %v5781
    %6678 = vmatprep.subr.bf16.mxu0 %v5790
    %6679 = vmatpush1.bf16.msra.mxu0 %v5789
    %6680 = vmatprep.subr.bf16.mxu0 %v5798
    %6681 = vmatpush1.bf16.msra.mxu0 %v5797
    %6682 = vmatprep.subr.bf16.mxu0 %v5806
    %6683 = vmatpush1.bf16.msra.mxu0 %v5805
    %6684 = vmatprep.subr.bf16.mxu0 %v5814
    %6685 = vmatpush1.bf16.msra.mxu0 %v5813
    %6686 = vmatprep.subr.bf16.mxu0 %v5822
    %6687 = vmatpush1.bf16.msra.mxu0 %v5821
    %6688 = vmatprep.subr.bf16.mxu0 %v5830
    %6689 = vmatpush1.bf16.msra.mxu0 %v5829
    %6690 = vmatprep.subr.bf16.mxu0 %v5838
    %6691 = vmatpush1.bf16.msra.mxu0 %v5837
    %6692 = vmatprep.subr.bf16.mxu0 %v5846
    %6693 = vmatpush1.bf16.msra.mxu0 %v5845
    %6694 = vmatprep.mubr.bf16.mxu0 %v3502
    %6695 = vmatmul.mubr.bf16.gmra.mrb[0].mxu0 %v3501
    %v6696 = vpop.f32.mrb[0].mxu0
    %v6697 = vadd.f32 %v6656, %v6696
    %v6698 = vpop.f32.mrb[0].mxu0
    %v6699 = vadd.f32 %v6658, %v6698
    %v6700 = vpop.f32.mrb[0].mxu0
    %v6701 = vpop.f32.mrb[0].mxu0
    %6702 = vdwg.mxu0
    %6703 = vmatprep.subr.bf16.mxu0 %v5854
    %6704 = vmatpush1.bf16.msra.mxu0 %v5853
    %6705 = vmatprep.subr.bf16.mxu0 %v5862
    %6706 = vmatpush1.bf16.msra.mxu0 %v5861
    %6707 = vmatprep.subr.bf16.mxu0 %v5870
    %6708 = vmatpush1.bf16.msra.mxu0 %v5869
    %6709 = vmatprep.subr.bf16.mxu0 %v5878
    %6710 = vmatpush1.bf16.msra.mxu0 %v5877
    %6711 = vmatprep.subr.bf16.mxu0 %v5886
    %6712 = vmatpush1.bf16.msra.mxu0 %v5885
    %6713 = vmatprep.subr.bf16.mxu0 %v5894
    %6714 = vmatpush1.bf16.msra.mxu0 %v5893
    %6715 = vmatprep.subr.bf16.mxu0 %v5902
    %6716 = vmatpush1.bf16.msra.mxu0 %v5901
    %6717 = vmatprep.subr.bf16.mxu0 %v5910
    %6718 = vmatpush1.bf16.msra.mxu0 %v5909
    %6719 = vmatprep.subr.bf16.mxu0 %v5918
    %6720 = vmatpush1.bf16.msra.mxu0 %v5917
    %6721 = vmatprep.subr.bf16.mxu0 %v5926
    %6722 = vmatpush1.bf16.msra.mxu0 %v5925
    %6723 = vmatprep.subr.bf16.mxu0 %v5934
    %6724 = vmatpush1.bf16.msra.mxu0 %v5933
    %6725 = vmatprep.subr.bf16.mxu0 %v5942
    %6726 = vmatpush1.bf16.msra.mxu0 %v5941
    %6727 = vmatprep.subr.bf16.mxu0 %v5950
    %6728 = vmatpush1.bf16.msra.mxu0 %v5949
    %6729 = vmatprep.subr.bf16.mxu0 %v5958
    %6730 = vmatpush1.bf16.msra.mxu0 %v5957
    %6731 = vmatprep.subr.bf16.mxu0 %v5966
    %6732 = vmatpush1.bf16.msra.mxu0 %v5965
    %6733 = vmatprep.subr.bf16.mxu0 %v5974
    %6734 = vmatpush1.bf16.msra.mxu0 %v5973
    %6735 = vmatprep.mubr.bf16.mxu0 %v3504
    %6736 = vmatmul.mubr.bf16.gmra.mrb[0].mxu0 %v3503
    %v6737 = vpop.f32.mrb[0].mxu0
    %v6738 = vadd.f32 %v6697, %v6737
    %v6739 = vpop.f32.mrb[0].mxu0
    %v6740 = vadd.f32 %v6699, %v6739
    %v6741 = vpop.f32.mrb[0].mxu0
    %v6742 = vpop.f32.mrb[0].mxu0
    %6743 = vdwg.mxu0
    %6744 = vmatprep.subr.bf16.mxu0 %v5982
    %6745 = vmatpush1.bf16.msra.mxu0 %v5981
    %6746 = vmatprep.subr.bf16.mxu0 %v5990
    %6747 = vmatpush1.bf16.msra.mxu0 %v5989
    %6748 = vmatprep.subr.bf16.mxu0 %v5998
    %6749 = vmatpush1.bf16.msra.mxu0 %v5997
    %6750 = vmatprep.subr.bf16.mxu0 %v6006
    %6751 = vmatpush1.bf16.msra.mxu0 %v6005
    %6752 = vmatprep.subr.bf16.mxu0 %v6014
    %6753 = vmatpush1.bf16.msra.mxu0 %v6013
    %6754 = vmatprep.subr.bf16.mxu0 %v6022
    %6755 = vmatpush1.bf16.msra.mxu0 %v6021
    %6756 = vmatprep.subr.bf16.mxu0 %v6030
    %6757 = vmatpush1.bf16.msra.mxu0 %v6029
    %6758 = vmatprep.subr.bf16.mxu0 %v6038
    %6759 = vmatpush1.bf16.msra.mxu0 %v6037
    %6760 = vmatprep.subr.bf16.mxu0 %v6046
    %6761 = vmatpush1.bf16.msra.mxu0 %v6045
    %6762 = vmatprep.subr.bf16.mxu0 %v6054
    %6763 = vmatpush1.bf16.msra.mxu0 %v6053
    %6764 = vmatprep.subr.bf16.mxu0 %v6062
    %6765 = vmatpush1.bf16.msra.mxu0 %v6061
    %6766 = vmatprep.subr.bf16.mxu0 %v6070
    %6767 = vmatpush1.bf16.msra.mxu0 %v6069
    %6768 = vmatprep.subr.bf16.mxu0 %v6078
    %6769 = vmatpush1.bf16.msra.mxu0 %v6077
    %6770 = vmatprep.subr.bf16.mxu0 %v6086
    %6771 = vmatpush1.bf16.msra.mxu0 %v6085
    %6772 = vmatprep.subr.bf16.mxu0 %v6094
    %6773 = vmatpush1.bf16.msra.mxu0 %v6093
    %6774 = vmatprep.subr.bf16.mxu0 %v6102
    %6775 = vmatpush1.bf16.msra.mxu0 %v6101
    %6776 = vmatprep.mubr.bf16.mxu0 %v3506
    %6777 = vmatmul.mubr.bf16.gmra.mrb[0].mxu0 %v3505
    %v6778 = vpop.f32.mrb[0].mxu0
    %v6779 = vadd.f32 %v6738, %v6778
    %v6780 = vpop.f32.mrb[0].mxu0
    %v6781 = vadd.f32 %v6740, %v6780
    %v6782 = vpop.f32.mrb[0].mxu0
    %v6783 = vpop.f32.mrb[0].mxu0
    %6784 = vdwg.mxu0
    %6785 = vmatprep.subr.bf16.mxu0 %v5600
    %6786 = vmatpush1.bf16.msra.mxu0 %v5599
    %6787 = vmatprep.subr.bf16.mxu0 %v5608
    %6788 = vmatpush1.bf16.msra.mxu0 %v5607
    %6789 = vmatprep.subr.bf16.mxu0 %v5616
    %6790 = vmatpush1.bf16.msra.mxu0 %v5615
    %6791 = vmatprep.subr.bf16.mxu0 %v5624
    %6792 = vmatpush1.bf16.msra.mxu0 %v5623
    %6793 = vmatprep.subr.bf16.mxu0 %v5632
    %6794 = vmatpush1.bf16.msra.mxu0 %v5631
    %6795 = vmatprep.subr.bf16.mxu0 %v5640
    %6796 = vmatpush1.bf16.msra.mxu0 %v5639
    %6797 = vmatprep.subr.bf16.mxu0 %v5648
    %6798 = vmatpush1.bf16.msra.mxu0 %v5647
    %6799 = vmatprep.subr.bf16.mxu0 %v5656
    %6800 = vmatpush1.bf16.msra.mxu0 %v5655
    %6801 = vmatprep.subr.bf16.mxu0 %v5664
    %6802 = vmatpush1.bf16.msra.mxu0 %v5663
    %6803 = vmatprep.subr.bf16.mxu0 %v5672
    %6804 = vmatpush1.bf16.msra.mxu0 %v5671
    %6805 = vmatprep.subr.bf16.mxu0 %v5680
    %6806 = vmatpush1.bf16.msra.mxu0 %v5679
    %6807 = vmatprep.subr.bf16.mxu0 %v5688
    %6808 = vmatpush1.bf16.msra.mxu0 %v5687
    %6809 = vmatprep.subr.bf16.mxu0 %v5696
    %6810 = vmatpush1.bf16.msra.mxu0 %v5695
    %6811 = vmatprep.subr.bf16.mxu0 %v5704
    %6812 = vmatpush1.bf16.msra.mxu0 %v5703
    %6813 = vmatprep.subr.bf16.mxu0 %v5712
    %6814 = vmatpush1.bf16.msra.mxu0 %v5711
    %6815 = vmatprep.subr.bf16.mxu0 %v5720
    %6816 = vmatpush1.bf16.msra.mxu0 %v5719
    %6817 = vmatprep.mubr.bf16.mxu0 %v3500
    %6818 = vmatmul.mubr.bf16.gmra.mrb[0].mxu0 %v3499
    %v6819 = vpop.f32.mrb[0].mxu0
    %v6820 = vadd.f32 %v4032, %v6819
    %v6821 = vpop.f32.mrb[0].mxu0
    %v6822 = vadd.f32 %v4036, %v6821
    %v6823 = vpop.f32.mrb[0].mxu0
    %v6824 = vpop.f32.mrb[0].mxu0
    %6825 = vdwg.mxu0
    %6826 = vmatprep.subr.bf16.mxu0 %v5728
    %6827 = vmatpush1.bf16.msra.mxu0 %v5727
    %6828 = vmatprep.subr.bf16.mxu0 %v5736
    %6829 = vmatpush1.bf16.msra.mxu0 %v5735
    %6830 = vmatprep.subr.bf16.mxu0 %v5744
    %6831 = vmatpush1.bf16.msra.mxu0 %v5743
    %6832 = vmatprep.subr.bf16.mxu0 %v5752
    %6833 = vmatpush1.bf16.msra.mxu0 %v5751
    %6834 = vmatprep.subr.bf16.mxu0 %v5760
    %6835 = vmatpush1.bf16.msra.mxu0 %v5759
    %6836 = vmatprep.subr.bf16.mxu0 %v5768
    %6837 = vmatpush1.bf16.msra.mxu0 %v5767
    %6838 = vmatprep.subr.bf16.mxu0 %v5776
    %6839 = vmatpush1.bf16.msra.mxu0 %v5775
    %6840 = vmatprep.subr.bf16.mxu0 %v5784
    %6841 = vmatpush1.bf16.msra.mxu0 %v5783
    %6842 = vmatprep.subr.bf16.mxu0 %v5792
    %6843 = vmatpush1.bf16.msra.mxu0 %v5791
    %6844 = vmatprep.subr.bf16.mxu0 %v5800
    %6845 = vmatpush1.bf16.msra.mxu0 %v5799
    %6846 = vmatprep.subr.bf16.mxu0 %v5808
    %6847 = vmatpush1.bf16.msra.mxu0 %v5807
    %6848 = vmatprep.subr.bf16.mxu0 %v5816
    %6849 = vmatpush1.bf16.msra.mxu0 %v5815
    %6850 = vmatprep.subr.bf16.mxu0 %v5824
    %6851 = vmatpush1.bf16.msra.mxu0 %v5823
    %6852 = vmatprep.subr.bf16.mxu0 %v5832
    %6853 = vmatpush1.bf16.msra.mxu0 %v5831
    %6854 = vmatprep.subr.bf16.mxu0 %v5840
    %6855 = vmatpush1.bf16.msra.mxu0 %v5839
    %6856 = vmatprep.subr.bf16.mxu0 %v5848
    %6857 = vmatpush1.bf16.msra.mxu0 %v5847
    %6858 = vmatprep.mubr.bf16.mxu0 %v3502
    %6859 = vmatmul.mubr.bf16.gmra.mrb[0].mxu0 %v3501
    %v6860 = vpop.f32.mrb[0].mxu0
    %v6861 = vadd.f32 %v6820, %v6860
    %v6862 = vpop.f32.mrb[0].mxu0
    %v6863 = vadd.f32 %v6822, %v6862
    %v6864 = vpop.f32.mrb[0].mxu0
    %v6865 = vpop.f32.mrb[0].mxu0
    %6866 = vdwg.mxu0
    %6867 = vmatprep.subr.bf16.mxu0 %v5856
    %6868 = vmatpush1.bf16.msra.mxu0 %v5855
    %6869 = vmatprep.subr.bf16.mxu0 %v5864
    %6870 = vmatpush1.bf16.msra.mxu0 %v5863
    %6871 = vmatprep.subr.bf16.mxu0 %v5872
    %6872 = vmatpush1.bf16.msra.mxu0 %v5871
    %6873 = vmatprep.subr.bf16.mxu0 %v5880
    %6874 = vmatpush1.bf16.msra.mxu0 %v5879
    %6875 = vmatprep.subr.bf16.mxu0 %v5888
    %6876 = vmatpush1.bf16.msra.mxu0 %v5887
    %6877 = vmatprep.subr.bf16.mxu0 %v5896
    %6878 = vmatpush1.bf16.msra.mxu0 %v5895
    %6879 = vmatprep.subr.bf16.mxu0 %v5904
    %6880 = vmatpush1.bf16.msra.mxu0 %v5903
    %6881 = vmatprep.subr.bf16.mxu0 %v5912
    %6882 = vmatpush1.bf16.msra.mxu0 %v5911
    %6883 = vmatprep.subr.bf16.mxu0 %v5920
    %6884 = vmatpush1.bf16.msra.mxu0 %v5919
    %6885 = vmatprep.subr.bf16.mxu0 %v5928
    %6886 = vmatpush1.bf16.msra.mxu0 %v5927
    %6887 = vmatprep.subr.bf16.mxu0 %v5936
    %6888 = vmatpush1.bf16.msra.mxu0 %v5935
    %6889 = vmatprep.subr.bf16.mxu0 %v5944
    %6890 = vmatpush1.bf16.msra.mxu0 %v5943
    %6891 = vmatprep.subr.bf16.mxu0 %v5952
    %6892 = vmatpush1.bf16.msra.mxu0 %v5951
    %6893 = vmatprep.subr.bf16.mxu0 %v5960
    %6894 = vmatpush1.bf16.msra.mxu0 %v5959
    %6895 = vmatprep.subr.bf16.mxu0 %v5968
    %6896 = vmatpush1.bf16.msra.mxu0 %v5967
    %6897 = vmatprep.subr.bf16.mxu0 %v5976
    %6898 = vmatpush1.bf16.msra.mxu0 %v5975
    %6899 = vmatprep.mubr.bf16.mxu0 %v3504
    %6900 = vmatmul.mubr.bf16.gmra.mrb[0].mxu0 %v3503
    %v6901 = vpop.f32.mrb[0].mxu0
    %v6902 = vadd.f32 %v6861, %v6901
    %v6903 = vpop.f32.mrb[0].mxu0
    %v6904 = vadd.f32 %v6863, %v6903
    %v6905 = vpop.f32.mrb[0].mxu0
    %v6906 = vpop.f32.mrb[0].mxu0
    %6907 = vdwg.mxu0
    %6908 = vmatprep.subr.bf16.mxu0 %v5984
    %6909 = vmatpush1.bf16.msra.mxu0 %v5983
    %6910 = vmatprep.subr.bf16.mxu0 %v5992
    %6911 = vmatpush1.bf16.msra.mxu0 %v5991
    %6912 = vmatprep.subr.bf16.mxu0 %v6000
    %6913 = vmatpush1.bf16.msra.mxu0 %v5999
    %6914 = vmatprep.subr.bf16.mxu0 %v6008
    %6915 = vmatpush1.bf16.msra.mxu0 %v6007
    %6916 = vmatprep.subr.bf16.mxu0 %v6016
    %6917 = vmatpush1.bf16.msra.mxu0 %v6015
    %6918 = vmatprep.subr.bf16.mxu0 %v6024
    %6919 = vmatpush1.bf16.msra.mxu0 %v6023
    %6920 = vmatprep.subr.bf16.mxu0 %v6032
    %6921 = vmatpush1.bf16.msra.mxu0 %v6031
    %6922 = vmatprep.subr.bf16.mxu0 %v6040
    %6923 = vmatpush1.bf16.msra.mxu0 %v6039
    %6924 = vmatprep.subr.bf16.mxu0 %v6048
    %6925 = vmatpush1.bf16.msra.mxu0 %v6047
    %6926 = vmatprep.subr.bf16.mxu0 %v6056
    %6927 = vmatpush1.bf16.msra.mxu0 %v6055
    %6928 = vmatprep.subr.bf16.mxu0 %v6064
    %6929 = vmatpush1.bf16.msra.mxu0 %v6063
    %6930 = vmatprep.subr.bf16.mxu0 %v6072
    %6931 = vmatpush1.bf16.msra.mxu0 %v6071
    %6932 = vmatprep.subr.bf16.mxu0 %v6080
    %6933 = vmatpush1.bf16.msra.mxu0 %v6079
    %6934 = vmatprep.subr.bf16.mxu0 %v6088
    %6935 = vmatpush1.bf16.msra.mxu0 %v6087
    %6936 = vmatprep.subr.bf16.mxu0 %v6096
    %6937 = vmatpush1.bf16.msra.mxu0 %v6095
    %6938 = vmatprep.subr.bf16.mxu0 %v6104
    %6939 = vmatpush1.bf16.msra.mxu0 %v6103
    %6940 = vmatprep.mubr.bf16.mxu0 %v3506
    %6941 = vmatmul.mubr.bf16.gmra.mrb[0].mxu0 %v3505
    %v6942 = vpop.f32.mrb[0].mxu0
    %v6943 = vadd.f32 %v6902, %v6942
    %v6944 = vpop.f32.mrb[0].mxu0
    %v6945 = vadd.f32 %v6904, %v6944
    %v6946 = vpop.f32.mrb[0].mxu0
    %v6947 = vpop.f32.mrb[0].mxu0
    %6948 = vdwg.mxu0
    %6949 = vmatprep.subr.bf16.mxu0 %v5602
    %6950 = vmatpush1.bf16.msra.mxu0 %v5601
    %6951 = vmatprep.subr.bf16.mxu0 %v5610
    %6952 = vmatpush1.bf16.msra.mxu0 %v5609
    %6953 = vmatprep.subr.bf16.mxu0 %v5618
    %6954 = vmatpush1.bf16.msra.mxu0 %v5617
    %6955 = vmatprep.subr.bf16.mxu0 %v5626
    %6956 = vmatpush1.bf16.msra.mxu0 %v5625
    %6957 = vmatprep.subr.bf16.mxu0 %v5634
    %6958 = vmatpush1.bf16.msra.mxu0 %v5633
    %6959 = vmatprep.subr.bf16.mxu0 %v5642
    %6960 = vmatpush1.bf16.msra.mxu0 %v5641
    %6961 = vmatprep.subr.bf16.mxu0 %v5650
    %6962 = vmatpush1.bf16.msra.mxu0 %v5649
    %6963 = vmatprep.subr.bf16.mxu0 %v5658
    %6964 = vmatpush1.bf16.msra.mxu0 %v5657
    %6965 = vmatprep.subr.bf16.mxu0 %v5666
    %6966 = vmatpush1.bf16.msra.mxu0 %v5665
    %6967 = vmatprep.subr.bf16.mxu0 %v5674
    %6968 = vmatpush1.bf16.msra.mxu0 %v5673
    %6969 = vmatprep.subr.bf16.mxu0 %v5682
    %6970 = vmatpush1.bf16.msra.mxu0 %v5681
    %6971 = vmatprep.subr.bf16.mxu0 %v5690
    %6972 = vmatpush1.bf16.msra.mxu0 %v5689
    %6973 = vmatprep.subr.bf16.mxu0 %v5698
    %6974 = vmatpush1.bf16.msra.mxu0 %v5697
    %6975 = vmatprep.subr.bf16.mxu0 %v5706
    %6976 = vmatpush1.bf16.msra.mxu0 %v5705
    %6977 = vmatprep.subr.bf16.mxu0 %v5714
    %6978 = vmatpush1.bf16.msra.mxu0 %v5713
    %6979 = vmatprep.subr.bf16.mxu0 %v5722
    %6980 = vmatpush1.bf16.msra.mxu0 %v5721
    %6981 = vmatprep.mubr.bf16.mxu0 %v3500
    %6982 = vmatmul.mubr.bf16.gmra.mrb[0].mxu0 %v3499
    %v6983 = vpop.f32.mrb[0].mxu0
    %v6984 = vadd.f32 %v4040, %v6983
    %v6985 = vpop.f32.mrb[0].mxu0
    %v6986 = vadd.f32 %v4044, %v6985
    %v6987 = vpop.f32.mrb[0].mxu0
    %v6988 = vpop.f32.mrb[0].mxu0
    %6989 = vdwg.mxu0
    %6990 = vmatprep.subr.bf16.mxu0 %v5730
    %6991 = vmatpush1.bf16.msra.mxu0 %v5729
    %6992 = vmatprep.subr.bf16.mxu0 %v5738
    %6993 = vmatpush1.bf16.msra.mxu0 %v5737
    %6994 = vmatprep.subr.bf16.mxu0 %v5746
    %6995 = vmatpush1.bf16.msra.mxu0 %v5745
    %6996 = vmatprep.subr.bf16.mxu0 %v5754
    %6997 = vmatpush1.bf16.msra.mxu0 %v5753
    %6998 = vmatprep.subr.bf16.mxu0 %v5762
    %6999 = vmatpush1.bf16.msra.mxu0 %v5761
    %7000 = vmatprep.subr.bf16.mxu0 %v5770
    %7001 = vmatpush1.bf16.msra.mxu0 %v5769
    %7002 = vmatprep.subr.bf16.mxu0 %v5778
    %7003 = vmatpush1.bf16.msra.mxu0 %v5777
    %7004 = vmatprep.subr.bf16.mxu0 %v5786
    %7005 = vmatpush1.bf16.msra.mxu0 %v5785
    %7006 = vmatprep.subr.bf16.mxu0 %v5794
    %7007 = vmatpush1.bf16.msra.mxu0 %v5793
    %7008 = vmatprep.subr.bf16.mxu0 %v5802
    %7009 = vmatpush1.bf16.msra.mxu0 %v5801
    %7010 = vmatprep.subr.bf16.mxu0 %v5810
    %7011 = vmatpush1.bf16.msra.mxu0 %v5809
    %7012 = vmatprep.subr.bf16.mxu0 %v5818
    %7013 = vmatpush1.bf16.msra.mxu0 %v5817
    %7014 = vmatprep.subr.bf16.mxu0 %v5826
    %7015 = vmatpush1.bf16.msra.mxu0 %v5825
    %7016 = vmatprep.subr.bf16.mxu0 %v5834
    %7017 = vmatpush1.bf16.msra.mxu0 %v5833
    %7018 = vmatprep.subr.bf16.mxu0 %v5842
    %7019 = vmatpush1.bf16.msra.mxu0 %v5841
    %7020 = vmatprep.subr.bf16.mxu0 %v5850
    %7021 = vmatpush1.bf16.msra.mxu0 %v5849
    %7022 = vmatprep.mubr.bf16.mxu0 %v3502
    %7023 = vmatmul.mubr.bf16.gmra.mrb[0].mxu0 %v3501
    %v7024 = vpop.f32.mrb[0].mxu0
    %v7025 = vadd.f32 %v6984, %v7024
    %v7026 = vpop.f32.mrb[0].mxu0
    %v7027 = vadd.f32 %v6986, %v7026
    %v7028 = vpop.f32.mrb[0].mxu0
    %v7029 = vpop.f32.mrb[0].mxu0
    %7030 = vdwg.mxu0
    %7031 = vmatprep.subr.bf16.mxu0 %v5858
    %7032 = vmatpush1.bf16.msra.mxu0 %v5857
    %7033 = vmatprep.subr.bf16.mxu0 %v5866
    %7034 = vmatpush1.bf16.msra.mxu0 %v5865
    %7035 = vmatprep.subr.bf16.mxu0 %v5874
    %7036 = vmatpush1.bf16.msra.mxu0 %v5873
    %7037 = vmatprep.subr.bf16.mxu0 %v5882
    %7038 = vmatpush1.bf16.msra.mxu0 %v5881
    %7039 = vmatprep.subr.bf16.mxu0 %v5890
    %7040 = vmatpush1.bf16.msra.mxu0 %v5889
    %7041 = vmatprep.subr.bf16.mxu0 %v5898
    %7042 = vmatpush1.bf16.msra.mxu0 %v5897
    %7043 = vmatprep.subr.bf16.mxu0 %v5906
    %7044 = vmatpush1.bf16.msra.mxu0 %v5905
    %7045 = vmatprep.subr.bf16.mxu0 %v5914
    %7046 = vmatpush1.bf16.msra.mxu0 %v5913
    %7047 = vmatprep.subr.bf16.mxu0 %v5922
    %7048 = vmatpush1.bf16.msra.mxu0 %v5921
    %7049 = vmatprep.subr.bf16.mxu0 %v5930
    %7050 = vmatpush1.bf16.msra.mxu0 %v5929
    %7051 = vmatprep.subr.bf16.mxu0 %v5938
    %7052 = vmatpush1.bf16.msra.mxu0 %v5937
    %7053 = vmatprep.subr.bf16.mxu0 %v5946
    %7054 = vmatpush1.bf16.msra.mxu0 %v5945
    %7055 = vmatprep.subr.bf16.mxu0 %v5954
    %7056 = vmatpush1.bf16.msra.mxu0 %v5953
    %7057 = vmatprep.subr.bf16.mxu0 %v5962
    %7058 = vmatpush1.bf16.msra.mxu0 %v5961
    %7059 = vmatprep.subr.bf16.mxu0 %v5970
    %7060 = vmatpush1.bf16.msra.mxu0 %v5969
    %7061 = vmatprep.subr.bf16.mxu0 %v5978
    %7062 = vmatpush1.bf16.msra.mxu0 %v5977
    %7063 = vmatprep.mubr.bf16.mxu0 %v3504
    %7064 = vmatmul.mubr.bf16.gmra.mrb[0].mxu0 %v3503
    %v7065 = vpop.f32.mrb[0].mxu0
    %v7066 = vadd.f32 %v7025, %v7065
    %v7067 = vpop.f32.mrb[0].mxu0
    %v7068 = vadd.f32 %v7027, %v7067
    %v7069 = vpop.f32.mrb[0].mxu0
    %v7070 = vpop.f32.mrb[0].mxu0
    %7071 = vdwg.mxu0
    %7072 = vmatprep.subr.bf16.mxu0 %v5986
    %7073 = vmatpush1.bf16.msra.mxu0 %v5985
    %7074 = vmatprep.subr.bf16.mxu0 %v5994
    %7075 = vmatpush1.bf16.msra.mxu0 %v5993
    %7076 = vmatprep.subr.bf16.mxu0 %v6002
    %7077 = vmatpush1.bf16.msra.mxu0 %v6001
    %7078 = vmatprep.subr.bf16.mxu0 %v6010
    %7079 = vmatpush1.bf16.msra.mxu0 %v6009
    %7080 = vmatprep.subr.bf16.mxu0 %v6018
    %7081 = vmatpush1.bf16.msra.mxu0 %v6017
    %7082 = vmatprep.subr.bf16.mxu0 %v6026
    %7083 = vmatpush1.bf16.msra.mxu0 %v6025
    %7084 = vmatprep.subr.bf16.mxu0 %v6034
    %7085 = vmatpush1.bf16.msra.mxu0 %v6033
    %7086 = vmatprep.subr.bf16.mxu0 %v6042
    %7087 = vmatpush1.bf16.msra.mxu0 %v6041
    %7088 = vmatprep.subr.bf16.mxu0 %v6050
    %7089 = vmatpush1.bf16.msra.mxu0 %v6049
    %7090 = vmatprep.subr.bf16.mxu0 %v6058
    %7091 = vmatpush1.bf16.msra.mxu0 %v6057
    %7092 = vmatprep.subr.bf16.mxu0 %v6066
    %7093 = vmatpush1.bf16.msra.mxu0 %v6065
    %7094 = vmatprep.subr.bf16.mxu0 %v6074
    %7095 = vmatpush1.bf16.msra.mxu0 %v6073
    %7096 = vmatprep.subr.bf16.mxu0 %v6082
    %7097 = vmatpush1.bf16.msra.mxu0 %v6081
    %7098 = vmatprep.subr.bf16.mxu0 %v6090
    %7099 = vmatpush1.bf16.msra.mxu0 %v6089
    %7100 = vmatprep.subr.bf16.mxu0 %v6098
    %7101 = vmatpush1.bf16.msra.mxu0 %v6097
    %7102 = vmatprep.subr.bf16.mxu0 %v6106
    %7103 = vmatpush1.bf16.msra.mxu0 %v6105
    %7104 = vmatprep.mubr.bf16.mxu0 %v3506
    %7105 = vmatmul.mubr.bf16.gmra.mrb[0].mxu0 %v3505
    %v7106 = vpop.f32.mrb[0].mxu0
    %v7107 = vadd.f32 %v7066, %v7106
    %v7108 = vpop.f32.mrb[0].mxu0
    %v7109 = vadd.f32 %v7068, %v7108
    %v7110 = vpop.f32.mrb[0].mxu0
    %v7111 = vpop.f32.mrb[0].mxu0
    %7112 = vdwg.mxu0
    %7113 = vmatprep.subr.bf16.mxu0 %v5604
    %7114 = vmatpush1.bf16.msra.mxu0 %v5603
    %7115 = vmatprep.subr.bf16.mxu0 %v5612
    %7116 = vmatpush1.bf16.msra.mxu0 %v5611
    %7117 = vmatprep.subr.bf16.mxu0 %v5620
    %7118 = vmatpush1.bf16.msra.mxu0 %v5619
    %7119 = vmatprep.subr.bf16.mxu0 %v5628
    %7120 = vmatpush1.bf16.msra.mxu0 %v5627
    %7121 = vmatprep.subr.bf16.mxu0 %v5636
    %7122 = vmatpush1.bf16.msra.mxu0 %v5635
    %7123 = vmatprep.subr.bf16.mxu0 %v5644
    %7124 = vmatpush1.bf16.msra.mxu0 %v5643
    %7125 = vmatprep.subr.bf16.mxu0 %v5652
    %7126 = vmatpush1.bf16.msra.mxu0 %v5651
    %7127 = vmatprep.subr.bf16.mxu0 %v5660
    %7128 = vmatpush1.bf16.msra.mxu0 %v5659
    %7129 = vmatprep.subr.bf16.mxu0 %v5668
    %7130 = vmatpush1.bf16.msra.mxu0 %v5667
    %7131 = vmatprep.subr.bf16.mxu0 %v5676
    %7132 = vmatpush1.bf16.msra.mxu0 %v5675
    %7133 = vmatprep.subr.bf16.mxu0 %v5684
    %7134 = vmatpush1.bf16.msra.mxu0 %v5683
    %7135 = vmatprep.subr.bf16.mxu0 %v5692
    %7136 = vmatpush1.bf16.msra.mxu0 %v5691
    %7137 = vmatprep.subr.bf16.mxu0 %v5700
    %7138 = vmatpush1.bf16.msra.mxu0 %v5699
    %7139 = vmatprep.subr.bf16.mxu0 %v5708
    %7140 = vmatpush1.bf16.msra.mxu0 %v5707
    %7141 = vmatprep.subr.bf16.mxu0 %v5716
    %7142 = vmatpush1.bf16.msra.mxu0 %v5715
    %7143 = vmatprep.subr.bf16.mxu0 %v5724
    %7144 = vmatpush1.bf16.msra.mxu0 %v5723
    %7145 = vmatprep.mubr.bf16.mxu0 %v3500
    %7146 = vmatmul.mubr.bf16.gmra.mrb[0].mxu0 %v3499
    %v7147 = vpop.f32.mrb[0].mxu0
    %v7148 = vadd.f32 %v4048, %v7147
    %v7149 = vpop.f32.mrb[0].mxu0
    %v7150 = vadd.f32 %v4052, %v7149
    %v7151 = vpop.f32.mrb[0].mxu0
    %v7152 = vpop.f32.mrb[0].mxu0
    %7153 = vdwg.mxu0
    %7154 = vmatprep.subr.bf16.mxu0 %v5732
    %7155 = vmatpush1.bf16.msra.mxu0 %v5731
    %7156 = vmatprep.subr.bf16.mxu0 %v5740
    %7157 = vmatpush1.bf16.msra.mxu0 %v5739
    %7158 = vmatprep.subr.bf16.mxu0 %v5748
    %7159 = vmatpush1.bf16.msra.mxu0 %v5747
    %7160 = vmatprep.subr.bf16.mxu0 %v5756
    %7161 = vmatpush1.bf16.msra.mxu0 %v5755
    %7162 = vmatprep.subr.bf16.mxu0 %v5764
    %7163 = vmatpush1.bf16.msra.mxu0 %v5763
    %7164 = vmatprep.subr.bf16.mxu0 %v5772
    %7165 = vmatpush1.bf16.msra.mxu0 %v5771
    %7166 = vmatprep.subr.bf16.mxu0 %v5780
    %7167 = vmatpush1.bf16.msra.mxu0 %v5779
    %7168 = vmatprep.subr.bf16.mxu0 %v5788
    %7169 = vmatpush1.bf16.msra.mxu0 %v5787
    %7170 = vmatprep.subr.bf16.mxu0 %v5796
    %7171 = vmatpush1.bf16.msra.mxu0 %v5795
    %7172 = vmatprep.subr.bf16.mxu0 %v5804
    %7173 = vmatpush1.bf16.msra.mxu0 %v5803
    %7174 = vmatprep.subr.bf16.mxu0 %v5812
    %7175 = vmatpush1.bf16.msra.mxu0 %v5811
    %7176 = vmatprep.subr.bf16.mxu0 %v5820
    %7177 = vmatpush1.bf16.msra.mxu0 %v5819
    %7178 = vmatprep.subr.bf16.mxu0 %v5828
    %7179 = vmatpush1.bf16.msra.mxu0 %v5827
    %7180 = vmatprep.subr.bf16.mxu0 %v5836
    %7181 = vmatpush1.bf16.msra.mxu0 %v5835
    %7182 = vmatprep.subr.bf16.mxu0 %v5844
    %7183 = vmatpush1.bf16.msra.mxu0 %v5843
    %7184 = vmatprep.subr.bf16.mxu0 %v5852
    %7185 = vmatpush1.bf16.msra.mxu0 %v5851
    %7186 = vmatprep.mubr.bf16.mxu0 %v3502
    %7187 = vmatmul.mubr.bf16.gmra.mrb[0].mxu0 %v3501
    %v7188 = vpop.f32.mrb[0].mxu0
    %v7189 = vadd.f32 %v7148, %v7188
    %v7190 = vpop.f32.mrb[0].mxu0
    %v7191 = vadd.f32 %v7150, %v7190
    %v7192 = vpop.f32.mrb[0].mxu0
    %v7193 = vpop.f32.mrb[0].mxu0
    %7194 = vdwg.mxu0
    %7195 = vmatprep.subr.bf16.mxu0 %v5860
    %7196 = vmatpush1.bf16.msra.mxu0 %v5859
    %7197 = vmatprep.subr.bf16.mxu0 %v5868
    %7198 = vmatpush1.bf16.msra.mxu0 %v5867
    %7199 = vmatprep.subr.bf16.mxu0 %v5876
    %7200 = vmatpush1.bf16.msra.mxu0 %v5875
    %7201 = vmatprep.subr.bf16.mxu0 %v5884
    %7202 = vmatpush1.bf16.msra.mxu0 %v5883
    %7203 = vmatprep.subr.bf16.mxu0 %v5892
    %7204 = vmatpush1.bf16.msra.mxu0 %v5891
    %7205 = vmatprep.subr.bf16.mxu0 %v5900
    %7206 = vmatpush1.bf16.msra.mxu0 %v5899
    %7207 = vmatprep.subr.bf16.mxu0 %v5908
    %7208 = vmatpush1.bf16.msra.mxu0 %v5907
    %7209 = vmatprep.subr.bf16.mxu0 %v5916
    %7210 = vmatpush1.bf16.msra.mxu0 %v5915
    %7211 = vmatprep.subr.bf16.mxu0 %v5924
    %7212 = vmatpush1.bf16.msra.mxu0 %v5923
    %7213 = vmatprep.subr.bf16.mxu0 %v5932
    %7214 = vmatpush1.bf16.msra.mxu0 %v5931
    %7215 = vmatprep.subr.bf16.mxu0 %v5940
    %7216 = vmatpush1.bf16.msra.mxu0 %v5939
    %7217 = vmatprep.subr.bf16.mxu0 %v5948
    %7218 = vmatpush1.bf16.msra.mxu0 %v5947
    %7219 = vmatprep.subr.bf16.mxu0 %v5956
    %7220 = vmatpush1.bf16.msra.mxu0 %v5955
    %7221 = vmatprep.subr.bf16.mxu0 %v5964
    %7222 = vmatpush1.bf16.msra.mxu0 %v5963
    %7223 = vmatprep.subr.bf16.mxu0 %v5972
    %7224 = vmatpush1.bf16.msra.mxu0 %v5971
    %7225 = vmatprep.subr.bf16.mxu0 %v5980
    %7226 = vmatpush1.bf16.msra.mxu0 %v5979
    %7227 = vmatprep.mubr.bf16.mxu0 %v3504
    %7228 = vmatmul.mubr.bf16.gmra.mrb[0].mxu0 %v3503
    %v7229 = vpop.f32.mrb[0].mxu0
    %v7230 = vadd.f32 %v7189, %v7229
    %v7231 = vpop.f32.mrb[0].mxu0
    %v7232 = vadd.f32 %v7191, %v7231
    %v7233 = vpop.f32.mrb[0].mxu0
    %v7234 = vpop.f32.mrb[0].mxu0
    %7235 = vdwg.mxu0
    %7236 = vmatprep.subr.bf16.mxu0 %v5988
    %7237 = vmatpush1.bf16.msra.mxu0 %v5987
    %7238 = vmatprep.subr.bf16.mxu0 %v5996
    %7239 = vmatpush1.bf16.msra.mxu0 %v5995
    %7240 = vmatprep.subr.bf16.mxu0 %v6004
    %7241 = vmatpush1.bf16.msra.mxu0 %v6003
    %7242 = vmatprep.subr.bf16.mxu0 %v6012
    %7243 = vmatpush1.bf16.msra.mxu0 %v6011
    %7244 = vmatprep.subr.bf16.mxu0 %v6020
    %7245 = vmatpush1.bf16.msra.mxu0 %v6019
    %7246 = vmatprep.subr.bf16.mxu0 %v6028
    %7247 = vmatpush1.bf16.msra.mxu0 %v6027
    %7248 = vmatprep.subr.bf16.mxu0 %v6036
    %7249 = vmatpush1.bf16.msra.mxu0 %v6035
    %7250 = vmatprep.subr.bf16.mxu0 %v6044
    %7251 = vmatpush1.bf16.msra.mxu0 %v6043
    %7252 = vmatprep.subr.bf16.mxu0 %v6052
    %7253 = vmatpush1.bf16.msra.mxu0 %v6051
    %7254 = vmatprep.subr.bf16.mxu0 %v6060
    %7255 = vmatpush1.bf16.msra.mxu0 %v6059
    %7256 = vmatprep.subr.bf16.mxu0 %v6068
    %7257 = vmatpush1.bf16.msra.mxu0 %v6067
    %7258 = vmatprep.subr.bf16.mxu0 %v6076
    %7259 = vmatpush1.bf16.msra.mxu0 %v6075
    %7260 = vmatprep.subr.bf16.mxu0 %v6084
    %7261 = vmatpush1.bf16.msra.mxu0 %v6083
    %7262 = vmatprep.subr.bf16.mxu0 %v6092
    %7263 = vmatpush1.bf16.msra.mxu0 %v6091
    %7264 = vmatprep.subr.bf16.mxu0 %v6100
    %7265 = vmatpush1.bf16.msra.mxu0 %v6099
    %7266 = vmatprep.subr.bf16.mxu0 %v6108
    %7267 = vmatpush1.bf16.msra.mxu0 %v6107
    %7268 = vmatprep.mubr.bf16.mxu0 %v3506
    %7269 = vmatmul.mubr.bf16.gmra.mrb[0].mxu0 %v3505
    %v7270 = vpop.f32.mrb[0].mxu0
    %v7271 = vadd.f32 %v7230, %v7270
    %v7272 = vpop.f32.mrb[0].mxu0
    %v7273 = vadd.f32 %v7232, %v7272
    %v7274 = vpop.f32.mrb[0].mxu0
    %v7275 = vpop.f32.mrb[0].mxu0
    %7276 = vdwg.mxu0
    %v7277 = vmax.f32 %v6779, 0.0
    %v7278 = vmax.f32 %v6781, 0.0
    %v7279 = vmax.f32 %v6943, 0.0
    %v7280 = vmax.f32 %v6945, 0.0
    %v7281 = vmax.f32 %v7107, 0.0
    %v7282 = vmax.f32 %v7109, 0.0
    %v7283 = vmax.f32 %v7271, 0.0
    %v7284 = vmax.f32 %v7273, 0.0
    %v7285 = vpack.c.bf16 %v7277, %v7277
    %v7286 = vpack.c.bf16 %v7278, %v7278
    %v7287 = vpack.c.bf16 %v7279, %v7279
    %v7288 = vpack.c.bf16 %v7280, %v7280
    %v7289 = vpack.c.bf16 %v7281, %v7281
    %v7290 = vpack.c.bf16 %v7282, %v7282
    %v7291 = vpack.c.bf16 %v7283, %v7283
    %v7292 = vpack.c.bf16 %v7284, %v7284
    %v7293 = vld [vmem:[%s5] sm:$0xff]
    %v7294 = vld [vmem:[%s5 + $0x8] sm:$0xff]
    %v7295 = vld [vmem:[%s5 + $0x10] sm:$0xff]
    %v7296 = vld [vmem:[%s5 + $0x18] sm:$0xff]
    %v7297 = vld [vmem:[%s5 + $0x20] sm:$0xff]
    %v7298 = vld [vmem:[%s5 + $0x28] sm:$0xff]
    %v7299 = vld [vmem:[%s5 + $0x30] sm:$0xff]
    %v7300 = vld [vmem:[%s5 + $0x38] sm:$0xff]
    %v7301 = vld [vmem:[%s5 + $0x40] sm:$0xff]
    %v7302 = vld [vmem:[%s5 + $0x48] sm:$0xff]
    %v7303 = vld [vmem:[%s5 + $0x50] sm:$0xff]
    %v7304 = vld [vmem:[%s5 + $0x58] sm:$0xff]
    %v7305 = vld [vmem:[%s5 + $0x60] sm:$0xff]
    %v7306 = vld [vmem:[%s5 + $0x68] sm:$0xff]
    %v7307 = vld [vmem:[%s5 + $0x70] sm:$0xff]
    %v7308 = vld [vmem:[%s5 + $0x78] sm:$0xff]
    %v7309 = vld [vmem:[%s5 + $0x80] sm:$0xff]
    %v7310 = vld [vmem:[%s5 + $0x88] sm:$0xff]
    %v7311 = vld [vmem:[%s5 + $0x90] sm:$0xff]
    %v7312 = vld [vmem:[%s5 + $0x98] sm:$0xff]
    %v7313 = vld [vmem:[%s5 + $0xa0] sm:$0xff]
    %v7314 = vld [vmem:[%s5 + $0xa8] sm:$0xff]
    %v7315 = vld [vmem:[%s5 + $0xb0] sm:$0xff]
    %v7316 = vld [vmem:[%s5 + $0xb8] sm:$0xff]
    %v7317 = vld [vmem:[%s5 + $0xc0] sm:$0xff]
    %v7318 = vld [vmem:[%s5 + $0xc8] sm:$0xff]
    %v7319 = vld [vmem:[%s5 + $0xd0] sm:$0xff]
    %v7320 = vld [vmem:[%s5 + $0xd8] sm:$0xff]
    %v7321 = vld [vmem:[%s5 + $0xe0] sm:$0xff]
    %v7322 = vld [vmem:[%s5 + $0xe8] sm:$0xff]
    %v7323 = vld [vmem:[%s5 + $0xf0] sm:$0xff]
    %v7324 = vld [vmem:[%s5 + $0xf8] sm:$0xff]
    %v7325 = vld [vmem:[%s5 + $0x100] sm:$0xff]
    %v7326 = vld [vmem:[%s5 + $0x108] sm:$0xff]
    %v7327 = vld [vmem:[%s5 + $0x110] sm:$0xff]
    %v7328 = vld [vmem:[%s5 + $0x118] sm:$0xff]
    %v7329 = vld [vmem:[%s5 + $0x120] sm:$0xff]
    %v7330 = vld [vmem:[%s5 + $0x128] sm:$0xff]
    %v7331 = vld [vmem:[%s5 + $0x130] sm:$0xff]
    %v7332 = vld [vmem:[%s5 + $0x138] sm:$0xff]
    %v7333 = vld [vmem:[%s5 + $0x140] sm:$0xff]
    %v7334 = vld [vmem:[%s5 + $0x148] sm:$0xff]
    %v7335 = vld [vmem:[%s5 + $0x150] sm:$0xff]
    %v7336 = vld [vmem:[%s5 + $0x158] sm:$0xff]
    %v7337 = vld [vmem:[%s5 + $0x160] sm:$0xff]
    %v7338 = vld [vmem:[%s5 + $0x168] sm:$0xff]
    %v7339 = vld [vmem:[%s5 + $0x170] sm:$0xff]
    %v7340 = vld [vmem:[%s5 + $0x178] sm:$0xff]
    %v7341 = vld [vmem:[%s5 + $0x180] sm:$0xff]
    %v7342 = vld [vmem:[%s5 + $0x188] sm:$0xff]
    %v7343 = vld [vmem:[%s5 + $0x190] sm:$0xff]
    %v7344 = vld [vmem:[%s5 + $0x198] sm:$0xff]
    %v7345 = vld [vmem:[%s5 + $0x1a0] sm:$0xff]
    %v7346 = vld [vmem:[%s5 + $0x1a8] sm:$0xff]
    %v7347 = vld [vmem:[%s5 + $0x1b0] sm:$0xff]
    %v7348 = vld [vmem:[%s5 + $0x1b8] sm:$0xff]
    %v7349 = vld [vmem:[%s5 + $0x1c0] sm:$0xff]
    %v7350 = vld [vmem:[%s5 + $0x1c8] sm:$0xff]
    %v7351 = vld [vmem:[%s5 + $0x1d0] sm:$0xff]
    %v7352 = vld [vmem:[%s5 + $0x1d8] sm:$0xff]
    %v7353 = vld [vmem:[%s5 + $0x1e0] sm:$0xff]
    %v7354 = vld [vmem:[%s5 + $0x1e8] sm:$0xff]
    %v7355 = vld [vmem:[%s5 + $0x1f0] sm:$0xff]
    %v7356 = vld [vmem:[%s5 + $0x1f8] sm:$0xff]
    %v7357 = vld [vmem:[%s5 + $0x200] sm:$0xff]
    %v7358 = vld [vmem:[%s5 + $0x208] sm:$0xff]
    %v7359 = vld [vmem:[%s5 + $0x210] sm:$0xff]
    %v7360 = vld [vmem:[%s5 + $0x218] sm:$0xff]
    %v7361 = vld [vmem:[%s5 + $0x220] sm:$0xff]
    %v7362 = vld [vmem:[%s5 + $0x228] sm:$0xff]
    %v7363 = vld [vmem:[%s5 + $0x230] sm:$0xff]
    %v7364 = vld [vmem:[%s5 + $0x238] sm:$0xff]
    %v7365 = vld [vmem:[%s5 + $0x240] sm:$0xff]
    %v7366 = vld [vmem:[%s5 + $0x248] sm:$0xff]
    %v7367 = vld [vmem:[%s5 + $0x250] sm:$0xff]
    %v7368 = vld [vmem:[%s5 + $0x258] sm:$0xff]
    %v7369 = vld [vmem:[%s5 + $0x260] sm:$0xff]
    %v7370 = vld [vmem:[%s5 + $0x268] sm:$0xff]
    %v7371 = vld [vmem:[%s5 + $0x270] sm:$0xff]
    %v7372 = vld [vmem:[%s5 + $0x278] sm:$0xff]
    %v7373 = vld [vmem:[%s5 + $0x280] sm:$0xff]
    %v7374 = vld [vmem:[%s5 + $0x288] sm:$0xff]
    %v7375 = vld [vmem:[%s5 + $0x290] sm:$0xff]
    %v7376 = vld [vmem:[%s5 + $0x298] sm:$0xff]
    %v7377 = vld [vmem:[%s5 + $0x2a0] sm:$0xff]
    %v7378 = vld [vmem:[%s5 + $0x2a8] sm:$0xff]
    %v7379 = vld [vmem:[%s5 + $0x2b0] sm:$0xff]
    %v7380 = vld [vmem:[%s5 + $0x2b8] sm:$0xff]
    %v7381 = vld [vmem:[%s5 + $0x2c0] sm:$0xff]
    %v7382 = vld [vmem:[%s5 + $0x2c8] sm:$0xff]
    %v7383 = vld [vmem:[%s5 + $0x2d0] sm:$0xff]
    %v7384 = vld [vmem:[%s5 + $0x2d8] sm:$0xff]
    %v7385 = vld [vmem:[%s5 + $0x2e0] sm:$0xff]
    %v7386 = vld [vmem:[%s5 + $0x2e8] sm:$0xff]
    %v7387 = vld [vmem:[%s5 + $0x2f0] sm:$0xff]
    %v7388 = vld [vmem:[%s5 + $0x2f8] sm:$0xff]
    %v7389 = vld [vmem:[%s5 + $0x300] sm:$0xff]
    %v7390 = vld [vmem:[%s5 + $0x308] sm:$0xff]
    %v7391 = vld [vmem:[%s5 + $0x310] sm:$0xff]
    %v7392 = vld [vmem:[%s5 + $0x318] sm:$0xff]
    %v7393 = vld [vmem:[%s5 + $0x320] sm:$0xff]
    %v7394 = vld [vmem:[%s5 + $0x328] sm:$0xff]
    %v7395 = vld [vmem:[%s5 + $0x330] sm:$0xff]
    %v7396 = vld [vmem:[%s5 + $0x338] sm:$0xff]
    %v7397 = vld [vmem:[%s5 + $0x340] sm:$0xff]
    %v7398 = vld [vmem:[%s5 + $0x348] sm:$0xff]
    %v7399 = vld [vmem:[%s5 + $0x350] sm:$0xff]
    %v7400 = vld [vmem:[%s5 + $0x358] sm:$0xff]
    %v7401 = vld [vmem:[%s5 + $0x360] sm:$0xff]
    %v7402 = vld [vmem:[%s5 + $0x368] sm:$0xff]
    %v7403 = vld [vmem:[%s5 + $0x370] sm:$0xff]
    %v7404 = vld [vmem:[%s5 + $0x378] sm:$0xff]
    %v7405 = vld [vmem:[%s5 + $0x380] sm:$0xff]
    %v7406 = vld [vmem:[%s5 + $0x388] sm:$0xff]
    %v7407 = vld [vmem:[%s5 + $0x390] sm:$0xff]
    %v7408 = vld [vmem:[%s5 + $0x398] sm:$0xff]
    %v7409 = vld [vmem:[%s5 + $0x3a0] sm:$0xff]
    %v7410 = vld [vmem:[%s5 + $0x3a8] sm:$0xff]
    %v7411 = vld [vmem:[%s5 + $0x3b0] sm:$0xff]
    %v7412 = vld [vmem:[%s5 + $0x3b8] sm:$0xff]
    %v7413 = vld [vmem:[%s5 + $0x3c0] sm:$0xff]
    %v7414 = vld [vmem:[%s5 + $0x3c8] sm:$0xff]
    %v7415 = vld [vmem:[%s5 + $0x3d0] sm:$0xff]
    %v7416 = vld [vmem:[%s5 + $0x3d8] sm:$0xff]
    %v7417 = vld [vmem:[%s5 + $0x3e0] sm:$0xff]
    %v7418 = vld [vmem:[%s5 + $0x3e8] sm:$0xff]
    %v7419 = vld [vmem:[%s5 + $0x3f0] sm:$0xff]
    %v7420 = vld [vmem:[%s5 + $0x3f8] sm:$0xff]
    %v7421 = vld [vmem:[%s5 + $0x400] sm:$0xff]
    %v7422 = vld [vmem:[%s5 + $0x408] sm:$0xff]
    %v7423 = vld [vmem:[%s5 + $0x410] sm:$0xff]
    %v7424 = vld [vmem:[%s5 + $0x418] sm:$0xff]
    %v7425 = vld [vmem:[%s5 + $0x420] sm:$0xff]
    %v7426 = vld [vmem:[%s5 + $0x428] sm:$0xff]
    %v7427 = vld [vmem:[%s5 + $0x430] sm:$0xff]
    %v7428 = vld [vmem:[%s5 + $0x438] sm:$0xff]
    %v7429 = vld [vmem:[%s5 + $0x440] sm:$0xff]
    %v7430 = vld [vmem:[%s5 + $0x448] sm:$0xff]
    %v7431 = vld [vmem:[%s5 + $0x450] sm:$0xff]
    %v7432 = vld [vmem:[%s5 + $0x458] sm:$0xff]
    %v7433 = vld [vmem:[%s5 + $0x460] sm:$0xff]
    %v7434 = vld [vmem:[%s5 + $0x468] sm:$0xff]
    %v7435 = vld [vmem:[%s5 + $0x470] sm:$0xff]
    %v7436 = vld [vmem:[%s5 + $0x478] sm:$0xff]
    %v7437 = vld [vmem:[%s5 + $0x480] sm:$0xff]
    %v7438 = vld [vmem:[%s5 + $0x488] sm:$0xff]
    %v7439 = vld [vmem:[%s5 + $0x490] sm:$0xff]
    %v7440 = vld [vmem:[%s5 + $0x498] sm:$0xff]
    %v7441 = vld [vmem:[%s5 + $0x4a0] sm:$0xff]
    %v7442 = vld [vmem:[%s5 + $0x4a8] sm:$0xff]
    %v7443 = vld [vmem:[%s5 + $0x4b0] sm:$0xff]
    %v7444 = vld [vmem:[%s5 + $0x4b8] sm:$0xff]
    %v7445 = vld [vmem:[%s5 + $0x4c0] sm:$0xff]
    %v7446 = vld [vmem:[%s5 + $0x4c8] sm:$0xff]
    %v7447 = vld [vmem:[%s5 + $0x4d0] sm:$0xff]
    %v7448 = vld [vmem:[%s5 + $0x4d8] sm:$0xff]
    %v7449 = vld [vmem:[%s5 + $0x4e0] sm:$0xff]
    %v7450 = vld [vmem:[%s5 + $0x4e8] sm:$0xff]
    %v7451 = vld [vmem:[%s5 + $0x4f0] sm:$0xff]
    %v7452 = vld [vmem:[%s5 + $0x4f8] sm:$0xff]
    %v7453 = vld [vmem:[%s5 + $0x500] sm:$0xff]
    %v7454 = vld [vmem:[%s5 + $0x508] sm:$0xff]
    %v7455 = vld [vmem:[%s5 + $0x510] sm:$0xff]
    %v7456 = vld [vmem:[%s5 + $0x518] sm:$0xff]
    %v7457 = vld [vmem:[%s5 + $0x520] sm:$0xff]
    %v7458 = vld [vmem:[%s5 + $0x528] sm:$0xff]
    %v7459 = vld [vmem:[%s5 + $0x530] sm:$0xff]
    %v7460 = vld [vmem:[%s5 + $0x538] sm:$0xff]
    %v7461 = vld [vmem:[%s5 + $0x540] sm:$0xff]
    %v7462 = vld [vmem:[%s5 + $0x548] sm:$0xff]
    %v7463 = vld [vmem:[%s5 + $0x550] sm:$0xff]
    %v7464 = vld [vmem:[%s5 + $0x558] sm:$0xff]
    %v7465 = vld [vmem:[%s5 + $0x560] sm:$0xff]
    %v7466 = vld [vmem:[%s5 + $0x568] sm:$0xff]
    %v7467 = vld [vmem:[%s5 + $0x570] sm:$0xff]
    %v7468 = vld [vmem:[%s5 + $0x578] sm:$0xff]
    %v7469 = vld [vmem:[%s5 + $0x580] sm:$0xff]
    %v7470 = vld [vmem:[%s5 + $0x588] sm:$0xff]
    %v7471 = vld [vmem:[%s5 + $0x590] sm:$0xff]
    %v7472 = vld [vmem:[%s5 + $0x598] sm:$0xff]
    %v7473 = vld [vmem:[%s5 + $0x5a0] sm:$0xff]
    %v7474 = vld [vmem:[%s5 + $0x5a8] sm:$0xff]
    %v7475 = vld [vmem:[%s5 + $0x5b0] sm:$0xff]
    %v7476 = vld [vmem:[%s5 + $0x5b8] sm:$0xff]
    %v7477 = vld [vmem:[%s5 + $0x5c0] sm:$0xff]
    %v7478 = vld [vmem:[%s5 + $0x5c8] sm:$0xff]
    %v7479 = vld [vmem:[%s5 + $0x5d0] sm:$0xff]
    %v7480 = vld [vmem:[%s5 + $0x5d8] sm:$0xff]
    %v7481 = vld [vmem:[%s5 + $0x5e0] sm:$0xff]
    %v7482 = vld [vmem:[%s5 + $0x5e8] sm:$0xff]
    %v7483 = vld [vmem:[%s5 + $0x5f0] sm:$0xff]
    %v7484 = vld [vmem:[%s5 + $0x5f8] sm:$0xff]
    %v7485 = vld [vmem:[%s5 + $0x600] sm:$0xff]
    %v7486 = vld [vmem:[%s5 + $0x608] sm:$0xff]
    %v7487 = vld [vmem:[%s5 + $0x610] sm:$0xff]
    %v7488 = vld [vmem:[%s5 + $0x618] sm:$0xff]
    %v7489 = vld [vmem:[%s5 + $0x620] sm:$0xff]
    %v7490 = vld [vmem:[%s5 + $0x628] sm:$0xff]
    %v7491 = vld [vmem:[%s5 + $0x630] sm:$0xff]
    %v7492 = vld [vmem:[%s5 + $0x638] sm:$0xff]
    %v7493 = vld [vmem:[%s5 + $0x640] sm:$0xff]
    %v7494 = vld [vmem:[%s5 + $0x648] sm:$0xff]
    %v7495 = vld [vmem:[%s5 + $0x650] sm:$0xff]
    %v7496 = vld [vmem:[%s5 + $0x658] sm:$0xff]
    %v7497 = vld [vmem:[%s5 + $0x660] sm:$0xff]
    %v7498 = vld [vmem:[%s5 + $0x668] sm:$0xff]
    %v7499 = vld [vmem:[%s5 + $0x670] sm:$0xff]
    %v7500 = vld [vmem:[%s5 + $0x678] sm:$0xff]
    %v7501 = vld [vmem:[%s5 + $0x680] sm:$0xff]
    %v7502 = vld [vmem:[%s5 + $0x688] sm:$0xff]
    %v7503 = vld [vmem:[%s5 + $0x690] sm:$0xff]
    %v7504 = vld [vmem:[%s5 + $0x698] sm:$0xff]
    %v7505 = vld [vmem:[%s5 + $0x6a0] sm:$0xff]
    %v7506 = vld [vmem:[%s5 + $0x6a8] sm:$0xff]
    %v7507 = vld [vmem:[%s5 + $0x6b0] sm:$0xff]
    %v7508 = vld [vmem:[%s5 + $0x6b8] sm:$0xff]
    %v7509 = vld [vmem:[%s5 + $0x6c0] sm:$0xff]
    %v7510 = vld [vmem:[%s5 + $0x6c8] sm:$0xff]
    %v7511 = vld [vmem:[%s5 + $0x6d0] sm:$0xff]
    %v7512 = vld [vmem:[%s5 + $0x6d8] sm:$0xff]
    %v7513 = vld [vmem:[%s5 + $0x6e0] sm:$0xff]
    %v7514 = vld [vmem:[%s5 + $0x6e8] sm:$0xff]
    %v7515 = vld [vmem:[%s5 + $0x6f0] sm:$0xff]
    %v7516 = vld [vmem:[%s5 + $0x6f8] sm:$0xff]
    %v7517 = vld [vmem:[%s5 + $0x700] sm:$0xff]
    %v7518 = vld [vmem:[%s5 + $0x708] sm:$0xff]
    %v7519 = vld [vmem:[%s5 + $0x710] sm:$0xff]
    %v7520 = vld [vmem:[%s5 + $0x718] sm:$0xff]
    %v7521 = vld [vmem:[%s5 + $0x720] sm:$0xff]
    %v7522 = vld [vmem:[%s5 + $0x728] sm:$0xff]
    %v7523 = vld [vmem:[%s5 + $0x730] sm:$0xff]
    %v7524 = vld [vmem:[%s5 + $0x738] sm:$0xff]
    %v7525 = vld [vmem:[%s5 + $0x740] sm:$0xff]
    %v7526 = vld [vmem:[%s5 + $0x748] sm:$0xff]
    %v7527 = vld [vmem:[%s5 + $0x750] sm:$0xff]
    %v7528 = vld [vmem:[%s5 + $0x758] sm:$0xff]
    %v7529 = vld [vmem:[%s5 + $0x760] sm:$0xff]
    %v7530 = vld [vmem:[%s5 + $0x768] sm:$0xff]
    %v7531 = vld [vmem:[%s5 + $0x770] sm:$0xff]
    %v7532 = vld [vmem:[%s5 + $0x778] sm:$0xff]
    %v7533 = vld [vmem:[%s5 + $0x780] sm:$0xff]
    %v7534 = vld [vmem:[%s5 + $0x788] sm:$0xff]
    %v7535 = vld [vmem:[%s5 + $0x790] sm:$0xff]
    %v7536 = vld [vmem:[%s5 + $0x798] sm:$0xff]
    %v7537 = vld [vmem:[%s5 + $0x7a0] sm:$0xff]
    %v7538 = vld [vmem:[%s5 + $0x7a8] sm:$0xff]
    %v7539 = vld [vmem:[%s5 + $0x7b0] sm:$0xff]
    %v7540 = vld [vmem:[%s5 + $0x7b8] sm:$0xff]
    %v7541 = vld [vmem:[%s5 + $0x7c0] sm:$0xff]
    %v7542 = vld [vmem:[%s5 + $0x7c8] sm:$0xff]
    %v7543 = vld [vmem:[%s5 + $0x7d0] sm:$0xff]
    %v7544 = vld [vmem:[%s5 + $0x7d8] sm:$0xff]
    %v7545 = vld [vmem:[%s5 + $0x7e0] sm:$0xff]
    %v7546 = vld [vmem:[%s5 + $0x7e8] sm:$0xff]
    %v7547 = vld [vmem:[%s5 + $0x7f0] sm:$0xff]
    %v7548 = vld [vmem:[%s5 + $0x7f8] sm:$0xff]
    %v7549 = vld [vmem:[#allocation7] sm:$0xf]
    %v7551 = vlaneseq
    %v7552 = vshrl.u32 %v7551, 7
    %v7553 = vsub.s32 0, %v7552
    %v7554 = vrot.slane %v7549, %v7553
    %v7555 = vlaneseq
    %v7556 = vshrl.u32 %v7555, 7
    %v7557 = vsub.s32 1, %v7556
    %v7558 = vrot.slane %v7549, %v7557
    %v7559 = vlaneseq
    %v7560 = vshrl.u32 %v7559, 7
    %v7561 = vsub.s32 2, %v7560
    %v7562 = vrot.slane %v7549, %v7561
    %v7563 = vlaneseq
    %v7564 = vshrl.u32 %v7563, 7
    %v7565 = vsub.s32 3, %v7564
    %v7566 = vrot.slane %v7549, %v7565
    %v7827 = vunpack.c.l.b16 %v7293
    %v7828 = vunpack.c.h.b16 %v7293
    %v7829 = vunpack.c.l.b16 %v7294
    %v7830 = vunpack.c.h.b16 %v7294
    %v7831 = vunpack.c.l.b16 %v7295
    %v7832 = vunpack.c.h.b16 %v7295
    %v7833 = vunpack.c.l.b16 %v7296
    %v7834 = vunpack.c.h.b16 %v7296
    %v7835 = vunpack.c.l.b16 %v7297
    %v7836 = vunpack.c.h.b16 %v7297
    %v7837 = vunpack.c.l.b16 %v7298
    %v7838 = vunpack.c.h.b16 %v7298
    %v7839 = vunpack.c.l.b16 %v7299
    %v7840 = vunpack.c.h.b16 %v7299
    %v7841 = vunpack.c.l.b16 %v7300
    %v7842 = vunpack.c.h.b16 %v7300
    %v7843 = vunpack.c.l.b16 %v7301
    %v7844 = vunpack.c.h.b16 %v7301
    %v7845 = vunpack.c.l.b16 %v7302
    %v7846 = vunpack.c.h.b16 %v7302
    %v7847 = vunpack.c.l.b16 %v7303
    %v7848 = vunpack.c.h.b16 %v7303
    %v7849 = vunpack.c.l.b16 %v7304
    %v7850 = vunpack.c.h.b16 %v7304
    %v7851 = vunpack.c.l.b16 %v7305
    %v7852 = vunpack.c.h.b16 %v7305
    %v7853 = vunpack.c.l.b16 %v7306
    %v7854 = vunpack.c.h.b16 %v7306
    %v7855 = vunpack.c.l.b16 %v7307
    %v7856 = vunpack.c.h.b16 %v7307
    %v7857 = vunpack.c.l.b16 %v7308
    %v7858 = vunpack.c.h.b16 %v7308
    %v7859 = vunpack.c.l.b16 %v7309
    %v7860 = vunpack.c.h.b16 %v7309
    %v7861 = vunpack.c.l.b16 %v7310
    %v7862 = vunpack.c.h.b16 %v7310
    %v7863 = vunpack.c.l.b16 %v7311
    %v7864 = vunpack.c.h.b16 %v7311
    %v7865 = vunpack.c.l.b16 %v7312
    %v7866 = vunpack.c.h.b16 %v7312
    %v7867 = vunpack.c.l.b16 %v7313
    %v7868 = vunpack.c.h.b16 %v7313
    %v7869 = vunpack.c.l.b16 %v7314
    %v7870 = vunpack.c.h.b16 %v7314
    %v7871 = vunpack.c.l.b16 %v7315
    %v7872 = vunpack.c.h.b16 %v7315
    %v7873 = vunpack.c.l.b16 %v7316
    %v7874 = vunpack.c.h.b16 %v7316
    %v7875 = vunpack.c.l.b16 %v7317
    %v7876 = vunpack.c.h.b16 %v7317
    %v7877 = vunpack.c.l.b16 %v7318
    %v7878 = vunpack.c.h.b16 %v7318
    %v7879 = vunpack.c.l.b16 %v7319
    %v7880 = vunpack.c.h.b16 %v7319
    %v7881 = vunpack.c.l.b16 %v7320
    %v7882 = vunpack.c.h.b16 %v7320
    %v7883 = vunpack.c.l.b16 %v7321
    %v7884 = vunpack.c.h.b16 %v7321
    %v7885 = vunpack.c.l.b16 %v7322
    %v7886 = vunpack.c.h.b16 %v7322
    %v7887 = vunpack.c.l.b16 %v7323
    %v7888 = vunpack.c.h.b16 %v7323
    %v7889 = vunpack.c.l.b16 %v7324
    %v7890 = vunpack.c.h.b16 %v7324
    %v7891 = vunpack.c.l.b16 %v7325
    %v7892 = vunpack.c.h.b16 %v7325
    %v7893 = vunpack.c.l.b16 %v7326
    %v7894 = vunpack.c.h.b16 %v7326
    %v7895 = vunpack.c.l.b16 %v7327
    %v7896 = vunpack.c.h.b16 %v7327
    %v7897 = vunpack.c.l.b16 %v7328
    %v7898 = vunpack.c.h.b16 %v7328
    %v7899 = vunpack.c.l.b16 %v7329
    %v7900 = vunpack.c.h.b16 %v7329
    %v7901 = vunpack.c.l.b16 %v7330
    %v7902 = vunpack.c.h.b16 %v7330
    %v7903 = vunpack.c.l.b16 %v7331
    %v7904 = vunpack.c.h.b16 %v7331
    %v7905 = vunpack.c.l.b16 %v7332
    %v7906 = vunpack.c.h.b16 %v7332
    %v7907 = vunpack.c.l.b16 %v7333
    %v7908 = vunpack.c.h.b16 %v7333
    %v7909 = vunpack.c.l.b16 %v7334
    %v7910 = vunpack.c.h.b16 %v7334
    %v7911 = vunpack.c.l.b16 %v7335
    %v7912 = vunpack.c.h.b16 %v7335
    %v7913 = vunpack.c.l.b16 %v7336
    %v7914 = vunpack.c.h.b16 %v7336
    %v7915 = vunpack.c.l.b16 %v7337
    %v7916 = vunpack.c.h.b16 %v7337
    %v7917 = vunpack.c.l.b16 %v7338
    %v7918 = vunpack.c.h.b16 %v7338
    %v7919 = vunpack.c.l.b16 %v7339
    %v7920 = vunpack.c.h.b16 %v7339
    %v7921 = vunpack.c.l.b16 %v7340
    %v7922 = vunpack.c.h.b16 %v7340
    %v7923 = vunpack.c.l.b16 %v7341
    %v7924 = vunpack.c.h.b16 %v7341
    %v7925 = vunpack.c.l.b16 %v7342
    %v7926 = vunpack.c.h.b16 %v7342
    %v7927 = vunpack.c.l.b16 %v7343
    %v7928 = vunpack.c.h.b16 %v7343
    %v7929 = vunpack.c.l.b16 %v7344
    %v7930 = vunpack.c.h.b16 %v7344
    %v7931 = vunpack.c.l.b16 %v7345
    %v7932 = vunpack.c.h.b16 %v7345
    %v7933 = vunpack.c.l.b16 %v7346
    %v7934 = vunpack.c.h.b16 %v7346
    %v7935 = vunpack.c.l.b16 %v7347
    %v7936 = vunpack.c.h.b16 %v7347
    %v7937 = vunpack.c.l.b16 %v7348
    %v7938 = vunpack.c.h.b16 %v7348
    %v7939 = vunpack.c.l.b16 %v7349
    %v7940 = vunpack.c.h.b16 %v7349
    %v7941 = vunpack.c.l.b16 %v7350
    %v7942 = vunpack.c.h.b16 %v7350
    %v7943 = vunpack.c.l.b16 %v7351
    %v7944 = vunpack.c.h.b16 %v7351
    %v7945 = vunpack.c.l.b16 %v7352
    %v7946 = vunpack.c.h.b16 %v7352
    %v7947 = vunpack.c.l.b16 %v7353
    %v7948 = vunpack.c.h.b16 %v7353
    %v7949 = vunpack.c.l.b16 %v7354
    %v7950 = vunpack.c.h.b16 %v7354
    %v7951 = vunpack.c.l.b16 %v7355
    %v7952 = vunpack.c.h.b16 %v7355
    %v7953 = vunpack.c.l.b16 %v7356
    %v7954 = vunpack.c.h.b16 %v7356
    %v7955 = vunpack.c.l.b16 %v7357
    %v7956 = vunpack.c.h.b16 %v7357
    %v7957 = vunpack.c.l.b16 %v7358
    %v7958 = vunpack.c.h.b16 %v7358
    %v7959 = vunpack.c.l.b16 %v7359
    %v7960 = vunpack.c.h.b16 %v7359
    %v7961 = vunpack.c.l.b16 %v7360
    %v7962 = vunpack.c.h.b16 %v7360
    %v7963 = vunpack.c.l.b16 %v7361
    %v7964 = vunpack.c.h.b16 %v7361
    %v7965 = vunpack.c.l.b16 %v7362
    %v7966 = vunpack.c.h.b16 %v7362
    %v7967 = vunpack.c.l.b16 %v7363
    %v7968 = vunpack.c.h.b16 %v7363
    %v7969 = vunpack.c.l.b16 %v7364
    %v7970 = vunpack.c.h.b16 %v7364
    %v7971 = vunpack.c.l.b16 %v7365
    %v7972 = vunpack.c.h.b16 %v7365
    %v7973 = vunpack.c.l.b16 %v7366
    %v7974 = vunpack.c.h.b16 %v7366
    %v7975 = vunpack.c.l.b16 %v7367
    %v7976 = vunpack.c.h.b16 %v7367
    %v7977 = vunpack.c.l.b16 %v7368
    %v7978 = vunpack.c.h.b16 %v7368
    %v7979 = vunpack.c.l.b16 %v7369
    %v7980 = vunpack.c.h.b16 %v7369
    %v7981 = vunpack.c.l.b16 %v7370
    %v7982 = vunpack.c.h.b16 %v7370
    %v7983 = vunpack.c.l.b16 %v7371
    %v7984 = vunpack.c.h.b16 %v7371
    %v7985 = vunpack.c.l.b16 %v7372
    %v7986 = vunpack.c.h.b16 %v7372
    %v7987 = vunpack.c.l.b16 %v7373
    %v7988 = vunpack.c.h.b16 %v7373
    %v7989 = vunpack.c.l.b16 %v7374
    %v7990 = vunpack.c.h.b16 %v7374
    %v7991 = vunpack.c.l.b16 %v7375
    %v7992 = vunpack.c.h.b16 %v7375
    %v7993 = vunpack.c.l.b16 %v7376
    %v7994 = vunpack.c.h.b16 %v7376
    %v7995 = vunpack.c.l.b16 %v7377
    %v7996 = vunpack.c.h.b16 %v7377
    %v7997 = vunpack.c.l.b16 %v7378
    %v7998 = vunpack.c.h.b16 %v7378
    %v7999 = vunpack.c.l.b16 %v7379
    %v8000 = vunpack.c.h.b16 %v7379
    %v8001 = vunpack.c.l.b16 %v7380
    %v8002 = vunpack.c.h.b16 %v7380
    %v8003 = vunpack.c.l.b16 %v7381
    %v8004 = vunpack.c.h.b16 %v7381
    %v8005 = vunpack.c.l.b16 %v7382
    %v8006 = vunpack.c.h.b16 %v7382
    %v8007 = vunpack.c.l.b16 %v7383
    %v8008 = vunpack.c.h.b16 %v7383
    %v8009 = vunpack.c.l.b16 %v7384
    %v8010 = vunpack.c.h.b16 %v7384
    %v8011 = vunpack.c.l.b16 %v7385
    %v8012 = vunpack.c.h.b16 %v7385
    %v8013 = vunpack.c.l.b16 %v7386
    %v8014 = vunpack.c.h.b16 %v7386
    %v8015 = vunpack.c.l.b16 %v7387
    %v8016 = vunpack.c.h.b16 %v7387
    %v8017 = vunpack.c.l.b16 %v7388
    %v8018 = vunpack.c.h.b16 %v7388
    %v8019 = vunpack.c.l.b16 %v7389
    %v8020 = vunpack.c.h.b16 %v7389
    %v8021 = vunpack.c.l.b16 %v7390
    %v8022 = vunpack.c.h.b16 %v7390
    %v8023 = vunpack.c.l.b16 %v7391
    %v8024 = vunpack.c.h.b16 %v7391
    %v8025 = vunpack.c.l.b16 %v7392
    %v8026 = vunpack.c.h.b16 %v7392
    %v8027 = vunpack.c.l.b16 %v7393
    %v8028 = vunpack.c.h.b16 %v7393
    %v8029 = vunpack.c.l.b16 %v7394
    %v8030 = vunpack.c.h.b16 %v7394
    %v8031 = vunpack.c.l.b16 %v7395
    %v8032 = vunpack.c.h.b16 %v7395
    %v8033 = vunpack.c.l.b16 %v7396
    %v8034 = vunpack.c.h.b16 %v7396
    %v8035 = vunpack.c.l.b16 %v7397
    %v8036 = vunpack.c.h.b16 %v7397
    %v8037 = vunpack.c.l.b16 %v7398
    %v8038 = vunpack.c.h.b16 %v7398
    %v8039 = vunpack.c.l.b16 %v7399
    %v8040 = vunpack.c.h.b16 %v7399
    %v8041 = vunpack.c.l.b16 %v7400
    %v8042 = vunpack.c.h.b16 %v7400
    %v8043 = vunpack.c.l.b16 %v7401
    %v8044 = vunpack.c.h.b16 %v7401
    %v8045 = vunpack.c.l.b16 %v7402
    %v8046 = vunpack.c.h.b16 %v7402
    %v8047 = vunpack.c.l.b16 %v7403
    %v8048 = vunpack.c.h.b16 %v7403
    %v8049 = vunpack.c.l.b16 %v7404
    %v8050 = vunpack.c.h.b16 %v7404
    %v8051 = vunpack.c.l.b16 %v7405
    %v8052 = vunpack.c.h.b16 %v7405
    %v8053 = vunpack.c.l.b16 %v7406
    %v8054 = vunpack.c.h.b16 %v7406
    %v8055 = vunpack.c.l.b16 %v7407
    %v8056 = vunpack.c.h.b16 %v7407
    %v8057 = vunpack.c.l.b16 %v7408
    %v8058 = vunpack.c.h.b16 %v7408
    %v8059 = vunpack.c.l.b16 %v7409
    %v8060 = vunpack.c.h.b16 %v7409
    %v8061 = vunpack.c.l.b16 %v7410
    %v8062 = vunpack.c.h.b16 %v7410
    %v8063 = vunpack.c.l.b16 %v7411
    %v8064 = vunpack.c.h.b16 %v7411
    %v8065 = vunpack.c.l.b16 %v7412
    %v8066 = vunpack.c.h.b16 %v7412
    %v8067 = vunpack.c.l.b16 %v7413
    %v8068 = vunpack.c.h.b16 %v7413
    %v8069 = vunpack.c.l.b16 %v7414
    %v8070 = vunpack.c.h.b16 %v7414
    %v8071 = vunpack.c.l.b16 %v7415
    %v8072 = vunpack.c.h.b16 %v7415
    %v8073 = vunpack.c.l.b16 %v7416
    %v8074 = vunpack.c.h.b16 %v7416
    %v8075 = vunpack.c.l.b16 %v7417
    %v8076 = vunpack.c.h.b16 %v7417
    %v8077 = vunpack.c.l.b16 %v7418
    %v8078 = vunpack.c.h.b16 %v7418
    %v8079 = vunpack.c.l.b16 %v7419
    %v8080 = vunpack.c.h.b16 %v7419
    %v8081 = vunpack.c.l.b16 %v7420
    %v8082 = vunpack.c.h.b16 %v7420
    %v8083 = vunpack.c.l.b16 %v7421
    %v8084 = vunpack.c.h.b16 %v7421
    %v8085 = vunpack.c.l.b16 %v7422
    %v8086 = vunpack.c.h.b16 %v7422
    %v8087 = vunpack.c.l.b16 %v7423
    %v8088 = vunpack.c.h.b16 %v7423
    %v8089 = vunpack.c.l.b16 %v7424
    %v8090 = vunpack.c.h.b16 %v7424
    %v8091 = vunpack.c.l.b16 %v7425
    %v8092 = vunpack.c.h.b16 %v7425
    %v8093 = vunpack.c.l.b16 %v7426
    %v8094 = vunpack.c.h.b16 %v7426
    %v8095 = vunpack.c.l.b16 %v7427
    %v8096 = vunpack.c.h.b16 %v7427
    %v8097 = vunpack.c.l.b16 %v7428
    %v8098 = vunpack.c.h.b16 %v7428
    %v8099 = vunpack.c.l.b16 %v7429
    %v8100 = vunpack.c.h.b16 %v7429
    %v8101 = vunpack.c.l.b16 %v7430
    %v8102 = vunpack.c.h.b16 %v7430
    %v8103 = vunpack.c.l.b16 %v7431
    %v8104 = vunpack.c.h.b16 %v7431
    %v8105 = vunpack.c.l.b16 %v7432
    %v8106 = vunpack.c.h.b16 %v7432
    %v8107 = vunpack.c.l.b16 %v7433
    %v8108 = vunpack.c.h.b16 %v7433
    %v8109 = vunpack.c.l.b16 %v7434
    %v8110 = vunpack.c.h.b16 %v7434
    %v8111 = vunpack.c.l.b16 %v7435
    %v8112 = vunpack.c.h.b16 %v7435
    %v8113 = vunpack.c.l.b16 %v7436
    %v8114 = vunpack.c.h.b16 %v7436
    %v8115 = vunpack.c.l.b16 %v7437
    %v8116 = vunpack.c.h.b16 %v7437
    %v8117 = vunpack.c.l.b16 %v7438
    %v8118 = vunpack.c.h.b16 %v7438
    %v8119 = vunpack.c.l.b16 %v7439
    %v8120 = vunpack.c.h.b16 %v7439
    %v8121 = vunpack.c.l.b16 %v7440
    %v8122 = vunpack.c.h.b16 %v7440
    %v8123 = vunpack.c.l.b16 %v7441
    %v8124 = vunpack.c.h.b16 %v7441
    %v8125 = vunpack.c.l.b16 %v7442
    %v8126 = vunpack.c.h.b16 %v7442
    %v8127 = vunpack.c.l.b16 %v7443
    %v8128 = vunpack.c.h.b16 %v7443
    %v8129 = vunpack.c.l.b16 %v7444
    %v8130 = vunpack.c.h.b16 %v7444
    %v8131 = vunpack.c.l.b16 %v7445
    %v8132 = vunpack.c.h.b16 %v7445
    %v8133 = vunpack.c.l.b16 %v7446
    %v8134 = vunpack.c.h.b16 %v7446
    %v8135 = vunpack.c.l.b16 %v7447
    %v8136 = vunpack.c.h.b16 %v7447
    %v8137 = vunpack.c.l.b16 %v7448
    %v8138 = vunpack.c.h.b16 %v7448
    %v8139 = vunpack.c.l.b16 %v7449
    %v8140 = vunpack.c.h.b16 %v7449
    %v8141 = vunpack.c.l.b16 %v7450
    %v8142 = vunpack.c.h.b16 %v7450
    %v8143 = vunpack.c.l.b16 %v7451
    %v8144 = vunpack.c.h.b16 %v7451
    %v8145 = vunpack.c.l.b16 %v7452
    %v8146 = vunpack.c.h.b16 %v7452
    %v8147 = vunpack.c.l.b16 %v7453
    %v8148 = vunpack.c.h.b16 %v7453
    %v8149 = vunpack.c.l.b16 %v7454
    %v8150 = vunpack.c.h.b16 %v7454
    %v8151 = vunpack.c.l.b16 %v7455
    %v8152 = vunpack.c.h.b16 %v7455
    %v8153 = vunpack.c.l.b16 %v7456
    %v8154 = vunpack.c.h.b16 %v7456
    %v8155 = vunpack.c.l.b16 %v7457
    %v8156 = vunpack.c.h.b16 %v7457
    %v8157 = vunpack.c.l.b16 %v7458
    %v8158 = vunpack.c.h.b16 %v7458
    %v8159 = vunpack.c.l.b16 %v7459
    %v8160 = vunpack.c.h.b16 %v7459
    %v8161 = vunpack.c.l.b16 %v7460
    %v8162 = vunpack.c.h.b16 %v7460
    %v8163 = vunpack.c.l.b16 %v7461
    %v8164 = vunpack.c.h.b16 %v7461
    %v8165 = vunpack.c.l.b16 %v7462
    %v8166 = vunpack.c.h.b16 %v7462
    %v8167 = vunpack.c.l.b16 %v7463
    %v8168 = vunpack.c.h.b16 %v7463
    %v8169 = vunpack.c.l.b16 %v7464
    %v8170 = vunpack.c.h.b16 %v7464
    %v8171 = vunpack.c.l.b16 %v7465
    %v8172 = vunpack.c.h.b16 %v7465
    %v8173 = vunpack.c.l.b16 %v7466
    %v8174 = vunpack.c.h.b16 %v7466
    %v8175 = vunpack.c.l.b16 %v7467
    %v8176 = vunpack.c.h.b16 %v7467
    %v8177 = vunpack.c.l.b16 %v7468
    %v8178 = vunpack.c.h.b16 %v7468
    %v8179 = vunpack.c.l.b16 %v7469
    %v8180 = vunpack.c.h.b16 %v7469
    %v8181 = vunpack.c.l.b16 %v7470
    %v8182 = vunpack.c.h.b16 %v7470
    %v8183 = vunpack.c.l.b16 %v7471
    %v8184 = vunpack.c.h.b16 %v7471
    %v8185 = vunpack.c.l.b16 %v7472
    %v8186 = vunpack.c.h.b16 %v7472
    %v8187 = vunpack.c.l.b16 %v7473
    %v8188 = vunpack.c.h.b16 %v7473
    %v8189 = vunpack.c.l.b16 %v7474
    %v8190 = vunpack.c.h.b16 %v7474
    %v8191 = vunpack.c.l.b16 %v7475
    %v8192 = vunpack.c.h.b16 %v7475
    %v8193 = vunpack.c.l.b16 %v7476
    %v8194 = vunpack.c.h.b16 %v7476
    %v8195 = vunpack.c.l.b16 %v7477
    %v8196 = vunpack.c.h.b16 %v7477
    %v8197 = vunpack.c.l.b16 %v7478
    %v8198 = vunpack.c.h.b16 %v7478
    %v8199 = vunpack.c.l.b16 %v7479
    %v8200 = vunpack.c.h.b16 %v7479
    %v8201 = vunpack.c.l.b16 %v7480
    %v8202 = vunpack.c.h.b16 %v7480
    %v8203 = vunpack.c.l.b16 %v7481
    %v8204 = vunpack.c.h.b16 %v7481
    %v8205 = vunpack.c.l.b16 %v7482
    %v8206 = vunpack.c.h.b16 %v7482
    %v8207 = vunpack.c.l.b16 %v7483
    %v8208 = vunpack.c.h.b16 %v7483
    %v8209 = vunpack.c.l.b16 %v7484
    %v8210 = vunpack.c.h.b16 %v7484
    %v8211 = vunpack.c.l.b16 %v7485
    %v8212 = vunpack.c.h.b16 %v7485
    %v8213 = vunpack.c.l.b16 %v7486
    %v8214 = vunpack.c.h.b16 %v7486
    %v8215 = vunpack.c.l.b16 %v7487
    %v8216 = vunpack.c.h.b16 %v7487
    %v8217 = vunpack.c.l.b16 %v7488
    %v8218 = vunpack.c.h.b16 %v7488
    %v8219 = vunpack.c.l.b16 %v7489
    %v8220 = vunpack.c.h.b16 %v7489
    %v8221 = vunpack.c.l.b16 %v7490
    %v8222 = vunpack.c.h.b16 %v7490
    %v8223 = vunpack.c.l.b16 %v7491
    %v8224 = vunpack.c.h.b16 %v7491
    %v8225 = vunpack.c.l.b16 %v7492
    %v8226 = vunpack.c.h.b16 %v7492
    %v8227 = vunpack.c.l.b16 %v7493
    %v8228 = vunpack.c.h.b16 %v7493
    %v8229 = vunpack.c.l.b16 %v7494
    %v8230 = vunpack.c.h.b16 %v7494
    %v8231 = vunpack.c.l.b16 %v7495
    %v8232 = vunpack.c.h.b16 %v7495
    %v8233 = vunpack.c.l.b16 %v7496
    %v8234 = vunpack.c.h.b16 %v7496
    %v8235 = vunpack.c.l.b16 %v7497
    %v8236 = vunpack.c.h.b16 %v7497
    %v8237 = vunpack.c.l.b16 %v7498
    %v8238 = vunpack.c.h.b16 %v7498
    %v8239 = vunpack.c.l.b16 %v7499
    %v8240 = vunpack.c.h.b16 %v7499
    %v8241 = vunpack.c.l.b16 %v7500
    %v8242 = vunpack.c.h.b16 %v7500
    %v8243 = vunpack.c.l.b16 %v7501
    %v8244 = vunpack.c.h.b16 %v7501
    %v8245 = vunpack.c.l.b16 %v7502
    %v8246 = vunpack.c.h.b16 %v7502
    %v8247 = vunpack.c.l.b16 %v7503
    %v8248 = vunpack.c.h.b16 %v7503
    %v8249 = vunpack.c.l.b16 %v7504
    %v8250 = vunpack.c.h.b16 %v7504
    %v8251 = vunpack.c.l.b16 %v7505
    %v8252 = vunpack.c.h.b16 %v7505
    %v8253 = vunpack.c.l.b16 %v7506
    %v8254 = vunpack.c.h.b16 %v7506
    %v8255 = vunpack.c.l.b16 %v7507
    %v8256 = vunpack.c.h.b16 %v7507
    %v8257 = vunpack.c.l.b16 %v7508
    %v8258 = vunpack.c.h.b16 %v7508
    %v8259 = vunpack.c.l.b16 %v7509
    %v8260 = vunpack.c.h.b16 %v7509
    %v8261 = vunpack.c.l.b16 %v7510
    %v8262 = vunpack.c.h.b16 %v7510
    %v8263 = vunpack.c.l.b16 %v7511
    %v8264 = vunpack.c.h.b16 %v7511
    %v8265 = vunpack.c.l.b16 %v7512
    %v8266 = vunpack.c.h.b16 %v7512
    %v8267 = vunpack.c.l.b16 %v7513
    %v8268 = vunpack.c.h.b16 %v7513
    %v8269 = vunpack.c.l.b16 %v7514
    %v8270 = vunpack.c.h.b16 %v7514
    %v8271 = vunpack.c.l.b16 %v7515
    %v8272 = vunpack.c.h.b16 %v7515
    %v8273 = vunpack.c.l.b16 %v7516
    %v8274 = vunpack.c.h.b16 %v7516
    %v8275 = vunpack.c.l.b16 %v7517
    %v8276 = vunpack.c.h.b16 %v7517
    %v8277 = vunpack.c.l.b16 %v7518
    %v8278 = vunpack.c.h.b16 %v7518
    %v8279 = vunpack.c.l.b16 %v7519
    %v8280 = vunpack.c.h.b16 %v7519
    %v8281 = vunpack.c.l.b16 %v7520
    %v8282 = vunpack.c.h.b16 %v7520
    %v8283 = vunpack.c.l.b16 %v7521
    %v8284 = vunpack.c.h.b16 %v7521
    %v8285 = vunpack.c.l.b16 %v7522
    %v8286 = vunpack.c.h.b16 %v7522
    %v8287 = vunpack.c.l.b16 %v7523
    %v8288 = vunpack.c.h.b16 %v7523
    %v8289 = vunpack.c.l.b16 %v7524
    %v8290 = vunpack.c.h.b16 %v7524
    %v8291 = vunpack.c.l.b16 %v7525
    %v8292 = vunpack.c.h.b16 %v7525
    %v8293 = vunpack.c.l.b16 %v7526
    %v8294 = vunpack.c.h.b16 %v7526
    %v8295 = vunpack.c.l.b16 %v7527
    %v8296 = vunpack.c.h.b16 %v7527
    %v8297 = vunpack.c.l.b16 %v7528
    %v8298 = vunpack.c.h.b16 %v7528
    %v8299 = vunpack.c.l.b16 %v7529
    %v8300 = vunpack.c.h.b16 %v7529
    %v8301 = vunpack.c.l.b16 %v7530
    %v8302 = vunpack.c.h.b16 %v7530
    %v8303 = vunpack.c.l.b16 %v7531
    %v8304 = vunpack.c.h.b16 %v7531
    %v8305 = vunpack.c.l.b16 %v7532
    %v8306 = vunpack.c.h.b16 %v7532
    %v8307 = vunpack.c.l.b16 %v7533
    %v8308 = vunpack.c.h.b16 %v7533
    %v8309 = vunpack.c.l.b16 %v7534
    %v8310 = vunpack.c.h.b16 %v7534
    %v8311 = vunpack.c.l.b16 %v7535
    %v8312 = vunpack.c.h.b16 %v7535
    %v8313 = vunpack.c.l.b16 %v7536
    %v8314 = vunpack.c.h.b16 %v7536
    %v8315 = vunpack.c.l.b16 %v7537
    %v8316 = vunpack.c.h.b16 %v7537
    %v8317 = vunpack.c.l.b16 %v7538
    %v8318 = vunpack.c.h.b16 %v7538
    %v8319 = vunpack.c.l.b16 %v7539
    %v8320 = vunpack.c.h.b16 %v7539
    %v8321 = vunpack.c.l.b16 %v7540
    %v8322 = vunpack.c.h.b16 %v7540
    %v8323 = vunpack.c.l.b16 %v7541
    %v8324 = vunpack.c.h.b16 %v7541
    %v8325 = vunpack.c.l.b16 %v7542
    %v8326 = vunpack.c.h.b16 %v7542
    %v8327 = vunpack.c.l.b16 %v7543
    %v8328 = vunpack.c.h.b16 %v7543
    %v8329 = vunpack.c.l.b16 %v7544
    %v8330 = vunpack.c.h.b16 %v7544
    %v8331 = vunpack.c.l.b16 %v7545
    %v8332 = vunpack.c.h.b16 %v7545
    %v8333 = vunpack.c.l.b16 %v7546
    %v8334 = vunpack.c.h.b16 %v7546
    %v8335 = vunpack.c.l.b16 %v7547
    %v8336 = vunpack.c.h.b16 %v7547
    %v8337 = vunpack.c.l.b16 %v7548
    %v8338 = vunpack.c.h.b16 %v7548
    %v8339 = vpack.c.b16 %v7831, %v7827
    %v8340 = vpack.c.b16 %v7832, %v7828
    %v8341 = vpack.c.b16 %v7833, %v7829
    %v8342 = vpack.c.b16 %v7834, %v7830
    %v8343 = vpack.c.b16 %v7839, %v7835
    %v8344 = vpack.c.b16 %v7840, %v7836
    %v8345 = vpack.c.b16 %v7841, %v7837
    %v8346 = vpack.c.b16 %v7842, %v7838
    %v8347 = vpack.c.b16 %v7847, %v7843
    %v8348 = vpack.c.b16 %v7848, %v7844
    %v8349 = vpack.c.b16 %v7849, %v7845
    %v8350 = vpack.c.b16 %v7850, %v7846
    %v8351 = vpack.c.b16 %v7855, %v7851
    %v8352 = vpack.c.b16 %v7856, %v7852
    %v8353 = vpack.c.b16 %v7857, %v7853
    %v8354 = vpack.c.b16 %v7858, %v7854
    %v8355 = vpack.c.b16 %v7863, %v7859
    %v8356 = vpack.c.b16 %v7864, %v7860
    %v8357 = vpack.c.b16 %v7865, %v7861
    %v8358 = vpack.c.b16 %v7866, %v7862
    %v8359 = vpack.c.b16 %v7871, %v7867
    %v8360 = vpack.c.b16 %v7872, %v7868
    %v8361 = vpack.c.b16 %v7873, %v7869
    %v8362 = vpack.c.b16 %v7874, %v7870
    %v8363 = vpack.c.b16 %v7879, %v7875
    %v8364 = vpack.c.b16 %v7880, %v7876
    %v8365 = vpack.c.b16 %v7881, %v7877
    %v8366 = vpack.c.b16 %v7882, %v7878
    %v8367 = vpack.c.b16 %v7887, %v7883
    %v8368 = vpack.c.b16 %v7888, %v7884
    %v8369 = vpack.c.b16 %v7889, %v7885
    %v8370 = vpack.c.b16 %v7890, %v7886
    %v8371 = vpack.c.b16 %v7895, %v7891
    %v8372 = vpack.c.b16 %v7896, %v7892
    %v8373 = vpack.c.b16 %v7897, %v7893
    %v8374 = vpack.c.b16 %v7898, %v7894
    %v8375 = vpack.c.b16 %v7903, %v7899
    %v8376 = vpack.c.b16 %v7904, %v7900
    %v8377 = vpack.c.b16 %v7905, %v7901
    %v8378 = vpack.c.b16 %v7906, %v7902
    %v8379 = vpack.c.b16 %v7911, %v7907
    %v8380 = vpack.c.b16 %v7912, %v7908
    %v8381 = vpack.c.b16 %v7913, %v7909
    %v8382 = vpack.c.b16 %v7914, %v7910
    %v8383 = vpack.c.b16 %v7919, %v7915
    %v8384 = vpack.c.b16 %v7920, %v7916
    %v8385 = vpack.c.b16 %v7921, %v7917
    %v8386 = vpack.c.b16 %v7922, %v7918
    %v8387 = vpack.c.b16 %v7927, %v7923
    %v8388 = vpack.c.b16 %v7928, %v7924
    %v8389 = vpack.c.b16 %v7929, %v7925
    %v8390 = vpack.c.b16 %v7930, %v7926
    %v8391 = vpack.c.b16 %v7935, %v7931
    %v8392 = vpack.c.b16 %v7936, %v7932
    %v8393 = vpack.c.b16 %v7937, %v7933
    %v8394 = vpack.c.b16 %v7938, %v7934
    %v8395 = vpack.c.b16 %v7943, %v7939
    %v8396 = vpack.c.b16 %v7944, %v7940
    %v8397 = vpack.c.b16 %v7945, %v7941
    %v8398 = vpack.c.b16 %v7946, %v7942
    %v8399 = vpack.c.b16 %v7951, %v7947
    %v8400 = vpack.c.b16 %v7952, %v7948
    %v8401 = vpack.c.b16 %v7953, %v7949
    %v8402 = vpack.c.b16 %v7954, %v7950
    %v8403 = vpack.c.b16 %v7959, %v7955
    %v8404 = vpack.c.b16 %v7960, %v7956
    %v8405 = vpack.c.b16 %v7961, %v7957
    %v8406 = vpack.c.b16 %v7962, %v7958
    %v8407 = vpack.c.b16 %v7967, %v7963
    %v8408 = vpack.c.b16 %v7968, %v7964
    %v8409 = vpack.c.b16 %v7969, %v7965
    %v8410 = vpack.c.b16 %v7970, %v7966
    %v8411 = vpack.c.b16 %v7975, %v7971
    %v8412 = vpack.c.b16 %v7976, %v7972
    %v8413 = vpack.c.b16 %v7977, %v7973
    %v8414 = vpack.c.b16 %v7978, %v7974
    %v8415 = vpack.c.b16 %v7983, %v7979
    %v8416 = vpack.c.b16 %v7984, %v7980
    %v8417 = vpack.c.b16 %v7985, %v7981
    %v8418 = vpack.c.b16 %v7986, %v7982
    %v8419 = vpack.c.b16 %v7991, %v7987
    %v8420 = vpack.c.b16 %v7992, %v7988
    %v8421 = vpack.c.b16 %v7993, %v7989
    %v8422 = vpack.c.b16 %v7994, %v7990
    %v8423 = vpack.c.b16 %v7999, %v7995
    %v8424 = vpack.c.b16 %v8000, %v7996
    %v8425 = vpack.c.b16 %v8001, %v7997
    %v8426 = vpack.c.b16 %v8002, %v7998
    %v8427 = vpack.c.b16 %v8007, %v8003
    %v8428 = vpack.c.b16 %v8008, %v8004
    %v8429 = vpack.c.b16 %v8009, %v8005
    %v8430 = vpack.c.b16 %v8010, %v8006
    %v8431 = vpack.c.b16 %v8015, %v8011
    %v8432 = vpack.c.b16 %v8016, %v8012
    %v8433 = vpack.c.b16 %v8017, %v8013
    %v8434 = vpack.c.b16 %v8018, %v8014
    %v8435 = vpack.c.b16 %v8023, %v8019
    %v8436 = vpack.c.b16 %v8024, %v8020
    %v8437 = vpack.c.b16 %v8025, %v8021
    %v8438 = vpack.c.b16 %v8026, %v8022
    %v8439 = vpack.c.b16 %v8031, %v8027
    %v8440 = vpack.c.b16 %v8032, %v8028
    %v8441 = vpack.c.b16 %v8033, %v8029
    %v8442 = vpack.c.b16 %v8034, %v8030
    %v8443 = vpack.c.b16 %v8039, %v8035
    %v8444 = vpack.c.b16 %v8040, %v8036
    %v8445 = vpack.c.b16 %v8041, %v8037
    %v8446 = vpack.c.b16 %v8042, %v8038
    %v8447 = vpack.c.b16 %v8047, %v8043
    %v8448 = vpack.c.b16 %v8048, %v8044
    %v8449 = vpack.c.b16 %v8049, %v8045
    %v8450 = vpack.c.b16 %v8050, %v8046
    %v8451 = vpack.c.b16 %v8055, %v8051
    %v8452 = vpack.c.b16 %v8056, %v8052
    %v8453 = vpack.c.b16 %v8057, %v8053
    %v8454 = vpack.c.b16 %v8058, %v8054
    %v8455 = vpack.c.b16 %v8063, %v8059
    %v8456 = vpack.c.b16 %v8064, %v8060
    %v8457 = vpack.c.b16 %v8065, %v8061
    %v8458 = vpack.c.b16 %v8066, %v8062
    %v8459 = vpack.c.b16 %v8071, %v8067
    %v8460 = vpack.c.b16 %v8072, %v8068
    %v8461 = vpack.c.b16 %v8073, %v8069
    %v8462 = vpack.c.b16 %v8074, %v8070
    %v8463 = vpack.c.b16 %v8079, %v8075
    %v8464 = vpack.c.b16 %v8080, %v8076
    %v8465 = vpack.c.b16 %v8081, %v8077
    %v8466 = vpack.c.b16 %v8082, %v8078
    %v8467 = vpack.c.b16 %v8087, %v8083
    %v8468 = vpack.c.b16 %v8088, %v8084
    %v8469 = vpack.c.b16 %v8089, %v8085
    %v8470 = vpack.c.b16 %v8090, %v8086
    %v8471 = vpack.c.b16 %v8095, %v8091
    %v8472 = vpack.c.b16 %v8096, %v8092
    %v8473 = vpack.c.b16 %v8097, %v8093
    %v8474 = vpack.c.b16 %v8098, %v8094
    %v8475 = vpack.c.b16 %v8103, %v8099
    %v8476 = vpack.c.b16 %v8104, %v8100
    %v8477 = vpack.c.b16 %v8105, %v8101
    %v8478 = vpack.c.b16 %v8106, %v8102
    %v8479 = vpack.c.b16 %v8111, %v8107
    %v8480 = vpack.c.b16 %v8112, %v8108
    %v8481 = vpack.c.b16 %v8113, %v8109
    %v8482 = vpack.c.b16 %v8114, %v8110
    %v8483 = vpack.c.b16 %v8119, %v8115
    %v8484 = vpack.c.b16 %v8120, %v8116
    %v8485 = vpack.c.b16 %v8121, %v8117
    %v8486 = vpack.c.b16 %v8122, %v8118
    %v8487 = vpack.c.b16 %v8127, %v8123
    %v8488 = vpack.c.b16 %v8128, %v8124
    %v8489 = vpack.c.b16 %v8129, %v8125
    %v8490 = vpack.c.b16 %v8130, %v8126
    %v8491 = vpack.c.b16 %v8135, %v8131
    %v8492 = vpack.c.b16 %v8136, %v8132
    %v8493 = vpack.c.b16 %v8137, %v8133
    %v8494 = vpack.c.b16 %v8138, %v8134
    %v8495 = vpack.c.b16 %v8143, %v8139
    %v8496 = vpack.c.b16 %v8144, %v8140
    %v8497 = vpack.c.b16 %v8145, %v8141
    %v8498 = vpack.c.b16 %v8146, %v8142
    %v8499 = vpack.c.b16 %v8151, %v8147
    %v8500 = vpack.c.b16 %v8152, %v8148
    %v8501 = vpack.c.b16 %v8153, %v8149
    %v8502 = vpack.c.b16 %v8154, %v8150
    %v8503 = vpack.c.b16 %v8159, %v8155
    %v8504 = vpack.c.b16 %v8160, %v8156
    %v8505 = vpack.c.b16 %v8161, %v8157
    %v8506 = vpack.c.b16 %v8162, %v8158
    %v8507 = vpack.c.b16 %v8167, %v8163
    %v8508 = vpack.c.b16 %v8168, %v8164
    %v8509 = vpack.c.b16 %v8169, %v8165
    %v8510 = vpack.c.b16 %v8170, %v8166
    %v8511 = vpack.c.b16 %v8175, %v8171
    %v8512 = vpack.c.b16 %v8176, %v8172
    %v8513 = vpack.c.b16 %v8177, %v8173
    %v8514 = vpack.c.b16 %v8178, %v8174
    %v8515 = vpack.c.b16 %v8183, %v8179
    %v8516 = vpack.c.b16 %v8184, %v8180
    %v8517 = vpack.c.b16 %v8185, %v8181
    %v8518 = vpack.c.b16 %v8186, %v8182
    %v8519 = vpack.c.b16 %v8191, %v8187
    %v8520 = vpack.c.b16 %v8192, %v8188
    %v8521 = vpack.c.b16 %v8193, %v8189
    %v8522 = vpack.c.b16 %v8194, %v8190
    %v8523 = vpack.c.b16 %v8199, %v8195
    %v8524 = vpack.c.b16 %v8200, %v8196
    %v8525 = vpack.c.b16 %v8201, %v8197
    %v8526 = vpack.c.b16 %v8202, %v8198
    %v8527 = vpack.c.b16 %v8207, %v8203
    %v8528 = vpack.c.b16 %v8208, %v8204
    %v8529 = vpack.c.b16 %v8209, %v8205
    %v8530 = vpack.c.b16 %v8210, %v8206
    %v8531 = vpack.c.b16 %v8215, %v8211
    %v8532 = vpack.c.b16 %v8216, %v8212
    %v8533 = vpack.c.b16 %v8217, %v8213
    %v8534 = vpack.c.b16 %v8218, %v8214
    %v8535 = vpack.c.b16 %v8223, %v8219
    %v8536 = vpack.c.b16 %v8224, %v8220
    %v8537 = vpack.c.b16 %v8225, %v8221
    %v8538 = vpack.c.b16 %v8226, %v8222
    %v8539 = vpack.c.b16 %v8231, %v8227
    %v8540 = vpack.c.b16 %v8232, %v8228
    %v8541 = vpack.c.b16 %v8233, %v8229
    %v8542 = vpack.c.b16 %v8234, %v8230
    %v8543 = vpack.c.b16 %v8239, %v8235
    %v8544 = vpack.c.b16 %v8240, %v8236
    %v8545 = vpack.c.b16 %v8241, %v8237
    %v8546 = vpack.c.b16 %v8242, %v8238
    %v8547 = vpack.c.b16 %v8247, %v8243
    %v8548 = vpack.c.b16 %v8248, %v8244
    %v8549 = vpack.c.b16 %v8249, %v8245
    %v8550 = vpack.c.b16 %v8250, %v8246
    %v8551 = vpack.c.b16 %v8255, %v8251
    %v8552 = vpack.c.b16 %v8256, %v8252
    %v8553 = vpack.c.b16 %v8257, %v8253
    %v8554 = vpack.c.b16 %v8258, %v8254
    %v8555 = vpack.c.b16 %v8263, %v8259
    %v8556 = vpack.c.b16 %v8264, %v8260
    %v8557 = vpack.c.b16 %v8265, %v8261
    %v8558 = vpack.c.b16 %v8266, %v8262
    %v8559 = vpack.c.b16 %v8271, %v8267
    %v8560 = vpack.c.b16 %v8272, %v8268
    %v8561 = vpack.c.b16 %v8273, %v8269
    %v8562 = vpack.c.b16 %v8274, %v8270
    %v8563 = vpack.c.b16 %v8279, %v8275
    %v8564 = vpack.c.b16 %v8280, %v8276
    %v8565 = vpack.c.b16 %v8281, %v8277
    %v8566 = vpack.c.b16 %v8282, %v8278
    %v8567 = vpack.c.b16 %v8287, %v8283
    %v8568 = vpack.c.b16 %v8288, %v8284
    %v8569 = vpack.c.b16 %v8289, %v8285
    %v8570 = vpack.c.b16 %v8290, %v8286
    %v8571 = vpack.c.b16 %v8295, %v8291
    %v8572 = vpack.c.b16 %v8296, %v8292
    %v8573 = vpack.c.b16 %v8297, %v8293
    %v8574 = vpack.c.b16 %v8298, %v8294
    %v8575 = vpack.c.b16 %v8303, %v8299
    %v8576 = vpack.c.b16 %v8304, %v8300
    %v8577 = vpack.c.b16 %v8305, %v8301
    %v8578 = vpack.c.b16 %v8306, %v8302
    %v8579 = vpack.c.b16 %v8311, %v8307
    %v8580 = vpack.c.b16 %v8312, %v8308
    %v8581 = vpack.c.b16 %v8313, %v8309
    %v8582 = vpack.c.b16 %v8314, %v8310
    %v8583 = vpack.c.b16 %v8319, %v8315
    %v8584 = vpack.c.b16 %v8320, %v8316
    %v8585 = vpack.c.b16 %v8321, %v8317
    %v8586 = vpack.c.b16 %v8322, %v8318
    %v8587 = vpack.c.b16 %v8327, %v8323
    %v8588 = vpack.c.b16 %v8328, %v8324
    %v8589 = vpack.c.b16 %v8329, %v8325
    %v8590 = vpack.c.b16 %v8330, %v8326
    %v8591 = vpack.c.b16 %v8335, %v8331
    %v8592 = vpack.c.b16 %v8336, %v8332
    %v8593 = vpack.c.b16 %v8337, %v8333
    %v8594 = vpack.c.b16 %v8338, %v8334
    %8851 = vmatprep.subr.bf16.mxu0 %v8340
    %8852 = vmatpush1.bf16.msra.mxu0 %v8339
    %8853 = vmatprep.subr.bf16.mxu0 %v8344
    %8854 = vmatpush1.bf16.msra.mxu0 %v8343
    %8855 = vmatprep.subr.bf16.mxu0 %v8348
    %8856 = vmatpush1.bf16.msra.mxu0 %v8347
    %8857 = vmatprep.subr.bf16.mxu0 %v8352
    %8858 = vmatpush1.bf16.msra.mxu0 %v8351
    %8859 = vmatprep.subr.bf16.mxu0 %v8356
    %8860 = vmatpush1.bf16.msra.mxu0 %v8355
    %8861 = vmatprep.subr.bf16.mxu0 %v8360
    %8862 = vmatpush1.bf16.msra.mxu0 %v8359
    %8863 = vmatprep.subr.bf16.mxu0 %v8364
    %8864 = vmatpush1.bf16.msra.mxu0 %v8363
    %8865 = vmatprep.subr.bf16.mxu0 %v8368
    %8866 = vmatpush1.bf16.msra.mxu0 %v8367
    %8867 = vmatprep.subr.bf16.mxu0 %v8372
    %8868 = vmatpush1.bf16.msra.mxu0 %v8371
    %8869 = vmatprep.subr.bf16.mxu0 %v8376
    %8870 = vmatpush1.bf16.msra.mxu0 %v8375
    %8871 = vmatprep.subr.bf16.mxu0 %v8380
    %8872 = vmatpush1.bf16.msra.mxu0 %v8379
    %8873 = vmatprep.subr.bf16.mxu0 %v8384
    %8874 = vmatpush1.bf16.msra.mxu0 %v8383
    %8875 = vmatprep.subr.bf16.mxu0 %v8388
    %8876 = vmatpush1.bf16.msra.mxu0 %v8387
    %8877 = vmatprep.subr.bf16.mxu0 %v8392
    %8878 = vmatpush1.bf16.msra.mxu0 %v8391
    %8879 = vmatprep.subr.bf16.mxu0 %v8396
    %8880 = vmatpush1.bf16.msra.mxu0 %v8395
    %8881 = vmatprep.subr.bf16.mxu0 %v8400
    %8882 = vmatpush1.bf16.msra.mxu0 %v8399
    %8883 = vmatprep.mubr.bf16.mxu0 %v7286
    %8884 = vmatmul.mubr.bf16.gmra.mrb[0].mxu0 %v7285
    %v8885 = vpop.f32.mrb[0].mxu0
    %v8886 = vadd.f32 %v7554, %v8885
    %v8887 = vpop.f32.mrb[0].mxu0
    %v8888 = vadd.f32 %v7558, %v8887
    %v8889 = vpop.f32.mrb[0].mxu0
    %v8890 = vpop.f32.mrb[0].mxu0
    %8891 = vdwg.mxu0
    %8892 = vmatprep.subr.bf16.mxu0 %v8404
    %8893 = vmatpush1.bf16.msra.mxu0 %v8403
    %8894 = vmatprep.subr.bf16.mxu0 %v8408
    %8895 = vmatpush1.bf16.msra.mxu0 %v8407
    %8896 = vmatprep.subr.bf16.mxu0 %v8412
    %8897 = vmatpush1.bf16.msra.mxu0 %v8411
    %8898 = vmatprep.subr.bf16.mxu0 %v8416
    %8899 = vmatpush1.bf16.msra.mxu0 %v8415
    %8900 = vmatprep.subr.bf16.mxu0 %v8420
    %8901 = vmatpush1.bf16.msra.mxu0 %v8419
    %8902 = vmatprep.subr.bf16.mxu0 %v8424
    %8903 = vmatpush1.bf16.msra.mxu0 %v8423
    %8904 = vmatprep.subr.bf16.mxu0 %v8428
    %8905 = vmatpush1.bf16.msra.mxu0 %v8427
    %8906 = vmatprep.subr.bf16.mxu0 %v8432
    %8907 = vmatpush1.bf16.msra.mxu0 %v8431
    %8908 = vmatprep.subr.bf16.mxu0 %v8436
    %8909 = vmatpush1.bf16.msra.mxu0 %v8435
    %8910 = vmatprep.subr.bf16.mxu0 %v8440
    %8911 = vmatpush1.bf16.msra.mxu0 %v8439
    %8912 = vmatprep.subr.bf16.mxu0 %v8444
    %8913 = vmatpush1.bf16.msra.mxu0 %v8443
    %8914 = vmatprep.subr.bf16.mxu0 %v8448
    %8915 = vmatpush1.bf16.msra.mxu0 %v8447
    %8916 = vmatprep.subr.bf16.mxu0 %v8452
    %8917 = vmatpush1.bf16.msra.mxu0 %v8451
    %8918 = vmatprep.subr.bf16.mxu0 %v8456
    %8919 = vmatpush1.bf16.msra.mxu0 %v8455
    %8920 = vmatprep.subr.bf16.mxu0 %v8460
    %8921 = vmatpush1.bf16.msra.mxu0 %v8459
    %8922 = vmatprep.subr.bf16.mxu0 %v8464
    %8923 = vmatpush1.bf16.msra.mxu0 %v8463
    %8924 = vmatprep.mubr.bf16.mxu0 %v7288
    %8925 = vmatmul.mubr.bf16.gmra.mrb[0].mxu0 %v7287
    %v8926 = vpop.f32.mrb[0].mxu0
    %v8927 = vadd.f32 %v8886, %v8926
    %v8928 = vpop.f32.mrb[0].mxu0
    %v8929 = vadd.f32 %v8888, %v8928
    %v8930 = vpop.f32.mrb[0].mxu0
    %v8931 = vpop.f32.mrb[0].mxu0
    %8932 = vdwg.mxu0
    %8933 = vmatprep.subr.bf16.mxu0 %v8468
    %8934 = vmatpush1.bf16.msra.mxu0 %v8467
    %8935 = vmatprep.subr.bf16.mxu0 %v8472
    %8936 = vmatpush1.bf16.msra.mxu0 %v8471
    %8937 = vmatprep.subr.bf16.mxu0 %v8476
    %8938 = vmatpush1.bf16.msra.mxu0 %v8475
    %8939 = vmatprep.subr.bf16.mxu0 %v8480
    %8940 = vmatpush1.bf16.msra.mxu0 %v8479
    %8941 = vmatprep.subr.bf16.mxu0 %v8484
    %8942 = vmatpush1.bf16.msra.mxu0 %v8483
    %8943 = vmatprep.subr.bf16.mxu0 %v8488
    %8944 = vmatpush1.bf16.msra.mxu0 %v8487
    %8945 = vmatprep.subr.bf16.mxu0 %v8492
    %8946 = vmatpush1.bf16.msra.mxu0 %v8491
    %8947 = vmatprep.subr.bf16.mxu0 %v8496
    %8948 = vmatpush1.bf16.msra.mxu0 %v8495
    %8949 = vmatprep.subr.bf16.mxu0 %v8500
    %8950 = vmatpush1.bf16.msra.mxu0 %v8499
    %8951 = vmatprep.subr.bf16.mxu0 %v8504
    %8952 = vmatpush1.bf16.msra.mxu0 %v8503
    %8953 = vmatprep.subr.bf16.mxu0 %v8508
    %8954 = vmatpush1.bf16.msra.mxu0 %v8507
    %8955 = vmatprep.subr.bf16.mxu0 %v8512
    %8956 = vmatpush1.bf16.msra.mxu0 %v8511
    %8957 = vmatprep.subr.bf16.mxu0 %v8516
    %8958 = vmatpush1.bf16.msra.mxu0 %v8515
    %8959 = vmatprep.subr.bf16.mxu0 %v8520
    %8960 = vmatpush1.bf16.msra.mxu0 %v8519
    %8961 = vmatprep.subr.bf16.mxu0 %v8524
    %8962 = vmatpush1.bf16.msra.mxu0 %v8523
    %8963 = vmatprep.subr.bf16.mxu0 %v8528
    %8964 = vmatpush1.bf16.msra.mxu0 %v8527
    %8965 = vmatprep.mubr.bf16.mxu0 %v7290
    %8966 = vmatmul.mubr.bf16.gmra.mrb[0].mxu0 %v7289
    %v8967 = vpop.f32.mrb[0].mxu0
    %v8968 = vadd.f32 %v8927, %v8967
    %v8969 = vpop.f32.mrb[0].mxu0
    %v8970 = vadd.f32 %v8929, %v8969
    %v8971 = vpop.f32.mrb[0].mxu0
    %v8972 = vpop.f32.mrb[0].mxu0
    %8973 = vdwg.mxu0
    %8974 = vmatprep.subr.bf16.mxu0 %v8532
    %8975 = vmatpush1.bf16.msra.mxu0 %v8531
    %8976 = vmatprep.subr.bf16.mxu0 %v8536
    %8977 = vmatpush1.bf16.msra.mxu0 %v8535
    %8978 = vmatprep.subr.bf16.mxu0 %v8540
    %8979 = vmatpush1.bf16.msra.mxu0 %v8539
    %8980 = vmatprep.subr.bf16.mxu0 %v8544
    %8981 = vmatpush1.bf16.msra.mxu0 %v8543
    %8982 = vmatprep.subr.bf16.mxu0 %v8548
    %8983 = vmatpush1.bf16.msra.mxu0 %v8547
    %8984 = vmatprep.subr.bf16.mxu0 %v8552
    %8985 = vmatpush1.bf16.msra.mxu0 %v8551
    %8986 = vmatprep.subr.bf16.mxu0 %v8556
    %8987 = vmatpush1.bf16.msra.mxu0 %v8555
    %8988 = vmatprep.subr.bf16.mxu0 %v8560
    %8989 = vmatpush1.bf16.msra.mxu0 %v8559
    %8990 = vmatprep.subr.bf16.mxu0 %v8564
    %8991 = vmatpush1.bf16.msra.mxu0 %v8563
    %8992 = vmatprep.subr.bf16.mxu0 %v8568
    %8993 = vmatpush1.bf16.msra.mxu0 %v8567
    %8994 = vmatprep.subr.bf16.mxu0 %v8572
    %8995 = vmatpush1.bf16.msra.mxu0 %v8571
    %8996 = vmatprep.subr.bf16.mxu0 %v8576
    %8997 = vmatpush1.bf16.msra.mxu0 %v8575
    %8998 = vmatprep.subr.bf16.mxu0 %v8580
    %8999 = vmatpush1.bf16.msra.mxu0 %v8579
    %9000 = vmatprep.subr.bf16.mxu0 %v8584
    %9001 = vmatpush1.bf16.msra.mxu0 %v8583
    %9002 = vmatprep.subr.bf16.mxu0 %v8588
    %9003 = vmatpush1.bf16.msra.mxu0 %v8587
    %9004 = vmatprep.subr.bf16.mxu0 %v8592
    %9005 = vmatpush1.bf16.msra.mxu0 %v8591
    %9006 = vmatprep.mubr.bf16.mxu0 %v7292
    %9007 = vmatmul.mubr.bf16.gmra.mrb[0].mxu0 %v7291
    %v9008 = vpop.f32.mrb[0].mxu0
    %v9009 = vadd.f32 %v8968, %v9008
    %v9010 = vpop.f32.mrb[0].mxu0
    %v9011 = vadd.f32 %v8970, %v9010
    %v9012 = vpop.f32.mrb[0].mxu0
    %v9013 = vpop.f32.mrb[0].mxu0
    %9014 = vdwg.mxu0
    %9015 = vmatprep.subr.bf16.mxu0 %v8342
    %9016 = vmatpush1.bf16.msra.mxu0 %v8341
    %9017 = vmatprep.subr.bf16.mxu0 %v8346
    %9018 = vmatpush1.bf16.msra.mxu0 %v8345
    %9019 = vmatprep.subr.bf16.mxu0 %v8350
    %9020 = vmatpush1.bf16.msra.mxu0 %v8349
    %9021 = vmatprep.subr.bf16.mxu0 %v8354
    %9022 = vmatpush1.bf16.msra.mxu0 %v8353
    %9023 = vmatprep.subr.bf16.mxu0 %v8358
    %9024 = vmatpush1.bf16.msra.mxu0 %v8357
    %9025 = vmatprep.subr.bf16.mxu0 %v8362
    %9026 = vmatpush1.bf16.msra.mxu0 %v8361
    %9027 = vmatprep.subr.bf16.mxu0 %v8366
    %9028 = vmatpush1.bf16.msra.mxu0 %v8365
    %9029 = vmatprep.subr.bf16.mxu0 %v8370
    %9030 = vmatpush1.bf16.msra.mxu0 %v8369
    %9031 = vmatprep.subr.bf16.mxu0 %v8374
    %9032 = vmatpush1.bf16.msra.mxu0 %v8373
    %9033 = vmatprep.subr.bf16.mxu0 %v8378
    %9034 = vmatpush1.bf16.msra.mxu0 %v8377
    %9035 = vmatprep.subr.bf16.mxu0 %v8382
    %9036 = vmatpush1.bf16.msra.mxu0 %v8381
    %9037 = vmatprep.subr.bf16.mxu0 %v8386
    %9038 = vmatpush1.bf16.msra.mxu0 %v8385
    %9039 = vmatprep.subr.bf16.mxu0 %v8390
    %9040 = vmatpush1.bf16.msra.mxu0 %v8389
    %9041 = vmatprep.subr.bf16.mxu0 %v8394
    %9042 = vmatpush1.bf16.msra.mxu0 %v8393
    %9043 = vmatprep.subr.bf16.mxu0 %v8398
    %9044 = vmatpush1.bf16.msra.mxu0 %v8397
    %9045 = vmatprep.subr.bf16.mxu0 %v8402
    %9046 = vmatpush1.bf16.msra.mxu0 %v8401
    %9047 = vmatprep.mubr.bf16.mxu0 %v7286
    %9048 = vmatmul.mubr.bf16.gmra.mrb[0].mxu0 %v7285
    %v9049 = vpop.f32.mrb[0].mxu0
    %v9050 = vadd.f32 %v7562, %v9049
    %v9051 = vpop.f32.mrb[0].mxu0
    %v9052 = vadd.f32 %v7566, %v9051
    %v9053 = vpop.f32.mrb[0].mxu0
    %v9054 = vpop.f32.mrb[0].mxu0
    %9055 = vdwg.mxu0
    %9056 = vmatprep.subr.bf16.mxu0 %v8406
    %9057 = vmatpush1.bf16.msra.mxu0 %v8405
    %9058 = vmatprep.subr.bf16.mxu0 %v8410
    %9059 = vmatpush1.bf16.msra.mxu0 %v8409
    %9060 = vmatprep.subr.bf16.mxu0 %v8414
    %9061 = vmatpush1.bf16.msra.mxu0 %v8413
    %9062 = vmatprep.subr.bf16.mxu0 %v8418
    %9063 = vmatpush1.bf16.msra.mxu0 %v8417
    %9064 = vmatprep.subr.bf16.mxu0 %v8422
    %9065 = vmatpush1.bf16.msra.mxu0 %v8421
    %9066 = vmatprep.subr.bf16.mxu0 %v8426
    %9067 = vmatpush1.bf16.msra.mxu0 %v8425
    %9068 = vmatprep.subr.bf16.mxu0 %v8430
    %9069 = vmatpush1.bf16.msra.mxu0 %v8429
    %9070 = vmatprep.subr.bf16.mxu0 %v8434
    %9071 = vmatpush1.bf16.msra.mxu0 %v8433
    %9072 = vmatprep.subr.bf16.mxu0 %v8438
    %9073 = vmatpush1.bf16.msra.mxu0 %v8437
    %9074 = vmatprep.subr.bf16.mxu0 %v8442
    %9075 = vmatpush1.bf16.msra.mxu0 %v8441
    %9076 = vmatprep.subr.bf16.mxu0 %v8446
    %9077 = vmatpush1.bf16.msra.mxu0 %v8445
    %9078 = vmatprep.subr.bf16.mxu0 %v8450
    %9079 = vmatpush1.bf16.msra.mxu0 %v8449
    %9080 = vmatprep.subr.bf16.mxu0 %v8454
    %9081 = vmatpush1.bf16.msra.mxu0 %v8453
    %9082 = vmatprep.subr.bf16.mxu0 %v8458
    %9083 = vmatpush1.bf16.msra.mxu0 %v8457
    %9084 = vmatprep.subr.bf16.mxu0 %v8462
    %9085 = vmatpush1.bf16.msra.mxu0 %v8461
    %9086 = vmatprep.subr.bf16.mxu0 %v8466
    %9087 = vmatpush1.bf16.msra.mxu0 %v8465
    %9088 = vmatprep.mubr.bf16.mxu0 %v7288
    %9089 = vmatmul.mubr.bf16.gmra.mrb[0].mxu0 %v7287
    %v9090 = vpop.f32.mrb[0].mxu0
    %v9091 = vadd.f32 %v9050, %v9090
    %v9092 = vpop.f32.mrb[0].mxu0
    %v9093 = vadd.f32 %v9052, %v9092
    %v9094 = vpop.f32.mrb[0].mxu0
    %v9095 = vpop.f32.mrb[0].mxu0
    %9096 = vdwg.mxu0
    %9097 = vmatprep.subr.bf16.mxu0 %v8470
    %9098 = vmatpush1.bf16.msra.mxu0 %v8469
    %9099 = vmatprep.subr.bf16.mxu0 %v8474
    %9100 = vmatpush1.bf16.msra.mxu0 %v8473
    %9101 = vmatprep.subr.bf16.mxu0 %v8478
    %9102 = vmatpush1.bf16.msra.mxu0 %v8477
    %9103 = vmatprep.subr.bf16.mxu0 %v8482
    %9104 = vmatpush1.bf16.msra.mxu0 %v8481
    %9105 = vmatprep.subr.bf16.mxu0 %v8486
    %9106 = vmatpush1.bf16.msra.mxu0 %v8485
    %9107 = vmatprep.subr.bf16.mxu0 %v8490
    %9108 = vmatpush1.bf16.msra.mxu0 %v8489
    %9109 = vmatprep.subr.bf16.mxu0 %v8494
    %9110 = vmatpush1.bf16.msra.mxu0 %v8493
    %9111 = vmatprep.subr.bf16.mxu0 %v8498
    %9112 = vmatpush1.bf16.msra.mxu0 %v8497
    %9113 = vmatprep.subr.bf16.mxu0 %v8502
    %9114 = vmatpush1.bf16.msra.mxu0 %v8501
    %9115 = vmatprep.subr.bf16.mxu0 %v8506
    %9116 = vmatpush1.bf16.msra.mxu0 %v8505
    %9117 = vmatprep.subr.bf16.mxu0 %v8510
    %9118 = vmatpush1.bf16.msra.mxu0 %v8509
    %9119 = vmatprep.subr.bf16.mxu0 %v8514
    %9120 = vmatpush1.bf16.msra.mxu0 %v8513
    %9121 = vmatprep.subr.bf16.mxu0 %v8518
    %9122 = vmatpush1.bf16.msra.mxu0 %v8517
    %9123 = vmatprep.subr.bf16.mxu0 %v8522
    %9124 = vmatpush1.bf16.msra.mxu0 %v8521
    %9125 = vmatprep.subr.bf16.mxu0 %v8526
    %9126 = vmatpush1.bf16.msra.mxu0 %v8525
    %9127 = vmatprep.subr.bf16.mxu0 %v8530
    %9128 = vmatpush1.bf16.msra.mxu0 %v8529
    %9129 = vmatprep.mubr.bf16.mxu0 %v7290
    %9130 = vmatmul.mubr.bf16.gmra.mrb[0].mxu0 %v7289
    %v9131 = vpop.f32.mrb[0].mxu0
    %v9132 = vadd.f32 %v9091, %v9131
    %v9133 = vpop.f32.mrb[0].mxu0
    %v9134 = vadd.f32 %v9093, %v9133
    %v9135 = vpop.f32.mrb[0].mxu0
    %v9136 = vpop.f32.mrb[0].mxu0
    %9137 = vdwg.mxu0
    %9138 = vmatprep.subr.bf16.mxu0 %v8534
    %9139 = vmatpush1.bf16.msra.mxu0 %v8533
    %9140 = vmatprep.subr.bf16.mxu0 %v8538
    %9141 = vmatpush1.bf16.msra.mxu0 %v8537
    %9142 = vmatprep.subr.bf16.mxu0 %v8542
    %9143 = vmatpush1.bf16.msra.mxu0 %v8541
    %9144 = vmatprep.subr.bf16.mxu0 %v8546
    %9145 = vmatpush1.bf16.msra.mxu0 %v8545
    %9146 = vmatprep.subr.bf16.mxu0 %v8550
    %9147 = vmatpush1.bf16.msra.mxu0 %v8549
    %9148 = vmatprep.subr.bf16.mxu0 %v8554
    %9149 = vmatpush1.bf16.msra.mxu0 %v8553
    %9150 = vmatprep.subr.bf16.mxu0 %v8558
    %9151 = vmatpush1.bf16.msra.mxu0 %v8557
    %9152 = vmatprep.subr.bf16.mxu0 %v8562
    %9153 = vmatpush1.bf16.msra.mxu0 %v8561
    %9154 = vmatprep.subr.bf16.mxu0 %v8566
    %9155 = vmatpush1.bf16.msra.mxu0 %v8565
    %9156 = vmatprep.subr.bf16.mxu0 %v8570
    %9157 = vmatpush1.bf16.msra.mxu0 %v8569
    %9158 = vmatprep.subr.bf16.mxu0 %v8574
    %9159 = vmatpush1.bf16.msra.mxu0 %v8573
    %9160 = vmatprep.subr.bf16.mxu0 %v8578
    %9161 = vmatpush1.bf16.msra.mxu0 %v8577
    %9162 = vmatprep.subr.bf16.mxu0 %v8582
    %9163 = vmatpush1.bf16.msra.mxu0 %v8581
    %9164 = vmatprep.subr.bf16.mxu0 %v8586
    %9165 = vmatpush1.bf16.msra.mxu0 %v8585
    %9166 = vmatprep.subr.bf16.mxu0 %v8590
    %9167 = vmatpush1.bf16.msra.mxu0 %v8589
    %9168 = vmatprep.subr.bf16.mxu0 %v8594
    %9169 = vmatpush1.bf16.msra.mxu0 %v8593
    %9170 = vmatprep.mubr.bf16.mxu0 %v7292
    %9171 = vmatmul.mubr.bf16.gmra.mrb[0].mxu0 %v7291
    %v9172 = vpop.f32.mrb[0].mxu0
    %v9173 = vadd.f32 %v9132, %v9172
    %v9174 = vpop.f32.mrb[0].mxu0
    %v9175 = vadd.f32 %v9134, %v9174
    %v9176 = vpop.f32.mrb[0].mxu0
    %v9177 = vpop.f32.mrb[0].mxu0
    %9178 = vdwg.mxu0
    %9179 = vst [vmem:[%s7] sm:$0xff] %v9009
    %9180 = vst [vmem:[%s7 + $0x8] sm:$0xff] %v9011
    %9181 = vst [vmem:[%s7 + $0x10] sm:$0xff] %v9173
    %vm9182 = vcmask 130048
    %9183 = vst.msk [vmem:[%s7 + $0x18] sm:$0xff] %vm9182, %v9175
    // Predicated region
    $region46: #{mlp_input_forward.1} parent=1 // pred_check
      _
    $region47: #{mlp_input_forward.1} parent=1 // pred_check_branch
      %9185 = sbr.rel (0) target = $region49
    $region48: #{mlp_input_forward.1} parent=1 // pred_region
      _
    $region49: #{mlp_input_forward.1} parent=1 // pred_fallthru
      _
    // Predicated region
    $region50: #{mlp_input_forward.1} parent=1 // pred_check
      _
    $region51: #{mlp_input_forward.1} parent=1 // pred_check_branch
      %9187 = sbr.rel (0) target = $region53
    $region52: #{mlp_input_forward.1} parent=1 // pred_region
      _
    $region53: #{mlp_input_forward.1} parent=1 // pred_fallthru
      _
    %9188 = vsyncpa [#allocation3], 1
    %9189 = vsyncpa [#allocation5], 1
    %9190 = vsyncpa [#allocation8], 1

</llo_original>
